<compile_context>
chip_gen: v5e
topology: v5e:2x2
jax: 0.10.0
libtpu: 0.0.40
codegen_flags: <defaults>
</compile_context>

<pallas_src>
import functools

import jax
import jax.numpy as jnp
from jax import lax
from jax.experimental import pallas as pl
from jax.experimental.pallas import tpu as pltpu

# ----- small configuration consistent with the module's __init__ defaults -----
BATCH = 4
IMG_C, IMG_H, IMG_W = 3, 16, 16
LATENT_DIM = 128          # latent_dim (768 in the real model)
HIDDEN_DIM = 256          # hidden_dim (2048 in the real model)
PREFIX_LEN = 4            # prefix_length (10 in the real model; the hard-coded "10" slice
                          # in text_decode is generalized to PREFIX_LEN)
PREFIX_SIZE = LATENT_DIM  # prefix_size
GPT_EMBED = 128           # gpt_embedding_size (768 for gpt2)
WORD_LEN = 6              # word_length (20 in the real model)
VOCAB = 256               # gpt2 vocab stand-in (50257 in the real model)
PADDING_INDEX = 220
BN_EPS = 1e-5
SUBLANE = 8               # f32 sublane tile


# ------------------------------------------------------------------
# Fused kernel: image_encode + clip_project + projector_image  -->  text_decode
# (W unrolled autoregressive steps)  -->  text_encode + projector_text.
# grid=(1,): everything resident in VMEM for the whole forward pass.
# ------------------------------------------------------------------
def _fused_kernel(b_real,
                  x_ref, wv_ref, bv_ref,
                  wc1_ref, bc1_ref, wc2_ref, bc2_ref,
                  wpi1_ref, s1_ref, t1_ref, wpi2_ref, s2_ref, t2_ref,
                  w1s_ref, b1s_ref, whs_ref, bhs_ref,
                  w1p_ref, b1p_ref, whp_ref, bhp_ref,
                  wte_ref, bos_ref, eos_ref,
                  wtr_ref, btr_ref, wtxt_ref, btxt_ref,
                  wpt1_ref, wpt2_ref,
                  pre_img_ref, imglat_ref, pre_txt_ref, txtlat_ref,
                  probs_ref, tprobs_ref):
    f32 = jnp.float32
    bp = x_ref.shape[0]               # padded batch (multiple of 8 sublanes)
    e = wte_ref.shape[1]
    v = wte_ref.shape[0]

    def mm(a, w_ref):
        # bf16 MXU operands, f32 accumulation; elementwise math stays f32 (v5e-safe).
        return jnp.dot(a.astype(jnp.bfloat16), w_ref[...], preferred_element_type=f32)

    # ---------- phase 1: image_encode + clip_project + projector_image (eval BN) ----------
    # TODO(synk): frozen pretrained CLIPVisionModelWithProjection replaced by a linear
    # stand-in (image_enc_freeze=True path, vision adapter unused).
    lat = mm(x_ref[...], wv_ref) + bv_ref[...]
    pre_img_ref[...] = lat

    # clip_project: Linear -> Tanh -> Linear
    h = jnp.tanh(mm(lat, wc1_ref) + bc1_ref[...])
    prefix_flat = mm(h, wc2_ref) + bc2_ref[...]                 # (bp, PREFIX_LEN * e)

    # projector_image: Linear(no bias) -> BN(eval) -> ReLU -> Linear(no bias) -> BN(eval)
    y = mm(lat, wpi1_ref)
    y = jnp.maximum(y * s1_ref[...] + t1_ref[...], 0.0)
    y = mm(y, wpi2_ref)
    imglat_ref[...] = y * s2_ref[...] + t2_ref[...]

    # prefix positional sum (static 128-aligned lane slices) -> incremental mean pooling
    sum_prefix = jnp.zeros((bp, e), f32)
    for j in range(PREFIX_LEN):
        sum_prefix = sum_prefix + prefix_flat[:, j * e:(j + 1) * e]

    bos = bos_ref[...]
    eos = eos_ref[...]
    lane = lax.broadcasted_iota(jnp.int32, (bp, v), 1)
    # padded batch rows must not pollute the cross-batch union mask
    row_valid = (lax.broadcasted_iota(jnp.int32, (bp, 1), 0) < b_real).astype(f32)

    # ---------- phase 2: text_decode — W autoregressive steps, fully unrolled ----------
    # TODO(synk): pretrained GPT2LMHeadModel student/prior replaced by deterministic pooled
    # 2-layer tanh heads; eval-mode (F.softmax) branch only — gumbel_softmax not implemented.
    # TODO(synk): at real sizes the vocab-sized weights (wte, wh_*) must be bf16, vocab-tiled /
    # streamed (single-buffered) to fit v7x's 64 MiB VMEM, and this loop should get a vocab
    # grid axis (online softmax) so the second TensorCore is used.
    def step(i, carry):
        sum_s, sum_p, mask_u, cap_sum = carry

        # student "GPT" on prefix + generated so far; teacher ("prior") on generated only
        pooled_s = sum_s * (1.0 / (PREFIX_LEN + i))
        pooled_p = sum_p * (1.0 / jnp.maximum(i, 1))

        h_s = jnp.tanh(mm(pooled_s, w1s_ref) + b1s_ref[...])
        logit_s = mm(h_s, whs_ref) + bhs_ref[...]
        h_p = jnp.tanh(mm(pooled_p, w1p_ref) + b1p_ref[...])
        logit_p = mm(h_p, whp_ref) + bhp_ref[...]

        teacher_logit = jnp.where(i == 0, logit_s, logit_p)     # teacher_outputs = outputs at i==0

        logit = logit_s - jnp.max(logit_s, axis=-1, keepdims=True)
        teacher_logit = teacher_logit - jnp.max(teacher_logit, axis=-1, keepdims=True)

        # teacher_logit[:, messages_ids] = min: union of previously generated ids over the batch
        row_min = jnp.min(teacher_logit, axis=-1, keepdims=True)
        teacher_logit = jnp.where(mask_u > 0.0, row_min, teacher_logit)

        # eval-mode: F.softmax (exact normalization — probs are returned downstream)
        ex = jnp.exp(logit)
        z_soft = ex / jnp.sum(ex, axis=-1, keepdims=True)
        tex = jnp.exp(teacher_logit)
        teacher_soft = teacher_logit - jnp.log(jnp.sum(tex, axis=-1, keepdims=True))  # log_softmax

        # straight_through_discretize: one-hot(first argmax); forward value == one-hot
        vmax = jnp.max(z_soft, axis=-1, keepdims=True)
        next_word = jnp.min(jnp.where(z_soft == vmax, lane, v), axis=-1, keepdims=True)  # (bp,1)
        onehot = (lane == next_word).astype(f32)
        # TODO(synk): at the real vocab (50257x768) wte must stay in HBM (memory_space=pl.ANY)
        # and this becomes a per-row DMA gather; at toy sizes the one-hot matmul is cheapest.
        next_embed = mm(onehot, wte_ref)                          # (bp, e)

        probs_ref[i] = z_soft
        tprobs_ref[i] = teacher_soft

        # text_encode accumulation: caption_embeds[message_ids == padding_index] = eos_embed
        cap_embed = jnp.where(next_word == PADDING_INDEX, eos, next_embed)

        return (sum_s + next_embed,
                sum_p + next_embed,
                jnp.maximum(mask_u, jnp.max(onehot * row_valid, axis=0, keepdims=True)),
                cap_sum + cap_embed)

    carry0 = (sum_prefix, jnp.zeros((bp, e), f32),
              jnp.zeros((1, v), f32), jnp.zeros((bp, e), f32))
    _, _, _, cap_sum = lax.fori_loop(0, WORD_LEN, step, carry0, unroll=True)

    # ---------- phase 3: text_encode + projector_text ----------
    # mean over [bos, caption tokens, eos]; translator is affine so it commutes with the mean.
    # TODO(synk): pretrained MyCLIPTextModel replaced by mean-pool + linear projection stand-in.
    pooled = (cap_sum + bos + eos) * (1.0 / (WORD_LEN + 2))
    tr = mm(pooled, wtr_ref) + btr_ref[...]
    pre = mm(tr, wtxt_ref) + btxt_ref[...]
    pre_txt_ref[...] = pre

    # projector_text: Linear(no bias) -> ReLU -> Linear(no bias)
    ht = jnp.maximum(mm(pre, wpt1_ref), 0.0)
    txtlat_ref[...] = mm(ht, wpt2_ref)


def _full_spec(shape):
    nd = len(shape)
    return pl.BlockSpec(shape, lambda i, nd=nd: (0,) * nd)


def pallas_simsiam_forward(x_flat, p):
    b, kin = x_flat.shape
    # fill the f32 8-sublane tile end-to-end (padded rows are sliced off below)
    bp = max(SUBLANE, ((b + SUBLANE - 1) // SUBLANE) * SUBLANE)
    x_pad = jnp.pad(x_flat.astype(jnp.float32), ((0, bp - b), (0, 0)))

    lat, e, v, hdim = LATENT_DIM, GPT_EMBED, VOCAB, HIDDEN_DIM

    bf = lambda w: w.astype(jnp.bfloat16)                 # halve weight DMA bytes; acc stays f32
    row = lambda x: x.reshape(1, -1).astype(jnp.float32)

    # eval-mode BatchNorm1d with default running stats: scale = 1/sqrt(1+eps), shift = 0
    bn_scale = jnp.full((1, hdim), (1.0 + BN_EPS) ** -0.5, jnp.float32)
    bn_shift = jnp.zeros((1, hdim), jnp.float32)

    operands = (
        x_pad,
        bf(p["w_vis"]), row(p["b_vis"]),
        bf(p["w_cp1"]), row(p["b_cp1"]), bf(p["w_cp2"]), row(p["b_cp2"]),
        bf(p["w_pi1"]), bn_scale, bn_shift, bf(p["w_pi2"]), bn_scale, bn_shift,
        bf(p["w1_s"]), row(p["b1_s"]), bf(p["wh_s"]), row(p["bh_s"]),
        bf(p["w1_p"]), row(p["b1_p"]), bf(p["wh_p"]), row(p["bh_p"]),
        bf(p["wte"]), row(p["bos_embed"]), row(p["eos_embed"]),
        bf(p["w_tr"]), row(p["b_tr"]), bf(p["w_txt"]), row(p["b_txt"]),
        bf(p["w_pt1"]), bf(p["w_pt2"]),
    )

    out_shapes = (
        jax.ShapeDtypeStruct((bp, lat), jnp.float32),          # pre_image_latent
        jax.ShapeDtypeStruct((bp, hdim), jnp.float32),         # image_latent (projector_image)
        jax.ShapeDtypeStruct((bp, lat), jnp.float32),          # pre_text_latent
        jax.ShapeDtypeStruct((bp, hdim), jnp.float32),         # text_latent (projector_text)
        jax.ShapeDtypeStruct((WORD_LEN, bp, v), jnp.float32),  # probs (W, B, V)
        jax.ShapeDtypeStruct((WORD_LEN, bp, v), jnp.float32),  # teacher log-probs (W, B, V)
    )

    outs = pl.pallas_call(
        functools.partial(_fused_kernel, b),
        out_shape=out_shapes,
        grid=(1,),
        in_specs=[_full_spec(o.shape) for o in operands],
        out_specs=tuple(_full_spec(s.shape) for s in out_shapes),
        compiler_params=pltpu.CompilerParams(dimension_semantics=("arbitrary",)),
    )(*operands)

    pre_img, img_lat, pre_txt, txt_lat, probs_wbv, tprobs_wbv = outs
    return (pre_img[:b], img_lat[:b], pre_txt[:b], txt_lat[:b],
            probs_wbv[:, :b, :], tprobs_wbv[:, :b, :])


# ------------------------------------------------------------------
# Parameter initialization (deterministic, synthetic)
# ------------------------------------------------------------------
def init_params(key):
    ks = iter(jax.random.split(key, 32))

    def w(shape, scale=0.05):
        return scale * jax.random.normal(next(ks), shape, jnp.float32)

    hid_cp = GPT_EMBED * PREFIX_LEN // 2
    out_cp = GPT_EMBED * PREFIX_LEN
    return {
        "w_vis": w((IMG_C * IMG_H * IMG_W, LATENT_DIM)), "b_vis": w((LATENT_DIM,)),
        "w_cp1": w((PREFIX_SIZE, hid_cp)), "b_cp1": w((hid_cp,)),
        "w_cp2": w((hid_cp, out_cp)), "b_cp2": w((out_cp,)),
        "w1_s": w((GPT_EMBED, GPT_EMBED)), "b1_s": w((GPT_EMBED,)),
        "wh_s": w((GPT_EMBED, VOCAB)), "bh_s": w((VOCAB,)),
        "w1_p": w((GPT_EMBED, GPT_EMBED)), "b1_p": w((GPT_EMBED,)),
        "wh_p": w((GPT_EMBED, VOCAB)), "bh_p": w((VOCAB,)),
        "wte": w((VOCAB, GPT_EMBED)),
        "w_tr": w((LATENT_DIM, LATENT_DIM)), "b_tr": w((LATENT_DIM,)),
        "w_txt": w((LATENT_DIM, LATENT_DIM)), "b_txt": w((LATENT_DIM,)),
        "bos_embed": w((LATENT_DIM,)), "eos_embed": w((LATENT_DIM,)),
        "w_pi1": w((LATENT_DIM, HIDDEN_DIM)), "w_pi2": w((HIDDEN_DIM, HIDDEN_DIM)),
        "w_pt1": w((LATENT_DIM, HIDDEN_DIM)), "w_pt2": w((HIDDEN_DIM, HIDDEN_DIM)),
    }


# ------------------------------------------------------------------
# Full forward pass (eval-mode semantics: F.softmax sampling, BatchNorm1d eval stats)
# ------------------------------------------------------------------
def simsiam_vlm_forward(params, image, use_proj=True):
    b = image.shape[0]
    x_flat = image.reshape(b, -1)

    (pre_image_latent, image_latent, pre_text_latent, text_latent,
     probs_wbv, tprobs_wbv) = pallas_simsiam_forward(x_flat, params)

    # (W, B, V) -> (B, W, V); negligible at toy size, folded away by XLA.
    probs = jnp.transpose(probs_wbv, (1, 0, 2))
    teacher_probs = jnp.transpose(tprobs_wbv, (1, 0, 2))

    if not use_proj:
        image_latent = jnp.zeros((0,), jnp.float32)
        text_latent = jnp.zeros((0,), jnp.float32)

    return pre_image_latent, image_latent, pre_text_latent, text_latent, probs, teacher_probs


if __name__ == "__main__":
    key = jax.random.PRNGKey(0)
    pkey, xkey = jax.random.split(key)
    params = init_params(pkey)
    image = jax.random.normal(xkey, (BATCH, IMG_C, IMG_H, IMG_W), jnp.float32)  # NCHW like PyTorch

    fwd = jax.jit(simsiam_vlm_forward, static_argnames=("use_proj",))
    outs = fwd(params, image, use_proj=True)
    for o in outs:
        jax.block_until_ready(o)

    pre_img, img_lat, pre_txt, txt_lat, probs, tprobs = outs
    assert pre_img.shape == (BATCH, LATENT_DIM)
    assert img_lat.shape == (BATCH, HIDDEN_DIM)
    assert pre_txt.shape == (BATCH, LATENT_DIM)
    assert txt_lat.shape == (BATCH, HIDDEN_DIM)
    assert probs.shape == (BATCH, WORD_LEN, VOCAB)
    assert tprobs.shape == (BATCH, WORD_LEN, VOCAB)
    assert bool(jnp.all(jnp.isfinite(probs))) and bool(jnp.all(jnp.isfinite(tprobs)))
    # softmax rows now use exact normalization
    assert bool(jnp.all(jnp.abs(jnp.sum(probs, axis=-1) - 1.0) < 1e-4))
    print("KERNEL_OK")
</pallas_src>

<mosaic_0001>
module attributes {stable_mosaic.version = 11 : i64} {
  func.func @_fused_kernel(%arg0: i32, %arg1: memref<8x768xf32, #tpu.memory_space<vmem>>, %arg2: memref<768x128xbf16, #tpu.memory_space<vmem>>, %arg3: memref<1x128xf32, #tpu.memory_space<vmem>>, %arg4: memref<128x256xbf16, #tpu.memory_space<vmem>>, %arg5: memref<1x256xf32, #tpu.memory_space<vmem>>, %arg6: memref<256x512xbf16, #tpu.memory_space<vmem>>, %arg7: memref<1x512xf32, #tpu.memory_space<vmem>>, %arg8: memref<128x256xbf16, #tpu.memory_space<vmem>>, %arg9: memref<1x256xf32, #tpu.memory_space<vmem>>, %arg10: memref<1x256xf32, #tpu.memory_space<vmem>>, %arg11: memref<256x256xbf16, #tpu.memory_space<vmem>>, %arg12: memref<1x256xf32, #tpu.memory_space<vmem>>, %arg13: memref<1x256xf32, #tpu.memory_space<vmem>>, %arg14: memref<128x128xbf16, #tpu.memory_space<vmem>>, %arg15: memref<1x128xf32, #tpu.memory_space<vmem>>, %arg16: memref<128x256xbf16, #tpu.memory_space<vmem>>, %arg17: memref<1x256xf32, #tpu.memory_space<vmem>>, %arg18: memref<128x128xbf16, #tpu.memory_space<vmem>>, %arg19: memref<1x128xf32, #tpu.memory_space<vmem>>, %arg20: memref<128x256xbf16, #tpu.memory_space<vmem>>, %arg21: memref<1x256xf32, #tpu.memory_space<vmem>>, %arg22: memref<256x128xbf16, #tpu.memory_space<vmem>>, %arg23: memref<1x128xf32, #tpu.memory_space<vmem>>, %arg24: memref<1x128xf32, #tpu.memory_space<vmem>>, %arg25: memref<128x128xbf16, #tpu.memory_space<vmem>>, %arg26: memref<1x128xf32, #tpu.memory_space<vmem>>, %arg27: memref<128x128xbf16, #tpu.memory_space<vmem>>, %arg28: memref<1x128xf32, #tpu.memory_space<vmem>>, %arg29: memref<128x256xbf16, #tpu.memory_space<vmem>>, %arg30: memref<256x256xbf16, #tpu.memory_space<vmem>>, %arg31: memref<8x128xf32, #tpu.memory_space<vmem>>, %arg32: memref<8x256xf32, #tpu.memory_space<vmem>>, %arg33: memref<8x128xf32, #tpu.memory_space<vmem>>, %arg34: memref<8x256xf32, #tpu.memory_space<vmem>>, %arg35: memref<6x8x256xf32, #tpu.memory_space<vmem>>, %arg36: memref<6x8x256xf32, #tpu.memory_space<vmem>>) attributes {dimension_semantics = [#tpu.dimension_semantics<arbitrary>], iteration_bounds = array<i64: 1>, scalar_prefetch = 0 : i64, scratch_operands = 0 : i64, tpu.core_type = #tpu.core_type<tc>, window_params = [{pipeline_mode = #tpu.pipeline_mode<synchronous>, transform_indices = @transform_0, window_bounds = array<i64: 8, 768>}, {pipeline_mode = #tpu.pipeline_mode<synchronous>, transform_indices = @transform_1, window_bounds = array<i64: 768, 128>}, {pipeline_mode = #tpu.pipeline_mode<synchronous>, transform_indices = @transform_2, window_bounds = array<i64: 1, 128>}, {pipeline_mode = #tpu.pipeline_mode<synchronous>, transform_indices = @transform_3, window_bounds = array<i64: 128, 256>}, {pipeline_mode = #tpu.pipeline_mode<synchronous>, transform_indices = @transform_4, window_bounds = array<i64: 1, 256>}, {pipeline_mode = #tpu.pipeline_mode<synchronous>, transform_indices = @transform_5, window_bounds = array<i64: 256, 512>}, {pipeline_mode = #tpu.pipeline_mode<synchronous>, transform_indices = @transform_6, window_bounds = array<i64: 1, 512>}, {pipeline_mode = #tpu.pipeline_mode<synchronous>, transform_indices = @transform_7, window_bounds = array<i64: 128, 256>}, {pipeline_mode = #tpu.pipeline_mode<synchronous>, transform_indices = @transform_8, window_bounds = array<i64: 1, 256>}, {pipeline_mode = #tpu.pipeline_mode<synchronous>, transform_indices = @transform_9, window_bounds = array<i64: 1, 256>}, {pipeline_mode = #tpu.pipeline_mode<synchronous>, transform_indices = @transform_10, window_bounds = array<i64: 256, 256>}, {pipeline_mode = #tpu.pipeline_mode<synchronous>, transform_indices = @transform_11, window_bounds = array<i64: 1, 256>}, {pipeline_mode = #tpu.pipeline_mode<synchronous>, transform_indices = @transform_12, window_bounds = array<i64: 1, 256>}, {pipeline_mode = #tpu.pipeline_mode<synchronous>, transform_indices = @transform_13, window_bounds = array<i64: 128, 128>}, {pipeline_mode = #tpu.pipeline_mode<synchronous>, transform_indices = @transform_14, window_bounds = array<i64: 1, 128>}, {pipeline_mode = #tpu.pipeline_mode<synchronous>, transform_indices = @transform_15, window_bounds = array<i64: 128, 256>}, {pipeline_mode = #tpu.pipeline_mode<synchronous>, transform_indices = @transform_16, window_bounds = array<i64: 1, 256>}, {pipeline_mode = #tpu.pipeline_mode<synchronous>, transform_indices = @transform_17, window_bounds = array<i64: 128, 128>}, {pipeline_mode = #tpu.pipeline_mode<synchronous>, transform_indices = @transform_18, window_bounds = array<i64: 1, 128>}, {pipeline_mode = #tpu.pipeline_mode<synchronous>, transform_indices = @transform_19, window_bounds = array<i64: 128, 256>}, {pipeline_mode = #tpu.pipeline_mode<synchronous>, transform_indices = @transform_20, window_bounds = array<i64: 1, 256>}, {pipeline_mode = #tpu.pipeline_mode<synchronous>, transform_indices = @transform_21, window_bounds = array<i64: 256, 128>}, {pipeline_mode = #tpu.pipeline_mode<synchronous>, transform_indices = @transform_22, window_bounds = array<i64: 1, 128>}, {pipeline_mode = #tpu.pipeline_mode<synchronous>, transform_indices = @transform_23, window_bounds = array<i64: 1, 128>}, {pipeline_mode = #tpu.pipeline_mode<synchronous>, transform_indices = @transform_24, window_bounds = array<i64: 128, 128>}, {pipeline_mode = #tpu.pipeline_mode<synchronous>, transform_indices = @transform_25, window_bounds = array<i64: 1, 128>}, {pipeline_mode = #tpu.pipeline_mode<synchronous>, transform_indices = @transform_26, window_bounds = array<i64: 128, 128>}, {pipeline_mode = #tpu.pipeline_mode<synchronous>, transform_indices = @transform_27, window_bounds = array<i64: 1, 128>}, {pipeline_mode = #tpu.pipeline_mode<synchronous>, transform_indices = @transform_28, window_bounds = array<i64: 128, 256>}, {pipeline_mode = #tpu.pipeline_mode<synchronous>, transform_indices = @transform_29, window_bounds = array<i64: 256, 256>}, {pipeline_mode = #tpu.pipeline_mode<synchronous>, transform_indices = @transform_30, window_bounds = array<i64: 8, 128>}, {pipeline_mode = #tpu.pipeline_mode<synchronous>, transform_indices = @transform_31, window_bounds = array<i64: 8, 256>}, {pipeline_mode = #tpu.pipeline_mode<synchronous>, transform_indices = @transform_32, window_bounds = array<i64: 8, 128>}, {pipeline_mode = #tpu.pipeline_mode<synchronous>, transform_indices = @transform_33, window_bounds = array<i64: 8, 256>}, {pipeline_mode = #tpu.pipeline_mode<synchronous>, transform_indices = @transform_34, window_bounds = array<i64: 6, 8, 256>}, {pipeline_mode = #tpu.pipeline_mode<synchronous>, transform_indices = @transform_35, window_bounds = array<i64: 6, 8, 256>}]} {
    %c0 = arith.constant 0 : index
    %c0_0 = arith.constant 0 : index
    %0 = vector.load %arg1[%c0, %c0_0] : memref<8x768xf32, #tpu.memory_space<vmem>>, vector<8x768xf32>
    %1 = arith.truncf %0 : vector<8x768xf32> to vector<8x768xbf16>
    %c0_1 = arith.constant 0 : index
    %c0_2 = arith.constant 0 : index
    %2 = vector.load %arg2[%c0_1, %c0_2] : memref<768x128xbf16, #tpu.memory_space<vmem>>, vector<768x128xbf16>
    %cst = arith.constant dense<0.000000e+00> : vector<8x128xf32>
    %3 = tpu.matmul %1, %2, %cst {dimension_numbers = #tpu.dot_dimension_numbers<[1], [0], [0], [1], [0, 0, 1, 1], [], []>} : vector<8x768xbf16>, vector<768x128xbf16>, vector<8x128xf32> -> vector<8x128xf32>
    %c0_3 = arith.constant 0 : index
    %c0_4 = arith.constant 0 : index
    %4 = vector.load %arg3[%c0_3, %c0_4] : memref<1x128xf32, #tpu.memory_space<vmem>>, vector<1x128xf32>
    %5 = vector.broadcast %4 : vector<1x128xf32> to vector<8x128xf32>
    %6 = arith.addf %3, %5 : vector<8x128xf32>
    %c0_5 = arith.constant 0 : index
    %c0_6 = arith.constant 0 : index
    %7 = vector.load %arg31[%c0_5, %c0_6] : memref<8x128xf32, #tpu.memory_space<vmem>>, vector<8x128xf32>
    tpu.vector_store %arg31[%c0_5, %c0_6], %6 {strides = array<i32>} : memref<8x128xf32, #tpu.memory_space<vmem>>, vector<8x128xf32>,
    %8 = arith.truncf %6 : vector<8x128xf32> to vector<8x128xbf16>
    %c0_7 = arith.constant 0 : index
    %c0_8 = arith.constant 0 : index
    %9 = vector.load %arg4[%c0_7, %c0_8] : memref<128x256xbf16, #tpu.memory_space<vmem>>, vector<128x256xbf16>
    %cst_9 = arith.constant dense<0.000000e+00> : vector<8x256xf32>
    %10 = tpu.matmul %8, %9, %cst_9 {dimension_numbers = #tpu.dot_dimension_numbers<[1], [0], [0], [1], [0, 0, 1, 1], [], []>} : vector<8x128xbf16>, vector<128x256xbf16>, vector<8x256xf32> -> vector<8x256xf32>
    %c0_10 = arith.constant 0 : index
    %c0_11 = arith.constant 0 : index
    %11 = vector.load %arg5[%c0_10, %c0_11] : memref<1x256xf32, #tpu.memory_space<vmem>>, vector<1x256xf32>
    %12 = vector.broadcast %11 : vector<1x256xf32> to vector<8x256xf32>
    %13 = arith.addf %10, %12 : vector<8x256xf32>
    %14 = math.tanh %13 : vector<8x256xf32>
    %15 = arith.truncf %14 : vector<8x256xf32> to vector<8x256xbf16>
    %c0_12 = arith.constant 0 : index
    %c0_13 = arith.constant 0 : index
    %16 = vector.load %arg6[%c0_12, %c0_13] : memref<256x512xbf16, #tpu.memory_space<vmem>>, vector<256x512xbf16>
    %cst_14 = arith.constant dense<0.000000e+00> : vector<8x512xf32>
    %17 = tpu.matmul %15, %16, %cst_14 {dimension_numbers = #tpu.dot_dimension_numbers<[1], [0], [0], [1], [0, 0, 1, 1], [], []>} : vector<8x256xbf16>, vector<256x512xbf16>, vector<8x512xf32> -> vector<8x512xf32>
    %c0_15 = arith.constant 0 : index
    %c0_16 = arith.constant 0 : index
    %18 = vector.load %arg7[%c0_15, %c0_16] : memref<1x512xf32, #tpu.memory_space<vmem>>, vector<1x512xf32>
    %19 = vector.broadcast %18 : vector<1x512xf32> to vector<8x512xf32>
    %20 = arith.addf %17, %19 : vector<8x512xf32>
    %21 = arith.truncf %6 : vector<8x128xf32> to vector<8x128xbf16>
    %c0_17 = arith.constant 0 : index
    %c0_18 = arith.constant 0 : index
    %22 = vector.load %arg8[%c0_17, %c0_18] : memref<128x256xbf16, #tpu.memory_space<vmem>>, vector<128x256xbf16>
    %cst_19 = arith.constant dense<0.000000e+00> : vector<8x256xf32>
    %23 = tpu.matmul %21, %22, %cst_19 {dimension_numbers = #tpu.dot_dimension_numbers<[1], [0], [0], [1], [0, 0, 1, 1], [], []>} : vector<8x128xbf16>, vector<128x256xbf16>, vector<8x256xf32> -> vector<8x256xf32>
    %c0_20 = arith.constant 0 : index
    %c0_21 = arith.constant 0 : index
    %24 = vector.load %arg9[%c0_20, %c0_21] : memref<1x256xf32, #tpu.memory_space<vmem>>, vector<1x256xf32>
    %25 = vector.broadcast %24 : vector<1x256xf32> to vector<8x256xf32>
    %26 = arith.mulf %23, %25 : vector<8x256xf32>
    %c0_22 = arith.constant 0 : index
    %c0_23 = arith.constant 0 : index
    %27 = vector.load %arg10[%c0_22, %c0_23] : memref<1x256xf32, #tpu.memory_space<vmem>>, vector<1x256xf32>
    %28 = vector.broadcast %27 : vector<1x256xf32> to vector<8x256xf32>
    %29 = arith.addf %26, %28 : vector<8x256xf32>
    %cst_24 = arith.constant 0.000000e+00 : f32
    %30 = vector.broadcast %cst_24 : f32 to vector<8x256xf32>
    %31 = arith.maximumf %29, %30 : vector<8x256xf32>
    %32 = arith.truncf %31 : vector<8x256xf32> to vector<8x256xbf16>
    %c0_25 = arith.constant 0 : index
    %c0_26 = arith.constant 0 : index
    %33 = vector.load %arg11[%c0_25, %c0_26] : memref<256x256xbf16, #tpu.memory_space<vmem>>, vector<256x256xbf16>
    %cst_27 = arith.constant dense<0.000000e+00> : vector<8x256xf32>
    %34 = tpu.matmul %32, %33, %cst_27 {dimension_numbers = #tpu.dot_dimension_numbers<[1], [0], [0], [1], [0, 0, 1, 1], [], []>} : vector<8x256xbf16>, vector<256x256xbf16>, vector<8x256xf32> -> vector<8x256xf32>
    %c0_28 = arith.constant 0 : index
    %c0_29 = arith.constant 0 : index
    %35 = vector.load %arg12[%c0_28, %c0_29] : memref<1x256xf32, #tpu.memory_space<vmem>>, vector<1x256xf32>
    %36 = vector.broadcast %35 : vector<1x256xf32> to vector<8x256xf32>
    %37 = arith.mulf %34, %36 : vector<8x256xf32>
    %c0_30 = arith.constant 0 : index
    %c0_31 = arith.constant 0 : index
    %38 = vector.load %arg13[%c0_30, %c0_31] : memref<1x256xf32, #tpu.memory_space<vmem>>, vector<1x256xf32>
    %39 = vector.broadcast %38 : vector<1x256xf32> to vector<8x256xf32>
    %40 = arith.addf %37, %39 : vector<8x256xf32>
    %c0_32 = arith.constant 0 : index
    %c0_33 = arith.constant 0 : index
    %41 = vector.load %arg32[%c0_32, %c0_33] : memref<8x256xf32, #tpu.memory_space<vmem>>, vector<8x256xf32>
    tpu.vector_store %arg32[%c0_32, %c0_33], %40 {strides = array<i32>} : memref<8x256xf32, #tpu.memory_space<vmem>>, vector<8x256xf32>,
    %cst_34 = arith.constant 0.000000e+00 : f32
    %42 = vector.broadcast %cst_34 : f32 to vector<8x128xf32>
    %43 = vector.extract_strided_slice %20 {offsets = [0, 0], sizes = [8, 128], strides = [1, 1]} : vector<8x512xf32> to vector<8x128xf32>
    %44 = arith.addf %42, %43 : vector<8x128xf32>
    %45 = vector.extract_strided_slice %20 {offsets = [0, 128], sizes = [8, 128], strides = [1, 1]} : vector<8x512xf32> to vector<8x128xf32>
    %46 = arith.addf %44, %45 : vector<8x128xf32>
    %47 = vector.extract_strided_slice %20 {offsets = [0, 256], sizes = [8, 128], strides = [1, 1]} : vector<8x512xf32> to vector<8x128xf32>
    %48 = arith.addf %46, %47 : vector<8x128xf32>
    %49 = vector.extract_strided_slice %20 {offsets = [0, 384], sizes = [8, 128], strides = [1, 1]} : vector<8x512xf32> to vector<8x128xf32>
    %50 = arith.addf %48, %49 : vector<8x128xf32>
    %c0_35 = arith.constant 0 : index
    %c0_36 = arith.constant 0 : index
    %51 = vector.load %arg23[%c0_35, %c0_36] : memref<1x128xf32, #tpu.memory_space<vmem>>, vector<1x128xf32>
    %c0_37 = arith.constant 0 : index
    %c0_38 = arith.constant 0 : index
    %52 = vector.load %arg24[%c0_37, %c0_38] : memref<1x128xf32, #tpu.memory_space<vmem>>, vector<1x128xf32>
    %53 = tpu.iota {dimensions = array<i32: 1>} : vector<8x256xi32>
    %54 = tpu.iota {dimensions = array<i32: 0>} : vector<8x1xi32>
    %c4_i32 = arith.constant 4 : i32
    %55 = vector.broadcast %c4_i32 : i32 to vector<8x1xi32>
    %56 = arith.cmpi slt, %54, %55 : vector<8x1xi32>
    %57 = arith.extui %56 : vector<8x1xi1> to vector<8x1xi32>
    %58 = arith.sitofp %57 : vector<8x1xi32> to vector<8x1xf32>
    %cst_39 = arith.constant 0.000000e+00 : f32
    %59 = vector.broadcast %cst_39 : f32 to vector<8x128xf32>
    %cst_40 = arith.constant 0.000000e+00 : f32
    %60 = vector.broadcast %cst_40 : f32 to vector<1x256xf32>
    %cst_41 = arith.constant 0.000000e+00 : f32
    %61 = vector.broadcast %cst_41 : f32 to vector<8x128xf32>
    %c0_i32 = arith.constant 0 : i32
    %c4_i32_42 = arith.constant 4 : i32
    %62 = arith.addi %c4_i32_42, %c0_i32 : i32
    %63 = arith.sitofp %62 : i32 to f32
    %cst_43 = arith.constant 1.000000e+00 : f32
    %64 = arith.divf %cst_43, %63 : f32
    %65 = vector.broadcast %64 : f32 to vector<8x128xf32>
    %66 = arith.mulf %50, %65 : vector<8x128xf32>
    %c1_i32 = arith.constant 1 : i32
    %67 = arith.maxsi %c0_i32, %c1_i32 : i32
    %68 = arith.sitofp %67 : i32 to f32
    %cst_44 = arith.constant 1.000000e+00 : f32
    %69 = arith.divf %cst_44, %68 : f32
    %70 = vector.broadcast %69 : f32 to vector<8x128xf32>
    %71 = arith.mulf %59, %70 : vector<8x128xf32>
    %72 = arith.truncf %66 : vector<8x128xf32> to vector<8x128xbf16>
    %c0_45 = arith.constant 0 : index
    %c0_46 = arith.constant 0 : index
    %73 = vector.load %arg14[%c0_45, %c0_46] : memref<128x128xbf16, #tpu.memory_space<vmem>>, vector<128x128xbf16>
    %cst_47 = arith.constant dense<0.000000e+00> : vector<8x128xf32>
    %74 = tpu.matmul %72, %73, %cst_47 {dimension_numbers = #tpu.dot_dimension_numbers<[1], [0], [0], [1], [0, 0, 1, 1], [], []>} : vector<8x128xbf16>, vector<128x128xbf16>, vector<8x128xf32> -> vector<8x128xf32>
    %c0_48 = arith.constant 0 : index
    %c0_49 = arith.constant 0 : index
    %75 = vector.load %arg15[%c0_48, %c0_49] : memref<1x128xf32, #tpu.memory_space<vmem>>, vector<1x128xf32>
    %76 = vector.broadcast %75 : vector<1x128xf32> to vector<8x128xf32>
    %77 = arith.addf %74, %76 : vector<8x128xf32>
    %78 = math.tanh %77 : vector<8x128xf32>
    %79 = arith.truncf %78 : vector<8x128xf32> to vector<8x128xbf16>
    %c0_50 = arith.constant 0 : index
    %c0_51 = arith.constant 0 : index
    %80 = vector.load %arg16[%c0_50, %c0_51] : memref<128x256xbf16, #tpu.memory_space<vmem>>, vector<128x256xbf16>
    %cst_52 = arith.constant dense<0.000000e+00> : vector<8x256xf32>
    %81 = tpu.matmul %79, %80, %cst_52 {dimension_numbers = #tpu.dot_dimension_numbers<[1], [0], [0], [1], [0, 0, 1, 1], [], []>} : vector<8x128xbf16>, vector<128x256xbf16>, vector<8x256xf32> -> vector<8x256xf32>
    %c0_53 = arith.constant 0 : index
    %c0_54 = arith.constant 0 : index
    %82 = vector.load %arg17[%c0_53, %c0_54] : memref<1x256xf32, #tpu.memory_space<vmem>>, vector<1x256xf32>
    %83 = vector.broadcast %82 : vector<1x256xf32> to vector<8x256xf32>
    %84 = arith.addf %81, %83 : vector<8x256xf32>
    %85 = arith.truncf %71 : vector<8x128xf32> to vector<8x128xbf16>
    %c0_55 = arith.constant 0 : index
    %c0_56 = arith.constant 0 : index
    %86 = vector.load %arg18[%c0_55, %c0_56] : memref<128x128xbf16, #tpu.memory_space<vmem>>, vector<128x128xbf16>
    %cst_57 = arith.constant dense<0.000000e+00> : vector<8x128xf32>
    %87 = tpu.matmul %85, %86, %cst_57 {dimension_numbers = #tpu.dot_dimension_numbers<[1], [0], [0], [1], [0, 0, 1, 1], [], []>} : vector<8x128xbf16>, vector<128x128xbf16>, vector<8x128xf32> -> vector<8x128xf32>
    %c0_58 = arith.constant 0 : index
    %c0_59 = arith.constant 0 : index
    %88 = vector.load %arg19[%c0_58, %c0_59] : memref<1x128xf32, #tpu.memory_space<vmem>>, vector<1x128xf32>
    %89 = vector.broadcast %88 : vector<1x128xf32> to vector<8x128xf32>
    %90 = arith.addf %87, %89 : vector<8x128xf32>
    %91 = math.tanh %90 : vector<8x128xf32>
    %92 = arith.truncf %91 : vector<8x128xf32> to vector<8x128xbf16>
    %c0_60 = arith.constant 0 : index
    %c0_61 = arith.constant 0 : index
    %93 = vector.load %arg20[%c0_60, %c0_61] : memref<128x256xbf16, #tpu.memory_space<vmem>>, vector<128x256xbf16>
    %cst_62 = arith.constant dense<0.000000e+00> : vector<8x256xf32>
    %94 = tpu.matmul %92, %93, %cst_62 {dimension_numbers = #tpu.dot_dimension_numbers<[1], [0], [0], [1], [0, 0, 1, 1], [], []>} : vector<8x128xbf16>, vector<128x256xbf16>, vector<8x256xf32> -> vector<8x256xf32>
    %c0_63 = arith.constant 0 : index
    %c0_64 = arith.constant 0 : index
    %95 = vector.load %arg21[%c0_63, %c0_64] : memref<1x256xf32, #tpu.memory_space<vmem>>, vector<1x256xf32>
    %96 = vector.broadcast %95 : vector<1x256xf32> to vector<8x256xf32>
    %97 = arith.addf %94, %96 : vector<8x256xf32>
    %c0_i32_65 = arith.constant 0 : i32
    %98 = arith.cmpi eq, %c0_i32, %c0_i32_65 : i32
    %99 = arith.select %98, %84, %97 : vector<8x256xf32>
    %cst_66 = arith.constant dense<0xFF800000> : vector<8xf32>
    %100 = vector.multi_reduction <maximumf>, %84, %cst_66 [1] : vector<8x256xf32> to vector<8xf32>
    %101 = vector.shape_cast %100 : vector<8xf32> to vector<8x1xf32>
    %102 = vector.broadcast %101 : vector<8x1xf32> to vector<8x256xf32>
    %103 = arith.subf %84, %102 : vector<8x256xf32>
    %cst_67 = arith.constant dense<0xFF800000> : vector<8xf32>
    %104 = vector.multi_reduction <maximumf>, %99, %cst_67 [1] : vector<8x256xf32> to vector<8xf32>
    %105 = vector.shape_cast %104 : vector<8xf32> to vector<8x1xf32>
    %106 = vector.broadcast %105 : vector<8x1xf32> to vector<8x256xf32>
    %107 = arith.subf %99, %106 : vector<8x256xf32>
    %cst_68 = arith.constant dense<0x7F800000> : vector<8xf32>
    %108 = vector.multi_reduction <minimumf>, %107, %cst_68 [1] : vector<8x256xf32> to vector<8xf32>
    %109 = vector.shape_cast %108 : vector<8xf32> to vector<8x1xf32>
    %cst_69 = arith.constant 0.000000e+00 : f32
    %110 = vector.broadcast %cst_69 : f32 to vector<1x256xf32>
    %111 = arith.cmpf ogt, %60, %110 : vector<1x256xf32>
    %112 = vector.shape_cast %111 : vector<1x256xi1> to vector<1x256xi1>
    %113 = vector.broadcast %112 : vector<1x256xi1> to vector<8x256xi1>
    %114 = vector.shape_cast %109 : vector<8x1xf32> to vector<8x1xf32>
    %115 = vector.broadcast %114 : vector<8x1xf32> to vector<8x256xf32>
    %116 = arith.select %113, %115, %107 : vector<8x256xi1>, vector<8x256xf32>
    %117 = math.exp %103 : vector<8x256xf32>
    %cst_70 = arith.constant dense<0.000000e+00> : vector<8xf32>
    %118 = vector.multi_reduction <add>, %117, %cst_70 [1] : vector<8x256xf32> to vector<8xf32>
    %119 = vector.shape_cast %118 : vector<8xf32> to vector<8x1xf32>
    %120 = vector.broadcast %119 : vector<8x1xf32> to vector<8x256xf32>
    %121 = arith.divf %117, %120 : vector<8x256xf32>
    %122 = math.exp %116 : vector<8x256xf32>
    %cst_71 = arith.constant dense<0.000000e+00> : vector<8xf32>
    %123 = vector.multi_reduction <add>, %122, %cst_71 [1] : vector<8x256xf32> to vector<8xf32>
    %124 = vector.shape_cast %123 : vector<8xf32> to vector<8x1xf32>
    %125 = math.log %124 : vector<8x1xf32>
    %126 = vector.broadcast %125 : vector<8x1xf32> to vector<8x256xf32>
    %127 = arith.subf %116, %126 : vector<8x256xf32>
    %cst_72 = arith.constant dense<0xFF800000> : vector<8xf32>
    %128 = vector.multi_reduction <maximumf>, %121, %cst_72 [1] : vector<8x256xf32> to vector<8xf32>
    %129 = vector.shape_cast %128 : vector<8xf32> to vector<8x1xf32>
    %130 = vector.broadcast %129 : vector<8x1xf32> to vector<8x256xf32>
    %131 = arith.cmpf oeq, %121, %130 : vector<8x256xf32>
    %c256_i32 = arith.constant 256 : i32
    %132 = vector.broadcast %c256_i32 : i32 to vector<8x256xi32>
    %133 = arith.select %131, %53, %132 : vector<8x256xi1>, vector<8x256xi32>
    %cst_73 = arith.constant dense<2147483647> : vector<8xi32>
    %134 = vector.multi_reduction <minsi>, %133, %cst_73 [1] : vector<8x256xi32> to vector<8xi32>
    %135 = vector.shape_cast %134 : vector<8xi32> to vector<8x1xi32>
    %136 = vector.broadcast %135 : vector<8x1xi32> to vector<8x256xi32>
    %137 = arith.cmpi eq, %53, %136 : vector<8x256xi32>
    %138 = arith.extui %137 : vector<8x256xi1> to vector<8x256xi32>
    %139 = arith.sitofp %138 : vector<8x256xi32> to vector<8x256xf32>
    %140 = arith.truncf %139 : vector<8x256xf32> to vector<8x256xbf16>
    %c0_74 = arith.constant 0 : index
    %c0_75 = arith.constant 0 : index
    %141 = vector.load %arg22[%c0_74, %c0_75] : memref<256x128xbf16, #tpu.memory_space<vmem>>, vector<256x128xbf16>
    %cst_76 = arith.constant dense<0.000000e+00> : vector<8x128xf32>
    %142 = tpu.matmul %140, %141, %cst_76 {dimension_numbers = #tpu.dot_dimension_numbers<[1], [0], [0], [1], [0, 0, 1, 1], [], []>} : vector<8x256xbf16>, vector<256x128xbf16>, vector<8x128xf32> -> vector<8x128xf32>
    %143 = arith.index_cast %c0_i32 : i32 to index
    %c0_77 = arith.constant 0 : index
    %c0_78 = arith.constant 0 : index
    %144 = vector.load %arg35[%143, %c0_77, %c0_78] : memref<6x8x256xf32, #tpu.memory_space<vmem>>, vector<1x8x256xf32>
    %145 = vector.shape_cast %144 : vector<1x8x256xf32> to vector<8x256xf32>
    %146 = vector.shape_cast %121 : vector<8x256xf32> to vector<1x8x256xf32>
    tpu.vector_store %arg35[%143, %c0_77, %c0_78], %146 {strides = array<i32>} : memref<6x8x256xf32, #tpu.memory_space<vmem>>, vector<1x8x256xf32>,
    %147 = arith.index_cast %c0_i32 : i32 to index
    %c0_79 = arith.constant 0 : index
    %c0_80 = arith.constant 0 : index
    %148 = vector.load %arg36[%147, %c0_79, %c0_80] : memref<6x8x256xf32, #tpu.memory_space<vmem>>, vector<1x8x256xf32>
    %149 = vector.shape_cast %148 : vector<1x8x256xf32> to vector<8x256xf32>
    %150 = vector.shape_cast %127 : vector<8x256xf32> to vector<1x8x256xf32>
    tpu.vector_store %arg36[%147, %c0_79, %c0_80], %150 {strides = array<i32>} : memref<6x8x256xf32, #tpu.memory_space<vmem>>, vector<1x8x256xf32>,
    %c220_i32 = arith.constant 220 : i32
    %151 = vector.broadcast %c220_i32 : i32 to vector<8x1xi32>
    %152 = arith.cmpi eq, %135, %151 : vector<8x1xi32>
    %153 = vector.shape_cast %152 : vector<8x1xi1> to vector<8x1xi1>
    %154 = vector.broadcast %153 : vector<8x1xi1> to vector<8x128xi1>
    %155 = vector.shape_cast %52 : vector<1x128xf32> to vector<1x128xf32>
    %156 = vector.broadcast %155 : vector<1x128xf32> to vector<8x128xf32>
    %157 = arith.select %154, %156, %142 : vector<8x128xi1>, vector<8x128xf32>
    %158 = arith.addf %50, %142 : vector<8x128xf32>
    %159 = arith.addf %59, %142 : vector<8x128xf32>
    %160 = vector.broadcast %58 : vector<8x1xf32> to vector<8x256xf32>
    %161 = arith.mulf %139, %160 : vector<8x256xf32>
    %cst_81 = arith.constant dense<0xFF800000> : vector<256xf32>
    %162 = vector.multi_reduction <maximumf>, %161, %cst_81 [0] : vector<8x256xf32> to vector<256xf32>
    %163 = vector.shape_cast %162 : vector<256xf32> to vector<1x256xf32>
    %164 = arith.maximumf %60, %163 : vector<1x256xf32>
    %165 = arith.addf %61, %157 : vector<8x128xf32>
    %c1_i32_82 = arith.constant 1 : i32
    %c4_i32_83 = arith.constant 4 : i32
    %166 = arith.addi %c4_i32_83, %c1_i32_82 : i32
    %167 = arith.sitofp %166 : i32 to f32
    %cst_84 = arith.constant 1.000000e+00 : f32
    %168 = arith.divf %cst_84, %167 : f32
    %169 = vector.broadcast %168 : f32 to vector<8x128xf32>
    %170 = arith.mulf %158, %169 : vector<8x128xf32>
    %c1_i32_85 = arith.constant 1 : i32
    %171 = arith.maxsi %c1_i32_82, %c1_i32_85 : i32
    %172 = arith.sitofp %171 : i32 to f32
    %cst_86 = arith.constant 1.000000e+00 : f32
    %173 = arith.divf %cst_86, %172 : f32
    %174 = vector.broadcast %173 : f32 to vector<8x128xf32>
    %175 = arith.mulf %159, %174 : vector<8x128xf32>
    %176 = arith.truncf %170 : vector<8x128xf32> to vector<8x128xbf16>
    %c0_87 = arith.constant 0 : index
    %c0_88 = arith.constant 0 : index
    %177 = vector.load %arg14[%c0_87, %c0_88] : memref<128x128xbf16, #tpu.memory_space<vmem>>, vector<128x128xbf16>
    %cst_89 = arith.constant dense<0.000000e+00> : vector<8x128xf32>
    %178 = tpu.matmul %176, %177, %cst_89 {dimension_numbers = #tpu.dot_dimension_numbers<[1], [0], [0], [1], [0, 0, 1, 1], [], []>} : vector<8x128xbf16>, vector<128x128xbf16>, vector<8x128xf32> -> vector<8x128xf32>
    %c0_90 = arith.constant 0 : index
    %c0_91 = arith.constant 0 : index
    %179 = vector.load %arg15[%c0_90, %c0_91] : memref<1x128xf32, #tpu.memory_space<vmem>>, vector<1x128xf32>
    %180 = vector.broadcast %179 : vector<1x128xf32> to vector<8x128xf32>
    %181 = arith.addf %178, %180 : vector<8x128xf32>
    %182 = math.tanh %181 : vector<8x128xf32>
    %183 = arith.truncf %182 : vector<8x128xf32> to vector<8x128xbf16>
    %c0_92 = arith.constant 0 : index
    %c0_93 = arith.constant 0 : index
    %184 = vector.load %arg16[%c0_92, %c0_93] : memref<128x256xbf16, #tpu.memory_space<vmem>>, vector<128x256xbf16>
    %cst_94 = arith.constant dense<0.000000e+00> : vector<8x256xf32>
    %185 = tpu.matmul %183, %184, %cst_94 {dimension_numbers = #tpu.dot_dimension_numbers<[1], [0], [0], [1], [0, 0, 1, 1], [], []>} : vector<8x128xbf16>, vector<128x256xbf16>, vector<8x256xf32> -> vector<8x256xf32>
    %c0_95 = arith.constant 0 : index
    %c0_96 = arith.constant 0 : index
    %186 = vector.load %arg17[%c0_95, %c0_96] : memref<1x256xf32, #tpu.memory_space<vmem>>, vector<1x256xf32>
    %187 = vector.broadcast %186 : vector<1x256xf32> to vector<8x256xf32>
    %188 = arith.addf %185, %187 : vector<8x256xf32>
    %189 = arith.truncf %175 : vector<8x128xf32> to vector<8x128xbf16>
    %c0_97 = arith.constant 0 : index
    %c0_98 = arith.constant 0 : index
    %190 = vector.load %arg18[%c0_97, %c0_98] : memref<128x128xbf16, #tpu.memory_space<vmem>>, vector<128x128xbf16>
    %cst_99 = arith.constant dense<0.000000e+00> : vector<8x128xf32>
    %191 = tpu.matmul %189, %190, %cst_99 {dimension_numbers = #tpu.dot_dimension_numbers<[1], [0], [0], [1], [0, 0, 1, 1], [], []>} : vector<8x128xbf16>, vector<128x128xbf16>, vector<8x128xf32> -> vector<8x128xf32>
    %c0_100 = arith.constant 0 : index
    %c0_101 = arith.constant 0 : index
    %192 = vector.load %arg19[%c0_100, %c0_101] : memref<1x128xf32, #tpu.memory_space<vmem>>, vector<1x128xf32>
    %193 = vector.broadcast %192 : vector<1x128xf32> to vector<8x128xf32>
    %194 = arith.addf %191, %193 : vector<8x128xf32>
    %195 = math.tanh %194 : vector<8x128xf32>
    %196 = arith.truncf %195 : vector<8x128xf32> to vector<8x128xbf16>
    %c0_102 = arith.constant 0 : index
    %c0_103 = arith.constant 0 : index
    %197 = vector.load %arg20[%c0_102, %c0_103] : memref<128x256xbf16, #tpu.memory_space<vmem>>, vector<128x256xbf16>
    %cst_104 = arith.constant dense<0.000000e+00> : vector<8x256xf32>
    %198 = tpu.matmul %196, %197, %cst_104 {dimension_numbers = #tpu.dot_dimension_numbers<[1], [0], [0], [1], [0, 0, 1, 1], [], []>} : vector<8x128xbf16>, vector<128x256xbf16>, vector<8x256xf32> -> vector<8x256xf32>
    %c0_105 = arith.constant 0 : index
    %c0_106 = arith.constant 0 : index
    %199 = vector.load %arg21[%c0_105, %c0_106] : memref<1x256xf32, #tpu.memory_space<vmem>>, vector<1x256xf32>
    %200 = vector.broadcast %199 : vector<1x256xf32> to vector<8x256xf32>
    %201 = arith.addf %198, %200 : vector<8x256xf32>
    %c0_i32_107 = arith.constant 0 : i32
    %202 = arith.cmpi eq, %c1_i32_82, %c0_i32_107 : i32
    %203 = arith.select %202, %188, %201 : vector<8x256xf32>
    %cst_108 = arith.constant dense<0xFF800000> : vector<8xf32>
    %204 = vector.multi_reduction <maximumf>, %188, %cst_108 [1] : vector<8x256xf32> to vector<8xf32>
    %205 = vector.shape_cast %204 : vector<8xf32> to vector<8x1xf32>
    %206 = vector.broadcast %205 : vector<8x1xf32> to vector<8x256xf32>
    %207 = arith.subf %188, %206 : vector<8x256xf32>
    %cst_109 = arith.constant dense<0xFF800000> : vector<8xf32>
    %208 = vector.multi_reduction <maximumf>, %203, %cst_109 [1] : vector<8x256xf32> to vector<8xf32>
    %209 = vector.shape_cast %208 : vector<8xf32> to vector<8x1xf32>
    %210 = vector.broadcast %209 : vector<8x1xf32> to vector<8x256xf32>
    %211 = arith.subf %203, %210 : vector<8x256xf32>
    %cst_110 = arith.constant dense<0x7F800000> : vector<8xf32>
    %212 = vector.multi_reduction <minimumf>, %211, %cst_110 [1] : vector<8x256xf32> to vector<8xf32>
    %213 = vector.shape_cast %212 : vector<8xf32> to vector<8x1xf32>
    %cst_111 = arith.constant 0.000000e+00 : f32
    %214 = vector.broadcast %cst_111 : f32 to vector<1x256xf32>
    %215 = arith.cmpf ogt, %164, %214 : vector<1x256xf32>
    %216 = vector.shape_cast %215 : vector<1x256xi1> to vector<1x256xi1>
    %217 = vector.broadcast %216 : vector<1x256xi1> to vector<8x256xi1>
    %218 = vector.shape_cast %213 : vector<8x1xf32> to vector<8x1xf32>
    %219 = vector.broadcast %218 : vector<8x1xf32> to vector<8x256xf32>
    %220 = arith.select %217, %219, %211 : vector<8x256xi1>, vector<8x256xf32>
    %221 = math.exp %207 : vector<8x256xf32>
    %cst_112 = arith.constant dense<0.000000e+00> : vector<8xf32>
    %222 = vector.multi_reduction <add>, %221, %cst_112 [1] : vector<8x256xf32> to vector<8xf32>
    %223 = vector.shape_cast %222 : vector<8xf32> to vector<8x1xf32>
    %224 = vector.broadcast %223 : vector<8x1xf32> to vector<8x256xf32>
    %225 = arith.divf %221, %224 : vector<8x256xf32>
    %226 = math.exp %220 : vector<8x256xf32>
    %cst_113 = arith.constant dense<0.000000e+00> : vector<8xf32>
    %227 = vector.multi_reduction <add>, %226, %cst_113 [1] : vector<8x256xf32> to vector<8xf32>
    %228 = vector.shape_cast %227 : vector<8xf32> to vector<8x1xf32>
    %229 = math.log %228 : vector<8x1xf32>
    %230 = vector.broadcast %229 : vector<8x1xf32> to vector<8x256xf32>
    %231 = arith.subf %220, %230 : vector<8x256xf32>
    %cst_114 = arith.constant dense<0xFF800000> : vector<8xf32>
    %232 = vector.multi_reduction <maximumf>, %225, %cst_114 [1] : vector<8x256xf32> to vector<8xf32>
    %233 = vector.shape_cast %232 : vector<8xf32> to vector<8x1xf32>
    %234 = vector.broadcast %233 : vector<8x1xf32> to vector<8x256xf32>
    %235 = arith.cmpf oeq, %225, %234 : vector<8x256xf32>
    %c256_i32_115 = arith.constant 256 : i32
    %236 = vector.broadcast %c256_i32_115 : i32 to vector<8x256xi32>
    %237 = arith.select %235, %53, %236 : vector<8x256xi1>, vector<8x256xi32>
    %cst_116 = arith.constant dense<2147483647> : vector<8xi32>
    %238 = vector.multi_reduction <minsi>, %237, %cst_116 [1] : vector<8x256xi32> to vector<8xi32>
    %239 = vector.shape_cast %238 : vector<8xi32> to vector<8x1xi32>
    %240 = vector.broadcast %239 : vector<8x1xi32> to vector<8x256xi32>
    %241 = arith.cmpi eq, %53, %240 : vector<8x256xi32>
    %242 = arith.extui %241 : vector<8x256xi1> to vector<8x256xi32>
    %243 = arith.sitofp %242 : vector<8x256xi32> to vector<8x256xf32>
    %244 = arith.truncf %243 : vector<8x256xf32> to vector<8x256xbf16>
    %c0_117 = arith.constant 0 : index
    %c0_118 = arith.constant 0 : index
    %245 = vector.load %arg22[%c0_117, %c0_118] : memref<256x128xbf16, #tpu.memory_space<vmem>>, vector<256x128xbf16>
    %cst_119 = arith.constant dense<0.000000e+00> : vector<8x128xf32>
    %246 = tpu.matmul %244, %245, %cst_119 {dimension_numbers = #tpu.dot_dimension_numbers<[1], [0], [0], [1], [0, 0, 1, 1], [], []>} : vector<8x256xbf16>, vector<256x128xbf16>, vector<8x128xf32> -> vector<8x128xf32>
    %247 = arith.index_cast %c1_i32_82 : i32 to index
    %c0_120 = arith.constant 0 : index
    %c0_121 = arith.constant 0 : index
    %248 = vector.load %arg35[%247, %c0_120, %c0_121] : memref<6x8x256xf32, #tpu.memory_space<vmem>>, vector<1x8x256xf32>
    %249 = vector.shape_cast %248 : vector<1x8x256xf32> to vector<8x256xf32>
    %250 = vector.shape_cast %225 : vector<8x256xf32> to vector<1x8x256xf32>
    tpu.vector_store %arg35[%247, %c0_120, %c0_121], %250 {strides = array<i32>} : memref<6x8x256xf32, #tpu.memory_space<vmem>>, vector<1x8x256xf32>,
    %251 = arith.index_cast %c1_i32_82 : i32 to index
    %c0_122 = arith.constant 0 : index
    %c0_123 = arith.constant 0 : index
    %252 = vector.load %arg36[%251, %c0_122, %c0_123] : memref<6x8x256xf32, #tpu.memory_space<vmem>>, vector<1x8x256xf32>
    %253 = vector.shape_cast %252 : vector<1x8x256xf32> to vector<8x256xf32>
    %254 = vector.shape_cast %231 : vector<8x256xf32> to vector<1x8x256xf32>
    tpu.vector_store %arg36[%251, %c0_122, %c0_123], %254 {strides = array<i32>} : memref<6x8x256xf32, #tpu.memory_space<vmem>>, vector<1x8x256xf32>,
    %c220_i32_124 = arith.constant 220 : i32
    %255 = vector.broadcast %c220_i32_124 : i32 to vector<8x1xi32>
    %256 = arith.cmpi eq, %239, %255 : vector<8x1xi32>
    %257 = vector.shape_cast %256 : vector<8x1xi1> to vector<8x1xi1>
    %258 = vector.broadcast %257 : vector<8x1xi1> to vector<8x128xi1>
    %259 = vector.shape_cast %52 : vector<1x128xf32> to vector<1x128xf32>
    %260 = vector.broadcast %259 : vector<1x128xf32> to vector<8x128xf32>
    %261 = arith.select %258, %260, %246 : vector<8x128xi1>, vector<8x128xf32>
    %262 = arith.addf %158, %246 : vector<8x128xf32>
    %263 = arith.addf %159, %246 : vector<8x128xf32>
    %264 = vector.broadcast %58 : vector<8x1xf32> to vector<8x256xf32>
    %265 = arith.mulf %243, %264 : vector<8x256xf32>
    %cst_125 = arith.constant dense<0xFF800000> : vector<256xf32>
    %266 = vector.multi_reduction <maximumf>, %265, %cst_125 [0] : vector<8x256xf32> to vector<256xf32>
    %267 = vector.shape_cast %266 : vector<256xf32> to vector<1x256xf32>
    %268 = arith.maximumf %164, %267 : vector<1x256xf32>
    %269 = arith.addf %165, %261 : vector<8x128xf32>
    %c2_i32 = arith.constant 2 : i32
    %c4_i32_126 = arith.constant 4 : i32
    %270 = arith.addi %c4_i32_126, %c2_i32 : i32
    %271 = arith.sitofp %270 : i32 to f32
    %cst_127 = arith.constant 1.000000e+00 : f32
    %272 = arith.divf %cst_127, %271 : f32
    %273 = vector.broadcast %272 : f32 to vector<8x128xf32>
    %274 = arith.mulf %262, %273 : vector<8x128xf32>
    %c1_i32_128 = arith.constant 1 : i32
    %275 = arith.maxsi %c2_i32, %c1_i32_128 : i32
    %276 = arith.sitofp %275 : i32 to f32
    %cst_129 = arith.constant 1.000000e+00 : f32
    %277 = arith.divf %cst_129, %276 : f32
    %278 = vector.broadcast %277 : f32 to vector<8x128xf32>
    %279 = arith.mulf %263, %278 : vector<8x128xf32>
    %280 = arith.truncf %274 : vector<8x128xf32> to vector<8x128xbf16>
    %c0_130 = arith.constant 0 : index
    %c0_131 = arith.constant 0 : index
    %281 = vector.load %arg14[%c0_130, %c0_131] : memref<128x128xbf16, #tpu.memory_space<vmem>>, vector<128x128xbf16>
    %cst_132 = arith.constant dense<0.000000e+00> : vector<8x128xf32>
    %282 = tpu.matmul %280, %281, %cst_132 {dimension_numbers = #tpu.dot_dimension_numbers<[1], [0], [0], [1], [0, 0, 1, 1], [], []>} : vector<8x128xbf16>, vector<128x128xbf16>, vector<8x128xf32> -> vector<8x128xf32>
    %c0_133 = arith.constant 0 : index
    %c0_134 = arith.constant 0 : index
    %283 = vector.load %arg15[%c0_133, %c0_134] : memref<1x128xf32, #tpu.memory_space<vmem>>, vector<1x128xf32>
    %284 = vector.broadcast %283 : vector<1x128xf32> to vector<8x128xf32>
    %285 = arith.addf %282, %284 : vector<8x128xf32>
    %286 = math.tanh %285 : vector<8x128xf32>
    %287 = arith.truncf %286 : vector<8x128xf32> to vector<8x128xbf16>
    %c0_135 = arith.constant 0 : index
    %c0_136 = arith.constant 0 : index
    %288 = vector.load %arg16[%c0_135, %c0_136] : memref<128x256xbf16, #tpu.memory_space<vmem>>, vector<128x256xbf16>
    %cst_137 = arith.constant dense<0.000000e+00> : vector<8x256xf32>
    %289 = tpu.matmul %287, %288, %cst_137 {dimension_numbers = #tpu.dot_dimension_numbers<[1], [0], [0], [1], [0, 0, 1, 1], [], []>} : vector<8x128xbf16>, vector<128x256xbf16>, vector<8x256xf32> -> vector<8x256xf32>
    %c0_138 = arith.constant 0 : index
    %c0_139 = arith.constant 0 : index
    %290 = vector.load %arg17[%c0_138, %c0_139] : memref<1x256xf32, #tpu.memory_space<vmem>>, vector<1x256xf32>
    %291 = vector.broadcast %290 : vector<1x256xf32> to vector<8x256xf32>
    %292 = arith.addf %289, %291 : vector<8x256xf32>
    %293 = arith.truncf %279 : vector<8x128xf32> to vector<8x128xbf16>
    %c0_140 = arith.constant 0 : index
    %c0_141 = arith.constant 0 : index
    %294 = vector.load %arg18[%c0_140, %c0_141] : memref<128x128xbf16, #tpu.memory_space<vmem>>, vector<128x128xbf16>
    %cst_142 = arith.constant dense<0.000000e+00> : vector<8x128xf32>
    %295 = tpu.matmul %293, %294, %cst_142 {dimension_numbers = #tpu.dot_dimension_numbers<[1], [0], [0], [1], [0, 0, 1, 1], [], []>} : vector<8x128xbf16>, vector<128x128xbf16>, vector<8x128xf32> -> vector<8x128xf32>
    %c0_143 = arith.constant 0 : index
    %c0_144 = arith.constant 0 : index
    %296 = vector.load %arg19[%c0_143, %c0_144] : memref<1x128xf32, #tpu.memory_space<vmem>>, vector<1x128xf32>
    %297 = vector.broadcast %296 : vector<1x128xf32> to vector<8x128xf32>
    %298 = arith.addf %295, %297 : vector<8x128xf32>
    %299 = math.tanh %298 : vector<8x128xf32>
    %300 = arith.truncf %299 : vector<8x128xf32> to vector<8x128xbf16>
    %c0_145 = arith.constant 0 : index
    %c0_146 = arith.constant 0 : index
    %301 = vector.load %arg20[%c0_145, %c0_146] : memref<128x256xbf16, #tpu.memory_space<vmem>>, vector<128x256xbf16>
    %cst_147 = arith.constant dense<0.000000e+00> : vector<8x256xf32>
    %302 = tpu.matmul %300, %301, %cst_147 {dimension_numbers = #tpu.dot_dimension_numbers<[1], [0], [0], [1], [0, 0, 1, 1], [], []>} : vector<8x128xbf16>, vector<128x256xbf16>, vector<8x256xf32> -> vector<8x256xf32>
    %c0_148 = arith.constant 0 : index
    %c0_149 = arith.constant 0 : index
    %303 = vector.load %arg21[%c0_148, %c0_149] : memref<1x256xf32, #tpu.memory_space<vmem>>, vector<1x256xf32>
    %304 = vector.broadcast %303 : vector<1x256xf32> to vector<8x256xf32>
    %305 = arith.addf %302, %304 : vector<8x256xf32>
    %c0_i32_150 = arith.constant 0 : i32
    %306 = arith.cmpi eq, %c2_i32, %c0_i32_150 : i32
    %307 = arith.select %306, %292, %305 : vector<8x256xf32>
    %cst_151 = arith.constant dense<0xFF800000> : vector<8xf32>
    %308 = vector.multi_reduction <maximumf>, %292, %cst_151 [1] : vector<8x256xf32> to vector<8xf32>
    %309 = vector.shape_cast %308 : vector<8xf32> to vector<8x1xf32>
    %310 = vector.broadcast %309 : vector<8x1xf32> to vector<8x256xf32>
    %311 = arith.subf %292, %310 : vector<8x256xf32>
    %cst_152 = arith.constant dense<0xFF800000> : vector<8xf32>
    %312 = vector.multi_reduction <maximumf>, %307, %cst_152 [1] : vector<8x256xf32> to vector<8xf32>
    %313 = vector.shape_cast %312 : vector<8xf32> to vector<8x1xf32>
    %314 = vector.broadcast %313 : vector<8x1xf32> to vector<8x256xf32>
    %315 = arith.subf %307, %314 : vector<8x256xf32>
    %cst_153 = arith.constant dense<0x7F800000> : vector<8xf32>
    %316 = vector.multi_reduction <minimumf>, %315, %cst_153 [1] : vector<8x256xf32> to vector<8xf32>
    %317 = vector.shape_cast %316 : vector<8xf32> to vector<8x1xf32>
    %cst_154 = arith.constant 0.000000e+00 : f32
    %318 = vector.broadcast %cst_154 : f32 to vector<1x256xf32>
    %319 = arith.cmpf ogt, %268, %318 : vector<1x256xf32>
    %320 = vector.shape_cast %319 : vector<1x256xi1> to vector<1x256xi1>
    %321 = vector.broadcast %320 : vector<1x256xi1> to vector<8x256xi1>
    %322 = vector.shape_cast %317 : vector<8x1xf32> to vector<8x1xf32>
    %323 = vector.broadcast %322 : vector<8x1xf32> to vector<8x256xf32>
    %324 = arith.select %321, %323, %315 : vector<8x256xi1>, vector<8x256xf32>
    %325 = math.exp %311 : vector<8x256xf32>
    %cst_155 = arith.constant dense<0.000000e+00> : vector<8xf32>
    %326 = vector.multi_reduction <add>, %325, %cst_155 [1] : vector<8x256xf32> to vector<8xf32>
    %327 = vector.shape_cast %326 : vector<8xf32> to vector<8x1xf32>
    %328 = vector.broadcast %327 : vector<8x1xf32> to vector<8x256xf32>
    %329 = arith.divf %325, %328 : vector<8x256xf32>
    %330 = math.exp %324 : vector<8x256xf32>
    %cst_156 = arith.constant dense<0.000000e+00> : vector<8xf32>
    %331 = vector.multi_reduction <add>, %330, %cst_156 [1] : vector<8x256xf32> to vector<8xf32>
    %332 = vector.shape_cast %331 : vector<8xf32> to vector<8x1xf32>
    %333 = math.log %332 : vector<8x1xf32>
    %334 = vector.broadcast %333 : vector<8x1xf32> to vector<8x256xf32>
    %335 = arith.subf %324, %334 : vector<8x256xf32>
    %cst_157 = arith.constant dense<0xFF800000> : vector<8xf32>
    %336 = vector.multi_reduction <maximumf>, %329, %cst_157 [1] : vector<8x256xf32> to vector<8xf32>
    %337 = vector.shape_cast %336 : vector<8xf32> to vector<8x1xf32>
    %338 = vector.broadcast %337 : vector<8x1xf32> to vector<8x256xf32>
    %339 = arith.cmpf oeq, %329, %338 : vector<8x256xf32>
    %c256_i32_158 = arith.constant 256 : i32
    %340 = vector.broadcast %c256_i32_158 : i32 to vector<8x256xi32>
    %341 = arith.select %339, %53, %340 : vector<8x256xi1>, vector<8x256xi32>
    %cst_159 = arith.constant dense<2147483647> : vector<8xi32>
    %342 = vector.multi_reduction <minsi>, %341, %cst_159 [1] : vector<8x256xi32> to vector<8xi32>
    %343 = vector.shape_cast %342 : vector<8xi32> to vector<8x1xi32>
    %344 = vector.broadcast %343 : vector<8x1xi32> to vector<8x256xi32>
    %345 = arith.cmpi eq, %53, %344 : vector<8x256xi32>
    %346 = arith.extui %345 : vector<8x256xi1> to vector<8x256xi32>
    %347 = arith.sitofp %346 : vector<8x256xi32> to vector<8x256xf32>
    %348 = arith.truncf %347 : vector<8x256xf32> to vector<8x256xbf16>
    %c0_160 = arith.constant 0 : index
    %c0_161 = arith.constant 0 : index
    %349 = vector.load %arg22[%c0_160, %c0_161] : memref<256x128xbf16, #tpu.memory_space<vmem>>, vector<256x128xbf16>
    %cst_162 = arith.constant dense<0.000000e+00> : vector<8x128xf32>
    %350 = tpu.matmul %348, %349, %cst_162 {dimension_numbers = #tpu.dot_dimension_numbers<[1], [0], [0], [1], [0, 0, 1, 1], [], []>} : vector<8x256xbf16>, vector<256x128xbf16>, vector<8x128xf32> -> vector<8x128xf32>
    %351 = arith.index_cast %c2_i32 : i32 to index
    %c0_163 = arith.constant 0 : index
    %c0_164 = arith.constant 0 : index
    %352 = vector.load %arg35[%351, %c0_163, %c0_164] : memref<6x8x256xf32, #tpu.memory_space<vmem>>, vector<1x8x256xf32>
    %353 = vector.shape_cast %352 : vector<1x8x256xf32> to vector<8x256xf32>
    %354 = vector.shape_cast %329 : vector<8x256xf32> to vector<1x8x256xf32>
    tpu.vector_store %arg35[%351, %c0_163, %c0_164], %354 {strides = array<i32>} : memref<6x8x256xf32, #tpu.memory_space<vmem>>, vector<1x8x256xf32>,
    %355 = arith.index_cast %c2_i32 : i32 to index
    %c0_165 = arith.constant 0 : index
    %c0_166 = arith.constant 0 : index
    %356 = vector.load %arg36[%355, %c0_165, %c0_166] : memref<6x8x256xf32, #tpu.memory_space<vmem>>, vector<1x8x256xf32>
    %357 = vector.shape_cast %356 : vector<1x8x256xf32> to vector<8x256xf32>
    %358 = vector.shape_cast %335 : vector<8x256xf32> to vector<1x8x256xf32>
    tpu.vector_store %arg36[%355, %c0_165, %c0_166], %358 {strides = array<i32>} : memref<6x8x256xf32, #tpu.memory_space<vmem>>, vector<1x8x256xf32>,
    %c220_i32_167 = arith.constant 220 : i32
    %359 = vector.broadcast %c220_i32_167 : i32 to vector<8x1xi32>
    %360 = arith.cmpi eq, %343, %359 : vector<8x1xi32>
    %361 = vector.shape_cast %360 : vector<8x1xi1> to vector<8x1xi1>
    %362 = vector.broadcast %361 : vector<8x1xi1> to vector<8x128xi1>
    %363 = vector.shape_cast %52 : vector<1x128xf32> to vector<1x128xf32>
    %364 = vector.broadcast %363 : vector<1x128xf32> to vector<8x128xf32>
    %365 = arith.select %362, %364, %350 : vector<8x128xi1>, vector<8x128xf32>
    %366 = arith.addf %262, %350 : vector<8x128xf32>
    %367 = arith.addf %263, %350 : vector<8x128xf32>
    %368 = vector.broadcast %58 : vector<8x1xf32> to vector<8x256xf32>
    %369 = arith.mulf %347, %368 : vector<8x256xf32>
    %cst_168 = arith.constant dense<0xFF800000> : vector<256xf32>
    %370 = vector.multi_reduction <maximumf>, %369, %cst_168 [0] : vector<8x256xf32> to vector<256xf32>
    %371 = vector.shape_cast %370 : vector<256xf32> to vector<1x256xf32>
    %372 = arith.maximumf %268, %371 : vector<1x256xf32>
    %373 = arith.addf %269, %365 : vector<8x128xf32>
    %c3_i32 = arith.constant 3 : i32
    %c4_i32_169 = arith.constant 4 : i32
    %374 = arith.addi %c4_i32_169, %c3_i32 : i32
    %375 = arith.sitofp %374 : i32 to f32
    %cst_170 = arith.constant 1.000000e+00 : f32
    %376 = arith.divf %cst_170, %375 : f32
    %377 = vector.broadcast %376 : f32 to vector<8x128xf32>
    %378 = arith.mulf %366, %377 : vector<8x128xf32>
    %c1_i32_171 = arith.constant 1 : i32
    %379 = arith.maxsi %c3_i32, %c1_i32_171 : i32
    %380 = arith.sitofp %379 : i32 to f32
    %cst_172 = arith.constant 1.000000e+00 : f32
    %381 = arith.divf %cst_172, %380 : f32
    %382 = vector.broadcast %381 : f32 to vector<8x128xf32>
    %383 = arith.mulf %367, %382 : vector<8x128xf32>
    %384 = arith.truncf %378 : vector<8x128xf32> to vector<8x128xbf16>
    %c0_173 = arith.constant 0 : index
    %c0_174 = arith.constant 0 : index
    %385 = vector.load %arg14[%c0_173, %c0_174] : memref<128x128xbf16, #tpu.memory_space<vmem>>, vector<128x128xbf16>
    %cst_175 = arith.constant dense<0.000000e+00> : vector<8x128xf32>
    %386 = tpu.matmul %384, %385, %cst_175 {dimension_numbers = #tpu.dot_dimension_numbers<[1], [0], [0], [1], [0, 0, 1, 1], [], []>} : vector<8x128xbf16>, vector<128x128xbf16>, vector<8x128xf32> -> vector<8x128xf32>
    %c0_176 = arith.constant 0 : index
    %c0_177 = arith.constant 0 : index
    %387 = vector.load %arg15[%c0_176, %c0_177] : memref<1x128xf32, #tpu.memory_space<vmem>>, vector<1x128xf32>
    %388 = vector.broadcast %387 : vector<1x128xf32> to vector<8x128xf32>
    %389 = arith.addf %386, %388 : vector<8x128xf32>
    %390 = math.tanh %389 : vector<8x128xf32>
    %391 = arith.truncf %390 : vector<8x128xf32> to vector<8x128xbf16>
    %c0_178 = arith.constant 0 : index
    %c0_179 = arith.constant 0 : index
    %392 = vector.load %arg16[%c0_178, %c0_179] : memref<128x256xbf16, #tpu.memory_space<vmem>>, vector<128x256xbf16>
    %cst_180 = arith.constant dense<0.000000e+00> : vector<8x256xf32>
    %393 = tpu.matmul %391, %392, %cst_180 {dimension_numbers = #tpu.dot_dimension_numbers<[1], [0], [0], [1], [0, 0, 1, 1], [], []>} : vector<8x128xbf16>, vector<128x256xbf16>, vector<8x256xf32> -> vector<8x256xf32>
    %c0_181 = arith.constant 0 : index
    %c0_182 = arith.constant 0 : index
    %394 = vector.load %arg17[%c0_181, %c0_182] : memref<1x256xf32, #tpu.memory_space<vmem>>, vector<1x256xf32>
    %395 = vector.broadcast %394 : vector<1x256xf32> to vector<8x256xf32>
    %396 = arith.addf %393, %395 : vector<8x256xf32>
    %397 = arith.truncf %383 : vector<8x128xf32> to vector<8x128xbf16>
    %c0_183 = arith.constant 0 : index
    %c0_184 = arith.constant 0 : index
    %398 = vector.load %arg18[%c0_183, %c0_184] : memref<128x128xbf16, #tpu.memory_space<vmem>>, vector<128x128xbf16>
    %cst_185 = arith.constant dense<0.000000e+00> : vector<8x128xf32>
    %399 = tpu.matmul %397, %398, %cst_185 {dimension_numbers = #tpu.dot_dimension_numbers<[1], [0], [0], [1], [0, 0, 1, 1], [], []>} : vector<8x128xbf16>, vector<128x128xbf16>, vector<8x128xf32> -> vector<8x128xf32>
    %c0_186 = arith.constant 0 : index
    %c0_187 = arith.constant 0 : index
    %400 = vector.load %arg19[%c0_186, %c0_187] : memref<1x128xf32, #tpu.memory_space<vmem>>, vector<1x128xf32>
    %401 = vector.broadcast %400 : vector<1x128xf32> to vector<8x128xf32>
    %402 = arith.addf %399, %401 : vector<8x128xf32>
    %403 = math.tanh %402 : vector<8x128xf32>
    %404 = arith.truncf %403 : vector<8x128xf32> to vector<8x128xbf16>
    %c0_188 = arith.constant 0 : index
    %c0_189 = arith.constant 0 : index
    %405 = vector.load %arg20[%c0_188, %c0_189] : memref<128x256xbf16, #tpu.memory_space<vmem>>, vector<128x256xbf16>
    %cst_190 = arith.constant dense<0.000000e+00> : vector<8x256xf32>
    %406 = tpu.matmul %404, %405, %cst_190 {dimension_numbers = #tpu.dot_dimension_numbers<[1], [0], [0], [1], [0, 0, 1, 1], [], []>} : vector<8x128xbf16>, vector<128x256xbf16>, vector<8x256xf32> -> vector<8x256xf32>
    %c0_191 = arith.constant 0 : index
    %c0_192 = arith.constant 0 : index
    %407 = vector.load %arg21[%c0_191, %c0_192] : memref<1x256xf32, #tpu.memory_space<vmem>>, vector<1x256xf32>
    %408 = vector.broadcast %407 : vector<1x256xf32> to vector<8x256xf32>
    %409 = arith.addf %406, %408 : vector<8x256xf32>
    %c0_i32_193 = arith.constant 0 : i32
    %410 = arith.cmpi eq, %c3_i32, %c0_i32_193 : i32
    %411 = arith.select %410, %396, %409 : vector<8x256xf32>
    %cst_194 = arith.constant dense<0xFF800000> : vector<8xf32>
    %412 = vector.multi_reduction <maximumf>, %396, %cst_194 [1] : vector<8x256xf32> to vector<8xf32>
    %413 = vector.shape_cast %412 : vector<8xf32> to vector<8x1xf32>
    %414 = vector.broadcast %413 : vector<8x1xf32> to vector<8x256xf32>
    %415 = arith.subf %396, %414 : vector<8x256xf32>
    %cst_195 = arith.constant dense<0xFF800000> : vector<8xf32>
    %416 = vector.multi_reduction <maximumf>, %411, %cst_195 [1] : vector<8x256xf32> to vector<8xf32>
    %417 = vector.shape_cast %416 : vector<8xf32> to vector<8x1xf32>
    %418 = vector.broadcast %417 : vector<8x1xf32> to vector<8x256xf32>
    %419 = arith.subf %411, %418 : vector<8x256xf32>
    %cst_196 = arith.constant dense<0x7F800000> : vector<8xf32>
    %420 = vector.multi_reduction <minimumf>, %419, %cst_196 [1] : vector<8x256xf32> to vector<8xf32>
    %421 = vector.shape_cast %420 : vector<8xf32> to vector<8x1xf32>
    %cst_197 = arith.constant 0.000000e+00 : f32
    %422 = vector.broadcast %cst_197 : f32 to vector<1x256xf32>
    %423 = arith.cmpf ogt, %372, %422 : vector<1x256xf32>
    %424 = vector.shape_cast %423 : vector<1x256xi1> to vector<1x256xi1>
    %425 = vector.broadcast %424 : vector<1x256xi1> to vector<8x256xi1>
    %426 = vector.shape_cast %421 : vector<8x1xf32> to vector<8x1xf32>
    %427 = vector.broadcast %426 : vector<8x1xf32> to vector<8x256xf32>
    %428 = arith.select %425, %427, %419 : vector<8x256xi1>, vector<8x256xf32>
    %429 = math.exp %415 : vector<8x256xf32>
    %cst_198 = arith.constant dense<0.000000e+00> : vector<8xf32>
    %430 = vector.multi_reduction <add>, %429, %cst_198 [1] : vector<8x256xf32> to vector<8xf32>
    %431 = vector.shape_cast %430 : vector<8xf32> to vector<8x1xf32>
    %432 = vector.broadcast %431 : vector<8x1xf32> to vector<8x256xf32>
    %433 = arith.divf %429, %432 : vector<8x256xf32>
    %434 = math.exp %428 : vector<8x256xf32>
    %cst_199 = arith.constant dense<0.000000e+00> : vector<8xf32>
    %435 = vector.multi_reduction <add>, %434, %cst_199 [1] : vector<8x256xf32> to vector<8xf32>
    %436 = vector.shape_cast %435 : vector<8xf32> to vector<8x1xf32>
    %437 = math.log %436 : vector<8x1xf32>
    %438 = vector.broadcast %437 : vector<8x1xf32> to vector<8x256xf32>
    %439 = arith.subf %428, %438 : vector<8x256xf32>
    %cst_200 = arith.constant dense<0xFF800000> : vector<8xf32>
    %440 = vector.multi_reduction <maximumf>, %433, %cst_200 [1] : vector<8x256xf32> to vector<8xf32>
    %441 = vector.shape_cast %440 : vector<8xf32> to vector<8x1xf32>
    %442 = vector.broadcast %441 : vector<8x1xf32> to vector<8x256xf32>
    %443 = arith.cmpf oeq, %433, %442 : vector<8x256xf32>
    %c256_i32_201 = arith.constant 256 : i32
    %444 = vector.broadcast %c256_i32_201 : i32 to vector<8x256xi32>
    %445 = arith.select %443, %53, %444 : vector<8x256xi1>, vector<8x256xi32>
    %cst_202 = arith.constant dense<2147483647> : vector<8xi32>
    %446 = vector.multi_reduction <minsi>, %445, %cst_202 [1] : vector<8x256xi32> to vector<8xi32>
    %447 = vector.shape_cast %446 : vector<8xi32> to vector<8x1xi32>
    %448 = vector.broadcast %447 : vector<8x1xi32> to vector<8x256xi32>
    %449 = arith.cmpi eq, %53, %448 : vector<8x256xi32>
    %450 = arith.extui %449 : vector<8x256xi1> to vector<8x256xi32>
    %451 = arith.sitofp %450 : vector<8x256xi32> to vector<8x256xf32>
    %452 = arith.truncf %451 : vector<8x256xf32> to vector<8x256xbf16>
    %c0_203 = arith.constant 0 : index
    %c0_204 = arith.constant 0 : index
    %453 = vector.load %arg22[%c0_203, %c0_204] : memref<256x128xbf16, #tpu.memory_space<vmem>>, vector<256x128xbf16>
    %cst_205 = arith.constant dense<0.000000e+00> : vector<8x128xf32>
    %454 = tpu.matmul %452, %453, %cst_205 {dimension_numbers = #tpu.dot_dimension_numbers<[1], [0], [0], [1], [0, 0, 1, 1], [], []>} : vector<8x256xbf16>, vector<256x128xbf16>, vector<8x128xf32> -> vector<8x128xf32>
    %455 = arith.index_cast %c3_i32 : i32 to index
    %c0_206 = arith.constant 0 : index
    %c0_207 = arith.constant 0 : index
    %456 = vector.load %arg35[%455, %c0_206, %c0_207] : memref<6x8x256xf32, #tpu.memory_space<vmem>>, vector<1x8x256xf32>
    %457 = vector.shape_cast %456 : vector<1x8x256xf32> to vector<8x256xf32>
    %458 = vector.shape_cast %433 : vector<8x256xf32> to vector<1x8x256xf32>
    tpu.vector_store %arg35[%455, %c0_206, %c0_207], %458 {strides = array<i32>} : memref<6x8x256xf32, #tpu.memory_space<vmem>>, vector<1x8x256xf32>,
    %459 = arith.index_cast %c3_i32 : i32 to index
    %c0_208 = arith.constant 0 : index
    %c0_209 = arith.constant 0 : index
    %460 = vector.load %arg36[%459, %c0_208, %c0_209] : memref<6x8x256xf32, #tpu.memory_space<vmem>>, vector<1x8x256xf32>
    %461 = vector.shape_cast %460 : vector<1x8x256xf32> to vector<8x256xf32>
    %462 = vector.shape_cast %439 : vector<8x256xf32> to vector<1x8x256xf32>
    tpu.vector_store %arg36[%459, %c0_208, %c0_209], %462 {strides = array<i32>} : memref<6x8x256xf32, #tpu.memory_space<vmem>>, vector<1x8x256xf32>,
    %c220_i32_210 = arith.constant 220 : i32
    %463 = vector.broadcast %c220_i32_210 : i32 to vector<8x1xi32>
    %464 = arith.cmpi eq, %447, %463 : vector<8x1xi32>
    %465 = vector.shape_cast %464 : vector<8x1xi1> to vector<8x1xi1>
    %466 = vector.broadcast %465 : vector<8x1xi1> to vector<8x128xi1>
    %467 = vector.shape_cast %52 : vector<1x128xf32> to vector<1x128xf32>
    %468 = vector.broadcast %467 : vector<1x128xf32> to vector<8x128xf32>
    %469 = arith.select %466, %468, %454 : vector<8x128xi1>, vector<8x128xf32>
    %470 = arith.addf %366, %454 : vector<8x128xf32>
    %471 = arith.addf %367, %454 : vector<8x128xf32>
    %472 = vector.broadcast %58 : vector<8x1xf32> to vector<8x256xf32>
    %473 = arith.mulf %451, %472 : vector<8x256xf32>
    %cst_211 = arith.constant dense<0xFF800000> : vector<256xf32>
    %474 = vector.multi_reduction <maximumf>, %473, %cst_211 [0] : vector<8x256xf32> to vector<256xf32>
    %475 = vector.shape_cast %474 : vector<256xf32> to vector<1x256xf32>
    %476 = arith.maximumf %372, %475 : vector<1x256xf32>
    %477 = arith.addf %373, %469 : vector<8x128xf32>
    %c4_i32_212 = arith.constant 4 : i32
    %c4_i32_213 = arith.constant 4 : i32
    %478 = arith.addi %c4_i32_213, %c4_i32_212 : i32
    %479 = arith.sitofp %478 : i32 to f32
    %cst_214 = arith.constant 1.000000e+00 : f32
    %480 = arith.divf %cst_214, %479 : f32
    %481 = vector.broadcast %480 : f32 to vector<8x128xf32>
    %482 = arith.mulf %470, %481 : vector<8x128xf32>
    %c1_i32_215 = arith.constant 1 : i32
    %483 = arith.maxsi %c4_i32_212, %c1_i32_215 : i32
    %484 = arith.sitofp %483 : i32 to f32
    %cst_216 = arith.constant 1.000000e+00 : f32
    %485 = arith.divf %cst_216, %484 : f32
    %486 = vector.broadcast %485 : f32 to vector<8x128xf32>
    %487 = arith.mulf %471, %486 : vector<8x128xf32>
    %488 = arith.truncf %482 : vector<8x128xf32> to vector<8x128xbf16>
    %c0_217 = arith.constant 0 : index
    %c0_218 = arith.constant 0 : index
    %489 = vector.load %arg14[%c0_217, %c0_218] : memref<128x128xbf16, #tpu.memory_space<vmem>>, vector<128x128xbf16>
    %cst_219 = arith.constant dense<0.000000e+00> : vector<8x128xf32>
    %490 = tpu.matmul %488, %489, %cst_219 {dimension_numbers = #tpu.dot_dimension_numbers<[1], [0], [0], [1], [0, 0, 1, 1], [], []>} : vector<8x128xbf16>, vector<128x128xbf16>, vector<8x128xf32> -> vector<8x128xf32>
    %c0_220 = arith.constant 0 : index
    %c0_221 = arith.constant 0 : index
    %491 = vector.load %arg15[%c0_220, %c0_221] : memref<1x128xf32, #tpu.memory_space<vmem>>, vector<1x128xf32>
    %492 = vector.broadcast %491 : vector<1x128xf32> to vector<8x128xf32>
    %493 = arith.addf %490, %492 : vector<8x128xf32>
    %494 = math.tanh %493 : vector<8x128xf32>
    %495 = arith.truncf %494 : vector<8x128xf32> to vector<8x128xbf16>
    %c0_222 = arith.constant 0 : index
    %c0_223 = arith.constant 0 : index
    %496 = vector.load %arg16[%c0_222, %c0_223] : memref<128x256xbf16, #tpu.memory_space<vmem>>, vector<128x256xbf16>
    %cst_224 = arith.constant dense<0.000000e+00> : vector<8x256xf32>
    %497 = tpu.matmul %495, %496, %cst_224 {dimension_numbers = #tpu.dot_dimension_numbers<[1], [0], [0], [1], [0, 0, 1, 1], [], []>} : vector<8x128xbf16>, vector<128x256xbf16>, vector<8x256xf32> -> vector<8x256xf32>
    %c0_225 = arith.constant 0 : index
    %c0_226 = arith.constant 0 : index
    %498 = vector.load %arg17[%c0_225, %c0_226] : memref<1x256xf32, #tpu.memory_space<vmem>>, vector<1x256xf32>
    %499 = vector.broadcast %498 : vector<1x256xf32> to vector<8x256xf32>
    %500 = arith.addf %497, %499 : vector<8x256xf32>
    %501 = arith.truncf %487 : vector<8x128xf32> to vector<8x128xbf16>
    %c0_227 = arith.constant 0 : index
    %c0_228 = arith.constant 0 : index
    %502 = vector.load %arg18[%c0_227, %c0_228] : memref<128x128xbf16, #tpu.memory_space<vmem>>, vector<128x128xbf16>
    %cst_229 = arith.constant dense<0.000000e+00> : vector<8x128xf32>
    %503 = tpu.matmul %501, %502, %cst_229 {dimension_numbers = #tpu.dot_dimension_numbers<[1], [0], [0], [1], [0, 0, 1, 1], [], []>} : vector<8x128xbf16>, vector<128x128xbf16>, vector<8x128xf32> -> vector<8x128xf32>
    %c0_230 = arith.constant 0 : index
    %c0_231 = arith.constant 0 : index
    %504 = vector.load %arg19[%c0_230, %c0_231] : memref<1x128xf32, #tpu.memory_space<vmem>>, vector<1x128xf32>
    %505 = vector.broadcast %504 : vector<1x128xf32> to vector<8x128xf32>
    %506 = arith.addf %503, %505 : vector<8x128xf32>
    %507 = math.tanh %506 : vector<8x128xf32>
    %508 = arith.truncf %507 : vector<8x128xf32> to vector<8x128xbf16>
    %c0_232 = arith.constant 0 : index
    %c0_233 = arith.constant 0 : index
    %509 = vector.load %arg20[%c0_232, %c0_233] : memref<128x256xbf16, #tpu.memory_space<vmem>>, vector<128x256xbf16>
    %cst_234 = arith.constant dense<0.000000e+00> : vector<8x256xf32>
    %510 = tpu.matmul %508, %509, %cst_234 {dimension_numbers = #tpu.dot_dimension_numbers<[1], [0], [0], [1], [0, 0, 1, 1], [], []>} : vector<8x128xbf16>, vector<128x256xbf16>, vector<8x256xf32> -> vector<8x256xf32>
    %c0_235 = arith.constant 0 : index
    %c0_236 = arith.constant 0 : index
    %511 = vector.load %arg21[%c0_235, %c0_236] : memref<1x256xf32, #tpu.memory_space<vmem>>, vector<1x256xf32>
    %512 = vector.broadcast %511 : vector<1x256xf32> to vector<8x256xf32>
    %513 = arith.addf %510, %512 : vector<8x256xf32>
    %c0_i32_237 = arith.constant 0 : i32
    %514 = arith.cmpi eq, %c4_i32_212, %c0_i32_237 : i32
    %515 = arith.select %514, %500, %513 : vector<8x256xf32>
    %cst_238 = arith.constant dense<0xFF800000> : vector<8xf32>
    %516 = vector.multi_reduction <maximumf>, %500, %cst_238 [1] : vector<8x256xf32> to vector<8xf32>
    %517 = vector.shape_cast %516 : vector<8xf32> to vector<8x1xf32>
    %518 = vector.broadcast %517 : vector<8x1xf32> to vector<8x256xf32>
    %519 = arith.subf %500, %518 : vector<8x256xf32>
    %cst_239 = arith.constant dense<0xFF800000> : vector<8xf32>
    %520 = vector.multi_reduction <maximumf>, %515, %cst_239 [1] : vector<8x256xf32> to vector<8xf32>
    %521 = vector.shape_cast %520 : vector<8xf32> to vector<8x1xf32>
    %522 = vector.broadcast %521 : vector<8x1xf32> to vector<8x256xf32>
    %523 = arith.subf %515, %522 : vector<8x256xf32>
    %cst_240 = arith.constant dense<0x7F800000> : vector<8xf32>
    %524 = vector.multi_reduction <minimumf>, %523, %cst_240 [1] : vector<8x256xf32> to vector<8xf32>
    %525 = vector.shape_cast %524 : vector<8xf32> to vector<8x1xf32>
    %cst_241 = arith.constant 0.000000e+00 : f32
    %526 = vector.broadcast %cst_241 : f32 to vector<1x256xf32>
    %527 = arith.cmpf ogt, %476, %526 : vector<1x256xf32>
    %528 = vector.shape_cast %527 : vector<1x256xi1> to vector<1x256xi1>
    %529 = vector.broadcast %528 : vector<1x256xi1> to vector<8x256xi1>
    %530 = vector.shape_cast %525 : vector<8x1xf32> to vector<8x1xf32>
    %531 = vector.broadcast %530 : vector<8x1xf32> to vector<8x256xf32>
    %532 = arith.select %529, %531, %523 : vector<8x256xi1>, vector<8x256xf32>
    %533 = math.exp %519 : vector<8x256xf32>
    %cst_242 = arith.constant dense<0.000000e+00> : vector<8xf32>
    %534 = vector.multi_reduction <add>, %533, %cst_242 [1] : vector<8x256xf32> to vector<8xf32>
    %535 = vector.shape_cast %534 : vector<8xf32> to vector<8x1xf32>
    %536 = vector.broadcast %535 : vector<8x1xf32> to vector<8x256xf32>
    %537 = arith.divf %533, %536 : vector<8x256xf32>
    %538 = math.exp %532 : vector<8x256xf32>
    %cst_243 = arith.constant dense<0.000000e+00> : vector<8xf32>
    %539 = vector.multi_reduction <add>, %538, %cst_243 [1] : vector<8x256xf32> to vector<8xf32>
    %540 = vector.shape_cast %539 : vector<8xf32> to vector<8x1xf32>
    %541 = math.log %540 : vector<8x1xf32>
    %542 = vector.broadcast %541 : vector<8x1xf32> to vector<8x256xf32>
    %543 = arith.subf %532, %542 : vector<8x256xf32>
    %cst_244 = arith.constant dense<0xFF800000> : vector<8xf32>
    %544 = vector.multi_reduction <maximumf>, %537, %cst_244 [1] : vector<8x256xf32> to vector<8xf32>
    %545 = vector.shape_cast %544 : vector<8xf32> to vector<8x1xf32>
    %546 = vector.broadcast %545 : vector<8x1xf32> to vector<8x256xf32>
    %547 = arith.cmpf oeq, %537, %546 : vector<8x256xf32>
    %c256_i32_245 = arith.constant 256 : i32
    %548 = vector.broadcast %c256_i32_245 : i32 to vector<8x256xi32>
    %549 = arith.select %547, %53, %548 : vector<8x256xi1>, vector<8x256xi32>
    %cst_246 = arith.constant dense<2147483647> : vector<8xi32>
    %550 = vector.multi_reduction <minsi>, %549, %cst_246 [1] : vector<8x256xi32> to vector<8xi32>
    %551 = vector.shape_cast %550 : vector<8xi32> to vector<8x1xi32>
    %552 = vector.broadcast %551 : vector<8x1xi32> to vector<8x256xi32>
    %553 = arith.cmpi eq, %53, %552 : vector<8x256xi32>
    %554 = arith.extui %553 : vector<8x256xi1> to vector<8x256xi32>
    %555 = arith.sitofp %554 : vector<8x256xi32> to vector<8x256xf32>
    %556 = arith.truncf %555 : vector<8x256xf32> to vector<8x256xbf16>
    %c0_247 = arith.constant 0 : index
    %c0_248 = arith.constant 0 : index
    %557 = vector.load %arg22[%c0_247, %c0_248] : memref<256x128xbf16, #tpu.memory_space<vmem>>, vector<256x128xbf16>
    %cst_249 = arith.constant dense<0.000000e+00> : vector<8x128xf32>
    %558 = tpu.matmul %556, %557, %cst_249 {dimension_numbers = #tpu.dot_dimension_numbers<[1], [0], [0], [1], [0, 0, 1, 1], [], []>} : vector<8x256xbf16>, vector<256x128xbf16>, vector<8x128xf32> -> vector<8x128xf32>
    %559 = arith.index_cast %c4_i32_212 : i32 to index
    %c0_250 = arith.constant 0 : index
    %c0_251 = arith.constant 0 : index
    %560 = vector.load %arg35[%559, %c0_250, %c0_251] : memref<6x8x256xf32, #tpu.memory_space<vmem>>, vector<1x8x256xf32>
    %561 = vector.shape_cast %560 : vector<1x8x256xf32> to vector<8x256xf32>
    %562 = vector.shape_cast %537 : vector<8x256xf32> to vector<1x8x256xf32>
    tpu.vector_store %arg35[%559, %c0_250, %c0_251], %562 {strides = array<i32>} : memref<6x8x256xf32, #tpu.memory_space<vmem>>, vector<1x8x256xf32>,
    %563 = arith.index_cast %c4_i32_212 : i32 to index
    %c0_252 = arith.constant 0 : index
    %c0_253 = arith.constant 0 : index
    %564 = vector.load %arg36[%563, %c0_252, %c0_253] : memref<6x8x256xf32, #tpu.memory_space<vmem>>, vector<1x8x256xf32>
    %565 = vector.shape_cast %564 : vector<1x8x256xf32> to vector<8x256xf32>
    %566 = vector.shape_cast %543 : vector<8x256xf32> to vector<1x8x256xf32>
    tpu.vector_store %arg36[%563, %c0_252, %c0_253], %566 {strides = array<i32>} : memref<6x8x256xf32, #tpu.memory_space<vmem>>, vector<1x8x256xf32>,
    %c220_i32_254 = arith.constant 220 : i32
    %567 = vector.broadcast %c220_i32_254 : i32 to vector<8x1xi32>
    %568 = arith.cmpi eq, %551, %567 : vector<8x1xi32>
    %569 = vector.shape_cast %568 : vector<8x1xi1> to vector<8x1xi1>
    %570 = vector.broadcast %569 : vector<8x1xi1> to vector<8x128xi1>
    %571 = vector.shape_cast %52 : vector<1x128xf32> to vector<1x128xf32>
    %572 = vector.broadcast %571 : vector<1x128xf32> to vector<8x128xf32>
    %573 = arith.select %570, %572, %558 : vector<8x128xi1>, vector<8x128xf32>
    %574 = arith.addf %470, %558 : vector<8x128xf32>
    %575 = arith.addf %471, %558 : vector<8x128xf32>
    %576 = vector.broadcast %58 : vector<8x1xf32> to vector<8x256xf32>
    %577 = arith.mulf %555, %576 : vector<8x256xf32>
    %cst_255 = arith.constant dense<0xFF800000> : vector<256xf32>
    %578 = vector.multi_reduction <maximumf>, %577, %cst_255 [0] : vector<8x256xf32> to vector<256xf32>
    %579 = vector.shape_cast %578 : vector<256xf32> to vector<1x256xf32>
    %580 = arith.maximumf %476, %579 : vector<1x256xf32>
    %581 = arith.addf %477, %573 : vector<8x128xf32>
    %c5_i32 = arith.constant 5 : i32
    %c4_i32_256 = arith.constant 4 : i32
    %582 = arith.addi %c4_i32_256, %c5_i32 : i32
    %583 = arith.sitofp %582 : i32 to f32
    %cst_257 = arith.constant 1.000000e+00 : f32
    %584 = arith.divf %cst_257, %583 : f32
    %585 = vector.broadcast %584 : f32 to vector<8x128xf32>
    %586 = arith.mulf %574, %585 : vector<8x128xf32>
    %c1_i32_258 = arith.constant 1 : i32
    %587 = arith.maxsi %c5_i32, %c1_i32_258 : i32
    %588 = arith.sitofp %587 : i32 to f32
    %cst_259 = arith.constant 1.000000e+00 : f32
    %589 = arith.divf %cst_259, %588 : f32
    %590 = vector.broadcast %589 : f32 to vector<8x128xf32>
    %591 = arith.mulf %575, %590 : vector<8x128xf32>
    %592 = arith.truncf %586 : vector<8x128xf32> to vector<8x128xbf16>
    %c0_260 = arith.constant 0 : index
    %c0_261 = arith.constant 0 : index
    %593 = vector.load %arg14[%c0_260, %c0_261] : memref<128x128xbf16, #tpu.memory_space<vmem>>, vector<128x128xbf16>
    %cst_262 = arith.constant dense<0.000000e+00> : vector<8x128xf32>
    %594 = tpu.matmul %592, %593, %cst_262 {dimension_numbers = #tpu.dot_dimension_numbers<[1], [0], [0], [1], [0, 0, 1, 1], [], []>} : vector<8x128xbf16>, vector<128x128xbf16>, vector<8x128xf32> -> vector<8x128xf32>
    %c0_263 = arith.constant 0 : index
    %c0_264 = arith.constant 0 : index
    %595 = vector.load %arg15[%c0_263, %c0_264] : memref<1x128xf32, #tpu.memory_space<vmem>>, vector<1x128xf32>
    %596 = vector.broadcast %595 : vector<1x128xf32> to vector<8x128xf32>
    %597 = arith.addf %594, %596 : vector<8x128xf32>
    %598 = math.tanh %597 : vector<8x128xf32>
    %599 = arith.truncf %598 : vector<8x128xf32> to vector<8x128xbf16>
    %c0_265 = arith.constant 0 : index
    %c0_266 = arith.constant 0 : index
    %600 = vector.load %arg16[%c0_265, %c0_266] : memref<128x256xbf16, #tpu.memory_space<vmem>>, vector<128x256xbf16>
    %cst_267 = arith.constant dense<0.000000e+00> : vector<8x256xf32>
    %601 = tpu.matmul %599, %600, %cst_267 {dimension_numbers = #tpu.dot_dimension_numbers<[1], [0], [0], [1], [0, 0, 1, 1], [], []>} : vector<8x128xbf16>, vector<128x256xbf16>, vector<8x256xf32> -> vector<8x256xf32>
    %c0_268 = arith.constant 0 : index
    %c0_269 = arith.constant 0 : index
    %602 = vector.load %arg17[%c0_268, %c0_269] : memref<1x256xf32, #tpu.memory_space<vmem>>, vector<1x256xf32>
    %603 = vector.broadcast %602 : vector<1x256xf32> to vector<8x256xf32>
    %604 = arith.addf %601, %603 : vector<8x256xf32>
    %605 = arith.truncf %591 : vector<8x128xf32> to vector<8x128xbf16>
    %c0_270 = arith.constant 0 : index
    %c0_271 = arith.constant 0 : index
    %606 = vector.load %arg18[%c0_270, %c0_271] : memref<128x128xbf16, #tpu.memory_space<vmem>>, vector<128x128xbf16>
    %cst_272 = arith.constant dense<0.000000e+00> : vector<8x128xf32>
    %607 = tpu.matmul %605, %606, %cst_272 {dimension_numbers = #tpu.dot_dimension_numbers<[1], [0], [0], [1], [0, 0, 1, 1], [], []>} : vector<8x128xbf16>, vector<128x128xbf16>, vector<8x128xf32> -> vector<8x128xf32>
    %c0_273 = arith.constant 0 : index
    %c0_274 = arith.constant 0 : index
    %608 = vector.load %arg19[%c0_273, %c0_274] : memref<1x128xf32, #tpu.memory_space<vmem>>, vector<1x128xf32>
    %609 = vector.broadcast %608 : vector<1x128xf32> to vector<8x128xf32>
    %610 = arith.addf %607, %609 : vector<8x128xf32>
    %611 = math.tanh %610 : vector<8x128xf32>
    %612 = arith.truncf %611 : vector<8x128xf32> to vector<8x128xbf16>
    %c0_275 = arith.constant 0 : index
    %c0_276 = arith.constant 0 : index
    %613 = vector.load %arg20[%c0_275, %c0_276] : memref<128x256xbf16, #tpu.memory_space<vmem>>, vector<128x256xbf16>
    %cst_277 = arith.constant dense<0.000000e+00> : vector<8x256xf32>
    %614 = tpu.matmul %612, %613, %cst_277 {dimension_numbers = #tpu.dot_dimension_numbers<[1], [0], [0], [1], [0, 0, 1, 1], [], []>} : vector<8x128xbf16>, vector<128x256xbf16>, vector<8x256xf32> -> vector<8x256xf32>
    %c0_278 = arith.constant 0 : index
    %c0_279 = arith.constant 0 : index
    %615 = vector.load %arg21[%c0_278, %c0_279] : memref<1x256xf32, #tpu.memory_space<vmem>>, vector<1x256xf32>
    %616 = vector.broadcast %615 : vector<1x256xf32> to vector<8x256xf32>
    %617 = arith.addf %614, %616 : vector<8x256xf32>
    %c0_i32_280 = arith.constant 0 : i32
    %618 = arith.cmpi eq, %c5_i32, %c0_i32_280 : i32
    %619 = arith.select %618, %604, %617 : vector<8x256xf32>
    %cst_281 = arith.constant dense<0xFF800000> : vector<8xf32>
    %620 = vector.multi_reduction <maximumf>, %604, %cst_281 [1] : vector<8x256xf32> to vector<8xf32>
    %621 = vector.shape_cast %620 : vector<8xf32> to vector<8x1xf32>
    %622 = vector.broadcast %621 : vector<8x1xf32> to vector<8x256xf32>
    %623 = arith.subf %604, %622 : vector<8x256xf32>
    %cst_282 = arith.constant dense<0xFF800000> : vector<8xf32>
    %624 = vector.multi_reduction <maximumf>, %619, %cst_282 [1] : vector<8x256xf32> to vector<8xf32>
    %625 = vector.shape_cast %624 : vector<8xf32> to vector<8x1xf32>
    %626 = vector.broadcast %625 : vector<8x1xf32> to vector<8x256xf32>
    %627 = arith.subf %619, %626 : vector<8x256xf32>
    %cst_283 = arith.constant dense<0x7F800000> : vector<8xf32>
    %628 = vector.multi_reduction <minimumf>, %627, %cst_283 [1] : vector<8x256xf32> to vector<8xf32>
    %629 = vector.shape_cast %628 : vector<8xf32> to vector<8x1xf32>
    %cst_284 = arith.constant 0.000000e+00 : f32
    %630 = vector.broadcast %cst_284 : f32 to vector<1x256xf32>
    %631 = arith.cmpf ogt, %580, %630 : vector<1x256xf32>
    %632 = vector.shape_cast %631 : vector<1x256xi1> to vector<1x256xi1>
    %633 = vector.broadcast %632 : vector<1x256xi1> to vector<8x256xi1>
    %634 = vector.shape_cast %629 : vector<8x1xf32> to vector<8x1xf32>
    %635 = vector.broadcast %634 : vector<8x1xf32> to vector<8x256xf32>
    %636 = arith.select %633, %635, %627 : vector<8x256xi1>, vector<8x256xf32>
    %637 = math.exp %623 : vector<8x256xf32>
    %cst_285 = arith.constant dense<0.000000e+00> : vector<8xf32>
    %638 = vector.multi_reduction <add>, %637, %cst_285 [1] : vector<8x256xf32> to vector<8xf32>
    %639 = vector.shape_cast %638 : vector<8xf32> to vector<8x1xf32>
    %640 = vector.broadcast %639 : vector<8x1xf32> to vector<8x256xf32>
    %641 = arith.divf %637, %640 : vector<8x256xf32>
    %642 = math.exp %636 : vector<8x256xf32>
    %cst_286 = arith.constant dense<0.000000e+00> : vector<8xf32>
    %643 = vector.multi_reduction <add>, %642, %cst_286 [1] : vector<8x256xf32> to vector<8xf32>
    %644 = vector.shape_cast %643 : vector<8xf32> to vector<8x1xf32>
    %645 = math.log %644 : vector<8x1xf32>
    %646 = vector.broadcast %645 : vector<8x1xf32> to vector<8x256xf32>
    %647 = arith.subf %636, %646 : vector<8x256xf32>
    %cst_287 = arith.constant dense<0xFF800000> : vector<8xf32>
    %648 = vector.multi_reduction <maximumf>, %641, %cst_287 [1] : vector<8x256xf32> to vector<8xf32>
    %649 = vector.shape_cast %648 : vector<8xf32> to vector<8x1xf32>
    %650 = vector.broadcast %649 : vector<8x1xf32> to vector<8x256xf32>
    %651 = arith.cmpf oeq, %641, %650 : vector<8x256xf32>
    %c256_i32_288 = arith.constant 256 : i32
    %652 = vector.broadcast %c256_i32_288 : i32 to vector<8x256xi32>
    %653 = arith.select %651, %53, %652 : vector<8x256xi1>, vector<8x256xi32>
    %cst_289 = arith.constant dense<2147483647> : vector<8xi32>
    %654 = vector.multi_reduction <minsi>, %653, %cst_289 [1] : vector<8x256xi32> to vector<8xi32>
    %655 = vector.shape_cast %654 : vector<8xi32> to vector<8x1xi32>
    %656 = vector.broadcast %655 : vector<8x1xi32> to vector<8x256xi32>
    %657 = arith.cmpi eq, %53, %656 : vector<8x256xi32>
    %658 = arith.extui %657 : vector<8x256xi1> to vector<8x256xi32>
    %659 = arith.sitofp %658 : vector<8x256xi32> to vector<8x256xf32>
    %660 = arith.truncf %659 : vector<8x256xf32> to vector<8x256xbf16>
    %c0_290 = arith.constant 0 : index
    %c0_291 = arith.constant 0 : index
    %661 = vector.load %arg22[%c0_290, %c0_291] : memref<256x128xbf16, #tpu.memory_space<vmem>>, vector<256x128xbf16>
    %cst_292 = arith.constant dense<0.000000e+00> : vector<8x128xf32>
    %662 = tpu.matmul %660, %661, %cst_292 {dimension_numbers = #tpu.dot_dimension_numbers<[1], [0], [0], [1], [0, 0, 1, 1], [], []>} : vector<8x256xbf16>, vector<256x128xbf16>, vector<8x128xf32> -> vector<8x128xf32>
    %663 = arith.index_cast %c5_i32 : i32 to index
    %c0_293 = arith.constant 0 : index
    %c0_294 = arith.constant 0 : index
    %664 = vector.load %arg35[%663, %c0_293, %c0_294] : memref<6x8x256xf32, #tpu.memory_space<vmem>>, vector<1x8x256xf32>
    %665 = vector.shape_cast %664 : vector<1x8x256xf32> to vector<8x256xf32>
    %666 = vector.shape_cast %641 : vector<8x256xf32> to vector<1x8x256xf32>
    tpu.vector_store %arg35[%663, %c0_293, %c0_294], %666 {strides = array<i32>} : memref<6x8x256xf32, #tpu.memory_space<vmem>>, vector<1x8x256xf32>,
    %667 = arith.index_cast %c5_i32 : i32 to index
    %c0_295 = arith.constant 0 : index
    %c0_296 = arith.constant 0 : index
    %668 = vector.load %arg36[%667, %c0_295, %c0_296] : memref<6x8x256xf32, #tpu.memory_space<vmem>>, vector<1x8x256xf32>
    %669 = vector.shape_cast %668 : vector<1x8x256xf32> to vector<8x256xf32>
    %670 = vector.shape_cast %647 : vector<8x256xf32> to vector<1x8x256xf32>
    tpu.vector_store %arg36[%667, %c0_295, %c0_296], %670 {strides = array<i32>} : memref<6x8x256xf32, #tpu.memory_space<vmem>>, vector<1x8x256xf32>,
    %c220_i32_297 = arith.constant 220 : i32
    %671 = vector.broadcast %c220_i32_297 : i32 to vector<8x1xi32>
    %672 = arith.cmpi eq, %655, %671 : vector<8x1xi32>
    %673 = vector.shape_cast %672 : vector<8x1xi1> to vector<8x1xi1>
    %674 = vector.broadcast %673 : vector<8x1xi1> to vector<8x128xi1>
    %675 = vector.shape_cast %52 : vector<1x128xf32> to vector<1x128xf32>
    %676 = vector.broadcast %675 : vector<1x128xf32> to vector<8x128xf32>
    %677 = arith.select %674, %676, %662 : vector<8x128xi1>, vector<8x128xf32>
    %678 = arith.addf %574, %662 : vector<8x128xf32>
    %679 = arith.addf %575, %662 : vector<8x128xf32>
    %680 = vector.broadcast %58 : vector<8x1xf32> to vector<8x256xf32>
    %681 = arith.mulf %659, %680 : vector<8x256xf32>
    %cst_298 = arith.constant dense<0xFF800000> : vector<256xf32>
    %682 = vector.multi_reduction <maximumf>, %681, %cst_298 [0] : vector<8x256xf32> to vector<256xf32>
    %683 = vector.shape_cast %682 : vector<256xf32> to vector<1x256xf32>
    %684 = arith.maximumf %580, %683 : vector<1x256xf32>
    %685 = arith.addf %581, %677 : vector<8x128xf32>
    %c6_i32 = arith.constant 6 : i32
    %686 = vector.broadcast %51 : vector<1x128xf32> to vector<8x128xf32>
    %687 = arith.addf %685, %686 : vector<8x128xf32>
    %688 = vector.broadcast %52 : vector<1x128xf32> to vector<8x128xf32>
    %689 = arith.addf %687, %688 : vector<8x128xf32>
    %cst_299 = arith.constant 1.250000e-01 : f32
    %690 = vector.broadcast %cst_299 : f32 to vector<8x128xf32>
    %691 = arith.mulf %689, %690 : vector<8x128xf32>
    %692 = arith.truncf %691 : vector<8x128xf32> to vector<8x128xbf16>
    %c0_300 = arith.constant 0 : index
    %c0_301 = arith.constant 0 : index
    %693 = vector.load %arg25[%c0_300, %c0_301] : memref<128x128xbf16, #tpu.memory_space<vmem>>, vector<128x128xbf16>
    %cst_302 = arith.constant dense<0.000000e+00> : vector<8x128xf32>
    %694 = tpu.matmul %692, %693, %cst_302 {dimension_numbers = #tpu.dot_dimension_numbers<[1], [0], [0], [1], [0, 0, 1, 1], [], []>} : vector<8x128xbf16>, vector<128x128xbf16>, vector<8x128xf32> -> vector<8x128xf32>
    %c0_303 = arith.constant 0 : index
    %c0_304 = arith.constant 0 : index
    %695 = vector.load %arg26[%c0_303, %c0_304] : memref<1x128xf32, #tpu.memory_space<vmem>>, vector<1x128xf32>
    %696 = vector.broadcast %695 : vector<1x128xf32> to vector<8x128xf32>
    %697 = arith.addf %694, %696 : vector<8x128xf32>
    %698 = arith.truncf %697 : vector<8x128xf32> to vector<8x128xbf16>
    %c0_305 = arith.constant 0 : index
    %c0_306 = arith.constant 0 : index
    %699 = vector.load %arg27[%c0_305, %c0_306] : memref<128x128xbf16, #tpu.memory_space<vmem>>, vector<128x128xbf16>
    %cst_307 = arith.constant dense<0.000000e+00> : vector<8x128xf32>
    %700 = tpu.matmul %698, %699, %cst_307 {dimension_numbers = #tpu.dot_dimension_numbers<[1], [0], [0], [1], [0, 0, 1, 1], [], []>} : vector<8x128xbf16>, vector<128x128xbf16>, vector<8x128xf32> -> vector<8x128xf32>
    %c0_308 = arith.constant 0 : index
    %c0_309 = arith.constant 0 : index
    %701 = vector.load %arg28[%c0_308, %c0_309] : memref<1x128xf32, #tpu.memory_space<vmem>>, vector<1x128xf32>
    %702 = vector.broadcast %701 : vector<1x128xf32> to vector<8x128xf32>
    %703 = arith.addf %700, %702 : vector<8x128xf32>
    %c0_310 = arith.constant 0 : index
    %c0_311 = arith.constant 0 : index
    %704 = vector.load %arg33[%c0_310, %c0_311] : memref<8x128xf32, #tpu.memory_space<vmem>>, vector<8x128xf32>
    tpu.vector_store %arg33[%c0_310, %c0_311], %703 {strides = array<i32>} : memref<8x128xf32, #tpu.memory_space<vmem>>, vector<8x128xf32>,
    %705 = arith.truncf %703 : vector<8x128xf32> to vector<8x128xbf16>
    %c0_312 = arith.constant 0 : index
    %c0_313 = arith.constant 0 : index
    %706 = vector.load %arg29[%c0_312, %c0_313] : memref<128x256xbf16, #tpu.memory_space<vmem>>, vector<128x256xbf16>
    %cst_314 = arith.constant dense<0.000000e+00> : vector<8x256xf32>
    %707 = tpu.matmul %705, %706, %cst_314 {dimension_numbers = #tpu.dot_dimension_numbers<[1], [0], [0], [1], [0, 0, 1, 1], [], []>} : vector<8x128xbf16>, vector<128x256xbf16>, vector<8x256xf32> -> vector<8x256xf32>
    %cst_315 = arith.constant 0.000000e+00 : f32
    %708 = vector.broadcast %cst_315 : f32 to vector<8x256xf32>
    %709 = arith.maximumf %707, %708 : vector<8x256xf32>
    %710 = arith.truncf %709 : vector<8x256xf32> to vector<8x256xbf16>
    %c0_316 = arith.constant 0 : index
    %c0_317 = arith.constant 0 : index
    %711 = vector.load %arg30[%c0_316, %c0_317] : memref<256x256xbf16, #tpu.memory_space<vmem>>, vector<256x256xbf16>
    %cst_318 = arith.constant dense<0.000000e+00> : vector<8x256xf32>
    %712 = tpu.matmul %710, %711, %cst_318 {dimension_numbers = #tpu.dot_dimension_numbers<[1], [0], [0], [1], [0, 0, 1, 1], [], []>} : vector<8x256xbf16>, vector<256x256xbf16>, vector<8x256xf32> -> vector<8x256xf32>
    %c0_319 = arith.constant 0 : index
    %c0_320 = arith.constant 0 : index
    %713 = vector.load %arg34[%c0_319, %c0_320] : memref<8x256xf32, #tpu.memory_space<vmem>>, vector<8x256xf32>
    tpu.vector_store %arg34[%c0_319, %c0_320], %712 {strides = array<i32>} : memref<8x256xf32, #tpu.memory_space<vmem>>, vector<8x256xf32>,
    return
  }
  func.func @transform_0(%arg0: i32) -> (i32, i32) {
    %c0_i32 = arith.constant 0 : i32
    %c0_i32_0 = arith.constant 0 : i32
    %c0_i32_1 = arith.constant 0 : i32
    return %c0_i32, %c0_i32_0 : i32, i32
  }
  func.func @transform_1(%arg0: i32) -> (i32, i32) {
    %c0_i32 = arith.constant 0 : i32
    %c0_i32_0 = arith.constant 0 : i32
    %c0_i32_1 = arith.constant 0 : i32
    return %c0_i32, %c0_i32_0 : i32, i32
  }
  func.func @transform_2(%arg0: i32) -> (i32, i32) {
    %c0_i32 = arith.constant 0 : i32
    %c0_i32_0 = arith.constant 0 : i32
    %c0_i32_1 = arith.constant 0 : i32
    return %c0_i32, %c0_i32_0 : i32, i32
  }
  func.func @transform_3(%arg0: i32) -> (i32, i32) {
    %c0_i32 = arith.constant 0 : i32
    %c0_i32_0 = arith.constant 0 : i32
    %c0_i32_1 = arith.constant 0 : i32
    return %c0_i32, %c0_i32_0 : i32, i32
  }
  func.func @transform_4(%arg0: i32) -> (i32, i32) {
    %c0_i32 = arith.constant 0 : i32
    %c0_i32_0 = arith.constant 0 : i32
    %c0_i32_1 = arith.constant 0 : i32
    return %c0_i32, %c0_i32_0 : i32, i32
  }
  func.func @transform_5(%arg0: i32) -> (i32, i32) {
    %c0_i32 = arith.constant 0 : i32
    %c0_i32_0 = arith.constant 0 : i32
    %c0_i32_1 = arith.constant 0 : i32
    return %c0_i32, %c0_i32_0 : i32, i32
  }
  func.func @transform_6(%arg0: i32) -> (i32, i32) {
    %c0_i32 = arith.constant 0 : i32
    %c0_i32_0 = arith.constant 0 : i32
    %c0_i32_1 = arith.constant 0 : i32
    return %c0_i32, %c0_i32_0 : i32, i32
  }
  func.func @transform_7(%arg0: i32) -> (i32, i32) {
    %c0_i32 = arith.constant 0 : i32
    %c0_i32_0 = arith.constant 0 : i32
    %c0_i32_1 = arith.constant 0 : i32
    return %c0_i32, %c0_i32_0 : i32, i32
  }
  func.func @transform_8(%arg0: i32) -> (i32, i32) {
    %c0_i32 = arith.constant 0 : i32
    %c0_i32_0 = arith.constant 0 : i32
    %c0_i32_1 = arith.constant 0 : i32
    return %c0_i32, %c0_i32_0 : i32, i32
  }
  func.func @transform_9(%arg0: i32) -> (i32, i32) {
    %c0_i32 = arith.constant 0 : i32
    %c0_i32_0 = arith.constant 0 : i32
    %c0_i32_1 = arith.constant 0 : i32
    return %c0_i32, %c0_i32_0 : i32, i32
  }
  func.func @transform_10(%arg0: i32) -> (i32, i32) {
    %c0_i32 = arith.constant 0 : i32
    %c0_i32_0 = arith.constant 0 : i32
    %c0_i32_1 = arith.constant 0 : i32
    return %c0_i32, %c0_i32_0 : i32, i32
  }
  func.func @transform_11(%arg0: i32) -> (i32, i32) {
    %c0_i32 = arith.constant 0 : i32
    %c0_i32_0 = arith.constant 0 : i32
    %c0_i32_1 = arith.constant 0 : i32
    return %c0_i32, %c0_i32_0 : i32, i32
  }
  func.func @transform_12(%arg0: i32) -> (i32, i32) {
    %c0_i32 = arith.constant 0 : i32
    %c0_i32_0 = arith.constant 0 : i32
    %c0_i32_1 = arith.constant 0 : i32
    return %c0_i32, %c0_i32_0 : i32, i32
  }
  func.func @transform_13(%arg0: i32) -> (i32, i32) {
    %c0_i32 = arith.constant 0 : i32
    %c0_i32_0 = arith.constant 0 : i32
    %c0_i32_1 = arith.constant 0 : i32
    return %c0_i32, %c0_i32_0 : i32, i32
  }
  func.func @transform_14(%arg0: i32) -> (i32, i32) {
    %c0_i32 = arith.constant 0 : i32
    %c0_i32_0 = arith.constant 0 : i32
    %c0_i32_1 = arith.constant 0 : i32
    return %c0_i32, %c0_i32_0 : i32, i32
  }
  func.func @transform_15(%arg0: i32) -> (i32, i32) {
    %c0_i32 = arith.constant 0 : i32
    %c0_i32_0 = arith.constant 0 : i32
    %c0_i32_1 = arith.constant 0 : i32
    return %c0_i32, %c0_i32_0 : i32, i32
  }
  func.func @transform_16(%arg0: i32) -> (i32, i32) {
    %c0_i32 = arith.constant 0 : i32
    %c0_i32_0 = arith.constant 0 : i32
    %c0_i32_1 = arith.constant 0 : i32
    return %c0_i32, %c0_i32_0 : i32, i32
  }
  func.func @transform_17(%arg0: i32) -> (i32, i32) {
    %c0_i32 = arith.constant 0 : i32
    %c0_i32_0 = arith.constant 0 : i32
    %c0_i32_1 = arith.constant 0 : i32
    return %c0_i32, %c0_i32_0 : i32, i32
  }
  func.func @transform_18(%arg0: i32) -> (i32, i32) {
    %c0_i32 = arith.constant 0 : i32
    %c0_i32_0 = arith.constant 0 : i32
    %c0_i32_1 = arith.constant 0 : i32
    return %c0_i32, %c0_i32_0 : i32, i32
  }
  func.func @transform_19(%arg0: i32) -> (i32, i32) {
    %c0_i32 = arith.constant 0 : i32
    %c0_i32_0 = arith.constant 0 : i32
    %c0_i32_1 = arith.constant 0 : i32
    return %c0_i32, %c0_i32_0 : i32, i32
  }
  func.func @transform_20(%arg0: i32) -> (i32, i32) {
    %c0_i32 = arith.constant 0 : i32
    %c0_i32_0 = arith.constant 0 : i32
    %c0_i32_1 = arith.constant 0 : i32
    return %c0_i32, %c0_i32_0 : i32, i32
  }
  func.func @transform_21(%arg0: i32) -> (i32, i32) {
    %c0_i32 = arith.constant 0 : i32
    %c0_i32_0 = arith.constant 0 : i32
    %c0_i32_1 = arith.constant 0 : i32
    return %c0_i32, %c0_i32_0 : i32, i32
  }
  func.func @transform_22(%arg0: i32) -> (i32, i32) {
    %c0_i32 = arith.constant 0 : i32
    %c0_i32_0 = arith.constant 0 : i32
    %c0_i32_1 = arith.constant 0 : i32
    return %c0_i32, %c0_i32_0 : i32, i32
  }
  func.func @transform_23(%arg0: i32) -> (i32, i32) {
    %c0_i32 = arith.constant 0 : i32
    %c0_i32_0 = arith.constant 0 : i32
    %c0_i32_1 = arith.constant 0 : i32
    return %c0_i32, %c0_i32_0 : i32, i32
  }
  func.func @transform_24(%arg0: i32) -> (i32, i32) {
    %c0_i32 = arith.constant 0 : i32
    %c0_i32_0 = arith.constant 0 : i32
    %c0_i32_1 = arith.constant 0 : i32
    return %c0_i32, %c0_i32_0 : i32, i32
  }
  func.func @transform_25(%arg0: i32) -> (i32, i32) {
    %c0_i32 = arith.constant 0 : i32
    %c0_i32_0 = arith.constant 0 : i32
    %c0_i32_1 = arith.constant 0 : i32
    return %c0_i32, %c0_i32_0 : i32, i32
  }
  func.func @transform_26(%arg0: i32) -> (i32, i32) {
    %c0_i32 = arith.constant 0 : i32
    %c0_i32_0 = arith.constant 0 : i32
    %c0_i32_1 = arith.constant 0 : i32
    return %c0_i32, %c0_i32_0 : i32, i32
  }
  func.func @transform_27(%arg0: i32) -> (i32, i32) {
    %c0_i32 = arith.constant 0 : i32
    %c0_i32_0 = arith.constant 0 : i32
    %c0_i32_1 = arith.constant 0 : i32
    return %c0_i32, %c0_i32_0 : i32, i32
  }
  func.func @transform_28(%arg0: i32) -> (i32, i32) {
    %c0_i32 = arith.constant 0 : i32
    %c0_i32_0 = arith.constant 0 : i32
    %c0_i32_1 = arith.constant 0 : i32
    return %c0_i32, %c0_i32_0 : i32, i32
  }
  func.func @transform_29(%arg0: i32) -> (i32, i32) {
    %c0_i32 = arith.constant 0 : i32
    %c0_i32_0 = arith.constant 0 : i32
    %c0_i32_1 = arith.constant 0 : i32
    return %c0_i32, %c0_i32_0 : i32, i32
  }
  func.func @transform_30(%arg0: i32) -> (i32, i32) {
    %c0_i32 = arith.constant 0 : i32
    %c0_i32_0 = arith.constant 0 : i32
    %c0_i32_1 = arith.constant 0 : i32
    return %c0_i32, %c0_i32_0 : i32, i32
  }
  func.func @transform_31(%arg0: i32) -> (i32, i32) {
    %c0_i32 = arith.constant 0 : i32
    %c0_i32_0 = arith.constant 0 : i32
    %c0_i32_1 = arith.constant 0 : i32
    return %c0_i32, %c0_i32_0 : i32, i32
  }
  func.func @transform_32(%arg0: i32) -> (i32, i32) {
    %c0_i32 = arith.constant 0 : i32
    %c0_i32_0 = arith.constant 0 : i32
    %c0_i32_1 = arith.constant 0 : i32
    return %c0_i32, %c0_i32_0 : i32, i32
  }
  func.func @transform_33(%arg0: i32) -> (i32, i32) {
    %c0_i32 = arith.constant 0 : i32
    %c0_i32_0 = arith.constant 0 : i32
    %c0_i32_1 = arith.constant 0 : i32
    return %c0_i32, %c0_i32_0 : i32, i32
  }
  func.func @transform_34(%arg0: i32) -> (i32, i32, i32) {
    %c0_i32 = arith.constant 0 : i32
    %c0_i32_0 = arith.constant 0 : i32
    %c0_i32_1 = arith.constant 0 : i32
    %c0_i32_2 = arith.constant 0 : i32
    return %c0_i32, %c0_i32_0, %c0_i32_1 : i32, i32, i32
  }
  func.func @transform_35(%arg0: i32) -> (i32, i32, i32) {
    %c0_i32 = arith.constant 0 : i32
    %c0_i32_0 = arith.constant 0 : i32
    %c0_i32_1 = arith.constant 0 : i32
    %c0_i32_2 = arith.constant 0 : i32
    return %c0_i32, %c0_i32_0, %c0_i32_1 : i32, i32, i32
  }
}

</mosaic_0001>

<llo_original>
// kernel: simsiam_vlm_forward.1
$region0: #{simsiam_vlm_forward.1}
  #allocation0 [shape = 'u32[]', space=smem, size = 0x4, offset = 0x4, fixed_abs, tag = 'smem constant byte address 0x4 - core index']
  #allocation1 [shape = 'u32[72,128]{1,0:T(1,128)}', space=vmem, size = 0x9000, scoped, tag = 'internal scratch']
  %s0 = inlined_call_operand.smem [shape: u32[36], index: -1, kind: input, shape index: {}]
  %s1 = sld [smem:[%s0]]
  %s2 = scalar_lea.smem %s0, 1
  %s3 = sld [smem:[%s2]]
  %s4 = scalar_lea.smem %s0, 2
  %s5 = sld [smem:[%s4]]
  %s6 = scalar_lea.smem %s0, 3
  %s7 = sld [smem:[%s6]]
  %s8 = scalar_lea.smem %s0, 4
  %s9 = sld [smem:[%s8]]
  %s10 = scalar_lea.smem %s0, 5
  %s11 = sld [smem:[%s10]]
  %s12 = scalar_lea.smem %s0, 6
  %s13 = sld [smem:[%s12]]
  %s14 = scalar_lea.smem %s0, 7
  %s15 = sld [smem:[%s14]]
  %s16 = scalar_lea.smem %s0, 8
  %s17 = sld [smem:[%s16]]
  %s18 = scalar_lea.smem %s0, 9
  %s19 = sld [smem:[%s18]]
  %s20 = scalar_lea.smem %s0, 10
  %s21 = sld [smem:[%s20]]
  %s22 = scalar_lea.smem %s0, 11
  %s23 = sld [smem:[%s22]]
  %s24 = scalar_lea.smem %s0, 12
  %s25 = sld [smem:[%s24]]
  %s26 = scalar_lea.smem %s0, 13
  %s27 = sld [smem:[%s26]]
  %s28 = scalar_lea.smem %s0, 14
  %s29 = sld [smem:[%s28]]
  %s30 = scalar_lea.smem %s0, 15
  %s31 = sld [smem:[%s30]]
  %s32 = scalar_lea.smem %s0, 16
  %s33 = sld [smem:[%s32]]
  %s34 = scalar_lea.smem %s0, 17
  %s35 = sld [smem:[%s34]]
  %s36 = scalar_lea.smem %s0, 18
  %s37 = sld [smem:[%s36]]
  %s38 = scalar_lea.smem %s0, 19
  %s39 = sld [smem:[%s38]]
  %s40 = scalar_lea.smem %s0, 20
  %s41 = sld [smem:[%s40]]
  %s42 = scalar_lea.smem %s0, 21
  %s43 = sld [smem:[%s42]]
  %s44 = scalar_lea.smem %s0, 22
  %s45 = sld [smem:[%s44]]
  %s46 = scalar_lea.smem %s0, 23
  %s47 = sld [smem:[%s46]]
  %s48 = scalar_lea.smem %s0, 24
  %s49 = sld [smem:[%s48]]
  %s50 = scalar_lea.smem %s0, 25
  %s51 = sld [smem:[%s50]]
  %s52 = scalar_lea.smem %s0, 26
  %s53 = sld [smem:[%s52]]
  %s54 = scalar_lea.smem %s0, 27
  %s55 = sld [smem:[%s54]]
  %s56 = scalar_lea.smem %s0, 28
  %s57 = sld [smem:[%s56]]
  %s58 = scalar_lea.smem %s0, 29
  %s59 = sld [smem:[%s58]]
  %s60 = scalar_lea.smem %s0, 30
  %s61 = sld [smem:[%s60]]
  %s62 = scalar_lea.smem %s0, 31
  %s63 = sld [smem:[%s62]]
  %s64 = scalar_lea.smem %s0, 32
  %s65 = sld [smem:[%s64]]
  %s66 = scalar_lea.smem %s0, 33
  %s67 = sld [smem:[%s66]]
  %s68 = scalar_lea.smem %s0, 34
  %s69 = sld [smem:[%s68]]
  %s70 = scalar_lea.smem %s0, 35
  %s71 = sld [smem:[%s70]]
  %72 = xla_tuple %s61, %s63, %s65, %s67, %s69, %s71
  %s73 = sld [smem:[#allocation0]]
  $region170: #{simsiam_vlm_forward.1} parent=0
    _
  %s75 = ssub.s32 1, %s73
  %s76 = scalar_select 0, %s75, %s73
  // Predicated region
  $region2: #{simsiam_vlm_forward.1} parent=0 // pred_check
    _
  $region3: #{simsiam_vlm_forward.1} parent=0 // pred_check_branch
    %78 = sbr.rel (0) target = $region5
  $region4: #{simsiam_vlm_forward.1} parent=0 // pred_region
    _
  $region5: #{simsiam_vlm_forward.1} parent=0 // pred_fallthru
    _
  // Predicated region
  $region6: #{simsiam_vlm_forward.1} parent=0 // pred_check
    _
  $region7: #{simsiam_vlm_forward.1} parent=0 // pred_check_branch
    %80 = sbr.rel (0) target = $region9
  $region8: #{simsiam_vlm_forward.1} parent=0 // pred_region
    _
  $region9: #{simsiam_vlm_forward.1} parent=0 // pred_fallthru
    _
  // Predicated region
  $region10: #{simsiam_vlm_forward.1} parent=0 // pred_check
    _
  $region11: #{simsiam_vlm_forward.1} parent=0 // pred_check_branch
    %82 = sbr.rel (0) target = $region13
  $region12: #{simsiam_vlm_forward.1} parent=0 // pred_region
    _
  $region13: #{simsiam_vlm_forward.1} parent=0 // pred_fallthru
    _
  // Predicated region
  $region14: #{simsiam_vlm_forward.1} parent=0 // pred_check
    _
  $region15: #{simsiam_vlm_forward.1} parent=0 // pred_check_branch
    %84 = sbr.rel (0) target = $region17
  $region16: #{simsiam_vlm_forward.1} parent=0 // pred_region
    _
  $region17: #{simsiam_vlm_forward.1} parent=0 // pred_fallthru
    _
  // Predicated region
  $region18: #{simsiam_vlm_forward.1} parent=0 // pred_check
    _
  $region19: #{simsiam_vlm_forward.1} parent=0 // pred_check_branch
    %86 = sbr.rel (0) target = $region21
  $region20: #{simsiam_vlm_forward.1} parent=0 // pred_region
    _
  $region21: #{simsiam_vlm_forward.1} parent=0 // pred_fallthru
    _
  // Predicated region
  $region22: #{simsiam_vlm_forward.1} parent=0 // pred_check
    _
  $region23: #{simsiam_vlm_forward.1} parent=0 // pred_check_branch
    %88 = sbr.rel (0) target = $region25
  $region24: #{simsiam_vlm_forward.1} parent=0 // pred_region
    _
  $region25: #{simsiam_vlm_forward.1} parent=0 // pred_fallthru
    _
  // Predicated region
  $region26: #{simsiam_vlm_forward.1} parent=0 // pred_check
    _
  $region27: #{simsiam_vlm_forward.1} parent=0 // pred_check_branch
    %90 = sbr.rel (0) target = $region29
  $region28: #{simsiam_vlm_forward.1} parent=0 // pred_region
    _
  $region29: #{simsiam_vlm_forward.1} parent=0 // pred_fallthru
    _
  // Predicated region
  $region30: #{simsiam_vlm_forward.1} parent=0 // pred_check
    _
  $region31: #{simsiam_vlm_forward.1} parent=0 // pred_check_branch
    %92 = sbr.rel (0) target = $region33
  $region32: #{simsiam_vlm_forward.1} parent=0 // pred_region
    _
  $region33: #{simsiam_vlm_forward.1} parent=0 // pred_fallthru
    _
  // Predicated region
  $region34: #{simsiam_vlm_forward.1} parent=0 // pred_check
    _
  $region35: #{simsiam_vlm_forward.1} parent=0 // pred_check_branch
    %94 = sbr.rel (0) target = $region37
  $region36: #{simsiam_vlm_forward.1} parent=0 // pred_region
    _
  $region37: #{simsiam_vlm_forward.1} parent=0 // pred_fallthru
    _
  // Predicated region
  $region38: #{simsiam_vlm_forward.1} parent=0 // pred_check
    _
  $region39: #{simsiam_vlm_forward.1} parent=0 // pred_check_branch
    %96 = sbr.rel (0) target = $region41
  $region40: #{simsiam_vlm_forward.1} parent=0 // pred_region
    _
  $region41: #{simsiam_vlm_forward.1} parent=0 // pred_fallthru
    _
  // Predicated region
  $region42: #{simsiam_vlm_forward.1} parent=0 // pred_check
    _
  $region43: #{simsiam_vlm_forward.1} parent=0 // pred_check_branch
    %98 = sbr.rel (0) target = $region45
  $region44: #{simsiam_vlm_forward.1} parent=0 // pred_region
    _
  $region45: #{simsiam_vlm_forward.1} parent=0 // pred_fallthru
    _
  // Predicated region
  $region46: #{simsiam_vlm_forward.1} parent=0 // pred_check
    _
  $region47: #{simsiam_vlm_forward.1} parent=0 // pred_check_branch
    %100 = sbr.rel (0) target = $region49
  $region48: #{simsiam_vlm_forward.1} parent=0 // pred_region
    _
  $region49: #{simsiam_vlm_forward.1} parent=0 // pred_fallthru
    _
  // Predicated region
  $region50: #{simsiam_vlm_forward.1} parent=0 // pred_check
    _
  $region51: #{simsiam_vlm_forward.1} parent=0 // pred_check_branch
    %102 = sbr.rel (0) target = $region53
  $region52: #{simsiam_vlm_forward.1} parent=0 // pred_region
    _
  $region53: #{simsiam_vlm_forward.1} parent=0 // pred_fallthru
    _
  // Predicated region
  $region54: #{simsiam_vlm_forward.1} parent=0 // pred_check
    _
  $region55: #{simsiam_vlm_forward.1} parent=0 // pred_check_branch
    %104 = sbr.rel (0) target = $region57
  $region56: #{simsiam_vlm_forward.1} parent=0 // pred_region
    _
  $region57: #{simsiam_vlm_forward.1} parent=0 // pred_fallthru
    _
  // Predicated region
  $region58: #{simsiam_vlm_forward.1} parent=0 // pred_check
    _
  $region59: #{simsiam_vlm_forward.1} parent=0 // pred_check_branch
    %106 = sbr.rel (0) target = $region61
  $region60: #{simsiam_vlm_forward.1} parent=0 // pred_region
    _
  $region61: #{simsiam_vlm_forward.1} parent=0 // pred_fallthru
    _
  // Predicated region
  $region62: #{simsiam_vlm_forward.1} parent=0 // pred_check
    _
  $region63: #{simsiam_vlm_forward.1} parent=0 // pred_check_branch
    %108 = sbr.rel (0) target = $region65
  $region64: #{simsiam_vlm_forward.1} parent=0 // pred_region
    _
  $region65: #{simsiam_vlm_forward.1} parent=0 // pred_fallthru
    _
  // Predicated region
  $region66: #{simsiam_vlm_forward.1} parent=0 // pred_check
    _
  $region67: #{simsiam_vlm_forward.1} parent=0 // pred_check_branch
    %110 = sbr.rel (0) target = $region69
  $region68: #{simsiam_vlm_forward.1} parent=0 // pred_region
    _
  $region69: #{simsiam_vlm_forward.1} parent=0 // pred_fallthru
    _
  // Predicated region
  $region70: #{simsiam_vlm_forward.1} parent=0 // pred_check
    _
  $region71: #{simsiam_vlm_forward.1} parent=0 // pred_check_branch
    %112 = sbr.rel (0) target = $region73
  $region72: #{simsiam_vlm_forward.1} parent=0 // pred_region
    _
  $region73: #{simsiam_vlm_forward.1} parent=0 // pred_fallthru
    _
  // Predicated region
  $region74: #{simsiam_vlm_forward.1} parent=0 // pred_check
    _
  $region75: #{simsiam_vlm_forward.1} parent=0 // pred_check_branch
    %114 = sbr.rel (0) target = $region77
  $region76: #{simsiam_vlm_forward.1} parent=0 // pred_region
    _
  $region77: #{simsiam_vlm_forward.1} parent=0 // pred_fallthru
    _
  // Predicated region
  $region78: #{simsiam_vlm_forward.1} parent=0 // pred_check
    _
  $region79: #{simsiam_vlm_forward.1} parent=0 // pred_check_branch
    %116 = sbr.rel (0) target = $region81
  $region80: #{simsiam_vlm_forward.1} parent=0 // pred_region
    _
  $region81: #{simsiam_vlm_forward.1} parent=0 // pred_fallthru
    _
  // Predicated region
  $region82: #{simsiam_vlm_forward.1} parent=0 // pred_check
    _
  $region83: #{simsiam_vlm_forward.1} parent=0 // pred_check_branch
    %118 = sbr.rel (0) target = $region85
  $region84: #{simsiam_vlm_forward.1} parent=0 // pred_region
    _
  $region85: #{simsiam_vlm_forward.1} parent=0 // pred_fallthru
    _
  // Predicated region
  $region86: #{simsiam_vlm_forward.1} parent=0 // pred_check
    _
  $region87: #{simsiam_vlm_forward.1} parent=0 // pred_check_branch
    %120 = sbr.rel (0) target = $region89
  $region88: #{simsiam_vlm_forward.1} parent=0 // pred_region
    _
  $region89: #{simsiam_vlm_forward.1} parent=0 // pred_fallthru
    _
  // Predicated region
  $region90: #{simsiam_vlm_forward.1} parent=0 // pred_check
    _
  $region91: #{simsiam_vlm_forward.1} parent=0 // pred_check_branch
    %122 = sbr.rel (0) target = $region93
  $region92: #{simsiam_vlm_forward.1} parent=0 // pred_region
    _
  $region93: #{simsiam_vlm_forward.1} parent=0 // pred_fallthru
    _
  // Predicated region
  $region94: #{simsiam_vlm_forward.1} parent=0 // pred_check
    _
  $region95: #{simsiam_vlm_forward.1} parent=0 // pred_check_branch
    %124 = sbr.rel (0) target = $region97
  $region96: #{simsiam_vlm_forward.1} parent=0 // pred_region
    _
  $region97: #{simsiam_vlm_forward.1} parent=0 // pred_fallthru
    _
  // Predicated region
  $region98: #{simsiam_vlm_forward.1} parent=0 // pred_check
    _
  $region99: #{simsiam_vlm_forward.1} parent=0 // pred_check_branch
    %126 = sbr.rel (0) target = $region101
  $region100: #{simsiam_vlm_forward.1} parent=0 // pred_region
    _
  $region101: #{simsiam_vlm_forward.1} parent=0 // pred_fallthru
    _
  // Predicated region
  $region102: #{simsiam_vlm_forward.1} parent=0 // pred_check
    _
  $region103: #{simsiam_vlm_forward.1} parent=0 // pred_check_branch
    %128 = sbr.rel (0) target = $region105
  $region104: #{simsiam_vlm_forward.1} parent=0 // pred_region
    _
  $region105: #{simsiam_vlm_forward.1} parent=0 // pred_fallthru
    _
  // Predicated region
  $region106: #{simsiam_vlm_forward.1} parent=0 // pred_check
    _
  $region107: #{simsiam_vlm_forward.1} parent=0 // pred_check_branch
    %130 = sbr.rel (0) target = $region109
  $region108: #{simsiam_vlm_forward.1} parent=0 // pred_region
    _
  $region109: #{simsiam_vlm_forward.1} parent=0 // pred_fallthru
    _
  // Predicated region
  $region110: #{simsiam_vlm_forward.1} parent=0 // pred_check
    _
  $region111: #{simsiam_vlm_forward.1} parent=0 // pred_check_branch
    %132 = sbr.rel (0) target = $region113
  $region112: #{simsiam_vlm_forward.1} parent=0 // pred_region
    _
  $region113: #{simsiam_vlm_forward.1} parent=0 // pred_fallthru
    _
  // Predicated region
  $region114: #{simsiam_vlm_forward.1} parent=0 // pred_check
    _
  $region115: #{simsiam_vlm_forward.1} parent=0 // pred_check_branch
    %134 = sbr.rel (0) target = $region117
  $region116: #{simsiam_vlm_forward.1} parent=0 // pred_region
    _
  $region117: #{simsiam_vlm_forward.1} parent=0 // pred_fallthru
    _
  // Predicated region
  $region118: #{simsiam_vlm_forward.1} parent=0 // pred_check
    _
  $region119: #{simsiam_vlm_forward.1} parent=0 // pred_check_branch
    %136 = sbr.rel (0) target = $region121
  $region120: #{simsiam_vlm_forward.1} parent=0 // pred_region
    _
  $region121: #{simsiam_vlm_forward.1} parent=0 // pred_fallthru
    _
  %v137 = vld [vmem:[%s1] sm:$0xff]
  %v138 = vld [vmem:[%s1 + $0x8] sm:$0xff]
  %v139 = vld [vmem:[%s1 + $0x10] sm:$0xff]
  %v140 = vld [vmem:[%s1 + $0x18] sm:$0xff]
  %v141 = vld [vmem:[%s1 + $0x20] sm:$0xff]
  %v142 = vld [vmem:[%s1 + $0x28] sm:$0xff]
  %v143 = vpack.c.bf16 %v137, %v137
  %v144 = vpack.c.bf16 %v138, %v138
  %v145 = vpack.c.bf16 %v139, %v139
  %v146 = vpack.c.bf16 %v140, %v140
  %v147 = vpack.c.bf16 %v141, %v141
  %v148 = vpack.c.bf16 %v142, %v142
  %v149 = vld [vmem:[%s3] sm:$0xf]
  %v150 = vld [vmem:[%s3 + $0x4] sm:$0xf]
  %v151 = vld [vmem:[%s3 + $0x8] sm:$0xf]
  %v152 = vld [vmem:[%s3 + $0xc] sm:$0xf]
  %v153 = vld [vmem:[%s3 + $0x10] sm:$0xf]
  %v154 = vld [vmem:[%s3 + $0x14] sm:$0xf]
  %v155 = vld [vmem:[%s3 + $0x18] sm:$0xf]
  %v156 = vld [vmem:[%s3 + $0x1c] sm:$0xf]
  %v157 = vld [vmem:[%s3 + $0x20] sm:$0xf]
  %v158 = vld [vmem:[%s3 + $0x24] sm:$0xf]
  %v159 = vld [vmem:[%s3 + $0x28] sm:$0xf]
  %v160 = vld [vmem:[%s3 + $0x2c] sm:$0xf]
  %v161 = vld [vmem:[%s3 + $0x30] sm:$0xf]
  %v162 = vld [vmem:[%s3 + $0x34] sm:$0xf]
  %v163 = vld [vmem:[%s3 + $0x38] sm:$0xf]
  %v164 = vld [vmem:[%s3 + $0x3c] sm:$0xf]
  %v165 = vld [vmem:[%s3 + $0x40] sm:$0xf]
  %v166 = vld [vmem:[%s3 + $0x44] sm:$0xf]
  %v167 = vld [vmem:[%s3 + $0x48] sm:$0xf]
  %v168 = vld [vmem:[%s3 + $0x4c] sm:$0xf]
  %v169 = vld [vmem:[%s3 + $0x50] sm:$0xf]
  %v170 = vld [vmem:[%s3 + $0x54] sm:$0xf]
  %v171 = vld [vmem:[%s3 + $0x58] sm:$0xf]
  %v172 = vld [vmem:[%s3 + $0x5c] sm:$0xf]
  %v173 = vld [vmem:[%s3 + $0x60] sm:$0xf]
  %v174 = vld [vmem:[%s3 + $0x64] sm:$0xf]
  %v175 = vld [vmem:[%s3 + $0x68] sm:$0xf]
  %v176 = vld [vmem:[%s3 + $0x6c] sm:$0xf]
  %v177 = vld [vmem:[%s3 + $0x70] sm:$0xf]
  %v178 = vld [vmem:[%s3 + $0x74] sm:$0xf]
  %v179 = vld [vmem:[%s3 + $0x78] sm:$0xf]
  %v180 = vld [vmem:[%s3 + $0x7c] sm:$0xf]
  %v181 = vld [vmem:[%s3 + $0x80] sm:$0xf]
  %v182 = vld [vmem:[%s3 + $0x84] sm:$0xf]
  %v183 = vld [vmem:[%s3 + $0x88] sm:$0xf]
  %v184 = vld [vmem:[%s3 + $0x8c] sm:$0xf]
  %v185 = vld [vmem:[%s3 + $0x90] sm:$0xf]
  %v186 = vld [vmem:[%s3 + $0x94] sm:$0xf]
  %v187 = vld [vmem:[%s3 + $0x98] sm:$0xf]
  %v188 = vld [vmem:[%s3 + $0x9c] sm:$0xf]
  %v189 = vld [vmem:[%s3 + $0xa0] sm:$0xf]
  %v190 = vld [vmem:[%s3 + $0xa4] sm:$0xf]
  %v191 = vld [vmem:[%s3 + $0xa8] sm:$0xf]
  %v192 = vld [vmem:[%s3 + $0xac] sm:$0xf]
  %v193 = vld [vmem:[%s3 + $0xb0] sm:$0xf]
  %v194 = vld [vmem:[%s3 + $0xb4] sm:$0xf]
  %v195 = vld [vmem:[%s3 + $0xb8] sm:$0xf]
  %v196 = vld [vmem:[%s3 + $0xbc] sm:$0xf]
  %v197 = vld [vmem:[%s3 + $0xc0] sm:$0xf]
  %v198 = vld [vmem:[%s3 + $0xc4] sm:$0xf]
  %v199 = vld [vmem:[%s3 + $0xc8] sm:$0xf]
  %v200 = vld [vmem:[%s3 + $0xcc] sm:$0xf]
  %v201 = vld [vmem:[%s3 + $0xd0] sm:$0xf]
  %v202 = vld [vmem:[%s3 + $0xd4] sm:$0xf]
  %v203 = vld [vmem:[%s3 + $0xd8] sm:$0xf]
  %v204 = vld [vmem:[%s3 + $0xdc] sm:$0xf]
  %v205 = vld [vmem:[%s3 + $0xe0] sm:$0xf]
  %v206 = vld [vmem:[%s3 + $0xe4] sm:$0xf]
  %v207 = vld [vmem:[%s3 + $0xe8] sm:$0xf]
  %v208 = vld [vmem:[%s3 + $0xec] sm:$0xf]
  %v209 = vld [vmem:[%s3 + $0xf0] sm:$0xf]
  %v210 = vld [vmem:[%s3 + $0xf4] sm:$0xf]
  %v211 = vld [vmem:[%s3 + $0xf8] sm:$0xf]
  %v212 = vld [vmem:[%s3 + $0xfc] sm:$0xf]
  %v213 = vld [vmem:[%s3 + $0x100] sm:$0xf]
  %v214 = vld [vmem:[%s3 + $0x104] sm:$0xf]
  %v215 = vld [vmem:[%s3 + $0x108] sm:$0xf]
  %v216 = vld [vmem:[%s3 + $0x10c] sm:$0xf]
  %v217 = vld [vmem:[%s3 + $0x110] sm:$0xf]
  %v218 = vld [vmem:[%s3 + $0x114] sm:$0xf]
  %v219 = vld [vmem:[%s3 + $0x118] sm:$0xf]
  %v220 = vld [vmem:[%s3 + $0x11c] sm:$0xf]
  %v221 = vld [vmem:[%s3 + $0x120] sm:$0xf]
  %v222 = vld [vmem:[%s3 + $0x124] sm:$0xf]
  %v223 = vld [vmem:[%s3 + $0x128] sm:$0xf]
  %v224 = vld [vmem:[%s3 + $0x12c] sm:$0xf]
  %v225 = vld [vmem:[%s3 + $0x130] sm:$0xf]
  %v226 = vld [vmem:[%s3 + $0x134] sm:$0xf]
  %v227 = vld [vmem:[%s3 + $0x138] sm:$0xf]
  %v228 = vld [vmem:[%s3 + $0x13c] sm:$0xf]
  %v229 = vld [vmem:[%s3 + $0x140] sm:$0xf]
  %v230 = vld [vmem:[%s3 + $0x144] sm:$0xf]
  %v231 = vld [vmem:[%s3 + $0x148] sm:$0xf]
  %v232 = vld [vmem:[%s3 + $0x14c] sm:$0xf]
  %v233 = vld [vmem:[%s3 + $0x150] sm:$0xf]
  %v234 = vld [vmem:[%s3 + $0x154] sm:$0xf]
  %v235 = vld [vmem:[%s3 + $0x158] sm:$0xf]
  %v236 = vld [vmem:[%s3 + $0x15c] sm:$0xf]
  %v237 = vld [vmem:[%s3 + $0x160] sm:$0xf]
  %v238 = vld [vmem:[%s3 + $0x164] sm:$0xf]
  %v239 = vld [vmem:[%s3 + $0x168] sm:$0xf]
  %v240 = vld [vmem:[%s3 + $0x16c] sm:$0xf]
  %v241 = vld [vmem:[%s3 + $0x170] sm:$0xf]
  %v242 = vld [vmem:[%s3 + $0x174] sm:$0xf]
  %v243 = vld [vmem:[%s3 + $0x178] sm:$0xf]
  %v244 = vld [vmem:[%s3 + $0x17c] sm:$0xf]
  %v245 = vld [vmem:[%s5] sm:$0x1]
  %v247 = vperm.slane %v245, 0
  %v345 = vunpack.c.l.b16 %v149
  %v346 = vunpack.c.l.b16 %v150
  %v347 = vunpack.c.l.b16 %v151
  %v348 = vunpack.c.l.b16 %v152
  %v349 = vunpack.c.l.b16 %v153
  %v350 = vunpack.c.l.b16 %v154
  %v351 = vunpack.c.l.b16 %v155
  %v352 = vunpack.c.l.b16 %v156
  %v353 = vunpack.c.l.b16 %v157
  %v354 = vunpack.c.l.b16 %v158
  %v355 = vunpack.c.l.b16 %v159
  %v356 = vunpack.c.l.b16 %v160
  %v357 = vunpack.c.l.b16 %v161
  %v358 = vunpack.c.l.b16 %v162
  %v359 = vunpack.c.l.b16 %v163
  %v360 = vunpack.c.l.b16 %v164
  %v361 = vunpack.c.l.b16 %v165
  %v362 = vunpack.c.l.b16 %v166
  %v363 = vunpack.c.l.b16 %v167
  %v364 = vunpack.c.l.b16 %v168
  %v365 = vunpack.c.l.b16 %v169
  %v366 = vunpack.c.l.b16 %v170
  %v367 = vunpack.c.l.b16 %v171
  %v368 = vunpack.c.l.b16 %v172
  %v369 = vunpack.c.l.b16 %v173
  %v370 = vunpack.c.l.b16 %v174
  %v371 = vunpack.c.l.b16 %v175
  %v372 = vunpack.c.l.b16 %v176
  %v373 = vunpack.c.l.b16 %v177
  %v374 = vunpack.c.l.b16 %v178
  %v375 = vunpack.c.l.b16 %v179
  %v376 = vunpack.c.l.b16 %v180
  %v377 = vunpack.c.l.b16 %v181
  %v378 = vunpack.c.l.b16 %v182
  %v379 = vunpack.c.l.b16 %v183
  %v380 = vunpack.c.l.b16 %v184
  %v381 = vunpack.c.l.b16 %v185
  %v382 = vunpack.c.l.b16 %v186
  %v383 = vunpack.c.l.b16 %v187
  %v384 = vunpack.c.l.b16 %v188
  %v385 = vunpack.c.l.b16 %v189
  %v386 = vunpack.c.l.b16 %v190
  %v387 = vunpack.c.l.b16 %v191
  %v388 = vunpack.c.l.b16 %v192
  %v389 = vunpack.c.l.b16 %v193
  %v390 = vunpack.c.l.b16 %v194
  %v391 = vunpack.c.l.b16 %v195
  %v392 = vunpack.c.l.b16 %v196
  %v393 = vunpack.c.l.b16 %v197
  %v394 = vunpack.c.l.b16 %v198
  %v395 = vunpack.c.l.b16 %v199
  %v396 = vunpack.c.l.b16 %v200
  %v397 = vunpack.c.l.b16 %v201
  %v398 = vunpack.c.l.b16 %v202
  %v399 = vunpack.c.l.b16 %v203
  %v400 = vunpack.c.l.b16 %v204
  %v401 = vunpack.c.l.b16 %v205
  %v402 = vunpack.c.l.b16 %v206
  %v403 = vunpack.c.l.b16 %v207
  %v404 = vunpack.c.l.b16 %v208
  %v405 = vunpack.c.l.b16 %v209
  %v406 = vunpack.c.l.b16 %v210
  %v407 = vunpack.c.l.b16 %v211
  %v408 = vunpack.c.l.b16 %v212
  %v409 = vunpack.c.l.b16 %v213
  %v410 = vunpack.c.l.b16 %v214
  %v411 = vunpack.c.l.b16 %v215
  %v412 = vunpack.c.l.b16 %v216
  %v413 = vunpack.c.l.b16 %v217
  %v414 = vunpack.c.l.b16 %v218
  %v415 = vunpack.c.l.b16 %v219
  %v416 = vunpack.c.l.b16 %v220
  %v417 = vunpack.c.l.b16 %v221
  %v418 = vunpack.c.l.b16 %v222
  %v419 = vunpack.c.l.b16 %v223
  %v420 = vunpack.c.l.b16 %v224
  %v421 = vunpack.c.l.b16 %v225
  %v422 = vunpack.c.l.b16 %v226
  %v423 = vunpack.c.l.b16 %v227
  %v424 = vunpack.c.l.b16 %v228
  %v425 = vunpack.c.l.b16 %v229
  %v426 = vunpack.c.l.b16 %v230
  %v427 = vunpack.c.l.b16 %v231
  %v428 = vunpack.c.l.b16 %v232
  %v429 = vunpack.c.l.b16 %v233
  %v430 = vunpack.c.l.b16 %v234
  %v431 = vunpack.c.l.b16 %v235
  %v432 = vunpack.c.l.b16 %v236
  %v433 = vunpack.c.l.b16 %v237
  %v434 = vunpack.c.l.b16 %v238
  %v435 = vunpack.c.l.b16 %v239
  %v436 = vunpack.c.l.b16 %v240
  %v437 = vunpack.c.l.b16 %v241
  %v438 = vunpack.c.l.b16 %v242
  %v439 = vunpack.c.l.b16 %v243
  %v440 = vunpack.c.l.b16 %v244
  %v441 = vpack.c.b16 %v346, %v345
  %v442 = vpack.c.b16 %v348, %v347
  %v443 = vpack.c.b16 %v350, %v349
  %v444 = vpack.c.b16 %v352, %v351
  %v445 = vpack.c.b16 %v354, %v353
  %v446 = vpack.c.b16 %v356, %v355
  %v447 = vpack.c.b16 %v358, %v357
  %v448 = vpack.c.b16 %v360, %v359
  %v449 = vpack.c.b16 %v362, %v361
  %v450 = vpack.c.b16 %v364, %v363
  %v451 = vpack.c.b16 %v366, %v365
  %v452 = vpack.c.b16 %v368, %v367
  %v453 = vpack.c.b16 %v370, %v369
  %v454 = vpack.c.b16 %v372, %v371
  %v455 = vpack.c.b16 %v374, %v373
  %v456 = vpack.c.b16 %v376, %v375
  %v457 = vpack.c.b16 %v378, %v377
  %v458 = vpack.c.b16 %v380, %v379
  %v459 = vpack.c.b16 %v382, %v381
  %v460 = vpack.c.b16 %v384, %v383
  %v461 = vpack.c.b16 %v386, %v385
  %v462 = vpack.c.b16 %v388, %v387
  %v463 = vpack.c.b16 %v390, %v389
  %v464 = vpack.c.b16 %v392, %v391
  %v465 = vpack.c.b16 %v394, %v393
  %v466 = vpack.c.b16 %v396, %v395
  %v467 = vpack.c.b16 %v398, %v397
  %v468 = vpack.c.b16 %v400, %v399
  %v469 = vpack.c.b16 %v402, %v401
  %v470 = vpack.c.b16 %v404, %v403
  %v471 = vpack.c.b16 %v406, %v405
  %v472 = vpack.c.b16 %v408, %v407
  %v473 = vpack.c.b16 %v410, %v409
  %v474 = vpack.c.b16 %v412, %v411
  %v475 = vpack.c.b16 %v414, %v413
  %v476 = vpack.c.b16 %v416, %v415
  %v477 = vpack.c.b16 %v418, %v417
  %v478 = vpack.c.b16 %v420, %v419
  %v479 = vpack.c.b16 %v422, %v421
  %v480 = vpack.c.b16 %v424, %v423
  %v481 = vpack.c.b16 %v426, %v425
  %v482 = vpack.c.b16 %v428, %v427
  %v483 = vpack.c.b16 %v430, %v429
  %v484 = vpack.c.b16 %v432, %v431
  %v485 = vpack.c.b16 %v434, %v433
  %v486 = vpack.c.b16 %v436, %v435
  %v487 = vpack.c.b16 %v438, %v437
  %v488 = vpack.c.b16 %v440, %v439
  %537 = vmatpush.bf16.msra.mxu0 %v448
  %538 = vmatpush.bf16.msra.mxu0 %v447
  %539 = vmatpush.bf16.msra.mxu0 %v446
  %540 = vmatpush.bf16.msra.mxu0 %v445
  %541 = vmatpush.bf16.msra.mxu0 %v444
  %542 = vmatpush.bf16.msra.mxu0 %v443
  %543 = vmatpush.bf16.msra.mxu0 %v442
  %544 = vmatpush.bf16.msra.mxu0 %v441
  %545 = vmatmul.bf16.gmra.mxu0 %v143
  %v546 = vpop.f32.mrf.mxu0
  %v547 = vadd.f32 %v247, %v546
  %v548 = vpop.f32.mrf.mxu0
  %549 = vdwg.mxu0
  %550 = vmatpush.bf16.msra.mxu0 %v456
  %551 = vmatpush.bf16.msra.mxu0 %v455
  %552 = vmatpush.bf16.msra.mxu0 %v454
  %553 = vmatpush.bf16.msra.mxu0 %v453
  %554 = vmatpush.bf16.msra.mxu0 %v452
  %555 = vmatpush.bf16.msra.mxu0 %v451
  %556 = vmatpush.bf16.msra.mxu0 %v450
  %557 = vmatpush.bf16.msra.mxu0 %v449
  %558 = vmatmul.bf16.gmra.mxu0 %v144
  %v559 = vpop.f32.mrf.mxu0
  %v560 = vadd.f32 %v547, %v559
  %v561 = vpop.f32.mrf.mxu0
  %562 = vdwg.mxu0
  %563 = vmatpush.bf16.msra.mxu0 %v464
  %564 = vmatpush.bf16.msra.mxu0 %v463
  %565 = vmatpush.bf16.msra.mxu0 %v462
  %566 = vmatpush.bf16.msra.mxu0 %v461
  %567 = vmatpush.bf16.msra.mxu0 %v460
  %568 = vmatpush.bf16.msra.mxu0 %v459
  %569 = vmatpush.bf16.msra.mxu0 %v458
  %570 = vmatpush.bf16.msra.mxu0 %v457
  %571 = vmatmul.bf16.gmra.mxu0 %v145
  %v572 = vpop.f32.mrf.mxu0
  %v573 = vadd.f32 %v560, %v572
  %v574 = vpop.f32.mrf.mxu0
  %575 = vdwg.mxu0
  %576 = vmatpush.bf16.msra.mxu0 %v472
  %577 = vmatpush.bf16.msra.mxu0 %v471
  %578 = vmatpush.bf16.msra.mxu0 %v470
  %579 = vmatpush.bf16.msra.mxu0 %v469
  %580 = vmatpush.bf16.msra.mxu0 %v468
  %581 = vmatpush.bf16.msra.mxu0 %v467
  %582 = vmatpush.bf16.msra.mxu0 %v466
  %583 = vmatpush.bf16.msra.mxu0 %v465
  %584 = vmatmul.bf16.gmra.mxu0 %v146
  %v585 = vpop.f32.mrf.mxu0
  %v586 = vadd.f32 %v573, %v585
  %v587 = vpop.f32.mrf.mxu0
  %588 = vdwg.mxu0
  %589 = vmatpush.bf16.msra.mxu0 %v480
  %590 = vmatpush.bf16.msra.mxu0 %v479
  %591 = vmatpush.bf16.msra.mxu0 %v478
  %592 = vmatpush.bf16.msra.mxu0 %v477
  %593 = vmatpush.bf16.msra.mxu0 %v476
  %594 = vmatpush.bf16.msra.mxu0 %v475
  %595 = vmatpush.bf16.msra.mxu0 %v474
  %596 = vmatpush.bf16.msra.mxu0 %v473
  %597 = vmatmul.bf16.gmra.mxu0 %v147
  %v598 = vpop.f32.mrf.mxu0
  %v599 = vadd.f32 %v586, %v598
  %v600 = vpop.f32.mrf.mxu0
  %601 = vdwg.mxu0
  %602 = vmatpush.bf16.msra.mxu0 %v488
  %603 = vmatpush.bf16.msra.mxu0 %v487
  %604 = vmatpush.bf16.msra.mxu0 %v486
  %605 = vmatpush.bf16.msra.mxu0 %v485
  %606 = vmatpush.bf16.msra.mxu0 %v484
  %607 = vmatpush.bf16.msra.mxu0 %v483
  %608 = vmatpush.bf16.msra.mxu0 %v482
  %609 = vmatpush.bf16.msra.mxu0 %v481
  %610 = vmatmul.bf16.gmra.mxu0 %v148
  %v611 = vpop.f32.mrf.mxu0
  %v612 = vadd.f32 %v599, %v611
  %v613 = vpop.f32.mrf.mxu0
  %614 = vdwg.mxu0
  %615 = vst [vmem:[%s61] sm:$0xff] %v612
  %v616 = vpack.c.bf16 %v612, %v612
  %v617 = vld [vmem:[%s7] sm:$0xff]
  %v618 = vld [vmem:[%s7 + $0x8] sm:$0xff]
  %v619 = vld [vmem:[%s7 + $0x10] sm:$0xff]
  %v620 = vld [vmem:[%s7 + $0x18] sm:$0xff]
  %v621 = vld [vmem:[%s7 + $0x20] sm:$0xff]
  %v622 = vld [vmem:[%s7 + $0x28] sm:$0xff]
  %v623 = vld [vmem:[%s7 + $0x30] sm:$0xff]
  %v624 = vld [vmem:[%s7 + $0x38] sm:$0xff]
  %v625 = vld [vmem:[%s7 + $0x40] sm:$0xff]
  %v626 = vld [vmem:[%s7 + $0x48] sm:$0xff]
  %v627 = vld [vmem:[%s7 + $0x50] sm:$0xff]
  %v628 = vld [vmem:[%s7 + $0x58] sm:$0xff]
  %v629 = vld [vmem:[%s7 + $0x60] sm:$0xff]
  %v630 = vld [vmem:[%s7 + $0x68] sm:$0xff]
  %v631 = vld [vmem:[%s7 + $0x70] sm:$0xff]
  %v632 = vld [vmem:[%s7 + $0x78] sm:$0xff]
  %v633 = vld [vmem:[%s9] sm:$0x3]
  %v635 = vperm.slane %v633, 0
  %v636 = vperm.slane %v633, 1
  %v655 = vunpack.c.l.b16 %v617
  %v656 = vunpack.c.h.b16 %v617
  %v657 = vunpack.c.l.b16 %v618
  %v658 = vunpack.c.h.b16 %v618
  %v659 = vunpack.c.l.b16 %v619
  %v660 = vunpack.c.h.b16 %v619
  %v661 = vunpack.c.l.b16 %v620
  %v662 = vunpack.c.h.b16 %v620
  %v663 = vunpack.c.l.b16 %v621
  %v664 = vunpack.c.h.b16 %v621
  %v665 = vunpack.c.l.b16 %v622
  %v666 = vunpack.c.h.b16 %v622
  %v667 = vunpack.c.l.b16 %v623
  %v668 = vunpack.c.h.b16 %v623
  %v669 = vunpack.c.l.b16 %v624
  %v670 = vunpack.c.h.b16 %v624
  %v671 = vunpack.c.l.b16 %v625
  %v672 = vunpack.c.h.b16 %v625
  %v673 = vunpack.c.l.b16 %v626
  %v674 = vunpack.c.h.b16 %v626
  %v675 = vunpack.c.l.b16 %v627
  %v676 = vunpack.c.h.b16 %v627
  %v677 = vunpack.c.l.b16 %v628
  %v678 = vunpack.c.h.b16 %v628
  %v679 = vunpack.c.l.b16 %v629
  %v680 = vunpack.c.h.b16 %v629
  %v681 = vunpack.c.l.b16 %v630
  %v682 = vunpack.c.h.b16 %v630
  %v683 = vunpack.c.l.b16 %v631
  %v684 = vunpack.c.h.b16 %v631
  %v685 = vunpack.c.l.b16 %v632
  %v686 = vunpack.c.h.b16 %v632
  %v687 = vpack.c.b16 %v657, %v655
  %v688 = vpack.c.b16 %v658, %v656
  %v689 = vpack.c.b16 %v661, %v659
  %v690 = vpack.c.b16 %v662, %v660
  %v691 = vpack.c.b16 %v665, %v663
  %v692 = vpack.c.b16 %v666, %v664
  %v693 = vpack.c.b16 %v669, %v667
  %v694 = vpack.c.b16 %v670, %v668
  %v695 = vpack.c.b16 %v673, %v671
  %v696 = vpack.c.b16 %v674, %v672
  %v697 = vpack.c.b16 %v677, %v675
  %v698 = vpack.c.b16 %v678, %v676
  %v699 = vpack.c.b16 %v681, %v679
  %v700 = vpack.c.b16 %v682, %v680
  %v701 = vpack.c.b16 %v685, %v683
  %v702 = vpack.c.b16 %v686, %v684
  %719 = vmatpush.bf16.msra.mxu0 %v701
  %720 = vmatpush.bf16.msra.mxu0 %v699
  %721 = vmatpush.bf16.msra.mxu0 %v697
  %722 = vmatpush.bf16.msra.mxu0 %v695
  %723 = vmatpush.bf16.msra.mxu0 %v693
  %724 = vmatpush.bf16.msra.mxu0 %v691
  %725 = vmatpush.bf16.msra.mxu0 %v689
  %726 = vmatpush.bf16.msra.mxu0 %v687
  %727 = vmatmul.bf16.gmra.mxu0 %v616
  %v728 = vpop.f32.mrf.mxu0
  %v729 = vadd.f32 %v635, %v728
  %v730 = vpop.f32.mrf.mxu0
  %731 = vdwg.mxu0
  %732 = vmatpush.bf16.msra.mxu0 %v702
  %733 = vmatpush.bf16.msra.mxu0 %v700
  %734 = vmatpush.bf16.msra.mxu0 %v698
  %735 = vmatpush.bf16.msra.mxu0 %v696
  %736 = vmatpush.bf16.msra.mxu0 %v694
  %737 = vmatpush.bf16.msra.mxu0 %v692
  %738 = vmatpush.bf16.msra.mxu0 %v690
  %739 = vmatpush.bf16.msra.mxu0 %v688
  %740 = vmatmul.bf16.gmra.mxu0 %v616
  %v741 = vpop.f32.mrf.mxu0
  %v742 = vadd.f32 %v636, %v741
  %v743 = vpop.f32.mrf.mxu0
  %744 = vdwg.mxu0
  %v745 = vtanh.pop %v729
  %v746 = vtanh.pop %v742
  %v747 = vpack.c.bf16 %v745, %v745
  %v748 = vpack.c.bf16 %v746, %v746
  %v749 = vld [vmem:[%s11] sm:$0xff]
  %v750 = vld [vmem:[%s11 + $0x8] sm:$0xff]
  %v751 = vld [vmem:[%s11 + $0x10] sm:$0xff]
  %v752 = vld [vmem:[%s11 + $0x18] sm:$0xff]
  %v753 = vld [vmem:[%s11 + $0x20] sm:$0xff]
  %v754 = vld [vmem:[%s11 + $0x28] sm:$0xff]
  %v755 = vld [vmem:[%s11 + $0x30] sm:$0xff]
  %v756 = vld [vmem:[%s11 + $0x38] sm:$0xff]
  %v757 = vld [vmem:[%s11 + $0x40] sm:$0xff]
  %v758 = vld [vmem:[%s11 + $0x48] sm:$0xff]
  %v759 = vld [vmem:[%s11 + $0x50] sm:$0xff]
  %v760 = vld [vmem:[%s11 + $0x58] sm:$0xff]
  %v761 = vld [vmem:[%s11 + $0x60] sm:$0xff]
  %v762 = vld [vmem:[%s11 + $0x68] sm:$0xff]
  %v763 = vld [vmem:[%s11 + $0x70] sm:$0xff]
  %v764 = vld [vmem:[%s11 + $0x78] sm:$0xff]
  %v765 = vld [vmem:[%s11 + $0x80] sm:$0xff]
  %v766 = vld [vmem:[%s11 + $0x88] sm:$0xff]
  %v767 = vld [vmem:[%s11 + $0x90] sm:$0xff]
  %v768 = vld [vmem:[%s11 + $0x98] sm:$0xff]
  %v769 = vld [vmem:[%s11 + $0xa0] sm:$0xff]
  %v770 = vld [vmem:[%s11 + $0xa8] sm:$0xff]
  %v771 = vld [vmem:[%s11 + $0xb0] sm:$0xff]
  %v772 = vld [vmem:[%s11 + $0xb8] sm:$0xff]
  %v773 = vld [vmem:[%s11 + $0xc0] sm:$0xff]
  %v774 = vld [vmem:[%s11 + $0xc8] sm:$0xff]
  %v775 = vld [vmem:[%s11 + $0xd0] sm:$0xff]
  %v776 = vld [vmem:[%s11 + $0xd8] sm:$0xff]
  %v777 = vld [vmem:[%s11 + $0xe0] sm:$0xff]
  %v778 = vld [vmem:[%s11 + $0xe8] sm:$0xff]
  %v779 = vld [vmem:[%s11 + $0xf0] sm:$0xff]
  %v780 = vld [vmem:[%s11 + $0xf8] sm:$0xff]
  %v781 = vld [vmem:[%s11 + $0x100] sm:$0xff]
  %v782 = vld [vmem:[%s11 + $0x108] sm:$0xff]
  %v783 = vld [vmem:[%s11 + $0x110] sm:$0xff]
  %v784 = vld [vmem:[%s11 + $0x118] sm:$0xff]
  %v785 = vld [vmem:[%s11 + $0x120] sm:$0xff]
  %v786 = vld [vmem:[%s11 + $0x128] sm:$0xff]
  %v787 = vld [vmem:[%s11 + $0x130] sm:$0xff]
  %v788 = vld [vmem:[%s11 + $0x138] sm:$0xff]
  %v789 = vld [vmem:[%s11 + $0x140] sm:$0xff]
  %v790 = vld [vmem:[%s11 + $0x148] sm:$0xff]
  %v791 = vld [vmem:[%s11 + $0x150] sm:$0xff]
  %v792 = vld [vmem:[%s11 + $0x158] sm:$0xff]
  %v793 = vld [vmem:[%s11 + $0x160] sm:$0xff]
  %v794 = vld [vmem:[%s11 + $0x168] sm:$0xff]
  %v795 = vld [vmem:[%s11 + $0x170] sm:$0xff]
  %v796 = vld [vmem:[%s11 + $0x178] sm:$0xff]
  %v797 = vld [vmem:[%s11 + $0x180] sm:$0xff]
  %v798 = vld [vmem:[%s11 + $0x188] sm:$0xff]
  %v799 = vld [vmem:[%s11 + $0x190] sm:$0xff]
  %v800 = vld [vmem:[%s11 + $0x198] sm:$0xff]
  %v801 = vld [vmem:[%s11 + $0x1a0] sm:$0xff]
  %v802 = vld [vmem:[%s11 + $0x1a8] sm:$0xff]
  %v803 = vld [vmem:[%s11 + $0x1b0] sm:$0xff]
  %v804 = vld [vmem:[%s11 + $0x1b8] sm:$0xff]
  %v805 = vld [vmem:[%s11 + $0x1c0] sm:$0xff]
  %v806 = vld [vmem:[%s11 + $0x1c8] sm:$0xff]
  %v807 = vld [vmem:[%s11 + $0x1d0] sm:$0xff]
  %v808 = vld [vmem:[%s11 + $0x1d8] sm:$0xff]
  %v809 = vld [vmem:[%s11 + $0x1e0] sm:$0xff]
  %v810 = vld [vmem:[%s11 + $0x1e8] sm:$0xff]
  %v811 = vld [vmem:[%s11 + $0x1f0] sm:$0xff]
  %v812 = vld [vmem:[%s11 + $0x1f8] sm:$0xff]
  %v813 = vld [vmem:[%s13] sm:$0xf]
  %v815 = vperm.slane %v813, 0
  %v816 = vperm.slane %v813, 1
  %v817 = vperm.slane %v813, 2
  %v818 = vperm.slane %v813, 3
  %v887 = vunpack.c.l.b16 %v749
  %v888 = vunpack.c.h.b16 %v749
  %v889 = vunpack.c.l.b16 %v750
  %v890 = vunpack.c.h.b16 %v750
  %v891 = vunpack.c.l.b16 %v751
  %v892 = vunpack.c.h.b16 %v751
  %v893 = vunpack.c.l.b16 %v752
  %v894 = vunpack.c.h.b16 %v752
  %v895 = vunpack.c.l.b16 %v753
  %v896 = vunpack.c.h.b16 %v753
  %v897 = vunpack.c.l.b16 %v754
  %v898 = vunpack.c.h.b16 %v754
  %v899 = vunpack.c.l.b16 %v755
  %v900 = vunpack.c.h.b16 %v755
  %v901 = vunpack.c.l.b16 %v756
  %v902 = vunpack.c.h.b16 %v756
  %v903 = vunpack.c.l.b16 %v757
  %v904 = vunpack.c.h.b16 %v757
  %v905 = vunpack.c.l.b16 %v758
  %v906 = vunpack.c.h.b16 %v758
  %v907 = vunpack.c.l.b16 %v759
  %v908 = vunpack.c.h.b16 %v759
  %v909 = vunpack.c.l.b16 %v760
  %v910 = vunpack.c.h.b16 %v760
  %v911 = vunpack.c.l.b16 %v761
  %v912 = vunpack.c.h.b16 %v761
  %v913 = vunpack.c.l.b16 %v762
  %v914 = vunpack.c.h.b16 %v762
  %v915 = vunpack.c.l.b16 %v763
  %v916 = vunpack.c.h.b16 %v763
  %v917 = vunpack.c.l.b16 %v764
  %v918 = vunpack.c.h.b16 %v764
  %v919 = vunpack.c.l.b16 %v765
  %v920 = vunpack.c.h.b16 %v765
  %v921 = vunpack.c.l.b16 %v766
  %v922 = vunpack.c.h.b16 %v766
  %v923 = vunpack.c.l.b16 %v767
  %v924 = vunpack.c.h.b16 %v767
  %v925 = vunpack.c.l.b16 %v768
  %v926 = vunpack.c.h.b16 %v768
  %v927 = vunpack.c.l.b16 %v769
  %v928 = vunpack.c.h.b16 %v769
  %v929 = vunpack.c.l.b16 %v770
  %v930 = vunpack.c.h.b16 %v770
  %v931 = vunpack.c.l.b16 %v771
  %v932 = vunpack.c.h.b16 %v771
  %v933 = vunpack.c.l.b16 %v772
  %v934 = vunpack.c.h.b16 %v772
  %v935 = vunpack.c.l.b16 %v773
  %v936 = vunpack.c.h.b16 %v773
  %v937 = vunpack.c.l.b16 %v774
  %v938 = vunpack.c.h.b16 %v774
  %v939 = vunpack.c.l.b16 %v775
  %v940 = vunpack.c.h.b16 %v775
  %v941 = vunpack.c.l.b16 %v776
  %v942 = vunpack.c.h.b16 %v776
  %v943 = vunpack.c.l.b16 %v777
  %v944 = vunpack.c.h.b16 %v777
  %v945 = vunpack.c.l.b16 %v778
  %v946 = vunpack.c.h.b16 %v778
  %v947 = vunpack.c.l.b16 %v779
  %v948 = vunpack.c.h.b16 %v779
  %v949 = vunpack.c.l.b16 %v780
  %v950 = vunpack.c.h.b16 %v780
  %v951 = vunpack.c.l.b16 %v781
  %v952 = vunpack.c.h.b16 %v781
  %v953 = vunpack.c.l.b16 %v782
  %v954 = vunpack.c.h.b16 %v782
  %v955 = vunpack.c.l.b16 %v783
  %v956 = vunpack.c.h.b16 %v783
  %v957 = vunpack.c.l.b16 %v784
  %v958 = vunpack.c.h.b16 %v784
  %v959 = vunpack.c.l.b16 %v785
  %v960 = vunpack.c.h.b16 %v785
  %v961 = vunpack.c.l.b16 %v786
  %v962 = vunpack.c.h.b16 %v786
  %v963 = vunpack.c.l.b16 %v787
  %v964 = vunpack.c.h.b16 %v787
  %v965 = vunpack.c.l.b16 %v788
  %v966 = vunpack.c.h.b16 %v788
  %v967 = vunpack.c.l.b16 %v789
  %v968 = vunpack.c.h.b16 %v789
  %v969 = vunpack.c.l.b16 %v790
  %v970 = vunpack.c.h.b16 %v790
  %v971 = vunpack.c.l.b16 %v791
  %v972 = vunpack.c.h.b16 %v791
  %v973 = vunpack.c.l.b16 %v792
  %v974 = vunpack.c.h.b16 %v792
  %v975 = vunpack.c.l.b16 %v793
  %v976 = vunpack.c.h.b16 %v793
  %v977 = vunpack.c.l.b16 %v794
  %v978 = vunpack.c.h.b16 %v794
  %v979 = vunpack.c.l.b16 %v795
  %v980 = vunpack.c.h.b16 %v795
  %v981 = vunpack.c.l.b16 %v796
  %v982 = vunpack.c.h.b16 %v796
  %v983 = vunpack.c.l.b16 %v797
  %v984 = vunpack.c.h.b16 %v797
  %v985 = vunpack.c.l.b16 %v798
  %v986 = vunpack.c.h.b16 %v798
  %v987 = vunpack.c.l.b16 %v799
  %v988 = vunpack.c.h.b16 %v799
  %v989 = vunpack.c.l.b16 %v800
  %v990 = vunpack.c.h.b16 %v800
  %v991 = vunpack.c.l.b16 %v801
  %v992 = vunpack.c.h.b16 %v801
  %v993 = vunpack.c.l.b16 %v802
  %v994 = vunpack.c.h.b16 %v802
  %v995 = vunpack.c.l.b16 %v803
  %v996 = vunpack.c.h.b16 %v803
  %v997 = vunpack.c.l.b16 %v804
  %v998 = vunpack.c.h.b16 %v804
  %v999 = vunpack.c.l.b16 %v805
  %v1000 = vunpack.c.h.b16 %v805
  %v1001 = vunpack.c.l.b16 %v806
  %v1002 = vunpack.c.h.b16 %v806
  %v1003 = vunpack.c.l.b16 %v807
  %v1004 = vunpack.c.h.b16 %v807
  %v1005 = vunpack.c.l.b16 %v808
  %v1006 = vunpack.c.h.b16 %v808
  %v1007 = vunpack.c.l.b16 %v809
  %v1008 = vunpack.c.h.b16 %v809
  %v1009 = vunpack.c.l.b16 %v810
  %v1010 = vunpack.c.h.b16 %v810
  %v1011 = vunpack.c.l.b16 %v811
  %v1012 = vunpack.c.h.b16 %v811
  %v1013 = vunpack.c.l.b16 %v812
  %v1014 = vunpack.c.h.b16 %v812
  %v1015 = vpack.c.b16 %v891, %v887
  %v1016 = vpack.c.b16 %v892, %v888
  %v1017 = vpack.c.b16 %v893, %v889
  %v1018 = vpack.c.b16 %v894, %v890
  %v1019 = vpack.c.b16 %v899, %v895
  %v1020 = vpack.c.b16 %v900, %v896
  %v1021 = vpack.c.b16 %v901, %v897
  %v1022 = vpack.c.b16 %v902, %v898
  %v1023 = vpack.c.b16 %v907, %v903
  %v1024 = vpack.c.b16 %v908, %v904
  %v1025 = vpack.c.b16 %v909, %v905
  %v1026 = vpack.c.b16 %v910, %v906
  %v1027 = vpack.c.b16 %v915, %v911
  %v1028 = vpack.c.b16 %v916, %v912
  %v1029 = vpack.c.b16 %v917, %v913
  %v1030 = vpack.c.b16 %v918, %v914
  %v1031 = vpack.c.b16 %v923, %v919
  %v1032 = vpack.c.b16 %v924, %v920
  %v1033 = vpack.c.b16 %v925, %v921
  %v1034 = vpack.c.b16 %v926, %v922
  %v1035 = vpack.c.b16 %v931, %v927
  %v1036 = vpack.c.b16 %v932, %v928
  %v1037 = vpack.c.b16 %v933, %v929
  %v1038 = vpack.c.b16 %v934, %v930
  %v1039 = vpack.c.b16 %v939, %v935
  %v1040 = vpack.c.b16 %v940, %v936
  %v1041 = vpack.c.b16 %v941, %v937
  %v1042 = vpack.c.b16 %v942, %v938
  %v1043 = vpack.c.b16 %v947, %v943
  %v1044 = vpack.c.b16 %v948, %v944
  %v1045 = vpack.c.b16 %v949, %v945
  %v1046 = vpack.c.b16 %v950, %v946
  %v1047 = vpack.c.b16 %v955, %v951
  %v1048 = vpack.c.b16 %v956, %v952
  %v1049 = vpack.c.b16 %v957, %v953
  %v1050 = vpack.c.b16 %v958, %v954
  %v1051 = vpack.c.b16 %v963, %v959
  %v1052 = vpack.c.b16 %v964, %v960
  %v1053 = vpack.c.b16 %v965, %v961
  %v1054 = vpack.c.b16 %v966, %v962
  %v1055 = vpack.c.b16 %v971, %v967
  %v1056 = vpack.c.b16 %v972, %v968
  %v1057 = vpack.c.b16 %v973, %v969
  %v1058 = vpack.c.b16 %v974, %v970
  %v1059 = vpack.c.b16 %v979, %v975
  %v1060 = vpack.c.b16 %v980, %v976
  %v1061 = vpack.c.b16 %v981, %v977
  %v1062 = vpack.c.b16 %v982, %v978
  %v1063 = vpack.c.b16 %v987, %v983
  %v1064 = vpack.c.b16 %v988, %v984
  %v1065 = vpack.c.b16 %v989, %v985
  %v1066 = vpack.c.b16 %v990, %v986
  %v1067 = vpack.c.b16 %v995, %v991
  %v1068 = vpack.c.b16 %v996, %v992
  %v1069 = vpack.c.b16 %v997, %v993
  %v1070 = vpack.c.b16 %v998, %v994
  %v1071 = vpack.c.b16 %v1003, %v999
  %v1072 = vpack.c.b16 %v1004, %v1000
  %v1073 = vpack.c.b16 %v1005, %v1001
  %v1074 = vpack.c.b16 %v1006, %v1002
  %v1075 = vpack.c.b16 %v1011, %v1007
  %v1076 = vpack.c.b16 %v1012, %v1008
  %v1077 = vpack.c.b16 %v1013, %v1009
  %v1078 = vpack.c.b16 %v1014, %v1010
  %1143 = vmatpush.bf16.msra.mxu0 %v1043
  %1144 = vmatpush.bf16.msra.mxu0 %v1039
  %1145 = vmatpush.bf16.msra.mxu0 %v1035
  %1146 = vmatpush.bf16.msra.mxu0 %v1031
  %1147 = vmatpush.bf16.msra.mxu0 %v1027
  %1148 = vmatpush.bf16.msra.mxu0 %v1023
  %1149 = vmatpush.bf16.msra.mxu0 %v1019
  %1150 = vmatpush.bf16.msra.mxu0 %v1015
  %1151 = vmatmul.bf16.gmra.mxu0 %v747
  %v1152 = vpop.f32.mrf.mxu0
  %v1153 = vadd.f32 %v815, %v1152
  %v1154 = vpop.f32.mrf.mxu0
  %1155 = vdwg.mxu0
  %1156 = vmatpush.bf16.msra.mxu0 %v1075
  %1157 = vmatpush.bf16.msra.mxu0 %v1071
  %1158 = vmatpush.bf16.msra.mxu0 %v1067
  %1159 = vmatpush.bf16.msra.mxu0 %v1063
  %1160 = vmatpush.bf16.msra.mxu0 %v1059
  %1161 = vmatpush.bf16.msra.mxu0 %v1055
  %1162 = vmatpush.bf16.msra.mxu0 %v1051
  %1163 = vmatpush.bf16.msra.mxu0 %v1047
  %1164 = vmatmul.bf16.gmra.mxu0 %v748
  %v1165 = vpop.f32.mrf.mxu0
  %v1166 = vadd.f32 %v1153, %v1165
  %v1167 = vpop.f32.mrf.mxu0
  %1168 = vdwg.mxu0
  %1169 = vmatpush.bf16.msra.mxu0 %v1044
  %1170 = vmatpush.bf16.msra.mxu0 %v1040
  %1171 = vmatpush.bf16.msra.mxu0 %v1036
  %1172 = vmatpush.bf16.msra.mxu0 %v1032
  %1173 = vmatpush.bf16.msra.mxu0 %v1028
  %1174 = vmatpush.bf16.msra.mxu0 %v1024
  %1175 = vmatpush.bf16.msra.mxu0 %v1020
  %1176 = vmatpush.bf16.msra.mxu0 %v1016
  %1177 = vmatmul.bf16.gmra.mxu0 %v747
  %v1178 = vpop.f32.mrf.mxu0
  %v1179 = vadd.f32 %v816, %v1178
  %v1180 = vpop.f32.mrf.mxu0
  %1181 = vdwg.mxu0
  %1182 = vmatpush.bf16.msra.mxu0 %v1076
  %1183 = vmatpush.bf16.msra.mxu0 %v1072
  %1184 = vmatpush.bf16.msra.mxu0 %v1068
  %1185 = vmatpush.bf16.msra.mxu0 %v1064
  %1186 = vmatpush.bf16.msra.mxu0 %v1060
  %1187 = vmatpush.bf16.msra.mxu0 %v1056
  %1188 = vmatpush.bf16.msra.mxu0 %v1052
  %1189 = vmatpush.bf16.msra.mxu0 %v1048
  %1190 = vmatmul.bf16.gmra.mxu0 %v748
  %v1191 = vpop.f32.mrf.mxu0
  %v1192 = vadd.f32 %v1179, %v1191
  %v1193 = vpop.f32.mrf.mxu0
  %1194 = vdwg.mxu0
  %1195 = vmatpush.bf16.msra.mxu0 %v1045
  %1196 = vmatpush.bf16.msra.mxu0 %v1041
  %1197 = vmatpush.bf16.msra.mxu0 %v1037
  %1198 = vmatpush.bf16.msra.mxu0 %v1033
  %1199 = vmatpush.bf16.msra.mxu0 %v1029
  %1200 = vmatpush.bf16.msra.mxu0 %v1025
  %1201 = vmatpush.bf16.msra.mxu0 %v1021
  %1202 = vmatpush.bf16.msra.mxu0 %v1017
  %1203 = vmatmul.bf16.gmra.mxu0 %v747
  %v1204 = vpop.f32.mrf.mxu0
  %v1205 = vadd.f32 %v817, %v1204
  %v1206 = vpop.f32.mrf.mxu0
  %1207 = vdwg.mxu0
  %1208 = vmatpush.bf16.msra.mxu0 %v1077
  %1209 = vmatpush.bf16.msra.mxu0 %v1073
  %1210 = vmatpush.bf16.msra.mxu0 %v1069
  %1211 = vmatpush.bf16.msra.mxu0 %v1065
  %1212 = vmatpush.bf16.msra.mxu0 %v1061
  %1213 = vmatpush.bf16.msra.mxu0 %v1057
  %1214 = vmatpush.bf16.msra.mxu0 %v1053
  %1215 = vmatpush.bf16.msra.mxu0 %v1049
  %1216 = vmatmul.bf16.gmra.mxu0 %v748
  %v1217 = vpop.f32.mrf.mxu0
  %v1218 = vadd.f32 %v1205, %v1217
  %v1219 = vpop.f32.mrf.mxu0
  %1220 = vdwg.mxu0
  %1221 = vmatpush.bf16.msra.mxu0 %v1046
  %1222 = vmatpush.bf16.msra.mxu0 %v1042
  %1223 = vmatpush.bf16.msra.mxu0 %v1038
  %1224 = vmatpush.bf16.msra.mxu0 %v1034
  %1225 = vmatpush.bf16.msra.mxu0 %v1030
  %1226 = vmatpush.bf16.msra.mxu0 %v1026
  %1227 = vmatpush.bf16.msra.mxu0 %v1022
  %1228 = vmatpush.bf16.msra.mxu0 %v1018
  %1229 = vmatmul.bf16.gmra.mxu0 %v747
  %v1230 = vpop.f32.mrf.mxu0
  %v1231 = vadd.f32 %v818, %v1230
  %v1232 = vpop.f32.mrf.mxu0
  %1233 = vdwg.mxu0
  %1234 = vmatpush.bf16.msra.mxu0 %v1078
  %1235 = vmatpush.bf16.msra.mxu0 %v1074
  %1236 = vmatpush.bf16.msra.mxu0 %v1070
  %1237 = vmatpush.bf16.msra.mxu0 %v1066
  %1238 = vmatpush.bf16.msra.mxu0 %v1062
  %1239 = vmatpush.bf16.msra.mxu0 %v1058
  %1240 = vmatpush.bf16.msra.mxu0 %v1054
  %1241 = vmatpush.bf16.msra.mxu0 %v1050
  %1242 = vmatmul.bf16.gmra.mxu0 %v748
  %v1243 = vpop.f32.mrf.mxu0
  %v1244 = vadd.f32 %v1231, %v1243
  %v1245 = vpop.f32.mrf.mxu0
  %1246 = vdwg.mxu0
  %v1247 = vld [vmem:[%s15] sm:$0xff]
  %v1248 = vld [vmem:[%s15 + $0x8] sm:$0xff]
  %v1249 = vld [vmem:[%s15 + $0x10] sm:$0xff]
  %v1250 = vld [vmem:[%s15 + $0x18] sm:$0xff]
  %v1251 = vld [vmem:[%s15 + $0x20] sm:$0xff]
  %v1252 = vld [vmem:[%s15 + $0x28] sm:$0xff]
  %v1253 = vld [vmem:[%s15 + $0x30] sm:$0xff]
  %v1254 = vld [vmem:[%s15 + $0x38] sm:$0xff]
  %v1255 = vld [vmem:[%s15 + $0x40] sm:$0xff]
  %v1256 = vld [vmem:[%s15 + $0x48] sm:$0xff]
  %v1257 = vld [vmem:[%s15 + $0x50] sm:$0xff]
  %v1258 = vld [vmem:[%s15 + $0x58] sm:$0xff]
  %v1259 = vld [vmem:[%s15 + $0x60] sm:$0xff]
  %v1260 = vld [vmem:[%s15 + $0x68] sm:$0xff]
  %v1261 = vld [vmem:[%s15 + $0x70] sm:$0xff]
  %v1262 = vld [vmem:[%s15 + $0x78] sm:$0xff]
  %v1279 = vunpack.c.l.b16 %v1247
  %v1280 = vunpack.c.h.b16 %v1247
  %v1281 = vunpack.c.l.b16 %v1248
  %v1282 = vunpack.c.h.b16 %v1248
  %v1283 = vunpack.c.l.b16 %v1249
  %v1284 = vunpack.c.h.b16 %v1249
  %v1285 = vunpack.c.l.b16 %v1250
  %v1286 = vunpack.c.h.b16 %v1250
  %v1287 = vunpack.c.l.b16 %v1251
  %v1288 = vunpack.c.h.b16 %v1251
  %v1289 = vunpack.c.l.b16 %v1252
  %v1290 = vunpack.c.h.b16 %v1252
  %v1291 = vunpack.c.l.b16 %v1253
  %v1292 = vunpack.c.h.b16 %v1253
  %v1293 = vunpack.c.l.b16 %v1254
  %v1294 = vunpack.c.h.b16 %v1254
  %v1295 = vunpack.c.l.b16 %v1255
  %v1296 = vunpack.c.h.b16 %v1255
  %v1297 = vunpack.c.l.b16 %v1256
  %v1298 = vunpack.c.h.b16 %v1256
  %v1299 = vunpack.c.l.b16 %v1257
  %v1300 = vunpack.c.h.b16 %v1257
  %v1301 = vunpack.c.l.b16 %v1258
  %v1302 = vunpack.c.h.b16 %v1258
  %v1303 = vunpack.c.l.b16 %v1259
  %v1304 = vunpack.c.h.b16 %v1259
  %v1305 = vunpack.c.l.b16 %v1260
  %v1306 = vunpack.c.h.b16 %v1260
  %v1307 = vunpack.c.l.b16 %v1261
  %v1308 = vunpack.c.h.b16 %v1261
  %v1309 = vunpack.c.l.b16 %v1262
  %v1310 = vunpack.c.h.b16 %v1262
  %v1311 = vpack.c.b16 %v1281, %v1279
  %v1312 = vpack.c.b16 %v1282, %v1280
  %v1313 = vpack.c.b16 %v1285, %v1283
  %v1314 = vpack.c.b16 %v1286, %v1284
  %v1315 = vpack.c.b16 %v1289, %v1287
  %v1316 = vpack.c.b16 %v1290, %v1288
  %v1317 = vpack.c.b16 %v1293, %v1291
  %v1318 = vpack.c.b16 %v1294, %v1292
  %v1319 = vpack.c.b16 %v1297, %v1295
  %v1320 = vpack.c.b16 %v1298, %v1296
  %v1321 = vpack.c.b16 %v1301, %v1299
  %v1322 = vpack.c.b16 %v1302, %v1300
  %v1323 = vpack.c.b16 %v1305, %v1303
  %v1324 = vpack.c.b16 %v1306, %v1304
  %v1325 = vpack.c.b16 %v1309, %v1307
  %v1326 = vpack.c.b16 %v1310, %v1308
  %1343 = vmatpush.bf16.msra.mxu0 %v1325
  %1344 = vmatpush.bf16.msra.mxu0 %v1323
  %1345 = vmatpush.bf16.msra.mxu0 %v1321
  %1346 = vmatpush.bf16.msra.mxu0 %v1319
  %1347 = vmatpush.bf16.msra.mxu0 %v1317
  %1348 = vmatpush.bf16.msra.mxu0 %v1315
  %1349 = vmatpush.bf16.msra.mxu0 %v1313
  %1350 = vmatpush.bf16.msra.mxu0 %v1311
  %1351 = vmatmul.bf16.gmra.mxu0 %v616
  %v1352 = vpop.f32.mrf.mxu0
  %v1353 = vadd.f32 0.0, %v1352
  %v1354 = vpop.f32.mrf.mxu0
  %1355 = vdwg.mxu0
  %1356 = vmatpush.bf16.msra.mxu0 %v1326
  %1357 = vmatpush.bf16.msra.mxu0 %v1324
  %1358 = vmatpush.bf16.msra.mxu0 %v1322
  %1359 = vmatpush.bf16.msra.mxu0 %v1320
  %1360 = vmatpush.bf16.msra.mxu0 %v1318
  %1361 = vmatpush.bf16.msra.mxu0 %v1316
  %1362 = vmatpush.bf16.msra.mxu0 %v1314
  %1363 = vmatpush.bf16.msra.mxu0 %v1312
  %1364 = vmatmul.bf16.gmra.mxu0 %v616
  %v1365 = vpop.f32.mrf.mxu0
  %v1366 = vadd.f32 0.0, %v1365
  %v1367 = vpop.f32.mrf.mxu0
  %1368 = vdwg.mxu0
  %v1369 = vld [vmem:[%s17] sm:$0x3]
  %v1371 = vperm.slane %v1369, 0
  %v1372 = vperm.slane %v1369, 1
  %v1375 = vmul.f32 %v1353, %v1371
  %v1376 = vmul.f32 %v1366, %v1372
  %v1377 = vld [vmem:[%s19] sm:$0x3]
  %v1379 = vperm.slane %v1377, 0
  %v1380 = vperm.slane %v1377, 1
  %v1383 = vadd.f32 %v1375, %v1379
  %v1384 = vadd.f32 %v1376, %v1380
  %v1385 = vmax.f32 %v1383, 0.0
  %v1386 = vmax.f32 %v1384, 0.0
  %v1387 = vpack.c.bf16 %v1385, %v1385
  %v1388 = vpack.c.bf16 %v1386, %v1386
  %v1389 = vld [vmem:[%s21] sm:$0xff]
  %v1390 = vld [vmem:[%s21 + $0x8] sm:$0xff]
  %v1391 = vld [vmem:[%s21 + $0x10] sm:$0xff]
  %v1392 = vld [vmem:[%s21 + $0x18] sm:$0xff]
  %v1393 = vld [vmem:[%s21 + $0x20] sm:$0xff]
  %v1394 = vld [vmem:[%s21 + $0x28] sm:$0xff]
  %v1395 = vld [vmem:[%s21 + $0x30] sm:$0xff]
  %v1396 = vld [vmem:[%s21 + $0x38] sm:$0xff]
  %v1397 = vld [vmem:[%s21 + $0x40] sm:$0xff]
  %v1398 = vld [vmem:[%s21 + $0x48] sm:$0xff]
  %v1399 = vld [vmem:[%s21 + $0x50] sm:$0xff]
  %v1400 = vld [vmem:[%s21 + $0x58] sm:$0xff]
  %v1401 = vld [vmem:[%s21 + $0x60] sm:$0xff]
  %v1402 = vld [vmem:[%s21 + $0x68] sm:$0xff]
  %v1403 = vld [vmem:[%s21 + $0x70] sm:$0xff]
  %v1404 = vld [vmem:[%s21 + $0x78] sm:$0xff]
  %v1405 = vld [vmem:[%s21 + $0x80] sm:$0xff]
  %v1406 = vld [vmem:[%s21 + $0x88] sm:$0xff]
  %v1407 = vld [vmem:[%s21 + $0x90] sm:$0xff]
  %v1408 = vld [vmem:[%s21 + $0x98] sm:$0xff]
  %v1409 = vld [vmem:[%s21 + $0xa0] sm:$0xff]
  %v1410 = vld [vmem:[%s21 + $0xa8] sm:$0xff]
  %v1411 = vld [vmem:[%s21 + $0xb0] sm:$0xff]
  %v1412 = vld [vmem:[%s21 + $0xb8] sm:$0xff]
  %v1413 = vld [vmem:[%s21 + $0xc0] sm:$0xff]
  %v1414 = vld [vmem:[%s21 + $0xc8] sm:$0xff]
  %v1415 = vld [vmem:[%s21 + $0xd0] sm:$0xff]
  %v1416 = vld [vmem:[%s21 + $0xd8] sm:$0xff]
  %v1417 = vld [vmem:[%s21 + $0xe0] sm:$0xff]
  %v1418 = vld [vmem:[%s21 + $0xe8] sm:$0xff]
  %v1419 = vld [vmem:[%s21 + $0xf0] sm:$0xff]
  %v1420 = vld [vmem:[%s21 + $0xf8] sm:$0xff]
  %v1453 = vunpack.c.l.b16 %v1389
  %v1454 = vunpack.c.h.b16 %v1389
  %v1455 = vunpack.c.l.b16 %v1390
  %v1456 = vunpack.c.h.b16 %v1390
  %v1457 = vunpack.c.l.b16 %v1391
  %v1458 = vunpack.c.h.b16 %v1391
  %v1459 = vunpack.c.l.b16 %v1392
  %v1460 = vunpack.c.h.b16 %v1392
  %v1461 = vunpack.c.l.b16 %v1393
  %v1462 = vunpack.c.h.b16 %v1393
  %v1463 = vunpack.c.l.b16 %v1394
  %v1464 = vunpack.c.h.b16 %v1394
  %v1465 = vunpack.c.l.b16 %v1395
  %v1466 = vunpack.c.h.b16 %v1395
  %v1467 = vunpack.c.l.b16 %v1396
  %v1468 = vunpack.c.h.b16 %v1396
  %v1469 = vunpack.c.l.b16 %v1397
  %v1470 = vunpack.c.h.b16 %v1397
  %v1471 = vunpack.c.l.b16 %v1398
  %v1472 = vunpack.c.h.b16 %v1398
  %v1473 = vunpack.c.l.b16 %v1399
  %v1474 = vunpack.c.h.b16 %v1399
  %v1475 = vunpack.c.l.b16 %v1400
  %v1476 = vunpack.c.h.b16 %v1400
  %v1477 = vunpack.c.l.b16 %v1401
  %v1478 = vunpack.c.h.b16 %v1401
  %v1479 = vunpack.c.l.b16 %v1402
  %v1480 = vunpack.c.h.b16 %v1402
  %v1481 = vunpack.c.l.b16 %v1403
  %v1482 = vunpack.c.h.b16 %v1403
  %v1483 = vunpack.c.l.b16 %v1404
  %v1484 = vunpack.c.h.b16 %v1404
  %v1485 = vunpack.c.l.b16 %v1405
  %v1486 = vunpack.c.h.b16 %v1405
  %v1487 = vunpack.c.l.b16 %v1406
  %v1488 = vunpack.c.h.b16 %v1406
  %v1489 = vunpack.c.l.b16 %v1407
  %v1490 = vunpack.c.h.b16 %v1407
  %v1491 = vunpack.c.l.b16 %v1408
  %v1492 = vunpack.c.h.b16 %v1408
  %v1493 = vunpack.c.l.b16 %v1409
  %v1494 = vunpack.c.h.b16 %v1409
  %v1495 = vunpack.c.l.b16 %v1410
  %v1496 = vunpack.c.h.b16 %v1410
  %v1497 = vunpack.c.l.b16 %v1411
  %v1498 = vunpack.c.h.b16 %v1411
  %v1499 = vunpack.c.l.b16 %v1412
  %v1500 = vunpack.c.h.b16 %v1412
  %v1501 = vunpack.c.l.b16 %v1413
  %v1502 = vunpack.c.h.b16 %v1413
  %v1503 = vunpack.c.l.b16 %v1414
  %v1504 = vunpack.c.h.b16 %v1414
  %v1505 = vunpack.c.l.b16 %v1415
  %v1506 = vunpack.c.h.b16 %v1415
  %v1507 = vunpack.c.l.b16 %v1416
  %v1508 = vunpack.c.h.b16 %v1416
  %v1509 = vunpack.c.l.b16 %v1417
  %v1510 = vunpack.c.h.b16 %v1417
  %v1511 = vunpack.c.l.b16 %v1418
  %v1512 = vunpack.c.h.b16 %v1418
  %v1513 = vunpack.c.l.b16 %v1419
  %v1514 = vunpack.c.h.b16 %v1419
  %v1515 = vunpack.c.l.b16 %v1420
  %v1516 = vunpack.c.h.b16 %v1420
  %v1517 = vpack.c.b16 %v1455, %v1453
  %v1518 = vpack.c.b16 %v1456, %v1454
  %v1519 = vpack.c.b16 %v1459, %v1457
  %v1520 = vpack.c.b16 %v1460, %v1458
  %v1521 = vpack.c.b16 %v1463, %v1461
  %v1522 = vpack.c.b16 %v1464, %v1462
  %v1523 = vpack.c.b16 %v1467, %v1465
  %v1524 = vpack.c.b16 %v1468, %v1466
  %v1525 = vpack.c.b16 %v1471, %v1469
  %v1526 = vpack.c.b16 %v1472, %v1470
  %v1527 = vpack.c.b16 %v1475, %v1473
  %v1528 = vpack.c.b16 %v1476, %v1474
  %v1529 = vpack.c.b16 %v1479, %v1477
  %v1530 = vpack.c.b16 %v1480, %v1478
  %v1531 = vpack.c.b16 %v1483, %v1481
  %v1532 = vpack.c.b16 %v1484, %v1482
  %v1533 = vpack.c.b16 %v1487, %v1485
  %v1534 = vpack.c.b16 %v1488, %v1486
  %v1535 = vpack.c.b16 %v1491, %v1489
  %v1536 = vpack.c.b16 %v1492, %v1490
  %v1537 = vpack.c.b16 %v1495, %v1493
  %v1538 = vpack.c.b16 %v1496, %v1494
  %v1539 = vpack.c.b16 %v1499, %v1497
  %v1540 = vpack.c.b16 %v1500, %v1498
  %v1541 = vpack.c.b16 %v1503, %v1501
  %v1542 = vpack.c.b16 %v1504, %v1502
  %v1543 = vpack.c.b16 %v1507, %v1505
  %v1544 = vpack.c.b16 %v1508, %v1506
  %v1545 = vpack.c.b16 %v1511, %v1509
  %v1546 = vpack.c.b16 %v1512, %v1510
  %v1547 = vpack.c.b16 %v1515, %v1513
  %v1548 = vpack.c.b16 %v1516, %v1514
  %1581 = vmatpush.bf16.msra.mxu0 %v1531
  %1582 = vmatpush.bf16.msra.mxu0 %v1529
  %1583 = vmatpush.bf16.msra.mxu0 %v1527
  %1584 = vmatpush.bf16.msra.mxu0 %v1525
  %1585 = vmatpush.bf16.msra.mxu0 %v1523
  %1586 = vmatpush.bf16.msra.mxu0 %v1521
  %1587 = vmatpush.bf16.msra.mxu0 %v1519
  %1588 = vmatpush.bf16.msra.mxu0 %v1517
  %1589 = vmatmul.bf16.gmra.mxu0 %v1387
  %v1590 = vpop.f32.mrf.mxu0
  %v1591 = vadd.f32 0.0, %v1590
  %v1592 = vpop.f32.mrf.mxu0
  %1593 = vdwg.mxu0
  %1594 = vmatpush.bf16.msra.mxu0 %v1547
  %1595 = vmatpush.bf16.msra.mxu0 %v1545
  %1596 = vmatpush.bf16.msra.mxu0 %v1543
  %1597 = vmatpush.bf16.msra.mxu0 %v1541
  %1598 = vmatpush.bf16.msra.mxu0 %v1539
  %1599 = vmatpush.bf16.msra.mxu0 %v1537
  %1600 = vmatpush.bf16.msra.mxu0 %v1535
  %1601 = vmatpush.bf16.msra.mxu0 %v1533
  %1602 = vmatmul.bf16.gmra.mxu0 %v1388
  %v1603 = vpop.f32.mrf.mxu0
  %v1604 = vadd.f32 %v1591, %v1603
  %v1605 = vpop.f32.mrf.mxu0
  %1606 = vdwg.mxu0
  %1607 = vmatpush.bf16.msra.mxu0 %v1532
  %1608 = vmatpush.bf16.msra.mxu0 %v1530
  %1609 = vmatpush.bf16.msra.mxu0 %v1528
  %1610 = vmatpush.bf16.msra.mxu0 %v1526
  %1611 = vmatpush.bf16.msra.mxu0 %v1524
  %1612 = vmatpush.bf16.msra.mxu0 %v1522
  %1613 = vmatpush.bf16.msra.mxu0 %v1520
  %1614 = vmatpush.bf16.msra.mxu0 %v1518
  %1615 = vmatmul.bf16.gmra.mxu0 %v1387
  %v1616 = vpop.f32.mrf.mxu0
  %v1617 = vadd.f32 0.0, %v1616
  %v1618 = vpop.f32.mrf.mxu0
  %1619 = vdwg.mxu0
  %1620 = vmatpush.bf16.msra.mxu0 %v1548
  %1621 = vmatpush.bf16.msra.mxu0 %v1546
  %1622 = vmatpush.bf16.msra.mxu0 %v1544
  %1623 = vmatpush.bf16.msra.mxu0 %v1542
  %1624 = vmatpush.bf16.msra.mxu0 %v1540
  %1625 = vmatpush.bf16.msra.mxu0 %v1538
  %1626 = vmatpush.bf16.msra.mxu0 %v1536
  %1627 = vmatpush.bf16.msra.mxu0 %v1534
  %1628 = vmatmul.bf16.gmra.mxu0 %v1388
  %v1629 = vpop.f32.mrf.mxu0
  %v1630 = vadd.f32 %v1617, %v1629
  %v1631 = vpop.f32.mrf.mxu0
  %1632 = vdwg.mxu0
  %v1633 = vld [vmem:[%s23] sm:$0x3]
  %v1635 = vperm.slane %v1633, 0
  %v1636 = vperm.slane %v1633, 1
  %v1639 = vmul.f32 %v1604, %v1635
  %v1640 = vmul.f32 %v1630, %v1636
  %v1641 = vld [vmem:[%s25] sm:$0x3]
  %v1643 = vperm.slane %v1641, 0
  %v1644 = vperm.slane %v1641, 1
  %v1647 = vadd.f32 %v1639, %v1643
  %v1648 = vadd.f32 %v1640, %v1644
  %1649 = vst [vmem:[%s63] sm:$0xff] %v1647
  %1650 = vst [vmem:[%s63 + $0x8] sm:$0xff] %v1648
  %v1651 = vadd.f32 %v1166, 0.0
  %v1652 = vadd.f32 %v1651, %v1192
  %v1653 = vadd.f32 %v1652, %v1218
  %v1654 = vadd.f32 %v1653, %v1244
  %v1655 = vld [vmem:[%s45] sm:$0x1]
  %v1656 = vld [vmem:[%s47] sm:$0x1]
  %v1657 = vlaneseq
  %v1658 = vand.u32 %v1657, 127
  %v1659 = vadd.s32 %v1658, 128
  %v1660 = vlaneseq
  %v1661 = vshrl.u32 %v1660, 7
  %vm1662 = vcmp.lt.s32.totalorder %v1661, 4
  %v1663 = vsel %vm1662, 1, 0
  %v1664 = vcvt.s32.f32 %v1663
  %v1665 = vmul.f32 %v1654, 0.25
  %v1666 = vpack.c.bf16 %v1665, %v1665
  %v1667 = vld [vmem:[%s27] sm:$0xf]
  %v1668 = vld [vmem:[%s27 + $0x4] sm:$0xf]
  %v1669 = vld [vmem:[%s27 + $0x8] sm:$0xf]
  %v1670 = vld [vmem:[%s27 + $0xc] sm:$0xf]
  %v1671 = vld [vmem:[%s27 + $0x10] sm:$0xf]
  %v1672 = vld [vmem:[%s27 + $0x14] sm:$0xf]
  %v1673 = vld [vmem:[%s27 + $0x18] sm:$0xf]
  %v1674 = vld [vmem:[%s27 + $0x1c] sm:$0xf]
  %v1675 = vld [vmem:[%s27 + $0x20] sm:$0xf]
  %v1676 = vld [vmem:[%s27 + $0x24] sm:$0xf]
  %v1677 = vld [vmem:[%s27 + $0x28] sm:$0xf]
  %v1678 = vld [vmem:[%s27 + $0x2c] sm:$0xf]
  %v1679 = vld [vmem:[%s27 + $0x30] sm:$0xf]
  %v1680 = vld [vmem:[%s27 + $0x34] sm:$0xf]
  %v1681 = vld [vmem:[%s27 + $0x38] sm:$0xf]
  %v1682 = vld [vmem:[%s27 + $0x3c] sm:$0xf]
  %v1683 = vld [vmem:[%s29] sm:$0x1]
  %v1685 = vperm.slane %v1683, 0
  %v1703 = vunpack.c.l.b16 %v1667
  %v1704 = vunpack.c.l.b16 %v1668
  %v1705 = vunpack.c.l.b16 %v1669
  %v1706 = vunpack.c.l.b16 %v1670
  %v1707 = vunpack.c.l.b16 %v1671
  %v1708 = vunpack.c.l.b16 %v1672
  %v1709 = vunpack.c.l.b16 %v1673
  %v1710 = vunpack.c.l.b16 %v1674
  %v1711 = vunpack.c.l.b16 %v1675
  %v1712 = vunpack.c.l.b16 %v1676
  %v1713 = vunpack.c.l.b16 %v1677
  %v1714 = vunpack.c.l.b16 %v1678
  %v1715 = vunpack.c.l.b16 %v1679
  %v1716 = vunpack.c.l.b16 %v1680
  %v1717 = vunpack.c.l.b16 %v1681
  %v1718 = vunpack.c.l.b16 %v1682
  %v1719 = vpack.c.b16 %v1704, %v1703
  %v1720 = vpack.c.b16 %v1706, %v1705
  %v1721 = vpack.c.b16 %v1708, %v1707
  %v1722 = vpack.c.b16 %v1710, %v1709
  %v1723 = vpack.c.b16 %v1712, %v1711
  %v1724 = vpack.c.b16 %v1714, %v1713
  %v1725 = vpack.c.b16 %v1716, %v1715
  %v1726 = vpack.c.b16 %v1718, %v1717
  %1735 = vmatpush.bf16.msra.mxu0 %v1726
  %1736 = vmatpush.bf16.msra.mxu0 %v1725
  %1737 = vmatpush.bf16.msra.mxu0 %v1724
  %1738 = vmatpush.bf16.msra.mxu0 %v1723
  %1739 = vmatpush.bf16.msra.mxu0 %v1722
  %1740 = vmatpush.bf16.msra.mxu0 %v1721
  %1741 = vmatpush.bf16.msra.mxu0 %v1720
  %1742 = vmatpush.bf16.msra.mxu0 %v1719
  %1743 = vmatmul.bf16.gmra.mxu0 %v1666
  %v1744 = vpop.f32.mrf.mxu0
  %v1745 = vadd.f32 %v1685, %v1744
  %v1746 = vpop.f32.mrf.mxu0
  %1747 = vdwg.mxu0
  %v1748 = vtanh.pop %v1745
  %v1749 = vpack.c.bf16 %v1748, %v1748
  %v1750 = vld [vmem:[%s31] sm:$0xff]
  %v1751 = vld [vmem:[%s31 + $0x8] sm:$0xff]
  %v1752 = vld [vmem:[%s31 + $0x10] sm:$0xff]
  %v1753 = vld [vmem:[%s31 + $0x18] sm:$0xff]
  %v1754 = vld [vmem:[%s31 + $0x20] sm:$0xff]
  %v1755 = vld [vmem:[%s31 + $0x28] sm:$0xff]
  %v1756 = vld [vmem:[%s31 + $0x30] sm:$0xff]
  %v1757 = vld [vmem:[%s31 + $0x38] sm:$0xff]
  %v1758 = vld [vmem:[%s31 + $0x40] sm:$0xff]
  %v1759 = vld [vmem:[%s31 + $0x48] sm:$0xff]
  %v1760 = vld [vmem:[%s31 + $0x50] sm:$0xff]
  %v1761 = vld [vmem:[%s31 + $0x58] sm:$0xff]
  %v1762 = vld [vmem:[%s31 + $0x60] sm:$0xff]
  %v1763 = vld [vmem:[%s31 + $0x68] sm:$0xff]
  %v1764 = vld [vmem:[%s31 + $0x70] sm:$0xff]
  %v1765 = vld [vmem:[%s31 + $0x78] sm:$0xff]
  %v1766 = vld [vmem:[%s33] sm:$0x3]
  %v1768 = vperm.slane %v1766, 0
  %v1769 = vperm.slane %v1766, 1
  %v1788 = vunpack.c.l.b16 %v1750
  %v1789 = vunpack.c.h.b16 %v1750
  %v1790 = vunpack.c.l.b16 %v1751
  %v1791 = vunpack.c.h.b16 %v1751
  %v1792 = vunpack.c.l.b16 %v1752
  %v1793 = vunpack.c.h.b16 %v1752
  %v1794 = vunpack.c.l.b16 %v1753
  %v1795 = vunpack.c.h.b16 %v1753
  %v1796 = vunpack.c.l.b16 %v1754
  %v1797 = vunpack.c.h.b16 %v1754
  %v1798 = vunpack.c.l.b16 %v1755
  %v1799 = vunpack.c.h.b16 %v1755
  %v1800 = vunpack.c.l.b16 %v1756
  %v1801 = vunpack.c.h.b16 %v1756
  %v1802 = vunpack.c.l.b16 %v1757
  %v1803 = vunpack.c.h.b16 %v1757
  %v1804 = vunpack.c.l.b16 %v1758
  %v1805 = vunpack.c.h.b16 %v1758
  %v1806 = vunpack.c.l.b16 %v1759
  %v1807 = vunpack.c.h.b16 %v1759
  %v1808 = vunpack.c.l.b16 %v1760
  %v1809 = vunpack.c.h.b16 %v1760
  %v1810 = vunpack.c.l.b16 %v1761
  %v1811 = vunpack.c.h.b16 %v1761
  %v1812 = vunpack.c.l.b16 %v1762
  %v1813 = vunpack.c.h.b16 %v1762
  %v1814 = vunpack.c.l.b16 %v1763
  %v1815 = vunpack.c.h.b16 %v1763
  %v1816 = vunpack.c.l.b16 %v1764
  %v1817 = vunpack.c.h.b16 %v1764
  %v1818 = vunpack.c.l.b16 %v1765
  %v1819 = vunpack.c.h.b16 %v1765
  %v1820 = vpack.c.b16 %v1790, %v1788
  %v1821 = vpack.c.b16 %v1791, %v1789
  %v1822 = vpack.c.b16 %v1794, %v1792
  %v1823 = vpack.c.b16 %v1795, %v1793
  %v1824 = vpack.c.b16 %v1798, %v1796
  %v1825 = vpack.c.b16 %v1799, %v1797
  %v1826 = vpack.c.b16 %v1802, %v1800
  %v1827 = vpack.c.b16 %v1803, %v1801
  %v1828 = vpack.c.b16 %v1806, %v1804
  %v1829 = vpack.c.b16 %v1807, %v1805
  %v1830 = vpack.c.b16 %v1810, %v1808
  %v1831 = vpack.c.b16 %v1811, %v1809
  %v1832 = vpack.c.b16 %v1814, %v1812
  %v1833 = vpack.c.b16 %v1815, %v1813
  %v1834 = vpack.c.b16 %v1818, %v1816
  %v1835 = vpack.c.b16 %v1819, %v1817
  %1852 = vmatpush.bf16.msra.mxu0 %v1834
  %1853 = vmatpush.bf16.msra.mxu0 %v1832
  %1854 = vmatpush.bf16.msra.mxu0 %v1830
  %1855 = vmatpush.bf16.msra.mxu0 %v1828
  %1856 = vmatpush.bf16.msra.mxu0 %v1826
  %1857 = vmatpush.bf16.msra.mxu0 %v1824
  %1858 = vmatpush.bf16.msra.mxu0 %v1822
  %1859 = vmatpush.bf16.msra.mxu0 %v1820
  %1860 = vmatmul.bf16.gmra.mxu0 %v1749
  %v1861 = vpop.f32.mrf.mxu0
  %v1862 = vadd.f32 %v1768, %v1861
  %v1863 = vpop.f32.mrf.mxu0
  %1864 = vdwg.mxu0
  %1865 = vmatpush.bf16.msra.mxu0 %v1835
  %1866 = vmatpush.bf16.msra.mxu0 %v1833
  %1867 = vmatpush.bf16.msra.mxu0 %v1831
  %1868 = vmatpush.bf16.msra.mxu0 %v1829
  %1869 = vmatpush.bf16.msra.mxu0 %v1827
  %1870 = vmatpush.bf16.msra.mxu0 %v1825
  %1871 = vmatpush.bf16.msra.mxu0 %v1823
  %1872 = vmatpush.bf16.msra.mxu0 %v1821
  %1873 = vmatmul.bf16.gmra.mxu0 %v1749
  %v1874 = vpop.f32.mrf.mxu0
  %v1875 = vadd.f32 %v1769, %v1874
  %v1876 = vpop.f32.mrf.mxu0
  %1877 = vdwg.mxu0
  %v1878 = vmax.f32 %v1862, %v1875
  %1879 = vmax.xlane.f32.xlu0 %v1878
  %v1880 = vpop.xlane.xlu0 %1879
  %v1881 = vsub.f32 %v1862, %v1880
  %v1882 = vsub.f32 %v1875, %v1880
  %v1883 = vmin.f32 %v1881, %v1882
  %1884 = vmin.xlane.f32.xlu0 %v1883
  %v1885 = vpop.xlane.xlu0 %1884
  %vm1886 = vcmp.gt.f32.partialorder 0.0, 0.0
  %v1887 = vsel %vm1886, 1, 0
  %vm1888 = vcmp.eq.s32.totalorder %v1887, 1
  %v1889 = vsel %vm1888, %v1885, %v1881
  %v1890 = vsel %vm1888, %v1885, %v1882
  %v1891 = vmul.f32 %v1881, 1.442695
  %v1892 = vpow.pop %v1891
  %v1893 = vmul.f32 %v1882, 1.442695
  %v1894 = vpow.pop %v1893
  %v1895 = vadd.f32 %v1892, %v1894
  %1896 = vadd.xlane.f32.xlu0 %v1895
  %v1897 = vpop.xlane.xlu0 %1896
  %v1898 = vrcp.pop %v1897
  %v1899 = vmul.f32 %v1897, %v1898
  %v1900 = vsub.f32 1.0, %v1899
  %v1901 = vmul.f32 %v1898, %v1900
  %v1902 = vadd.f32 %v1898, %v1901
  %vm1903 = vweird.f32 %v1897
  %vm1904 = vweird.f32 %v1898
  %vm1905 = vmor %vm1903, %vm1904
  %v1906 = vsel %vm1905, %v1898, %v1902
  %v1907 = vand.u32 2147483647, %v1897
  %vm1908 = vcmp.eq.f32.partialorder %v1907, 8.507059e+37
  %v1909 = vand.u32 %v1897, 2147483648
  %v1910 = vor.u32 1.1754944e-38, %v1909
  %v1911 = vsel %vm1908, %v1910, %v1906
  %v1912 = vmul.f32 %v1892, %v1911
  %v1913 = vmul.f32 %v1894, %v1911
  %v1914 = vmul.f32 %v1889, 1.442695
  %v1915 = vpow.pop %v1914
  %v1916 = vmul.f32 %v1890, 1.442695
  %v1917 = vpow.pop %v1916
  %v1918 = vadd.f32 %v1915, %v1917
  %1919 = vadd.xlane.f32.xlu0 %v1918
  %v1920 = vpop.xlane.xlu0 %1919
  %v1921 = vlog2.pop %v1920
  %v1922 = vmul.f32 %v1921, 0.6931472
  %v1923 = vsub.f32 %v1889, %v1922
  %v1924 = vsub.f32 %v1890, %v1922
  %v1925 = vmax.f32 %v1912, %v1913
  %1926 = vmax.xlane.f32.xlu0 %v1925
  %v1927 = vpop.xlane.xlu0 %1926
  %vm1928 = vcmp.eq.f32.partialorder %v1912, %v1927
  %vm1929 = vcmp.eq.f32.partialorder %v1913, %v1927
  %v1930 = vsel %vm1928, %v1658, 256
  %v1931 = vsel %vm1929, %v1659, 256
  %vm1932 = vcmp.lt.s32.totalorder %v1930, %v1931
  %v1933 = vsel %vm1932, %v1930, %v1931
  %v1934 = vand.u32 %v1933, 65535
  %v1935 = vshra.s32 %v1933, 16
  %v1936 = vcvt.s32.f32 %v1934
  %v1937 = vcvt.s32.f32 %v1935
  %1938 = vmin.xlane.f32.xlu0 %v1937
  %v1939 = vpop.xlane.xlu0 %1938
  %vm1940 = vcmp.eq.f32.partialorder %v1937, %v1939
  %v1941 = vsel %vm1940, %v1936, inf
  %1942 = vmin.xlane.f32.xlu0 %v1941
  %v1943 = vpop.xlane.xlu0 %1942
  %v1944 = vcvt.f32.s32 %v1943
  %v1945 = vcvt.f32.s32 %v1939
  %v1946 = vshll.u32 %v1945, 16
  %v1947 = vadd.s32 %v1946, %v1944
  %vm1948 = vcmp.eq.s32.totalorder %v1658, %v1947
  %vm1949 = vcmp.eq.s32.totalorder %v1659, %v1947
  %v1950 = vsel %vm1948, 1, 0
  %v1951 = vsel %vm1949, 1, 0
  %v1952 = vcvt.s32.f32 %v1950
  %v1953 = vcvt.s32.f32 %v1951
  %v1954 = vpack.c.bf16 %v1952, %v1952
  %v1955 = vpack.c.bf16 %v1953, %v1953
  %v1956 = vld [vmem:[%s43] sm:$0xf]
  %v1957 = vld [vmem:[%s43 + $0x4] sm:$0xf]
  %v1958 = vld [vmem:[%s43 + $0x8] sm:$0xf]
  %v1959 = vld [vmem:[%s43 + $0xc] sm:$0xf]
  %v1960 = vld [vmem:[%s43 + $0x10] sm:$0xf]
  %v1961 = vld [vmem:[%s43 + $0x14] sm:$0xf]
  %v1962 = vld [vmem:[%s43 + $0x18] sm:$0xf]
  %v1963 = vld [vmem:[%s43 + $0x1c] sm:$0xf]
  %v1964 = vld [vmem:[%s43 + $0x20] sm:$0xf]
  %v1965 = vld [vmem:[%s43 + $0x24] sm:$0xf]
  %v1966 = vld [vmem:[%s43 + $0x28] sm:$0xf]
  %v1967 = vld [vmem:[%s43 + $0x2c] sm:$0xf]
  %v1968 = vld [vmem:[%s43 + $0x30] sm:$0xf]
  %v1969 = vld [vmem:[%s43 + $0x34] sm:$0xf]
  %v1970 = vld [vmem:[%s43 + $0x38] sm:$0xf]
  %v1971 = vld [vmem:[%s43 + $0x3c] sm:$0xf]
  %v1972 = vld [vmem:[%s43 + $0x40] sm:$0xf]
  %v1973 = vld [vmem:[%s43 + $0x44] sm:$0xf]
  %v1974 = vld [vmem:[%s43 + $0x48] sm:$0xf]
  %v1975 = vld [vmem:[%s43 + $0x4c] sm:$0xf]
  %v1976 = vld [vmem:[%s43 + $0x50] sm:$0xf]
  %v1977 = vld [vmem:[%s43 + $0x54] sm:$0xf]
  %v1978 = vld [vmem:[%s43 + $0x58] sm:$0xf]
  %v1979 = vld [vmem:[%s43 + $0x5c] sm:$0xf]
  %v1980 = vld [vmem:[%s43 + $0x60] sm:$0xf]
  %v1981 = vld [vmem:[%s43 + $0x64] sm:$0xf]
  %v1982 = vld [vmem:[%s43 + $0x68] sm:$0xf]
  %v1983 = vld [vmem:[%s43 + $0x6c] sm:$0xf]
  %v1984 = vld [vmem:[%s43 + $0x70] sm:$0xf]
  %v1985 = vld [vmem:[%s43 + $0x74] sm:$0xf]
  %v1986 = vld [vmem:[%s43 + $0x78] sm:$0xf]
  %v1987 = vld [vmem:[%s43 + $0x7c] sm:$0xf]
  %v2020 = vunpack.c.l.b16 %v1956
  %v2021 = vunpack.c.l.b16 %v1957
  %v2022 = vunpack.c.l.b16 %v1958
  %v2023 = vunpack.c.l.b16 %v1959
  %v2024 = vunpack.c.l.b16 %v1960
  %v2025 = vunpack.c.l.b16 %v1961
  %v2026 = vunpack.c.l.b16 %v1962
  %v2027 = vunpack.c.l.b16 %v1963
  %v2028 = vunpack.c.l.b16 %v1964
  %v2029 = vunpack.c.l.b16 %v1965
  %v2030 = vunpack.c.l.b16 %v1966
  %v2031 = vunpack.c.l.b16 %v1967
  %v2032 = vunpack.c.l.b16 %v1968
  %v2033 = vunpack.c.l.b16 %v1969
  %v2034 = vunpack.c.l.b16 %v1970
  %v2035 = vunpack.c.l.b16 %v1971
  %v2036 = vunpack.c.l.b16 %v1972
  %v2037 = vunpack.c.l.b16 %v1973
  %v2038 = vunpack.c.l.b16 %v1974
  %v2039 = vunpack.c.l.b16 %v1975
  %v2040 = vunpack.c.l.b16 %v1976
  %v2041 = vunpack.c.l.b16 %v1977
  %v2042 = vunpack.c.l.b16 %v1978
  %v2043 = vunpack.c.l.b16 %v1979
  %v2044 = vunpack.c.l.b16 %v1980
  %v2045 = vunpack.c.l.b16 %v1981
  %v2046 = vunpack.c.l.b16 %v1982
  %v2047 = vunpack.c.l.b16 %v1983
  %v2048 = vunpack.c.l.b16 %v1984
  %v2049 = vunpack.c.l.b16 %v1985
  %v2050 = vunpack.c.l.b16 %v1986
  %v2051 = vunpack.c.l.b16 %v1987
  %v2052 = vpack.c.b16 %v2021, %v2020
  %v2053 = vpack.c.b16 %v2023, %v2022
  %v2054 = vpack.c.b16 %v2025, %v2024
  %v2055 = vpack.c.b16 %v2027, %v2026
  %v2056 = vpack.c.b16 %v2029, %v2028
  %v2057 = vpack.c.b16 %v2031, %v2030
  %v2058 = vpack.c.b16 %v2033, %v2032
  %v2059 = vpack.c.b16 %v2035, %v2034
  %v2060 = vpack.c.b16 %v2037, %v2036
  %v2061 = vpack.c.b16 %v2039, %v2038
  %v2062 = vpack.c.b16 %v2041, %v2040
  %v2063 = vpack.c.b16 %v2043, %v2042
  %v2064 = vpack.c.b16 %v2045, %v2044
  %v2065 = vpack.c.b16 %v2047, %v2046
  %v2066 = vpack.c.b16 %v2049, %v2048
  %v2067 = vpack.c.b16 %v2051, %v2050
  %2084 = vmatpush.bf16.msra.mxu0 %v2059
  %2085 = vmatpush.bf16.msra.mxu0 %v2058
  %2086 = vmatpush.bf16.msra.mxu0 %v2057
  %2087 = vmatpush.bf16.msra.mxu0 %v2056
  %2088 = vmatpush.bf16.msra.mxu0 %v2055
  %2089 = vmatpush.bf16.msra.mxu0 %v2054
  %2090 = vmatpush.bf16.msra.mxu0 %v2053
  %2091 = vmatpush.bf16.msra.mxu0 %v2052
  %2092 = vmatmul.bf16.gmra.mxu0 %v1954
  %v2093 = vpop.f32.mrf.mxu0
  %v2094 = vadd.f32 0.0, %v2093
  %v2095 = vpop.f32.mrf.mxu0
  %2096 = vdwg.mxu0
  %2097 = vmatpush.bf16.msra.mxu0 %v2067
  %2098 = vmatpush.bf16.msra.mxu0 %v2066
  %2099 = vmatpush.bf16.msra.mxu0 %v2065
  %2100 = vmatpush.bf16.msra.mxu0 %v2064
  %2101 = vmatpush.bf16.msra.mxu0 %v2063
  %2102 = vmatpush.bf16.msra.mxu0 %v2062
  %2103 = vmatpush.bf16.msra.mxu0 %v2061
  %2104 = vmatpush.bf16.msra.mxu0 %v2060
  %2105 = vmatmul.bf16.gmra.mxu0 %v1955
  %v2106 = vpop.f32.mrf.mxu0
  %v2107 = vadd.f32 %v2094, %v2106
  %v2108 = vpop.f32.mrf.mxu0
  %2109 = vdwg.mxu0
  %2110 = vst [vmem:[%s69] sm:$0xff] %v1912
  %2111 = vst [vmem:[%s69 + $0x8] sm:$0xff] %v1913
  %2112 = vst [vmem:[%s71] sm:$0xff] %v1923
  %2113 = vst [vmem:[%s71 + $0x8] sm:$0xff] %v1924
  %vm2114 = vcmp.eq.s32.totalorder %v1947, 220
  %v2115 = vsel %vm2114, 1, 0
  %vm2116 = vcmp.eq.s32.totalorder %v2115, 1
  %v2118 = vperm.slane %v1656, 0
  %v2120 = vsel %vm2116, %v2118, %v2107
  %v2121 = vadd.f32 %v1654, %v2107
  %v2122 = vadd.f32 %v2107, 0.0
  %v2123 = vmul.f32 %v1952, %v1664
  %v2124 = vmul.f32 %v1953, %v1664
  %v2125 = vrot.slane %v2123, 4
  %v2126 = vmax.f32 %v2123, %v2125
  %v2127 = vrot.slane %v2126, 2
  %v2128 = vmax.f32 %v2126, %v2127
  %v2129 = vrot.slane %v2128, 1
  %v2130 = vmax.f32 %v2128, %v2129
  %v2131 = vrot.slane %v2124, 4
  %v2132 = vmax.f32 %v2124, %v2131
  %v2133 = vrot.slane %v2132, 2
  %v2134 = vmax.f32 %v2132, %v2133
  %v2135 = vrot.slane %v2134, 1
  %v2136 = vmax.f32 %v2134, %v2135
  %v2137 = vmax.f32 %v2130, 0.0
  %v2138 = vmax.f32 %v2136, 0.0
  %v2139 = vadd.f32 %v2120, 0.0
  %v2140 = vmul.f32 %v2121, 0.2
  %v2141 = vpack.c.bf16 %v2140, %v2140
  %v2142 = vld [vmem:[%s27] sm:$0xf]
  %v2143 = vld [vmem:[%s27 + $0x4] sm:$0xf]
  %v2144 = vld [vmem:[%s27 + $0x8] sm:$0xf]
  %v2145 = vld [vmem:[%s27 + $0xc] sm:$0xf]
  %v2146 = vld [vmem:[%s27 + $0x10] sm:$0xf]
  %v2147 = vld [vmem:[%s27 + $0x14] sm:$0xf]
  %v2148 = vld [vmem:[%s27 + $0x18] sm:$0xf]
  %v2149 = vld [vmem:[%s27 + $0x1c] sm:$0xf]
  %v2150 = vld [vmem:[%s27 + $0x20] sm:$0xf]
  %v2151 = vld [vmem:[%s27 + $0x24] sm:$0xf]
  %v2152 = vld [vmem:[%s27 + $0x28] sm:$0xf]
  %v2153 = vld [vmem:[%s27 + $0x2c] sm:$0xf]
  %v2154 = vld [vmem:[%s27 + $0x30] sm:$0xf]
  %v2155 = vld [vmem:[%s27 + $0x34] sm:$0xf]
  %v2156 = vld [vmem:[%s27 + $0x38] sm:$0xf]
  %v2157 = vld [vmem:[%s27 + $0x3c] sm:$0xf]
  %v2158 = vld [vmem:[%s29] sm:$0x1]
  %v2160 = vperm.slane %v2158, 0
  %v2178 = vunpack.c.l.b16 %v2142
  %v2179 = vunpack.c.l.b16 %v2143
  %v2180 = vunpack.c.l.b16 %v2144
  %v2181 = vunpack.c.l.b16 %v2145
  %v2182 = vunpack.c.l.b16 %v2146
  %v2183 = vunpack.c.l.b16 %v2147
  %v2184 = vunpack.c.l.b16 %v2148
  %v2185 = vunpack.c.l.b16 %v2149
  %v2186 = vunpack.c.l.b16 %v2150
  %v2187 = vunpack.c.l.b16 %v2151
  %v2188 = vunpack.c.l.b16 %v2152
  %v2189 = vunpack.c.l.b16 %v2153
  %v2190 = vunpack.c.l.b16 %v2154
  %v2191 = vunpack.c.l.b16 %v2155
  %v2192 = vunpack.c.l.b16 %v2156
  %v2193 = vunpack.c.l.b16 %v2157
  %v2194 = vpack.c.b16 %v2179, %v2178
  %v2195 = vpack.c.b16 %v2181, %v2180
  %v2196 = vpack.c.b16 %v2183, %v2182
  %v2197 = vpack.c.b16 %v2185, %v2184
  %v2198 = vpack.c.b16 %v2187, %v2186
  %v2199 = vpack.c.b16 %v2189, %v2188
  %v2200 = vpack.c.b16 %v2191, %v2190
  %v2201 = vpack.c.b16 %v2193, %v2192
  %2210 = vmatpush.bf16.msra.mxu0 %v2201
  %2211 = vmatpush.bf16.msra.mxu0 %v2200
  %2212 = vmatpush.bf16.msra.mxu0 %v2199
  %2213 = vmatpush.bf16.msra.mxu0 %v2198
  %2214 = vmatpush.bf16.msra.mxu0 %v2197
  %2215 = vmatpush.bf16.msra.mxu0 %v2196
  %2216 = vmatpush.bf16.msra.mxu0 %v2195
  %2217 = vmatpush.bf16.msra.mxu0 %v2194
  %2218 = vmatmul.bf16.gmra.mxu0 %v2141
  %v2219 = vpop.f32.mrf.mxu0
  %v2220 = vadd.f32 %v2160, %v2219
  %v2221 = vpop.f32.mrf.mxu0
  %2222 = vdwg.mxu0
  %v2223 = vtanh.pop %v2220
  %v2224 = vpack.c.bf16 %v2223, %v2223
  %v2225 = vld [vmem:[%s31] sm:$0xff]
  %v2226 = vld [vmem:[%s31 + $0x8] sm:$0xff]
  %v2227 = vld [vmem:[%s31 + $0x10] sm:$0xff]
  %v2228 = vld [vmem:[%s31 + $0x18] sm:$0xff]
  %v2229 = vld [vmem:[%s31 + $0x20] sm:$0xff]
  %v2230 = vld [vmem:[%s31 + $0x28] sm:$0xff]
  %v2231 = vld [vmem:[%s31 + $0x30] sm:$0xff]
  %v2232 = vld [vmem:[%s31 + $0x38] sm:$0xff]
  %v2233 = vld [vmem:[%s31 + $0x40] sm:$0xff]
  %v2234 = vld [vmem:[%s31 + $0x48] sm:$0xff]
  %v2235 = vld [vmem:[%s31 + $0x50] sm:$0xff]
  %v2236 = vld [vmem:[%s31 + $0x58] sm:$0xff]
  %v2237 = vld [vmem:[%s31 + $0x60] sm:$0xff]
  %v2238 = vld [vmem:[%s31 + $0x68] sm:$0xff]
  %v2239 = vld [vmem:[%s31 + $0x70] sm:$0xff]
  %v2240 = vld [vmem:[%s31 + $0x78] sm:$0xff]
  %v2241 = vld [vmem:[%s33] sm:$0x3]
  %v2243 = vperm.slane %v2241, 0
  %v2244 = vperm.slane %v2241, 1
  %v2263 = vunpack.c.l.b16 %v2225
  %v2264 = vunpack.c.h.b16 %v2225
  %v2265 = vunpack.c.l.b16 %v2226
  %v2266 = vunpack.c.h.b16 %v2226
  %v2267 = vunpack.c.l.b16 %v2227
  %v2268 = vunpack.c.h.b16 %v2227
  %v2269 = vunpack.c.l.b16 %v2228
  %v2270 = vunpack.c.h.b16 %v2228
  %v2271 = vunpack.c.l.b16 %v2229
  %v2272 = vunpack.c.h.b16 %v2229
  %v2273 = vunpack.c.l.b16 %v2230
  %v2274 = vunpack.c.h.b16 %v2230
  %v2275 = vunpack.c.l.b16 %v2231
  %v2276 = vunpack.c.h.b16 %v2231
  %v2277 = vunpack.c.l.b16 %v2232
  %v2278 = vunpack.c.h.b16 %v2232
  %v2279 = vunpack.c.l.b16 %v2233
  %v2280 = vunpack.c.h.b16 %v2233
  %v2281 = vunpack.c.l.b16 %v2234
  %v2282 = vunpack.c.h.b16 %v2234
  %v2283 = vunpack.c.l.b16 %v2235
  %v2284 = vunpack.c.h.b16 %v2235
  %v2285 = vunpack.c.l.b16 %v2236
  %v2286 = vunpack.c.h.b16 %v2236
  %v2287 = vunpack.c.l.b16 %v2237
  %v2288 = vunpack.c.h.b16 %v2237
  %v2289 = vunpack.c.l.b16 %v2238
  %v2290 = vunpack.c.h.b16 %v2238
  %v2291 = vunpack.c.l.b16 %v2239
  %v2292 = vunpack.c.h.b16 %v2239
  %v2293 = vunpack.c.l.b16 %v2240
  %v2294 = vunpack.c.h.b16 %v2240
  %v2295 = vpack.c.b16 %v2265, %v2263
  %v2296 = vpack.c.b16 %v2266, %v2264
  %v2297 = vpack.c.b16 %v2269, %v2267
  %v2298 = vpack.c.b16 %v2270, %v2268
  %v2299 = vpack.c.b16 %v2273, %v2271
  %v2300 = vpack.c.b16 %v2274, %v2272
  %v2301 = vpack.c.b16 %v2277, %v2275
  %v2302 = vpack.c.b16 %v2278, %v2276
  %v2303 = vpack.c.b16 %v2281, %v2279
  %v2304 = vpack.c.b16 %v2282, %v2280
  %v2305 = vpack.c.b16 %v2285, %v2283
  %v2306 = vpack.c.b16 %v2286, %v2284
  %v2307 = vpack.c.b16 %v2289, %v2287
  %v2308 = vpack.c.b16 %v2290, %v2288
  %v2309 = vpack.c.b16 %v2293, %v2291
  %v2310 = vpack.c.b16 %v2294, %v2292
  %2327 = vmatpush.bf16.msra.mxu0 %v2309
  %2328 = vmatpush.bf16.msra.mxu0 %v2307
  %2329 = vmatpush.bf16.msra.mxu0 %v2305
  %2330 = vmatpush.bf16.msra.mxu0 %v2303
  %2331 = vmatpush.bf16.msra.mxu0 %v2301
  %2332 = vmatpush.bf16.msra.mxu0 %v2299
  %2333 = vmatpush.bf16.msra.mxu0 %v2297
  %2334 = vmatpush.bf16.msra.mxu0 %v2295
  %2335 = vmatmul.bf16.gmra.mxu0 %v2224
  %v2336 = vpop.f32.mrf.mxu0
  %v2337 = vadd.f32 %v2243, %v2336
  %v2338 = vpop.f32.mrf.mxu0
  %2339 = vdwg.mxu0
  %2340 = vmatpush.bf16.msra.mxu0 %v2310
  %2341 = vmatpush.bf16.msra.mxu0 %v2308
  %2342 = vmatpush.bf16.msra.mxu0 %v2306
  %2343 = vmatpush.bf16.msra.mxu0 %v2304
  %2344 = vmatpush.bf16.msra.mxu0 %v2302
  %2345 = vmatpush.bf16.msra.mxu0 %v2300
  %2346 = vmatpush.bf16.msra.mxu0 %v2298
  %2347 = vmatpush.bf16.msra.mxu0 %v2296
  %2348 = vmatmul.bf16.gmra.mxu0 %v2224
  %v2349 = vpop.f32.mrf.mxu0
  %v2350 = vadd.f32 %v2244, %v2349
  %v2351 = vpop.f32.mrf.mxu0
  %2352 = vdwg.mxu0
  %v2353 = vpack.c.bf16 %v2122, %v2122
  %v2354 = vld [vmem:[%s35] sm:$0xf]
  %v2355 = vld [vmem:[%s35 + $0x4] sm:$0xf]
  %v2356 = vld [vmem:[%s35 + $0x8] sm:$0xf]
  %v2357 = vld [vmem:[%s35 + $0xc] sm:$0xf]
  %v2358 = vld [vmem:[%s35 + $0x10] sm:$0xf]
  %v2359 = vld [vmem:[%s35 + $0x14] sm:$0xf]
  %v2360 = vld [vmem:[%s35 + $0x18] sm:$0xf]
  %v2361 = vld [vmem:[%s35 + $0x1c] sm:$0xf]
  %v2362 = vld [vmem:[%s35 + $0x20] sm:$0xf]
  %v2363 = vld [vmem:[%s35 + $0x24] sm:$0xf]
  %v2364 = vld [vmem:[%s35 + $0x28] sm:$0xf]
  %v2365 = vld [vmem:[%s35 + $0x2c] sm:$0xf]
  %v2366 = vld [vmem:[%s35 + $0x30] sm:$0xf]
  %v2367 = vld [vmem:[%s35 + $0x34] sm:$0xf]
  %v2368 = vld [vmem:[%s35 + $0x38] sm:$0xf]
  %v2369 = vld [vmem:[%s35 + $0x3c] sm:$0xf]
  %v2370 = vld [vmem:[%s37] sm:$0x1]
  %v2372 = vperm.slane %v2370, 0
  %v2390 = vunpack.c.l.b16 %v2354
  %v2391 = vunpack.c.l.b16 %v2355
  %v2392 = vunpack.c.l.b16 %v2356
  %v2393 = vunpack.c.l.b16 %v2357
  %v2394 = vunpack.c.l.b16 %v2358
  %v2395 = vunpack.c.l.b16 %v2359
  %v2396 = vunpack.c.l.b16 %v2360
  %v2397 = vunpack.c.l.b16 %v2361
  %v2398 = vunpack.c.l.b16 %v2362
  %v2399 = vunpack.c.l.b16 %v2363
  %v2400 = vunpack.c.l.b16 %v2364
  %v2401 = vunpack.c.l.b16 %v2365
  %v2402 = vunpack.c.l.b16 %v2366
  %v2403 = vunpack.c.l.b16 %v2367
  %v2404 = vunpack.c.l.b16 %v2368
  %v2405 = vunpack.c.l.b16 %v2369
  %v2406 = vpack.c.b16 %v2391, %v2390
  %v2407 = vpack.c.b16 %v2393, %v2392
  %v2408 = vpack.c.b16 %v2395, %v2394
  %v2409 = vpack.c.b16 %v2397, %v2396
  %v2410 = vpack.c.b16 %v2399, %v2398
  %v2411 = vpack.c.b16 %v2401, %v2400
  %v2412 = vpack.c.b16 %v2403, %v2402
  %v2413 = vpack.c.b16 %v2405, %v2404
  %2422 = vmatpush.bf16.msra.mxu0 %v2413
  %2423 = vmatpush.bf16.msra.mxu0 %v2412
  %2424 = vmatpush.bf16.msra.mxu0 %v2411
  %2425 = vmatpush.bf16.msra.mxu0 %v2410
  %2426 = vmatpush.bf16.msra.mxu0 %v2409
  %2427 = vmatpush.bf16.msra.mxu0 %v2408
  %2428 = vmatpush.bf16.msra.mxu0 %v2407
  %2429 = vmatpush.bf16.msra.mxu0 %v2406
  %2430 = vmatmul.bf16.gmra.mxu0 %v2353
  %v2431 = vpop.f32.mrf.mxu0
  %v2432 = vadd.f32 %v2372, %v2431
  %v2433 = vpop.f32.mrf.mxu0
  %2434 = vdwg.mxu0
  %v2435 = vtanh.pop %v2432
  %v2436 = vpack.c.bf16 %v2435, %v2435
  %v2437 = vld [vmem:[%s39] sm:$0xff]
  %v2438 = vld [vmem:[%s39 + $0x8] sm:$0xff]
  %v2439 = vld [vmem:[%s39 + $0x10] sm:$0xff]
  %v2440 = vld [vmem:[%s39 + $0x18] sm:$0xff]
  %v2441 = vld [vmem:[%s39 + $0x20] sm:$0xff]
  %v2442 = vld [vmem:[%s39 + $0x28] sm:$0xff]
  %v2443 = vld [vmem:[%s39 + $0x30] sm:$0xff]
  %v2444 = vld [vmem:[%s39 + $0x38] sm:$0xff]
  %v2445 = vld [vmem:[%s39 + $0x40] sm:$0xff]
  %v2446 = vld [vmem:[%s39 + $0x48] sm:$0xff]
  %v2447 = vld [vmem:[%s39 + $0x50] sm:$0xff]
  %v2448 = vld [vmem:[%s39 + $0x58] sm:$0xff]
  %v2449 = vld [vmem:[%s39 + $0x60] sm:$0xff]
  %v2450 = vld [vmem:[%s39 + $0x68] sm:$0xff]
  %v2451 = vld [vmem:[%s39 + $0x70] sm:$0xff]
  %v2452 = vld [vmem:[%s39 + $0x78] sm:$0xff]
  %v2453 = vld [vmem:[%s41] sm:$0x3]
  %v2455 = vperm.slane %v2453, 0
  %v2456 = vperm.slane %v2453, 1
  %v2475 = vunpack.c.l.b16 %v2437
  %v2476 = vunpack.c.h.b16 %v2437
  %v2477 = vunpack.c.l.b16 %v2438
  %v2478 = vunpack.c.h.b16 %v2438
  %v2479 = vunpack.c.l.b16 %v2439
  %v2480 = vunpack.c.h.b16 %v2439
  %v2481 = vunpack.c.l.b16 %v2440
  %v2482 = vunpack.c.h.b16 %v2440
  %v2483 = vunpack.c.l.b16 %v2441
  %v2484 = vunpack.c.h.b16 %v2441
  %v2485 = vunpack.c.l.b16 %v2442
  %v2486 = vunpack.c.h.b16 %v2442
  %v2487 = vunpack.c.l.b16 %v2443
  %v2488 = vunpack.c.h.b16 %v2443
  %v2489 = vunpack.c.l.b16 %v2444
  %v2490 = vunpack.c.h.b16 %v2444
  %v2491 = vunpack.c.l.b16 %v2445
  %v2492 = vunpack.c.h.b16 %v2445
  %v2493 = vunpack.c.l.b16 %v2446
  %v2494 = vunpack.c.h.b16 %v2446
  %v2495 = vunpack.c.l.b16 %v2447
  %v2496 = vunpack.c.h.b16 %v2447
  %v2497 = vunpack.c.l.b16 %v2448
  %v2498 = vunpack.c.h.b16 %v2448
  %v2499 = vunpack.c.l.b16 %v2449
  %v2500 = vunpack.c.h.b16 %v2449
  %v2501 = vunpack.c.l.b16 %v2450
  %v2502 = vunpack.c.h.b16 %v2450
  %v2503 = vunpack.c.l.b16 %v2451
  %v2504 = vunpack.c.h.b16 %v2451
  %v2505 = vunpack.c.l.b16 %v2452
  %v2506 = vunpack.c.h.b16 %v2452
  %v2507 = vpack.c.b16 %v2477, %v2475
  %v2508 = vpack.c.b16 %v2478, %v2476
  %v2509 = vpack.c.b16 %v2481, %v2479
  %v2510 = vpack.c.b16 %v2482, %v2480
  %v2511 = vpack.c.b16 %v2485, %v2483
  %v2512 = vpack.c.b16 %v2486, %v2484
  %v2513 = vpack.c.b16 %v2489, %v2487
  %v2514 = vpack.c.b16 %v2490, %v2488
  %v2515 = vpack.c.b16 %v2493, %v2491
  %v2516 = vpack.c.b16 %v2494, %v2492
  %v2517 = vpack.c.b16 %v2497, %v2495
  %v2518 = vpack.c.b16 %v2498, %v2496
  %v2519 = vpack.c.b16 %v2501, %v2499
  %v2520 = vpack.c.b16 %v2502, %v2500
  %v2521 = vpack.c.b16 %v2505, %v2503
  %v2522 = vpack.c.b16 %v2506, %v2504
  %2539 = vmatpush.bf16.msra.mxu0 %v2521
  %2540 = vmatpush.bf16.msra.mxu0 %v2519
  %2541 = vmatpush.bf16.msra.mxu0 %v2517
  %2542 = vmatpush.bf16.msra.mxu0 %v2515
  %2543 = vmatpush.bf16.msra.mxu0 %v2513
  %2544 = vmatpush.bf16.msra.mxu0 %v2511
  %2545 = vmatpush.bf16.msra.mxu0 %v2509
  %2546 = vmatpush.bf16.msra.mxu0 %v2507
  %2547 = vmatmul.bf16.gmra.mxu0 %v2436
  %v2548 = vpop.f32.mrf.mxu0
  %v2549 = vadd.f32 %v2455, %v2548
  %v2550 = vpop.f32.mrf.mxu0
  %2551 = vdwg.mxu0
  %2552 = vmatpush.bf16.msra.mxu0 %v2522
  %2553 = vmatpush.bf16.msra.mxu0 %v2520
  %2554 = vmatpush.bf16.msra.mxu0 %v2518
  %2555 = vmatpush.bf16.msra.mxu0 %v2516
  %2556 = vmatpush.bf16.msra.mxu0 %v2514
  %2557 = vmatpush.bf16.msra.mxu0 %v2512
  %2558 = vmatpush.bf16.msra.mxu0 %v2510
  %2559 = vmatpush.bf16.msra.mxu0 %v2508
  %2560 = vmatmul.bf16.gmra.mxu0 %v2436
  %v2561 = vpop.f32.mrf.mxu0
  %v2562 = vadd.f32 %v2456, %v2561
  %v2563 = vpop.f32.mrf.mxu0
  %2564 = vdwg.mxu0
  %v2565 = vmax.f32 %v2337, %v2350
  %2566 = vmax.xlane.f32.xlu0 %v2565
  %v2567 = vpop.xlane.xlu0 %2566
  %v2568 = vsub.f32 %v2337, %v2567
  %v2569 = vsub.f32 %v2350, %v2567
  %v2570 = vmax.f32 %v2549, %v2562
  %2571 = vmax.xlane.f32.xlu0 %v2570
  %v2572 = vpop.xlane.xlu0 %2571
  %v2573 = vsub.f32 %v2549, %v2572
  %v2574 = vsub.f32 %v2562, %v2572
  %v2575 = vmin.f32 %v2573, %v2574
  %2576 = vmin.xlane.f32.xlu0 %v2575
  %v2577 = vpop.xlane.xlu0 %2576
  %vm2578 = vcmp.gt.f32.partialorder %v2137, 0.0
  %vm2579 = vcmp.gt.f32.partialorder %v2138, 0.0
  %v2580 = vsel %vm2578, 1, 0
  %v2581 = vsel %vm2579, 1, 0
  %vm2582 = vcmp.eq.s32.totalorder %v2580, 1
  %vm2583 = vcmp.eq.s32.totalorder %v2581, 1
  %v2584 = vsel %vm2582, %v2577, %v2573
  %v2585 = vsel %vm2583, %v2577, %v2574
  %v2586 = vmul.f32 %v2568, 1.442695
  %v2587 = vpow.pop %v2586
  %v2588 = vmul.f32 %v2569, 1.442695
  %v2589 = vpow.pop %v2588
  %v2590 = vadd.f32 %v2587, %v2589
  %2591 = vadd.xlane.f32.xlu0 %v2590
  %v2592 = vpop.xlane.xlu0 %2591
  %v2593 = vrcp.pop %v2592
  %v2594 = vmul.f32 %v2592, %v2593
  %v2595 = vsub.f32 1.0, %v2594
  %v2596 = vmul.f32 %v2593, %v2595
  %v2597 = vadd.f32 %v2593, %v2596
  %vm2598 = vweird.f32 %v2592
  %vm2599 = vweird.f32 %v2593
  %vm2600 = vmor %vm2598, %vm2599
  %v2601 = vsel %vm2600, %v2593, %v2597
  %v2602 = vand.u32 2147483647, %v2592
  %vm2603 = vcmp.eq.f32.partialorder %v2602, 8.507059e+37
  %v2604 = vand.u32 %v2592, 2147483648
  %v2605 = vor.u32 1.1754944e-38, %v2604
  %v2606 = vsel %vm2603, %v2605, %v2601
  %v2607 = vmul.f32 %v2587, %v2606
  %v2608 = vmul.f32 %v2589, %v2606
  %v2609 = vmul.f32 %v2584, 1.442695
  %v2610 = vpow.pop %v2609
  %v2611 = vmul.f32 %v2585, 1.442695
  %v2612 = vpow.pop %v2611
  %v2613 = vadd.f32 %v2610, %v2612
  %2614 = vadd.xlane.f32.xlu0 %v2613
  %v2615 = vpop.xlane.xlu0 %2614
  %v2616 = vlog2.pop %v2615
  %v2617 = vmul.f32 %v2616, 0.6931472
  %v2618 = vsub.f32 %v2584, %v2617
  %v2619 = vsub.f32 %v2585, %v2617
  %v2620 = vmax.f32 %v2607, %v2608
  %2621 = vmax.xlane.f32.xlu0 %v2620
  %v2622 = vpop.xlane.xlu0 %2621
  %vm2623 = vcmp.eq.f32.partialorder %v2607, %v2622
  %vm2624 = vcmp.eq.f32.partialorder %v2608, %v2622
  %v2625 = vsel %vm2623, %v1658, 256
  %v2626 = vsel %vm2624, %v1659, 256
  %vm2627 = vcmp.lt.s32.totalorder %v2625, %v2626
  %v2628 = vsel %vm2627, %v2625, %v2626
  %v2629 = vand.u32 %v2628, 65535
  %v2630 = vshra.s32 %v2628, 16
  %v2631 = vcvt.s32.f32 %v2629
  %v2632 = vcvt.s32.f32 %v2630
  %2633 = vmin.xlane.f32.xlu0 %v2632
  %v2634 = vpop.xlane.xlu0 %2633
  %vm2635 = vcmp.eq.f32.partialorder %v2632, %v2634
  %v2636 = vsel %vm2635, %v2631, inf
  %2637 = vmin.xlane.f32.xlu0 %v2636
  %v2638 = vpop.xlane.xlu0 %2637
  %v2639 = vcvt.f32.s32 %v2638
  %v2640 = vcvt.f32.s32 %v2634
  %v2641 = vshll.u32 %v2640, 16
  %v2642 = vadd.s32 %v2641, %v2639
  %vm2643 = vcmp.eq.s32.totalorder %v1658, %v2642
  %vm2644 = vcmp.eq.s32.totalorder %v1659, %v2642
  %v2645 = vsel %vm2643, 1, 0
  %v2646 = vsel %vm2644, 1, 0
  %v2647 = vcvt.s32.f32 %v2645
  %v2648 = vcvt.s32.f32 %v2646
  %v2649 = vpack.c.bf16 %v2647, %v2647
  %v2650 = vpack.c.bf16 %v2648, %v2648
  %v2651 = vld [vmem:[%s43] sm:$0xf]
  %v2652 = vld [vmem:[%s43 + $0x4] sm:$0xf]
  %v2653 = vld [vmem:[%s43 + $0x8] sm:$0xf]
  %v2654 = vld [vmem:[%s43 + $0xc] sm:$0xf]
  %v2655 = vld [vmem:[%s43 + $0x10] sm:$0xf]
  %v2656 = vld [vmem:[%s43 + $0x14] sm:$0xf]
  %v2657 = vld [vmem:[%s43 + $0x18] sm:$0xf]
  %v2658 = vld [vmem:[%s43 + $0x1c] sm:$0xf]
  %v2659 = vld [vmem:[%s43 + $0x20] sm:$0xf]
  %v2660 = vld [vmem:[%s43 + $0x24] sm:$0xf]
  %v2661 = vld [vmem:[%s43 + $0x28] sm:$0xf]
  %v2662 = vld [vmem:[%s43 + $0x2c] sm:$0xf]
  %v2663 = vld [vmem:[%s43 + $0x30] sm:$0xf]
  %v2664 = vld [vmem:[%s43 + $0x34] sm:$0xf]
  %v2665 = vld [vmem:[%s43 + $0x38] sm:$0xf]
  %v2666 = vld [vmem:[%s43 + $0x3c] sm:$0xf]
  %v2667 = vld [vmem:[%s43 + $0x40] sm:$0xf]
  %v2668 = vld [vmem:[%s43 + $0x44] sm:$0xf]
  %v2669 = vld [vmem:[%s43 + $0x48] sm:$0xf]
  %v2670 = vld [vmem:[%s43 + $0x4c] sm:$0xf]
  %v2671 = vld [vmem:[%s43 + $0x50] sm:$0xf]
  %v2672 = vld [vmem:[%s43 + $0x54] sm:$0xf]
  %v2673 = vld [vmem:[%s43 + $0x58] sm:$0xf]
  %v2674 = vld [vmem:[%s43 + $0x5c] sm:$0xf]
  %v2675 = vld [vmem:[%s43 + $0x60] sm:$0xf]
  %v2676 = vld [vmem:[%s43 + $0x64] sm:$0xf]
  %v2677 = vld [vmem:[%s43 + $0x68] sm:$0xf]
  %v2678 = vld [vmem:[%s43 + $0x6c] sm:$0xf]
  %v2679 = vld [vmem:[%s43 + $0x70] sm:$0xf]
  %v2680 = vld [vmem:[%s43 + $0x74] sm:$0xf]
  %v2681 = vld [vmem:[%s43 + $0x78] sm:$0xf]
  %v2682 = vld [vmem:[%s43 + $0x7c] sm:$0xf]
  %v2715 = vunpack.c.l.b16 %v2651
  %v2716 = vunpack.c.l.b16 %v2652
  %v2717 = vunpack.c.l.b16 %v2653
  %v2718 = vunpack.c.l.b16 %v2654
  %v2719 = vunpack.c.l.b16 %v2655
  %v2720 = vunpack.c.l.b16 %v2656
  %v2721 = vunpack.c.l.b16 %v2657
  %v2722 = vunpack.c.l.b16 %v2658
  %v2723 = vunpack.c.l.b16 %v2659
  %v2724 = vunpack.c.l.b16 %v2660
  %v2725 = vunpack.c.l.b16 %v2661
  %v2726 = vunpack.c.l.b16 %v2662
  %v2727 = vunpack.c.l.b16 %v2663
  %v2728 = vunpack.c.l.b16 %v2664
  %v2729 = vunpack.c.l.b16 %v2665
  %v2730 = vunpack.c.l.b16 %v2666
  %v2731 = vunpack.c.l.b16 %v2667
  %v2732 = vunpack.c.l.b16 %v2668
  %v2733 = vunpack.c.l.b16 %v2669
  %v2734 = vunpack.c.l.b16 %v2670
  %v2735 = vunpack.c.l.b16 %v2671
  %v2736 = vunpack.c.l.b16 %v2672
  %v2737 = vunpack.c.l.b16 %v2673
  %v2738 = vunpack.c.l.b16 %v2674
  %v2739 = vunpack.c.l.b16 %v2675
  %v2740 = vunpack.c.l.b16 %v2676
  %v2741 = vunpack.c.l.b16 %v2677
  %v2742 = vunpack.c.l.b16 %v2678
  %v2743 = vunpack.c.l.b16 %v2679
  %v2744 = vunpack.c.l.b16 %v2680
  %v2745 = vunpack.c.l.b16 %v2681
  %v2746 = vunpack.c.l.b16 %v2682
  %v2747 = vpack.c.b16 %v2716, %v2715
  %v2748 = vpack.c.b16 %v2718, %v2717
  %v2749 = vpack.c.b16 %v2720, %v2719
  %v2750 = vpack.c.b16 %v2722, %v2721
  %v2751 = vpack.c.b16 %v2724, %v2723
  %v2752 = vpack.c.b16 %v2726, %v2725
  %v2753 = vpack.c.b16 %v2728, %v2727
  %v2754 = vpack.c.b16 %v2730, %v2729
  %v2755 = vpack.c.b16 %v2732, %v2731
  %v2756 = vpack.c.b16 %v2734, %v2733
  %v2757 = vpack.c.b16 %v2736, %v2735
  %v2758 = vpack.c.b16 %v2738, %v2737
  %v2759 = vpack.c.b16 %v2740, %v2739
  %v2760 = vpack.c.b16 %v2742, %v2741
  %v2761 = vpack.c.b16 %v2744, %v2743
  %v2762 = vpack.c.b16 %v2746, %v2745
  %2779 = vmatpush.bf16.msra.mxu0 %v2754
  %2780 = vmatpush.bf16.msra.mxu0 %v2753
  %2781 = vmatpush.bf16.msra.mxu0 %v2752
  %2782 = vmatpush.bf16.msra.mxu0 %v2751
  %2783 = vmatpush.bf16.msra.mxu0 %v2750
  %2784 = vmatpush.bf16.msra.mxu0 %v2749
  %2785 = vmatpush.bf16.msra.mxu0 %v2748
  %2786 = vmatpush.bf16.msra.mxu0 %v2747
  %2787 = vmatmul.bf16.gmra.mxu0 %v2649
  %v2788 = vpop.f32.mrf.mxu0
  %v2789 = vadd.f32 0.0, %v2788
  %v2790 = vpop.f32.mrf.mxu0
  %2791 = vdwg.mxu0
  %2792 = vmatpush.bf16.msra.mxu0 %v2762
  %2793 = vmatpush.bf16.msra.mxu0 %v2761
  %2794 = vmatpush.bf16.msra.mxu0 %v2760
  %2795 = vmatpush.bf16.msra.mxu0 %v2759
  %2796 = vmatpush.bf16.msra.mxu0 %v2758
  %2797 = vmatpush.bf16.msra.mxu0 %v2757
  %2798 = vmatpush.bf16.msra.mxu0 %v2756
  %2799 = vmatpush.bf16.msra.mxu0 %v2755
  %2800 = vmatmul.bf16.gmra.mxu0 %v2650
  %v2801 = vpop.f32.mrf.mxu0
  %v2802 = vadd.f32 %v2789, %v2801
  %v2803 = vpop.f32.mrf.mxu0
  %2804 = vdwg.mxu0
  %s2805 = scalar_lea.vmem %s69, 16
  %2806 = vst [vmem:[%s2805] sm:$0xff] %v2607
  %2807 = vst [vmem:[%s2805 + $0x8] sm:$0xff] %v2608
  %s2808 = scalar_lea.vmem %s71, 16
  %2809 = vst [vmem:[%s2808] sm:$0xff] %v2618
  %2810 = vst [vmem:[%s2808 + $0x8] sm:$0xff] %v2619
  %vm2811 = vcmp.eq.s32.totalorder %v2642, 220
  %v2812 = vsel %vm2811, 1, 0
  %vm2813 = vcmp.eq.s32.totalorder %v2812, 1
  %v2814 = vsel %vm2813, %v2118, %v2802
  %v2815 = vadd.f32 %v2121, %v2802
  %v2816 = vadd.f32 %v2122, %v2802
  %v2817 = vmul.f32 %v2647, %v1664
  %v2818 = vmul.f32 %v2648, %v1664
  %v2819 = vrot.slane %v2817, 4
  %v2820 = vmax.f32 %v2817, %v2819
  %v2821 = vrot.slane %v2820, 2
  %v2822 = vmax.f32 %v2820, %v2821
  %v2823 = vrot.slane %v2822, 1
  %v2824 = vmax.f32 %v2822, %v2823
  %v2825 = vrot.slane %v2818, 4
  %v2826 = vmax.f32 %v2818, %v2825
  %v2827 = vrot.slane %v2826, 2
  %v2828 = vmax.f32 %v2826, %v2827
  %v2829 = vrot.slane %v2828, 1
  %v2830 = vmax.f32 %v2828, %v2829
  %v2831 = vmax.f32 %v2137, %v2824
  %v2832 = vmax.f32 %v2138, %v2830
  %v2833 = vadd.f32 %v2139, %v2814
  %v2834 = vmul.f32 %v2815, 0.16666667
  %v2835 = vmul.f32 %v2816, 0.5
  %v2836 = vpack.c.bf16 %v2834, %v2834
  %v2837 = vld [vmem:[%s27] sm:$0xf]
  %v2838 = vld [vmem:[%s27 + $0x4] sm:$0xf]
  %v2839 = vld [vmem:[%s27 + $0x8] sm:$0xf]
  %v2840 = vld [vmem:[%s27 + $0xc] sm:$0xf]
  %v2841 = vld [vmem:[%s27 + $0x10] sm:$0xf]
  %v2842 = vld [vmem:[%s27 + $0x14] sm:$0xf]
  %v2843 = vld [vmem:[%s27 + $0x18] sm:$0xf]
  %v2844 = vld [vmem:[%s27 + $0x1c] sm:$0xf]
  %v2845 = vld [vmem:[%s27 + $0x20] sm:$0xf]
  %v2846 = vld [vmem:[%s27 + $0x24] sm:$0xf]
  %v2847 = vld [vmem:[%s27 + $0x28] sm:$0xf]
  %v2848 = vld [vmem:[%s27 + $0x2c] sm:$0xf]
  %v2849 = vld [vmem:[%s27 + $0x30] sm:$0xf]
  %v2850 = vld [vmem:[%s27 + $0x34] sm:$0xf]
  %v2851 = vld [vmem:[%s27 + $0x38] sm:$0xf]
  %v2852 = vld [vmem:[%s27 + $0x3c] sm:$0xf]
  %v2853 = vld [vmem:[%s29] sm:$0x1]
  %v2855 = vperm.slane %v2853, 0
  %v2873 = vunpack.c.l.b16 %v2837
  %v2874 = vunpack.c.l.b16 %v2838
  %v2875 = vunpack.c.l.b16 %v2839
  %v2876 = vunpack.c.l.b16 %v2840
  %v2877 = vunpack.c.l.b16 %v2841
  %v2878 = vunpack.c.l.b16 %v2842
  %v2879 = vunpack.c.l.b16 %v2843
  %v2880 = vunpack.c.l.b16 %v2844
  %v2881 = vunpack.c.l.b16 %v2845
  %v2882 = vunpack.c.l.b16 %v2846
  %v2883 = vunpack.c.l.b16 %v2847
  %v2884 = vunpack.c.l.b16 %v2848
  %v2885 = vunpack.c.l.b16 %v2849
  %v2886 = vunpack.c.l.b16 %v2850
  %v2887 = vunpack.c.l.b16 %v2851
  %v2888 = vunpack.c.l.b16 %v2852
  %v2889 = vpack.c.b16 %v2874, %v2873
  %v2890 = vpack.c.b16 %v2876, %v2875
  %v2891 = vpack.c.b16 %v2878, %v2877
  %v2892 = vpack.c.b16 %v2880, %v2879
  %v2893 = vpack.c.b16 %v2882, %v2881
  %v2894 = vpack.c.b16 %v2884, %v2883
  %v2895 = vpack.c.b16 %v2886, %v2885
  %v2896 = vpack.c.b16 %v2888, %v2887
  %2905 = vmatpush.bf16.msra.mxu0 %v2896
  %2906 = vmatpush.bf16.msra.mxu0 %v2895
  %2907 = vmatpush.bf16.msra.mxu0 %v2894
  %2908 = vmatpush.bf16.msra.mxu0 %v2893
  %2909 = vmatpush.bf16.msra.mxu0 %v2892
  %2910 = vmatpush.bf16.msra.mxu0 %v2891
  %2911 = vmatpush.bf16.msra.mxu0 %v2890
  %2912 = vmatpush.bf16.msra.mxu0 %v2889
  %2913 = vmatmul.bf16.gmra.mxu0 %v2836
  %v2914 = vpop.f32.mrf.mxu0
  %v2915 = vadd.f32 %v2855, %v2914
  %v2916 = vpop.f32.mrf.mxu0
  %2917 = vdwg.mxu0
  %v2918 = vtanh.pop %v2915
  %v2919 = vpack.c.bf16 %v2918, %v2918
  %v2920 = vld [vmem:[%s31] sm:$0xff]
  %v2921 = vld [vmem:[%s31 + $0x8] sm:$0xff]
  %v2922 = vld [vmem:[%s31 + $0x10] sm:$0xff]
  %v2923 = vld [vmem:[%s31 + $0x18] sm:$0xff]
  %v2924 = vld [vmem:[%s31 + $0x20] sm:$0xff]
  %v2925 = vld [vmem:[%s31 + $0x28] sm:$0xff]
  %v2926 = vld [vmem:[%s31 + $0x30] sm:$0xff]
  %v2927 = vld [vmem:[%s31 + $0x38] sm:$0xff]
  %v2928 = vld [vmem:[%s31 + $0x40] sm:$0xff]
  %v2929 = vld [vmem:[%s31 + $0x48] sm:$0xff]
  %v2930 = vld [vmem:[%s31 + $0x50] sm:$0xff]
  %v2931 = vld [vmem:[%s31 + $0x58] sm:$0xff]
  %v2932 = vld [vmem:[%s31 + $0x60] sm:$0xff]
  %v2933 = vld [vmem:[%s31 + $0x68] sm:$0xff]
  %v2934 = vld [vmem:[%s31 + $0x70] sm:$0xff]
  %v2935 = vld [vmem:[%s31 + $0x78] sm:$0xff]
  %v2936 = vld [vmem:[%s33] sm:$0x3]
  %v2938 = vperm.slane %v2936, 0
  %v2939 = vperm.slane %v2936, 1
  %v2958 = vunpack.c.l.b16 %v2920
  %v2959 = vunpack.c.h.b16 %v2920
  %v2960 = vunpack.c.l.b16 %v2921
  %v2961 = vunpack.c.h.b16 %v2921
  %v2962 = vunpack.c.l.b16 %v2922
  %v2963 = vunpack.c.h.b16 %v2922
  %v2964 = vunpack.c.l.b16 %v2923
  %v2965 = vunpack.c.h.b16 %v2923
  %v2966 = vunpack.c.l.b16 %v2924
  %v2967 = vunpack.c.h.b16 %v2924
  %v2968 = vunpack.c.l.b16 %v2925
  %v2969 = vunpack.c.h.b16 %v2925
  %v2970 = vunpack.c.l.b16 %v2926
  %v2971 = vunpack.c.h.b16 %v2926
  %v2972 = vunpack.c.l.b16 %v2927
  %v2973 = vunpack.c.h.b16 %v2927
  %v2974 = vunpack.c.l.b16 %v2928
  %v2975 = vunpack.c.h.b16 %v2928
  %v2976 = vunpack.c.l.b16 %v2929
  %v2977 = vunpack.c.h.b16 %v2929
  %v2978 = vunpack.c.l.b16 %v2930
  %v2979 = vunpack.c.h.b16 %v2930
  %v2980 = vunpack.c.l.b16 %v2931
  %v2981 = vunpack.c.h.b16 %v2931
  %v2982 = vunpack.c.l.b16 %v2932
  %v2983 = vunpack.c.h.b16 %v2932
  %v2984 = vunpack.c.l.b16 %v2933
  %v2985 = vunpack.c.h.b16 %v2933
  %v2986 = vunpack.c.l.b16 %v2934
  %v2987 = vunpack.c.h.b16 %v2934
  %v2988 = vunpack.c.l.b16 %v2935
  %v2989 = vunpack.c.h.b16 %v2935
  %v2990 = vpack.c.b16 %v2960, %v2958
  %v2991 = vpack.c.b16 %v2961, %v2959
  %v2992 = vpack.c.b16 %v2964, %v2962
  %v2993 = vpack.c.b16 %v2965, %v2963
  %v2994 = vpack.c.b16 %v2968, %v2966
  %v2995 = vpack.c.b16 %v2969, %v2967
  %v2996 = vpack.c.b16 %v2972, %v2970
  %v2997 = vpack.c.b16 %v2973, %v2971
  %v2998 = vpack.c.b16 %v2976, %v2974
  %v2999 = vpack.c.b16 %v2977, %v2975
  %v3000 = vpack.c.b16 %v2980, %v2978
  %v3001 = vpack.c.b16 %v2981, %v2979
  %v3002 = vpack.c.b16 %v2984, %v2982
  %v3003 = vpack.c.b16 %v2985, %v2983
  %v3004 = vpack.c.b16 %v2988, %v2986
  %v3005 = vpack.c.b16 %v2989, %v2987
  %3022 = vmatpush.bf16.msra.mxu0 %v3004
  %3023 = vmatpush.bf16.msra.mxu0 %v3002
  %3024 = vmatpush.bf16.msra.mxu0 %v3000
  %3025 = vmatpush.bf16.msra.mxu0 %v2998
  %3026 = vmatpush.bf16.msra.mxu0 %v2996
  %3027 = vmatpush.bf16.msra.mxu0 %v2994
  %3028 = vmatpush.bf16.msra.mxu0 %v2992
  %3029 = vmatpush.bf16.msra.mxu0 %v2990
  %3030 = vmatmul.bf16.gmra.mxu0 %v2919
  %v3031 = vpop.f32.mrf.mxu0
  %v3032 = vadd.f32 %v2938, %v3031
  %v3033 = vpop.f32.mrf.mxu0
  %3034 = vdwg.mxu0
  %3035 = vmatpush.bf16.msra.mxu0 %v3005
  %3036 = vmatpush.bf16.msra.mxu0 %v3003
  %3037 = vmatpush.bf16.msra.mxu0 %v3001
  %3038 = vmatpush.bf16.msra.mxu0 %v2999
  %3039 = vmatpush.bf16.msra.mxu0 %v2997
  %3040 = vmatpush.bf16.msra.mxu0 %v2995
  %3041 = vmatpush.bf16.msra.mxu0 %v2993
  %3042 = vmatpush.bf16.msra.mxu0 %v2991
  %3043 = vmatmul.bf16.gmra.mxu0 %v2919
  %v3044 = vpop.f32.mrf.mxu0
  %v3045 = vadd.f32 %v2939, %v3044
  %v3046 = vpop.f32.mrf.mxu0
  %3047 = vdwg.mxu0
  %v3048 = vpack.c.bf16 %v2835, %v2835
  %v3049 = vld [vmem:[%s35] sm:$0xf]
  %v3050 = vld [vmem:[%s35 + $0x4] sm:$0xf]
  %v3051 = vld [vmem:[%s35 + $0x8] sm:$0xf]
  %v3052 = vld [vmem:[%s35 + $0xc] sm:$0xf]
  %v3053 = vld [vmem:[%s35 + $0x10] sm:$0xf]
  %v3054 = vld [vmem:[%s35 + $0x14] sm:$0xf]
  %v3055 = vld [vmem:[%s35 + $0x18] sm:$0xf]
  %v3056 = vld [vmem:[%s35 + $0x1c] sm:$0xf]
  %v3057 = vld [vmem:[%s35 + $0x20] sm:$0xf]
  %v3058 = vld [vmem:[%s35 + $0x24] sm:$0xf]
  %v3059 = vld [vmem:[%s35 + $0x28] sm:$0xf]
  %v3060 = vld [vmem:[%s35 + $0x2c] sm:$0xf]
  %v3061 = vld [vmem:[%s35 + $0x30] sm:$0xf]
  %v3062 = vld [vmem:[%s35 + $0x34] sm:$0xf]
  %v3063 = vld [vmem:[%s35 + $0x38] sm:$0xf]
  %v3064 = vld [vmem:[%s35 + $0x3c] sm:$0xf]
  %v3065 = vld [vmem:[%s37] sm:$0x1]
  %v3067 = vperm.slane %v3065, 0
  %v3085 = vunpack.c.l.b16 %v3049
  %v3086 = vunpack.c.l.b16 %v3050
  %v3087 = vunpack.c.l.b16 %v3051
  %v3088 = vunpack.c.l.b16 %v3052
  %v3089 = vunpack.c.l.b16 %v3053
  %v3090 = vunpack.c.l.b16 %v3054
  %v3091 = vunpack.c.l.b16 %v3055
  %v3092 = vunpack.c.l.b16 %v3056
  %v3093 = vunpack.c.l.b16 %v3057
  %v3094 = vunpack.c.l.b16 %v3058
  %v3095 = vunpack.c.l.b16 %v3059
  %v3096 = vunpack.c.l.b16 %v3060
  %v3097 = vunpack.c.l.b16 %v3061
  %v3098 = vunpack.c.l.b16 %v3062
  %v3099 = vunpack.c.l.b16 %v3063
  %v3100 = vunpack.c.l.b16 %v3064
  %v3101 = vpack.c.b16 %v3086, %v3085
  %v3102 = vpack.c.b16 %v3088, %v3087
  %v3103 = vpack.c.b16 %v3090, %v3089
  %v3104 = vpack.c.b16 %v3092, %v3091
  %v3105 = vpack.c.b16 %v3094, %v3093
  %v3106 = vpack.c.b16 %v3096, %v3095
  %v3107 = vpack.c.b16 %v3098, %v3097
  %v3108 = vpack.c.b16 %v3100, %v3099
  %3117 = vmatpush.bf16.msra.mxu0 %v3108
  %3118 = vmatpush.bf16.msra.mxu0 %v3107
  %3119 = vmatpush.bf16.msra.mxu0 %v3106
  %3120 = vmatpush.bf16.msra.mxu0 %v3105
  %3121 = vmatpush.bf16.msra.mxu0 %v3104
  %3122 = vmatpush.bf16.msra.mxu0 %v3103
  %3123 = vmatpush.bf16.msra.mxu0 %v3102
  %3124 = vmatpush.bf16.msra.mxu0 %v3101
  %3125 = vmatmul.bf16.gmra.mxu0 %v3048
  %v3126 = vpop.f32.mrf.mxu0
  %v3127 = vadd.f32 %v3067, %v3126
  %v3128 = vpop.f32.mrf.mxu0
  %3129 = vdwg.mxu0
  %v3130 = vtanh.pop %v3127
  %v3131 = vpack.c.bf16 %v3130, %v3130
  %v3132 = vld [vmem:[%s39] sm:$0xff]
  %v3133 = vld [vmem:[%s39 + $0x8] sm:$0xff]
  %v3134 = vld [vmem:[%s39 + $0x10] sm:$0xff]
  %v3135 = vld [vmem:[%s39 + $0x18] sm:$0xff]
  %v3136 = vld [vmem:[%s39 + $0x20] sm:$0xff]
  %v3137 = vld [vmem:[%s39 + $0x28] sm:$0xff]
  %v3138 = vld [vmem:[%s39 + $0x30] sm:$0xff]
  %v3139 = vld [vmem:[%s39 + $0x38] sm:$0xff]
  %v3140 = vld [vmem:[%s39 + $0x40] sm:$0xff]
  %v3141 = vld [vmem:[%s39 + $0x48] sm:$0xff]
  %v3142 = vld [vmem:[%s39 + $0x50] sm:$0xff]
  %v3143 = vld [vmem:[%s39 + $0x58] sm:$0xff]
  %v3144 = vld [vmem:[%s39 + $0x60] sm:$0xff]
  %v3145 = vld [vmem:[%s39 + $0x68] sm:$0xff]
  %v3146 = vld [vmem:[%s39 + $0x70] sm:$0xff]
  %v3147 = vld [vmem:[%s39 + $0x78] sm:$0xff]
  %v3148 = vld [vmem:[%s41] sm:$0x3]
  %v3150 = vperm.slane %v3148, 0
  %v3151 = vperm.slane %v3148, 1
  %v3170 = vunpack.c.l.b16 %v3132
  %v3171 = vunpack.c.h.b16 %v3132
  %v3172 = vunpack.c.l.b16 %v3133
  %v3173 = vunpack.c.h.b16 %v3133
  %v3174 = vunpack.c.l.b16 %v3134
  %v3175 = vunpack.c.h.b16 %v3134
  %v3176 = vunpack.c.l.b16 %v3135
  %v3177 = vunpack.c.h.b16 %v3135
  %v3178 = vunpack.c.l.b16 %v3136
  %v3179 = vunpack.c.h.b16 %v3136
  %v3180 = vunpack.c.l.b16 %v3137
  %v3181 = vunpack.c.h.b16 %v3137
  %v3182 = vunpack.c.l.b16 %v3138
  %v3183 = vunpack.c.h.b16 %v3138
  %v3184 = vunpack.c.l.b16 %v3139
  %v3185 = vunpack.c.h.b16 %v3139
  %v3186 = vunpack.c.l.b16 %v3140
  %v3187 = vunpack.c.h.b16 %v3140
  %v3188 = vunpack.c.l.b16 %v3141
  %v3189 = vunpack.c.h.b16 %v3141
  %v3190 = vunpack.c.l.b16 %v3142
  %v3191 = vunpack.c.h.b16 %v3142
  %v3192 = vunpack.c.l.b16 %v3143
  %v3193 = vunpack.c.h.b16 %v3143
  %v3194 = vunpack.c.l.b16 %v3144
  %v3195 = vunpack.c.h.b16 %v3144
  %v3196 = vunpack.c.l.b16 %v3145
  %v3197 = vunpack.c.h.b16 %v3145
  %v3198 = vunpack.c.l.b16 %v3146
  %v3199 = vunpack.c.h.b16 %v3146
  %v3200 = vunpack.c.l.b16 %v3147
  %v3201 = vunpack.c.h.b16 %v3147
  %v3202 = vpack.c.b16 %v3172, %v3170
  %v3203 = vpack.c.b16 %v3173, %v3171
  %v3204 = vpack.c.b16 %v3176, %v3174
  %v3205 = vpack.c.b16 %v3177, %v3175
  %v3206 = vpack.c.b16 %v3180, %v3178
  %v3207 = vpack.c.b16 %v3181, %v3179
  %v3208 = vpack.c.b16 %v3184, %v3182
  %v3209 = vpack.c.b16 %v3185, %v3183
  %v3210 = vpack.c.b16 %v3188, %v3186
  %v3211 = vpack.c.b16 %v3189, %v3187
  %v3212 = vpack.c.b16 %v3192, %v3190
  %v3213 = vpack.c.b16 %v3193, %v3191
  %v3214 = vpack.c.b16 %v3196, %v3194
  %v3215 = vpack.c.b16 %v3197, %v3195
  %v3216 = vpack.c.b16 %v3200, %v3198
  %v3217 = vpack.c.b16 %v3201, %v3199
  %3234 = vmatpush.bf16.msra.mxu0 %v3216
  %3235 = vmatpush.bf16.msra.mxu0 %v3214
  %3236 = vmatpush.bf16.msra.mxu0 %v3212
  %3237 = vmatpush.bf16.msra.mxu0 %v3210
  %3238 = vmatpush.bf16.msra.mxu0 %v3208
  %3239 = vmatpush.bf16.msra.mxu0 %v3206
  %3240 = vmatpush.bf16.msra.mxu0 %v3204
  %3241 = vmatpush.bf16.msra.mxu0 %v3202
  %3242 = vmatmul.bf16.gmra.mxu0 %v3131
  %v3243 = vpop.f32.mrf.mxu0
  %v3244 = vadd.f32 %v3150, %v3243
  %v3245 = vpop.f32.mrf.mxu0
  %3246 = vdwg.mxu0
  %3247 = vmatpush.bf16.msra.mxu0 %v3217
  %3248 = vmatpush.bf16.msra.mxu0 %v3215
  %3249 = vmatpush.bf16.msra.mxu0 %v3213
  %3250 = vmatpush.bf16.msra.mxu0 %v3211
  %3251 = vmatpush.bf16.msra.mxu0 %v3209
  %3252 = vmatpush.bf16.msra.mxu0 %v3207
  %3253 = vmatpush.bf16.msra.mxu0 %v3205
  %3254 = vmatpush.bf16.msra.mxu0 %v3203
  %3255 = vmatmul.bf16.gmra.mxu0 %v3131
  %v3256 = vpop.f32.mrf.mxu0
  %v3257 = vadd.f32 %v3151, %v3256
  %v3258 = vpop.f32.mrf.mxu0
  %3259 = vdwg.mxu0
  %v3260 = vmax.f32 %v3032, %v3045
  %3261 = vmax.xlane.f32.xlu0 %v3260
  %v3262 = vpop.xlane.xlu0 %3261
  %v3263 = vsub.f32 %v3032, %v3262
  %v3264 = vsub.f32 %v3045, %v3262
  %v3265 = vmax.f32 %v3244, %v3257
  %3266 = vmax.xlane.f32.xlu0 %v3265
  %v3267 = vpop.xlane.xlu0 %3266
  %v3268 = vsub.f32 %v3244, %v3267
  %v3269 = vsub.f32 %v3257, %v3267
  %v3270 = vmin.f32 %v3268, %v3269
  %3271 = vmin.xlane.f32.xlu0 %v3270
  %v3272 = vpop.xlane.xlu0 %3271
  %vm3273 = vcmp.gt.f32.partialorder %v2831, 0.0
  %vm3274 = vcmp.gt.f32.partialorder %v2832, 0.0
  %v3275 = vsel %vm3273, 1, 0
  %v3276 = vsel %vm3274, 1, 0
  %vm3277 = vcmp.eq.s32.totalorder %v3275, 1
  %vm3278 = vcmp.eq.s32.totalorder %v3276, 1
  %v3279 = vsel %vm3277, %v3272, %v3268
  %v3280 = vsel %vm3278, %v3272, %v3269
  %v3281 = vmul.f32 %v3263, 1.442695
  %v3282 = vpow.pop %v3281
  %v3283 = vmul.f32 %v3264, 1.442695
  %v3284 = vpow.pop %v3283
  %v3285 = vadd.f32 %v3282, %v3284
  %3286 = vadd.xlane.f32.xlu0 %v3285
  %v3287 = vpop.xlane.xlu0 %3286
  %v3288 = vrcp.pop %v3287
  %v3289 = vmul.f32 %v3287, %v3288
  %v3290 = vsub.f32 1.0, %v3289
  %v3291 = vmul.f32 %v3288, %v3290
  %v3292 = vadd.f32 %v3288, %v3291
  %vm3293 = vweird.f32 %v3287
  %vm3294 = vweird.f32 %v3288
  %vm3295 = vmor %vm3293, %vm3294
  %v3296 = vsel %vm3295, %v3288, %v3292
  %v3297 = vand.u32 2147483647, %v3287
  %vm3298 = vcmp.eq.f32.partialorder %v3297, 8.507059e+37
  %v3299 = vand.u32 %v3287, 2147483648
  %v3300 = vor.u32 1.1754944e-38, %v3299
  %v3301 = vsel %vm3298, %v3300, %v3296
  %v3302 = vmul.f32 %v3282, %v3301
  %v3303 = vmul.f32 %v3284, %v3301
  %v3304 = vmul.f32 %v3279, 1.442695
  %v3305 = vpow.pop %v3304
  %v3306 = vmul.f32 %v3280, 1.442695
  %v3307 = vpow.pop %v3306
  %v3308 = vadd.f32 %v3305, %v3307
  %3309 = vadd.xlane.f32.xlu0 %v3308
  %v3310 = vpop.xlane.xlu0 %3309
  %v3311 = vlog2.pop %v3310
  %v3312 = vmul.f32 %v3311, 0.6931472
  %v3313 = vsub.f32 %v3279, %v3312
  %v3314 = vsub.f32 %v3280, %v3312
  %v3315 = vmax.f32 %v3302, %v3303
  %3316 = vmax.xlane.f32.xlu0 %v3315
  %v3317 = vpop.xlane.xlu0 %3316
  %vm3318 = vcmp.eq.f32.partialorder %v3302, %v3317
  %vm3319 = vcmp.eq.f32.partialorder %v3303, %v3317
  %v3320 = vsel %vm3318, %v1658, 256
  %v3321 = vsel %vm3319, %v1659, 256
  %vm3322 = vcmp.lt.s32.totalorder %v3320, %v3321
  %v3323 = vsel %vm3322, %v3320, %v3321
  %v3324 = vand.u32 %v3323, 65535
  %v3325 = vshra.s32 %v3323, 16
  %v3326 = vcvt.s32.f32 %v3324
  %v3327 = vcvt.s32.f32 %v3325
  %3328 = vmin.xlane.f32.xlu0 %v3327
  %v3329 = vpop.xlane.xlu0 %3328
  %vm3330 = vcmp.eq.f32.partialorder %v3327, %v3329
  %v3331 = vsel %vm3330, %v3326, inf
  %3332 = vmin.xlane.f32.xlu0 %v3331
  %v3333 = vpop.xlane.xlu0 %3332
  %v3334 = vcvt.f32.s32 %v3333
  %v3335 = vcvt.f32.s32 %v3329
  %v3336 = vshll.u32 %v3335, 16
  %v3337 = vadd.s32 %v3336, %v3334
  %vm3338 = vcmp.eq.s32.totalorder %v1658, %v3337
  %vm3339 = vcmp.eq.s32.totalorder %v1659, %v3337
  %v3340 = vsel %vm3338, 1, 0
  %v3341 = vsel %vm3339, 1, 0
  %v3342 = vcvt.s32.f32 %v3340
  %v3343 = vcvt.s32.f32 %v3341
  %v3344 = vpack.c.bf16 %v3342, %v3342
  %v3345 = vpack.c.bf16 %v3343, %v3343
  %v3346 = vld [vmem:[%s43] sm:$0xf]
  %v3347 = vld [vmem:[%s43 + $0x4] sm:$0xf]
  %v3348 = vld [vmem:[%s43 + $0x8] sm:$0xf]
  %v3349 = vld [vmem:[%s43 + $0xc] sm:$0xf]
  %v3350 = vld [vmem:[%s43 + $0x10] sm:$0xf]
  %v3351 = vld [vmem:[%s43 + $0x14] sm:$0xf]
  %v3352 = vld [vmem:[%s43 + $0x18] sm:$0xf]
  %v3353 = vld [vmem:[%s43 + $0x1c] sm:$0xf]
  %v3354 = vld [vmem:[%s43 + $0x20] sm:$0xf]
  %v3355 = vld [vmem:[%s43 + $0x24] sm:$0xf]
  %v3356 = vld [vmem:[%s43 + $0x28] sm:$0xf]
  %v3357 = vld [vmem:[%s43 + $0x2c] sm:$0xf]
  %v3358 = vld [vmem:[%s43 + $0x30] sm:$0xf]
  %v3359 = vld [vmem:[%s43 + $0x34] sm:$0xf]
  %v3360 = vld [vmem:[%s43 + $0x38] sm:$0xf]
  %v3361 = vld [vmem:[%s43 + $0x3c] sm:$0xf]
  %v3362 = vld [vmem:[%s43 + $0x40] sm:$0xf]
  %v3363 = vld [vmem:[%s43 + $0x44] sm:$0xf]
  %v3364 = vld [vmem:[%s43 + $0x48] sm:$0xf]
  %v3365 = vld [vmem:[%s43 + $0x4c] sm:$0xf]
  %v3366 = vld [vmem:[%s43 + $0x50] sm:$0xf]
  %v3367 = vld [vmem:[%s43 + $0x54] sm:$0xf]
  %v3368 = vld [vmem:[%s43 + $0x58] sm:$0xf]
  %v3369 = vld [vmem:[%s43 + $0x5c] sm:$0xf]
  %v3370 = vld [vmem:[%s43 + $0x60] sm:$0xf]
  %v3371 = vld [vmem:[%s43 + $0x64] sm:$0xf]
  %v3372 = vld [vmem:[%s43 + $0x68] sm:$0xf]
  %v3373 = vld [vmem:[%s43 + $0x6c] sm:$0xf]
  %v3374 = vld [vmem:[%s43 + $0x70] sm:$0xf]
  %v3375 = vld [vmem:[%s43 + $0x74] sm:$0xf]
  %v3376 = vld [vmem:[%s43 + $0x78] sm:$0xf]
  %v3377 = vld [vmem:[%s43 + $0x7c] sm:$0xf]
  %v3410 = vunpack.c.l.b16 %v3346
  %v3411 = vunpack.c.l.b16 %v3347
  %v3412 = vunpack.c.l.b16 %v3348
  %v3413 = vunpack.c.l.b16 %v3349
  %v3414 = vunpack.c.l.b16 %v3350
  %v3415 = vunpack.c.l.b16 %v3351
  %v3416 = vunpack.c.l.b16 %v3352
  %v3417 = vunpack.c.l.b16 %v3353
  %v3418 = vunpack.c.l.b16 %v3354
  %v3419 = vunpack.c.l.b16 %v3355
  %v3420 = vunpack.c.l.b16 %v3356
  %v3421 = vunpack.c.l.b16 %v3357
  %v3422 = vunpack.c.l.b16 %v3358
  %v3423 = vunpack.c.l.b16 %v3359
  %v3424 = vunpack.c.l.b16 %v3360
  %v3425 = vunpack.c.l.b16 %v3361
  %v3426 = vunpack.c.l.b16 %v3362
  %v3427 = vunpack.c.l.b16 %v3363
  %v3428 = vunpack.c.l.b16 %v3364
  %v3429 = vunpack.c.l.b16 %v3365
  %v3430 = vunpack.c.l.b16 %v3366
  %v3431 = vunpack.c.l.b16 %v3367
  %v3432 = vunpack.c.l.b16 %v3368
  %v3433 = vunpack.c.l.b16 %v3369
  %v3434 = vunpack.c.l.b16 %v3370
  %v3435 = vunpack.c.l.b16 %v3371
  %v3436 = vunpack.c.l.b16 %v3372
  %v3437 = vunpack.c.l.b16 %v3373
  %v3438 = vunpack.c.l.b16 %v3374
  %v3439 = vunpack.c.l.b16 %v3375
  %v3440 = vunpack.c.l.b16 %v3376
  %v3441 = vunpack.c.l.b16 %v3377
  %v3442 = vpack.c.b16 %v3411, %v3410
  %v3443 = vpack.c.b16 %v3413, %v3412
  %v3444 = vpack.c.b16 %v3415, %v3414
  %v3445 = vpack.c.b16 %v3417, %v3416
  %v3446 = vpack.c.b16 %v3419, %v3418
  %v3447 = vpack.c.b16 %v3421, %v3420
  %v3448 = vpack.c.b16 %v3423, %v3422
  %v3449 = vpack.c.b16 %v3425, %v3424
  %v3450 = vpack.c.b16 %v3427, %v3426
  %v3451 = vpack.c.b16 %v3429, %v3428
  %v3452 = vpack.c.b16 %v3431, %v3430
  %v3453 = vpack.c.b16 %v3433, %v3432
  %v3454 = vpack.c.b16 %v3435, %v3434
  %v3455 = vpack.c.b16 %v3437, %v3436
  %v3456 = vpack.c.b16 %v3439, %v3438
  %v3457 = vpack.c.b16 %v3441, %v3440
  %3474 = vmatpush.bf16.msra.mxu0 %v3449
  %3475 = vmatpush.bf16.msra.mxu0 %v3448
  %3476 = vmatpush.bf16.msra.mxu0 %v3447
  %3477 = vmatpush.bf16.msra.mxu0 %v3446
  %3478 = vmatpush.bf16.msra.mxu0 %v3445
  %3479 = vmatpush.bf16.msra.mxu0 %v3444
  %3480 = vmatpush.bf16.msra.mxu0 %v3443
  %3481 = vmatpush.bf16.msra.mxu0 %v3442
  %3482 = vmatmul.bf16.gmra.mxu0 %v3344
  %v3483 = vpop.f32.mrf.mxu0
  %v3484 = vadd.f32 0.0, %v3483
  %v3485 = vpop.f32.mrf.mxu0
  %3486 = vdwg.mxu0
  %3487 = vmatpush.bf16.msra.mxu0 %v3457
  %3488 = vmatpush.bf16.msra.mxu0 %v3456
  %3489 = vmatpush.bf16.msra.mxu0 %v3455
  %3490 = vmatpush.bf16.msra.mxu0 %v3454
  %3491 = vmatpush.bf16.msra.mxu0 %v3453
  %3492 = vmatpush.bf16.msra.mxu0 %v3452
  %3493 = vmatpush.bf16.msra.mxu0 %v3451
  %3494 = vmatpush.bf16.msra.mxu0 %v3450
  %3495 = vmatmul.bf16.gmra.mxu0 %v3345
  %v3496 = vpop.f32.mrf.mxu0
  %v3497 = vadd.f32 %v3484, %v3496
  %v3498 = vpop.f32.mrf.mxu0
  %3499 = vdwg.mxu0
  %s3500 = scalar_lea.vmem %s69, 32
  %3501 = vst [vmem:[%s3500] sm:$0xff] %v3302
  %3502 = vst [vmem:[%s3500 + $0x8] sm:$0xff] %v3303
  %s3503 = scalar_lea.vmem %s71, 32
  %3504 = vst [vmem:[%s3503] sm:$0xff] %v3313
  %3505 = vst [vmem:[%s3503 + $0x8] sm:$0xff] %v3314
  %vm3506 = vcmp.eq.s32.totalorder %v3337, 220
  %v3507 = vsel %vm3506, 1, 0
  %vm3508 = vcmp.eq.s32.totalorder %v3507, 1
  %v3509 = vsel %vm3508, %v2118, %v3497
  %v3510 = vadd.f32 %v2815, %v3497
  %v3511 = vadd.f32 %v2816, %v3497
  %v3512 = vmul.f32 %v3342, %v1664
  %v3513 = vmul.f32 %v3343, %v1664
  %v3514 = vrot.slane %v3512, 4
  %v3515 = vmax.f32 %v3512, %v3514
  %v3516 = vrot.slane %v3515, 2
  %v3517 = vmax.f32 %v3515, %v3516
  %v3518 = vrot.slane %v3517, 1
  %v3519 = vmax.f32 %v3517, %v3518
  %v3520 = vrot.slane %v3513, 4
  %v3521 = vmax.f32 %v3513, %v3520
  %v3522 = vrot.slane %v3521, 2
  %v3523 = vmax.f32 %v3521, %v3522
  %v3524 = vrot.slane %v3523, 1
  %v3525 = vmax.f32 %v3523, %v3524
  %v3526 = vmax.f32 %v2831, %v3519
  %v3527 = vmax.f32 %v2832, %v3525
  %v3528 = vadd.f32 %v2833, %v3509
  %v3529 = vmul.f32 %v3510, 0.14285715
  %v3530 = vmul.f32 %v3511, 0.33333334
  %v3531 = vpack.c.bf16 %v3529, %v3529
  %v3532 = vld [vmem:[%s27] sm:$0xf]
  %v3533 = vld [vmem:[%s27 + $0x4] sm:$0xf]
  %v3534 = vld [vmem:[%s27 + $0x8] sm:$0xf]
  %v3535 = vld [vmem:[%s27 + $0xc] sm:$0xf]
  %v3536 = vld [vmem:[%s27 + $0x10] sm:$0xf]
  %v3537 = vld [vmem:[%s27 + $0x14] sm:$0xf]
  %v3538 = vld [vmem:[%s27 + $0x18] sm:$0xf]
  %v3539 = vld [vmem:[%s27 + $0x1c] sm:$0xf]
  %v3540 = vld [vmem:[%s27 + $0x20] sm:$0xf]
  %v3541 = vld [vmem:[%s27 + $0x24] sm:$0xf]
  %v3542 = vld [vmem:[%s27 + $0x28] sm:$0xf]
  %v3543 = vld [vmem:[%s27 + $0x2c] sm:$0xf]
  %v3544 = vld [vmem:[%s27 + $0x30] sm:$0xf]
  %v3545 = vld [vmem:[%s27 + $0x34] sm:$0xf]
  %v3546 = vld [vmem:[%s27 + $0x38] sm:$0xf]
  %v3547 = vld [vmem:[%s27 + $0x3c] sm:$0xf]
  %v3548 = vld [vmem:[%s29] sm:$0x1]
  %v3550 = vperm.slane %v3548, 0
  %v3568 = vunpack.c.l.b16 %v3532
  %v3569 = vunpack.c.l.b16 %v3533
  %v3570 = vunpack.c.l.b16 %v3534
  %v3571 = vunpack.c.l.b16 %v3535
  %v3572 = vunpack.c.l.b16 %v3536
  %v3573 = vunpack.c.l.b16 %v3537
  %v3574 = vunpack.c.l.b16 %v3538
  %v3575 = vunpack.c.l.b16 %v3539
  %v3576 = vunpack.c.l.b16 %v3540
  %v3577 = vunpack.c.l.b16 %v3541
  %v3578 = vunpack.c.l.b16 %v3542
  %v3579 = vunpack.c.l.b16 %v3543
  %v3580 = vunpack.c.l.b16 %v3544
  %v3581 = vunpack.c.l.b16 %v3545
  %v3582 = vunpack.c.l.b16 %v3546
  %v3583 = vunpack.c.l.b16 %v3547
  %v3584 = vpack.c.b16 %v3569, %v3568
  %v3585 = vpack.c.b16 %v3571, %v3570
  %v3586 = vpack.c.b16 %v3573, %v3572
  %v3587 = vpack.c.b16 %v3575, %v3574
  %v3588 = vpack.c.b16 %v3577, %v3576
  %v3589 = vpack.c.b16 %v3579, %v3578
  %v3590 = vpack.c.b16 %v3581, %v3580
  %v3591 = vpack.c.b16 %v3583, %v3582
  %3600 = vmatpush.bf16.msra.mxu0 %v3591
  %3601 = vmatpush.bf16.msra.mxu0 %v3590
  %3602 = vmatpush.bf16.msra.mxu0 %v3589
  %3603 = vmatpush.bf16.msra.mxu0 %v3588
  %3604 = vmatpush.bf16.msra.mxu0 %v3587
  %3605 = vmatpush.bf16.msra.mxu0 %v3586
  %3606 = vmatpush.bf16.msra.mxu0 %v3585
  %3607 = vmatpush.bf16.msra.mxu0 %v3584
  %3608 = vmatmul.bf16.gmra.mxu0 %v3531
  %v3609 = vpop.f32.mrf.mxu0
  %v3610 = vadd.f32 %v3550, %v3609
  %v3611 = vpop.f32.mrf.mxu0
  %3612 = vdwg.mxu0
  %v3613 = vtanh.pop %v3610
  %v3614 = vpack.c.bf16 %v3613, %v3613
  %v3615 = vld [vmem:[%s31] sm:$0xff]
  %v3616 = vld [vmem:[%s31 + $0x8] sm:$0xff]
  %v3617 = vld [vmem:[%s31 + $0x10] sm:$0xff]
  %v3618 = vld [vmem:[%s31 + $0x18] sm:$0xff]
  %v3619 = vld [vmem:[%s31 + $0x20] sm:$0xff]
  %v3620 = vld [vmem:[%s31 + $0x28] sm:$0xff]
  %v3621 = vld [vmem:[%s31 + $0x30] sm:$0xff]
  %v3622 = vld [vmem:[%s31 + $0x38] sm:$0xff]
  %v3623 = vld [vmem:[%s31 + $0x40] sm:$0xff]
  %v3624 = vld [vmem:[%s31 + $0x48] sm:$0xff]
  %v3625 = vld [vmem:[%s31 + $0x50] sm:$0xff]
  %v3626 = vld [vmem:[%s31 + $0x58] sm:$0xff]
  %v3627 = vld [vmem:[%s31 + $0x60] sm:$0xff]
  %v3628 = vld [vmem:[%s31 + $0x68] sm:$0xff]
  %v3629 = vld [vmem:[%s31 + $0x70] sm:$0xff]
  %v3630 = vld [vmem:[%s31 + $0x78] sm:$0xff]
  %v3631 = vld [vmem:[%s33] sm:$0x3]
  %v3633 = vperm.slane %v3631, 0
  %v3634 = vperm.slane %v3631, 1
  %v3653 = vunpack.c.l.b16 %v3615
  %v3654 = vunpack.c.h.b16 %v3615
  %v3655 = vunpack.c.l.b16 %v3616
  %v3656 = vunpack.c.h.b16 %v3616
  %v3657 = vunpack.c.l.b16 %v3617
  %v3658 = vunpack.c.h.b16 %v3617
  %v3659 = vunpack.c.l.b16 %v3618
  %v3660 = vunpack.c.h.b16 %v3618
  %v3661 = vunpack.c.l.b16 %v3619
  %v3662 = vunpack.c.h.b16 %v3619
  %v3663 = vunpack.c.l.b16 %v3620
  %v3664 = vunpack.c.h.b16 %v3620
  %v3665 = vunpack.c.l.b16 %v3621
  %v3666 = vunpack.c.h.b16 %v3621
  %v3667 = vunpack.c.l.b16 %v3622
  %v3668 = vunpack.c.h.b16 %v3622
  %v3669 = vunpack.c.l.b16 %v3623
  %v3670 = vunpack.c.h.b16 %v3623
  %v3671 = vunpack.c.l.b16 %v3624
  %v3672 = vunpack.c.h.b16 %v3624
  %v3673 = vunpack.c.l.b16 %v3625
  %v3674 = vunpack.c.h.b16 %v3625
  %v3675 = vunpack.c.l.b16 %v3626
  %v3676 = vunpack.c.h.b16 %v3626
  %v3677 = vunpack.c.l.b16 %v3627
  %v3678 = vunpack.c.h.b16 %v3627
  %v3679 = vunpack.c.l.b16 %v3628
  %v3680 = vunpack.c.h.b16 %v3628
  %v3681 = vunpack.c.l.b16 %v3629
  %v3682 = vunpack.c.h.b16 %v3629
  %v3683 = vunpack.c.l.b16 %v3630
  %v3684 = vunpack.c.h.b16 %v3630
  %v3685 = vpack.c.b16 %v3655, %v3653
  %v3686 = vpack.c.b16 %v3656, %v3654
  %v3687 = vpack.c.b16 %v3659, %v3657
  %v3688 = vpack.c.b16 %v3660, %v3658
  %v3689 = vpack.c.b16 %v3663, %v3661
  %v3690 = vpack.c.b16 %v3664, %v3662
  %v3691 = vpack.c.b16 %v3667, %v3665
  %v3692 = vpack.c.b16 %v3668, %v3666
  %v3693 = vpack.c.b16 %v3671, %v3669
  %v3694 = vpack.c.b16 %v3672, %v3670
  %v3695 = vpack.c.b16 %v3675, %v3673
  %v3696 = vpack.c.b16 %v3676, %v3674
  %v3697 = vpack.c.b16 %v3679, %v3677
  %v3698 = vpack.c.b16 %v3680, %v3678
  %v3699 = vpack.c.b16 %v3683, %v3681
  %v3700 = vpack.c.b16 %v3684, %v3682
  %3717 = vmatpush.bf16.msra.mxu0 %v3699
  %3718 = vmatpush.bf16.msra.mxu0 %v3697
  %3719 = vmatpush.bf16.msra.mxu0 %v3695
  %3720 = vmatpush.bf16.msra.mxu0 %v3693
  %3721 = vmatpush.bf16.msra.mxu0 %v3691
  %3722 = vmatpush.bf16.msra.mxu0 %v3689
  %3723 = vmatpush.bf16.msra.mxu0 %v3687
  %3724 = vmatpush.bf16.msra.mxu0 %v3685
  %3725 = vmatmul.bf16.gmra.mxu0 %v3614
  %v3726 = vpop.f32.mrf.mxu0
  %v3727 = vadd.f32 %v3633, %v3726
  %v3728 = vpop.f32.mrf.mxu0
  %3729 = vdwg.mxu0
  %3730 = vmatpush.bf16.msra.mxu0 %v3700
  %3731 = vmatpush.bf16.msra.mxu0 %v3698
  %3732 = vmatpush.bf16.msra.mxu0 %v3696
  %3733 = vmatpush.bf16.msra.mxu0 %v3694
  %3734 = vmatpush.bf16.msra.mxu0 %v3692
  %3735 = vmatpush.bf16.msra.mxu0 %v3690
  %3736 = vmatpush.bf16.msra.mxu0 %v3688
  %3737 = vmatpush.bf16.msra.mxu0 %v3686
  %3738 = vmatmul.bf16.gmra.mxu0 %v3614
  %v3739 = vpop.f32.mrf.mxu0
  %v3740 = vadd.f32 %v3634, %v3739
  %v3741 = vpop.f32.mrf.mxu0
  %3742 = vdwg.mxu0
  %v3743 = vpack.c.bf16 %v3530, %v3530
  %v3744 = vld [vmem:[%s35] sm:$0xf]
  %v3745 = vld [vmem:[%s35 + $0x4] sm:$0xf]
  %v3746 = vld [vmem:[%s35 + $0x8] sm:$0xf]
  %v3747 = vld [vmem:[%s35 + $0xc] sm:$0xf]
  %v3748 = vld [vmem:[%s35 + $0x10] sm:$0xf]
  %v3749 = vld [vmem:[%s35 + $0x14] sm:$0xf]
  %v3750 = vld [vmem:[%s35 + $0x18] sm:$0xf]
  %v3751 = vld [vmem:[%s35 + $0x1c] sm:$0xf]
  %v3752 = vld [vmem:[%s35 + $0x20] sm:$0xf]
  %v3753 = vld [vmem:[%s35 + $0x24] sm:$0xf]
  %v3754 = vld [vmem:[%s35 + $0x28] sm:$0xf]
  %v3755 = vld [vmem:[%s35 + $0x2c] sm:$0xf]
  %v3756 = vld [vmem:[%s35 + $0x30] sm:$0xf]
  %v3757 = vld [vmem:[%s35 + $0x34] sm:$0xf]
  %v3758 = vld [vmem:[%s35 + $0x38] sm:$0xf]
  %v3759 = vld [vmem:[%s35 + $0x3c] sm:$0xf]
  %v3760 = vld [vmem:[%s37] sm:$0x1]
  %v3762 = vperm.slane %v3760, 0
  %v3780 = vunpack.c.l.b16 %v3744
  %v3781 = vunpack.c.l.b16 %v3745
  %v3782 = vunpack.c.l.b16 %v3746
  %v3783 = vunpack.c.l.b16 %v3747
  %v3784 = vunpack.c.l.b16 %v3748
  %v3785 = vunpack.c.l.b16 %v3749
  %v3786 = vunpack.c.l.b16 %v3750
  %v3787 = vunpack.c.l.b16 %v3751
  %v3788 = vunpack.c.l.b16 %v3752
  %v3789 = vunpack.c.l.b16 %v3753
  %v3790 = vunpack.c.l.b16 %v3754
  %v3791 = vunpack.c.l.b16 %v3755
  %v3792 = vunpack.c.l.b16 %v3756
  %v3793 = vunpack.c.l.b16 %v3757
  %v3794 = vunpack.c.l.b16 %v3758
  %v3795 = vunpack.c.l.b16 %v3759
  %v3796 = vpack.c.b16 %v3781, %v3780
  %v3797 = vpack.c.b16 %v3783, %v3782
  %v3798 = vpack.c.b16 %v3785, %v3784
  %v3799 = vpack.c.b16 %v3787, %v3786
  %v3800 = vpack.c.b16 %v3789, %v3788
  %v3801 = vpack.c.b16 %v3791, %v3790
  %v3802 = vpack.c.b16 %v3793, %v3792
  %v3803 = vpack.c.b16 %v3795, %v3794
  %3812 = vmatpush.bf16.msra.mxu0 %v3803
  %3813 = vmatpush.bf16.msra.mxu0 %v3802
  %3814 = vmatpush.bf16.msra.mxu0 %v3801
  %3815 = vmatpush.bf16.msra.mxu0 %v3800
  %3816 = vmatpush.bf16.msra.mxu0 %v3799
  %3817 = vmatpush.bf16.msra.mxu0 %v3798
  %3818 = vmatpush.bf16.msra.mxu0 %v3797
  %3819 = vmatpush.bf16.msra.mxu0 %v3796
  %3820 = vmatmul.bf16.gmra.mxu0 %v3743
  %v3821 = vpop.f32.mrf.mxu0
  %v3822 = vadd.f32 %v3762, %v3821
  %v3823 = vpop.f32.mrf.mxu0
  %3824 = vdwg.mxu0
  %v3825 = vtanh.pop %v3822
  %v3826 = vpack.c.bf16 %v3825, %v3825
  %v3827 = vld [vmem:[%s39] sm:$0xff]
  %v3828 = vld [vmem:[%s39 + $0x8] sm:$0xff]
  %v3829 = vld [vmem:[%s39 + $0x10] sm:$0xff]
  %v3830 = vld [vmem:[%s39 + $0x18] sm:$0xff]
  %v3831 = vld [vmem:[%s39 + $0x20] sm:$0xff]
  %v3832 = vld [vmem:[%s39 + $0x28] sm:$0xff]
  %v3833 = vld [vmem:[%s39 + $0x30] sm:$0xff]
  %v3834 = vld [vmem:[%s39 + $0x38] sm:$0xff]
  %v3835 = vld [vmem:[%s39 + $0x40] sm:$0xff]
  %v3836 = vld [vmem:[%s39 + $0x48] sm:$0xff]
  %v3837 = vld [vmem:[%s39 + $0x50] sm:$0xff]
  %v3838 = vld [vmem:[%s39 + $0x58] sm:$0xff]
  %v3839 = vld [vmem:[%s39 + $0x60] sm:$0xff]
  %v3840 = vld [vmem:[%s39 + $0x68] sm:$0xff]
  %v3841 = vld [vmem:[%s39 + $0x70] sm:$0xff]
  %v3842 = vld [vmem:[%s39 + $0x78] sm:$0xff]
  %v3843 = vld [vmem:[%s41] sm:$0x3]
  %v3845 = vperm.slane %v3843, 0
  %v3846 = vperm.slane %v3843, 1
  %v3865 = vunpack.c.l.b16 %v3827
  %v3866 = vunpack.c.h.b16 %v3827
  %v3867 = vunpack.c.l.b16 %v3828
  %v3868 = vunpack.c.h.b16 %v3828
  %v3869 = vunpack.c.l.b16 %v3829
  %v3870 = vunpack.c.h.b16 %v3829
  %v3871 = vunpack.c.l.b16 %v3830
  %v3872 = vunpack.c.h.b16 %v3830
  %v3873 = vunpack.c.l.b16 %v3831
  %v3874 = vunpack.c.h.b16 %v3831
  %v3875 = vunpack.c.l.b16 %v3832
  %v3876 = vunpack.c.h.b16 %v3832
  %v3877 = vunpack.c.l.b16 %v3833
  %v3878 = vunpack.c.h.b16 %v3833
  %v3879 = vunpack.c.l.b16 %v3834
  %v3880 = vunpack.c.h.b16 %v3834
  %v3881 = vunpack.c.l.b16 %v3835
  %v3882 = vunpack.c.h.b16 %v3835
  %v3883 = vunpack.c.l.b16 %v3836
  %v3884 = vunpack.c.h.b16 %v3836
  %v3885 = vunpack.c.l.b16 %v3837
  %v3886 = vunpack.c.h.b16 %v3837
  %v3887 = vunpack.c.l.b16 %v3838
  %v3888 = vunpack.c.h.b16 %v3838
  %v3889 = vunpack.c.l.b16 %v3839
  %v3890 = vunpack.c.h.b16 %v3839
  %v3891 = vunpack.c.l.b16 %v3840
  %v3892 = vunpack.c.h.b16 %v3840
  %v3893 = vunpack.c.l.b16 %v3841
  %v3894 = vunpack.c.h.b16 %v3841
  %v3895 = vunpack.c.l.b16 %v3842
  %v3896 = vunpack.c.h.b16 %v3842
  %v3897 = vpack.c.b16 %v3867, %v3865
  %v3898 = vpack.c.b16 %v3868, %v3866
  %v3899 = vpack.c.b16 %v3871, %v3869
  %v3900 = vpack.c.b16 %v3872, %v3870
  %v3901 = vpack.c.b16 %v3875, %v3873
  %v3902 = vpack.c.b16 %v3876, %v3874
  %v3903 = vpack.c.b16 %v3879, %v3877
  %v3904 = vpack.c.b16 %v3880, %v3878
  %v3905 = vpack.c.b16 %v3883, %v3881
  %v3906 = vpack.c.b16 %v3884, %v3882
  %v3907 = vpack.c.b16 %v3887, %v3885
  %v3908 = vpack.c.b16 %v3888, %v3886
  %v3909 = vpack.c.b16 %v3891, %v3889
  %v3910 = vpack.c.b16 %v3892, %v3890
  %v3911 = vpack.c.b16 %v3895, %v3893
  %v3912 = vpack.c.b16 %v3896, %v3894
  %3929 = vmatpush.bf16.msra.mxu0 %v3911
  %3930 = vmatpush.bf16.msra.mxu0 %v3909
  %3931 = vmatpush.bf16.msra.mxu0 %v3907
  %3932 = vmatpush.bf16.msra.mxu0 %v3905
  %3933 = vmatpush.bf16.msra.mxu0 %v3903
  %3934 = vmatpush.bf16.msra.mxu0 %v3901
  %3935 = vmatpush.bf16.msra.mxu0 %v3899
  %3936 = vmatpush.bf16.msra.mxu0 %v3897
  %3937 = vmatmul.bf16.gmra.mxu0 %v3826
  %v3938 = vpop.f32.mrf.mxu0
  %v3939 = vadd.f32 %v3845, %v3938
  %v3940 = vpop.f32.mrf.mxu0
  %3941 = vdwg.mxu0
  %3942 = vmatpush.bf16.msra.mxu0 %v3912
  %3943 = vmatpush.bf16.msra.mxu0 %v3910
  %3944 = vmatpush.bf16.msra.mxu0 %v3908
  %3945 = vmatpush.bf16.msra.mxu0 %v3906
  %3946 = vmatpush.bf16.msra.mxu0 %v3904
  %3947 = vmatpush.bf16.msra.mxu0 %v3902
  %3948 = vmatpush.bf16.msra.mxu0 %v3900
  %3949 = vmatpush.bf16.msra.mxu0 %v3898
  %3950 = vmatmul.bf16.gmra.mxu0 %v3826
  %v3951 = vpop.f32.mrf.mxu0
  %v3952 = vadd.f32 %v3846, %v3951
  %v3953 = vpop.f32.mrf.mxu0
  %3954 = vdwg.mxu0
  %v3955 = vmax.f32 %v3727, %v3740
  %3956 = vmax.xlane.f32.xlu0 %v3955
  %v3957 = vpop.xlane.xlu0 %3956
  %v3958 = vsub.f32 %v3727, %v3957
  %v3959 = vsub.f32 %v3740, %v3957
  %v3960 = vmax.f32 %v3939, %v3952
  %3961 = vmax.xlane.f32.xlu0 %v3960
  %v3962 = vpop.xlane.xlu0 %3961
  %v3963 = vsub.f32 %v3939, %v3962
  %v3964 = vsub.f32 %v3952, %v3962
  %v3965 = vmin.f32 %v3963, %v3964
  %3966 = vmin.xlane.f32.xlu0 %v3965
  %v3967 = vpop.xlane.xlu0 %3966
  %vm3968 = vcmp.gt.f32.partialorder %v3526, 0.0
  %vm3969 = vcmp.gt.f32.partialorder %v3527, 0.0
  %v3970 = vsel %vm3968, 1, 0
  %v3971 = vsel %vm3969, 1, 0
  %vm3972 = vcmp.eq.s32.totalorder %v3970, 1
  %vm3973 = vcmp.eq.s32.totalorder %v3971, 1
  %v3974 = vsel %vm3972, %v3967, %v3963
  %v3975 = vsel %vm3973, %v3967, %v3964
  %v3976 = vmul.f32 %v3958, 1.442695
  %v3977 = vpow.pop %v3976
  %v3978 = vmul.f32 %v3959, 1.442695
  %v3979 = vpow.pop %v3978
  %v3980 = vadd.f32 %v3977, %v3979
  %3981 = vadd.xlane.f32.xlu0 %v3980
  %v3982 = vpop.xlane.xlu0 %3981
  %v3983 = vrcp.pop %v3982
  %v3984 = vmul.f32 %v3982, %v3983
  %v3985 = vsub.f32 1.0, %v3984
  %v3986 = vmul.f32 %v3983, %v3985
  %v3987 = vadd.f32 %v3983, %v3986
  %vm3988 = vweird.f32 %v3982
  %vm3989 = vweird.f32 %v3983
  %vm3990 = vmor %vm3988, %vm3989
  %v3991 = vsel %vm3990, %v3983, %v3987
  %v3992 = vand.u32 2147483647, %v3982
  %vm3993 = vcmp.eq.f32.partialorder %v3992, 8.507059e+37
  %v3994 = vand.u32 %v3982, 2147483648
  %v3995 = vor.u32 1.1754944e-38, %v3994
  %v3996 = vsel %vm3993, %v3995, %v3991
  %v3997 = vmul.f32 %v3977, %v3996
  %v3998 = vmul.f32 %v3979, %v3996
  %v3999 = vmul.f32 %v3974, 1.442695
  %v4000 = vpow.pop %v3999
  %v4001 = vmul.f32 %v3975, 1.442695
  %v4002 = vpow.pop %v4001
  %v4003 = vadd.f32 %v4000, %v4002
  %4004 = vadd.xlane.f32.xlu0 %v4003
  %v4005 = vpop.xlane.xlu0 %4004
  %v4006 = vlog2.pop %v4005
  %v4007 = vmul.f32 %v4006, 0.6931472
  %v4008 = vsub.f32 %v3974, %v4007
  %v4009 = vsub.f32 %v3975, %v4007
  %v4010 = vmax.f32 %v3997, %v3998
  %4011 = vmax.xlane.f32.xlu0 %v4010
  %v4012 = vpop.xlane.xlu0 %4011
  %vm4013 = vcmp.eq.f32.partialorder %v3997, %v4012
  %vm4014 = vcmp.eq.f32.partialorder %v3998, %v4012
  %v4015 = vsel %vm4013, %v1658, 256
  %v4016 = vsel %vm4014, %v1659, 256
  %vm4017 = vcmp.lt.s32.totalorder %v4015, %v4016
  %v4018 = vsel %vm4017, %v4015, %v4016
  %v4019 = vand.u32 %v4018, 65535
  %v4020 = vshra.s32 %v4018, 16
  %v4021 = vcvt.s32.f32 %v4019
  %v4022 = vcvt.s32.f32 %v4020
  %4023 = vmin.xlane.f32.xlu0 %v4022
  %v4024 = vpop.xlane.xlu0 %4023
  %vm4025 = vcmp.eq.f32.partialorder %v4022, %v4024
  %v4026 = vsel %vm4025, %v4021, inf
  %4027 = vmin.xlane.f32.xlu0 %v4026
  %v4028 = vpop.xlane.xlu0 %4027
  %v4029 = vcvt.f32.s32 %v4028
  %v4030 = vcvt.f32.s32 %v4024
  %v4031 = vshll.u32 %v4030, 16
  %v4032 = vadd.s32 %v4031, %v4029
  %vm4033 = vcmp.eq.s32.totalorder %v1658, %v4032
  %vm4034 = vcmp.eq.s32.totalorder %v1659, %v4032
  %v4035 = vsel %vm4033, 1, 0
  %v4036 = vsel %vm4034, 1, 0
  %v4037 = vcvt.s32.f32 %v4035
  %v4038 = vcvt.s32.f32 %v4036
  %v4039 = vpack.c.bf16 %v4037, %v4037
  %v4040 = vpack.c.bf16 %v4038, %v4038
  %v4041 = vld [vmem:[%s43] sm:$0xf]
  %v4042 = vld [vmem:[%s43 + $0x4] sm:$0xf]
  %v4043 = vld [vmem:[%s43 + $0x8] sm:$0xf]
  %v4044 = vld [vmem:[%s43 + $0xc] sm:$0xf]
  %v4045 = vld [vmem:[%s43 + $0x10] sm:$0xf]
  %v4046 = vld [vmem:[%s43 + $0x14] sm:$0xf]
  %v4047 = vld [vmem:[%s43 + $0x18] sm:$0xf]
  %v4048 = vld [vmem:[%s43 + $0x1c] sm:$0xf]
  %v4049 = vld [vmem:[%s43 + $0x20] sm:$0xf]
  %v4050 = vld [vmem:[%s43 + $0x24] sm:$0xf]
  %v4051 = vld [vmem:[%s43 + $0x28] sm:$0xf]
  %v4052 = vld [vmem:[%s43 + $0x2c] sm:$0xf]
  %v4053 = vld [vmem:[%s43 + $0x30] sm:$0xf]
  %v4054 = vld [vmem:[%s43 + $0x34] sm:$0xf]
  %v4055 = vld [vmem:[%s43 + $0x38] sm:$0xf]
  %v4056 = vld [vmem:[%s43 + $0x3c] sm:$0xf]
  %v4057 = vld [vmem:[%s43 + $0x40] sm:$0xf]
  %v4058 = vld [vmem:[%s43 + $0x44] sm:$0xf]
  %v4059 = vld [vmem:[%s43 + $0x48] sm:$0xf]
  %v4060 = vld [vmem:[%s43 + $0x4c] sm:$0xf]
  %v4061 = vld [vmem:[%s43 + $0x50] sm:$0xf]
  %v4062 = vld [vmem:[%s43 + $0x54] sm:$0xf]
  %v4063 = vld [vmem:[%s43 + $0x58] sm:$0xf]
  %v4064 = vld [vmem:[%s43 + $0x5c] sm:$0xf]
  %v4065 = vld [vmem:[%s43 + $0x60] sm:$0xf]
  %v4066 = vld [vmem:[%s43 + $0x64] sm:$0xf]
  %v4067 = vld [vmem:[%s43 + $0x68] sm:$0xf]
  %v4068 = vld [vmem:[%s43 + $0x6c] sm:$0xf]
  %v4069 = vld [vmem:[%s43 + $0x70] sm:$0xf]
  %v4070 = vld [vmem:[%s43 + $0x74] sm:$0xf]
  %v4071 = vld [vmem:[%s43 + $0x78] sm:$0xf]
  %v4072 = vld [vmem:[%s43 + $0x7c] sm:$0xf]
  %v4105 = vunpack.c.l.b16 %v4041
  %v4106 = vunpack.c.l.b16 %v4042
  %v4107 = vunpack.c.l.b16 %v4043
  %v4108 = vunpack.c.l.b16 %v4044
  %v4109 = vunpack.c.l.b16 %v4045
  %v4110 = vunpack.c.l.b16 %v4046
  %v4111 = vunpack.c.l.b16 %v4047
  %v4112 = vunpack.c.l.b16 %v4048
  %v4113 = vunpack.c.l.b16 %v4049
  %v4114 = vunpack.c.l.b16 %v4050
  %v4115 = vunpack.c.l.b16 %v4051
  %v4116 = vunpack.c.l.b16 %v4052
  %v4117 = vunpack.c.l.b16 %v4053
  %v4118 = vunpack.c.l.b16 %v4054
  %v4119 = vunpack.c.l.b16 %v4055
  %v4120 = vunpack.c.l.b16 %v4056
  %v4121 = vunpack.c.l.b16 %v4057
  %v4122 = vunpack.c.l.b16 %v4058
  %v4123 = vunpack.c.l.b16 %v4059
  %v4124 = vunpack.c.l.b16 %v4060
  %v4125 = vunpack.c.l.b16 %v4061
  %v4126 = vunpack.c.l.b16 %v4062
  %v4127 = vunpack.c.l.b16 %v4063
  %v4128 = vunpack.c.l.b16 %v4064
  %v4129 = vunpack.c.l.b16 %v4065
  %v4130 = vunpack.c.l.b16 %v4066
  %v4131 = vunpack.c.l.b16 %v4067
  %v4132 = vunpack.c.l.b16 %v4068
  %v4133 = vunpack.c.l.b16 %v4069
  %v4134 = vunpack.c.l.b16 %v4070
  %v4135 = vunpack.c.l.b16 %v4071
  %v4136 = vunpack.c.l.b16 %v4072
  %v4137 = vpack.c.b16 %v4106, %v4105
  %v4138 = vpack.c.b16 %v4108, %v4107
  %v4139 = vpack.c.b16 %v4110, %v4109
  %v4140 = vpack.c.b16 %v4112, %v4111
  %v4141 = vpack.c.b16 %v4114, %v4113
  %v4142 = vpack.c.b16 %v4116, %v4115
  %v4143 = vpack.c.b16 %v4118, %v4117
  %v4144 = vpack.c.b16 %v4120, %v4119
  %v4145 = vpack.c.b16 %v4122, %v4121
  %v4146 = vpack.c.b16 %v4124, %v4123
  %v4147 = vpack.c.b16 %v4126, %v4125
  %v4148 = vpack.c.b16 %v4128, %v4127
  %v4149 = vpack.c.b16 %v4130, %v4129
  %v4150 = vpack.c.b16 %v4132, %v4131
  %v4151 = vpack.c.b16 %v4134, %v4133
  %v4152 = vpack.c.b16 %v4136, %v4135
  %4169 = vmatpush.bf16.msra.mxu0 %v4144
  %4170 = vmatpush.bf16.msra.mxu0 %v4143
  %4171 = vmatpush.bf16.msra.mxu0 %v4142
  %4172 = vmatpush.bf16.msra.mxu0 %v4141
  %4173 = vmatpush.bf16.msra.mxu0 %v4140
  %4174 = vmatpush.bf16.msra.mxu0 %v4139
  %4175 = vmatpush.bf16.msra.mxu0 %v4138
  %4176 = vmatpush.bf16.msra.mxu0 %v4137
  %4177 = vmatmul.bf16.gmra.mxu0 %v4039
  %v4178 = vpop.f32.mrf.mxu0
  %v4179 = vadd.f32 0.0, %v4178
  %v4180 = vpop.f32.mrf.mxu0
  %4181 = vdwg.mxu0
  %4182 = vmatpush.bf16.msra.mxu0 %v4152
  %4183 = vmatpush.bf16.msra.mxu0 %v4151
  %4184 = vmatpush.bf16.msra.mxu0 %v4150
  %4185 = vmatpush.bf16.msra.mxu0 %v4149
  %4186 = vmatpush.bf16.msra.mxu0 %v4148
  %4187 = vmatpush.bf16.msra.mxu0 %v4147
  %4188 = vmatpush.bf16.msra.mxu0 %v4146
  %4189 = vmatpush.bf16.msra.mxu0 %v4145
  %4190 = vmatmul.bf16.gmra.mxu0 %v4040
  %v4191 = vpop.f32.mrf.mxu0
  %v4192 = vadd.f32 %v4179, %v4191
  %v4193 = vpop.f32.mrf.mxu0
  %4194 = vdwg.mxu0
  %s4195 = scalar_lea.vmem %s69, 48
  %4196 = vst [vmem:[%s4195] sm:$0xff] %v3997
  %4197 = vst [vmem:[%s4195 + $0x8] sm:$0xff] %v3998
  %s4198 = scalar_lea.vmem %s71, 48
  %4199 = vst [vmem:[%s4198] sm:$0xff] %v4008
  %4200 = vst [vmem:[%s4198 + $0x8] sm:$0xff] %v4009
  %vm4201 = vcmp.eq.s32.totalorder %v4032, 220
  %v4202 = vsel %vm4201, 1, 0
  %vm4203 = vcmp.eq.s32.totalorder %v4202, 1
  %v4204 = vsel %vm4203, %v2118, %v4192
  %v4205 = vadd.f32 %v3510, %v4192
  %v4206 = vadd.f32 %v3511, %v4192
  %v4207 = vmul.f32 %v4037, %v1664
  %v4208 = vmul.f32 %v4038, %v1664
  %v4209 = vrot.slane %v4207, 4
  %v4210 = vmax.f32 %v4207, %v4209
  %v4211 = vrot.slane %v4210, 2
  %v4212 = vmax.f32 %v4210, %v4211
  %v4213 = vrot.slane %v4212, 1
  %v4214 = vmax.f32 %v4212, %v4213
  %v4215 = vrot.slane %v4208, 4
  %v4216 = vmax.f32 %v4208, %v4215
  %v4217 = vrot.slane %v4216, 2
  %v4218 = vmax.f32 %v4216, %v4217
  %v4219 = vrot.slane %v4218, 1
  %v4220 = vmax.f32 %v4218, %v4219
  %v4221 = vmax.f32 %v3526, %v4214
  %v4222 = vmax.f32 %v3527, %v4220
  %v4223 = vadd.f32 %v3528, %v4204
  %v4224 = vmul.f32 %v4205, 0.125
  %v4225 = vmul.f32 %v4206, 0.25
  %v4226 = vpack.c.bf16 %v4224, %v4224
  %v4227 = vld [vmem:[%s27] sm:$0xf]
  %v4228 = vld [vmem:[%s27 + $0x4] sm:$0xf]
  %v4229 = vld [vmem:[%s27 + $0x8] sm:$0xf]
  %v4230 = vld [vmem:[%s27 + $0xc] sm:$0xf]
  %v4231 = vld [vmem:[%s27 + $0x10] sm:$0xf]
  %v4232 = vld [vmem:[%s27 + $0x14] sm:$0xf]
  %v4233 = vld [vmem:[%s27 + $0x18] sm:$0xf]
  %v4234 = vld [vmem:[%s27 + $0x1c] sm:$0xf]
  %v4235 = vld [vmem:[%s27 + $0x20] sm:$0xf]
  %v4236 = vld [vmem:[%s27 + $0x24] sm:$0xf]
  %v4237 = vld [vmem:[%s27 + $0x28] sm:$0xf]
  %v4238 = vld [vmem:[%s27 + $0x2c] sm:$0xf]
  %v4239 = vld [vmem:[%s27 + $0x30] sm:$0xf]
  %v4240 = vld [vmem:[%s27 + $0x34] sm:$0xf]
  %v4241 = vld [vmem:[%s27 + $0x38] sm:$0xf]
  %v4242 = vld [vmem:[%s27 + $0x3c] sm:$0xf]
  %v4243 = vld [vmem:[%s29] sm:$0x1]
  %v4245 = vperm.slane %v4243, 0
  %v4263 = vunpack.c.l.b16 %v4227
  %v4264 = vunpack.c.l.b16 %v4228
  %v4265 = vunpack.c.l.b16 %v4229
  %v4266 = vunpack.c.l.b16 %v4230
  %v4267 = vunpack.c.l.b16 %v4231
  %v4268 = vunpack.c.l.b16 %v4232
  %v4269 = vunpack.c.l.b16 %v4233
  %v4270 = vunpack.c.l.b16 %v4234
  %v4271 = vunpack.c.l.b16 %v4235
  %v4272 = vunpack.c.l.b16 %v4236
  %v4273 = vunpack.c.l.b16 %v4237
  %v4274 = vunpack.c.l.b16 %v4238
  %v4275 = vunpack.c.l.b16 %v4239
  %v4276 = vunpack.c.l.b16 %v4240
  %v4277 = vunpack.c.l.b16 %v4241
  %v4278 = vunpack.c.l.b16 %v4242
  %v4279 = vpack.c.b16 %v4264, %v4263
  %v4280 = vpack.c.b16 %v4266, %v4265
  %v4281 = vpack.c.b16 %v4268, %v4267
  %v4282 = vpack.c.b16 %v4270, %v4269
  %v4283 = vpack.c.b16 %v4272, %v4271
  %v4284 = vpack.c.b16 %v4274, %v4273
  %v4285 = vpack.c.b16 %v4276, %v4275
  %v4286 = vpack.c.b16 %v4278, %v4277
  %4295 = vmatpush.bf16.msra.mxu0 %v4286
  %4296 = vmatpush.bf16.msra.mxu0 %v4285
  %4297 = vmatpush.bf16.msra.mxu0 %v4284
  %4298 = vmatpush.bf16.msra.mxu0 %v4283
  %4299 = vmatpush.bf16.msra.mxu0 %v4282
  %4300 = vmatpush.bf16.msra.mxu0 %v4281
  %4301 = vmatpush.bf16.msra.mxu0 %v4280
  %4302 = vmatpush.bf16.msra.mxu0 %v4279
  %4303 = vmatmul.bf16.gmra.mxu0 %v4226
  %v4304 = vpop.f32.mrf.mxu0
  %v4305 = vadd.f32 %v4245, %v4304
  %v4306 = vpop.f32.mrf.mxu0
  %4307 = vdwg.mxu0
  %v4308 = vtanh.pop %v4305
  %v4309 = vpack.c.bf16 %v4308, %v4308
  %v4310 = vld [vmem:[%s31] sm:$0xff]
  %v4311 = vld [vmem:[%s31 + $0x8] sm:$0xff]
  %v4312 = vld [vmem:[%s31 + $0x10] sm:$0xff]
  %v4313 = vld [vmem:[%s31 + $0x18] sm:$0xff]
  %v4314 = vld [vmem:[%s31 + $0x20] sm:$0xff]
  %v4315 = vld [vmem:[%s31 + $0x28] sm:$0xff]
  %v4316 = vld [vmem:[%s31 + $0x30] sm:$0xff]
  %v4317 = vld [vmem:[%s31 + $0x38] sm:$0xff]
  %v4318 = vld [vmem:[%s31 + $0x40] sm:$0xff]
  %v4319 = vld [vmem:[%s31 + $0x48] sm:$0xff]
  %v4320 = vld [vmem:[%s31 + $0x50] sm:$0xff]
  %v4321 = vld [vmem:[%s31 + $0x58] sm:$0xff]
  %v4322 = vld [vmem:[%s31 + $0x60] sm:$0xff]
  %v4323 = vld [vmem:[%s31 + $0x68] sm:$0xff]
  %v4324 = vld [vmem:[%s31 + $0x70] sm:$0xff]
  %v4325 = vld [vmem:[%s31 + $0x78] sm:$0xff]
  %v4326 = vld [vmem:[%s33] sm:$0x3]
  %v4328 = vperm.slane %v4326, 0
  %v4329 = vperm.slane %v4326, 1
  %v4348 = vunpack.c.l.b16 %v4310
  %v4349 = vunpack.c.h.b16 %v4310
  %v4350 = vunpack.c.l.b16 %v4311
  %v4351 = vunpack.c.h.b16 %v4311
  %v4352 = vunpack.c.l.b16 %v4312
  %v4353 = vunpack.c.h.b16 %v4312
  %v4354 = vunpack.c.l.b16 %v4313
  %v4355 = vunpack.c.h.b16 %v4313
  %v4356 = vunpack.c.l.b16 %v4314
  %v4357 = vunpack.c.h.b16 %v4314
  %v4358 = vunpack.c.l.b16 %v4315
  %v4359 = vunpack.c.h.b16 %v4315
  %v4360 = vunpack.c.l.b16 %v4316
  %v4361 = vunpack.c.h.b16 %v4316
  %v4362 = vunpack.c.l.b16 %v4317
  %v4363 = vunpack.c.h.b16 %v4317
  %v4364 = vunpack.c.l.b16 %v4318
  %v4365 = vunpack.c.h.b16 %v4318
  %v4366 = vunpack.c.l.b16 %v4319
  %v4367 = vunpack.c.h.b16 %v4319
  %v4368 = vunpack.c.l.b16 %v4320
  %v4369 = vunpack.c.h.b16 %v4320
  %v4370 = vunpack.c.l.b16 %v4321
  %v4371 = vunpack.c.h.b16 %v4321
  %v4372 = vunpack.c.l.b16 %v4322
  %v4373 = vunpack.c.h.b16 %v4322
  %v4374 = vunpack.c.l.b16 %v4323
  %v4375 = vunpack.c.h.b16 %v4323
  %v4376 = vunpack.c.l.b16 %v4324
  %v4377 = vunpack.c.h.b16 %v4324
  %v4378 = vunpack.c.l.b16 %v4325
  %v4379 = vunpack.c.h.b16 %v4325
  %v4380 = vpack.c.b16 %v4350, %v4348
  %v4381 = vpack.c.b16 %v4351, %v4349
  %v4382 = vpack.c.b16 %v4354, %v4352
  %v4383 = vpack.c.b16 %v4355, %v4353
  %v4384 = vpack.c.b16 %v4358, %v4356
  %v4385 = vpack.c.b16 %v4359, %v4357
  %v4386 = vpack.c.b16 %v4362, %v4360
  %v4387 = vpack.c.b16 %v4363, %v4361
  %v4388 = vpack.c.b16 %v4366, %v4364
  %v4389 = vpack.c.b16 %v4367, %v4365
  %v4390 = vpack.c.b16 %v4370, %v4368
  %v4391 = vpack.c.b16 %v4371, %v4369
  %v4392 = vpack.c.b16 %v4374, %v4372
  %v4393 = vpack.c.b16 %v4375, %v4373
  %v4394 = vpack.c.b16 %v4378, %v4376
  %v4395 = vpack.c.b16 %v4379, %v4377
  %4412 = vmatpush.bf16.msra.mxu0 %v4394
  %4413 = vmatpush.bf16.msra.mxu0 %v4392
  %4414 = vmatpush.bf16.msra.mxu0 %v4390
  %4415 = vmatpush.bf16.msra.mxu0 %v4388
  %4416 = vmatpush.bf16.msra.mxu0 %v4386
  %4417 = vmatpush.bf16.msra.mxu0 %v4384
  %4418 = vmatpush.bf16.msra.mxu0 %v4382
  %4419 = vmatpush.bf16.msra.mxu0 %v4380
  %4420 = vmatmul.bf16.gmra.mxu0 %v4309
  %v4421 = vpop.f32.mrf.mxu0
  %v4422 = vadd.f32 %v4328, %v4421
  %v4423 = vpop.f32.mrf.mxu0
  %4424 = vdwg.mxu0
  %4425 = vmatpush.bf16.msra.mxu0 %v4395
  %4426 = vmatpush.bf16.msra.mxu0 %v4393
  %4427 = vmatpush.bf16.msra.mxu0 %v4391
  %4428 = vmatpush.bf16.msra.mxu0 %v4389
  %4429 = vmatpush.bf16.msra.mxu0 %v4387
  %4430 = vmatpush.bf16.msra.mxu0 %v4385
  %4431 = vmatpush.bf16.msra.mxu0 %v4383
  %4432 = vmatpush.bf16.msra.mxu0 %v4381
  %4433 = vmatmul.bf16.gmra.mxu0 %v4309
  %v4434 = vpop.f32.mrf.mxu0
  %v4435 = vadd.f32 %v4329, %v4434
  %v4436 = vpop.f32.mrf.mxu0
  %4437 = vdwg.mxu0
  %v4438 = vpack.c.bf16 %v4225, %v4225
  %v4439 = vld [vmem:[%s35] sm:$0xf]
  %v4440 = vld [vmem:[%s35 + $0x4] sm:$0xf]
  %v4441 = vld [vmem:[%s35 + $0x8] sm:$0xf]
  %v4442 = vld [vmem:[%s35 + $0xc] sm:$0xf]
  %v4443 = vld [vmem:[%s35 + $0x10] sm:$0xf]
  %v4444 = vld [vmem:[%s35 + $0x14] sm:$0xf]
  %v4445 = vld [vmem:[%s35 + $0x18] sm:$0xf]
  %v4446 = vld [vmem:[%s35 + $0x1c] sm:$0xf]
  %v4447 = vld [vmem:[%s35 + $0x20] sm:$0xf]
  %v4448 = vld [vmem:[%s35 + $0x24] sm:$0xf]
  %v4449 = vld [vmem:[%s35 + $0x28] sm:$0xf]
  %v4450 = vld [vmem:[%s35 + $0x2c] sm:$0xf]
  %v4451 = vld [vmem:[%s35 + $0x30] sm:$0xf]
  %v4452 = vld [vmem:[%s35 + $0x34] sm:$0xf]
  %v4453 = vld [vmem:[%s35 + $0x38] sm:$0xf]
  %v4454 = vld [vmem:[%s35 + $0x3c] sm:$0xf]
  %v4455 = vld [vmem:[%s37] sm:$0x1]
  %v4457 = vperm.slane %v4455, 0
  %v4475 = vunpack.c.l.b16 %v4439
  %v4476 = vunpack.c.l.b16 %v4440
  %v4477 = vunpack.c.l.b16 %v4441
  %v4478 = vunpack.c.l.b16 %v4442
  %v4479 = vunpack.c.l.b16 %v4443
  %v4480 = vunpack.c.l.b16 %v4444
  %v4481 = vunpack.c.l.b16 %v4445
  %v4482 = vunpack.c.l.b16 %v4446
  %v4483 = vunpack.c.l.b16 %v4447
  %v4484 = vunpack.c.l.b16 %v4448
  %v4485 = vunpack.c.l.b16 %v4449
  %v4486 = vunpack.c.l.b16 %v4450
  %v4487 = vunpack.c.l.b16 %v4451
  %v4488 = vunpack.c.l.b16 %v4452
  %v4489 = vunpack.c.l.b16 %v4453
  %v4490 = vunpack.c.l.b16 %v4454
  %v4491 = vpack.c.b16 %v4476, %v4475
  %v4492 = vpack.c.b16 %v4478, %v4477
  %v4493 = vpack.c.b16 %v4480, %v4479
  %v4494 = vpack.c.b16 %v4482, %v4481
  %v4495 = vpack.c.b16 %v4484, %v4483
  %v4496 = vpack.c.b16 %v4486, %v4485
  %v4497 = vpack.c.b16 %v4488, %v4487
  %v4498 = vpack.c.b16 %v4490, %v4489
  %4507 = vmatpush.bf16.msra.mxu0 %v4498
  %4508 = vmatpush.bf16.msra.mxu0 %v4497
  %4509 = vmatpush.bf16.msra.mxu0 %v4496
  %4510 = vmatpush.bf16.msra.mxu0 %v4495
  %4511 = vmatpush.bf16.msra.mxu0 %v4494
  %4512 = vmatpush.bf16.msra.mxu0 %v4493
  %4513 = vmatpush.bf16.msra.mxu0 %v4492
  %4514 = vmatpush.bf16.msra.mxu0 %v4491
  %4515 = vmatmul.bf16.gmra.mxu0 %v4438
  %v4516 = vpop.f32.mrf.mxu0
  %v4517 = vadd.f32 %v4457, %v4516
  %v4518 = vpop.f32.mrf.mxu0
  %4519 = vdwg.mxu0
  %v4520 = vtanh.pop %v4517
  %v4521 = vpack.c.bf16 %v4520, %v4520
  %v4522 = vld [vmem:[%s39] sm:$0xff]
  %v4523 = vld [vmem:[%s39 + $0x8] sm:$0xff]
  %v4524 = vld [vmem:[%s39 + $0x10] sm:$0xff]
  %v4525 = vld [vmem:[%s39 + $0x18] sm:$0xff]
  %v4526 = vld [vmem:[%s39 + $0x20] sm:$0xff]
  %v4527 = vld [vmem:[%s39 + $0x28] sm:$0xff]
  %v4528 = vld [vmem:[%s39 + $0x30] sm:$0xff]
  %v4529 = vld [vmem:[%s39 + $0x38] sm:$0xff]
  %v4530 = vld [vmem:[%s39 + $0x40] sm:$0xff]
  %v4531 = vld [vmem:[%s39 + $0x48] sm:$0xff]
  %v4532 = vld [vmem:[%s39 + $0x50] sm:$0xff]
  %v4533 = vld [vmem:[%s39 + $0x58] sm:$0xff]
  %v4534 = vld [vmem:[%s39 + $0x60] sm:$0xff]
  %v4535 = vld [vmem:[%s39 + $0x68] sm:$0xff]
  %v4536 = vld [vmem:[%s39 + $0x70] sm:$0xff]
  %v4537 = vld [vmem:[%s39 + $0x78] sm:$0xff]
  %v4538 = vld [vmem:[%s41] sm:$0x3]
  %v4540 = vperm.slane %v4538, 0
  %v4541 = vperm.slane %v4538, 1
  %v4560 = vunpack.c.l.b16 %v4522
  %v4561 = vunpack.c.h.b16 %v4522
  %v4562 = vunpack.c.l.b16 %v4523
  %v4563 = vunpack.c.h.b16 %v4523
  %v4564 = vunpack.c.l.b16 %v4524
  %v4565 = vunpack.c.h.b16 %v4524
  %v4566 = vunpack.c.l.b16 %v4525
  %v4567 = vunpack.c.h.b16 %v4525
  %v4568 = vunpack.c.l.b16 %v4526
  %v4569 = vunpack.c.h.b16 %v4526
  %v4570 = vunpack.c.l.b16 %v4527
  %v4571 = vunpack.c.h.b16 %v4527
  %v4572 = vunpack.c.l.b16 %v4528
  %v4573 = vunpack.c.h.b16 %v4528
  %v4574 = vunpack.c.l.b16 %v4529
  %v4575 = vunpack.c.h.b16 %v4529
  %v4576 = vunpack.c.l.b16 %v4530
  %v4577 = vunpack.c.h.b16 %v4530
  %v4578 = vunpack.c.l.b16 %v4531
  %v4579 = vunpack.c.h.b16 %v4531
  %v4580 = vunpack.c.l.b16 %v4532
  %v4581 = vunpack.c.h.b16 %v4532
  %v4582 = vunpack.c.l.b16 %v4533
  %v4583 = vunpack.c.h.b16 %v4533
  %v4584 = vunpack.c.l.b16 %v4534
  %v4585 = vunpack.c.h.b16 %v4534
  %v4586 = vunpack.c.l.b16 %v4535
  %v4587 = vunpack.c.h.b16 %v4535
  %v4588 = vunpack.c.l.b16 %v4536
  %v4589 = vunpack.c.h.b16 %v4536
  %v4590 = vunpack.c.l.b16 %v4537
  %v4591 = vunpack.c.h.b16 %v4537
  %v4592 = vpack.c.b16 %v4562, %v4560
  %v4593 = vpack.c.b16 %v4563, %v4561
  %v4594 = vpack.c.b16 %v4566, %v4564
  %v4595 = vpack.c.b16 %v4567, %v4565
  %v4596 = vpack.c.b16 %v4570, %v4568
  %v4597 = vpack.c.b16 %v4571, %v4569
  %v4598 = vpack.c.b16 %v4574, %v4572
  %v4599 = vpack.c.b16 %v4575, %v4573
  %v4600 = vpack.c.b16 %v4578, %v4576
  %v4601 = vpack.c.b16 %v4579, %v4577
  %v4602 = vpack.c.b16 %v4582, %v4580
  %v4603 = vpack.c.b16 %v4583, %v4581
  %v4604 = vpack.c.b16 %v4586, %v4584
  %v4605 = vpack.c.b16 %v4587, %v4585
  %v4606 = vpack.c.b16 %v4590, %v4588
  %v4607 = vpack.c.b16 %v4591, %v4589
  %4624 = vmatpush.bf16.msra.mxu0 %v4606
  %4625 = vmatpush.bf16.msra.mxu0 %v4604
  %4626 = vmatpush.bf16.msra.mxu0 %v4602
  %4627 = vmatpush.bf16.msra.mxu0 %v4600
  %4628 = vmatpush.bf16.msra.mxu0 %v4598
  %4629 = vmatpush.bf16.msra.mxu0 %v4596
  %4630 = vmatpush.bf16.msra.mxu0 %v4594
  %4631 = vmatpush.bf16.msra.mxu0 %v4592
  %4632 = vmatmul.bf16.gmra.mxu0 %v4521
  %v4633 = vpop.f32.mrf.mxu0
  %v4634 = vadd.f32 %v4540, %v4633
  %v4635 = vpop.f32.mrf.mxu0
  %4636 = vdwg.mxu0
  %4637 = vmatpush.bf16.msra.mxu0 %v4607
  %4638 = vmatpush.bf16.msra.mxu0 %v4605
  %4639 = vmatpush.bf16.msra.mxu0 %v4603
  %4640 = vmatpush.bf16.msra.mxu0 %v4601
  %4641 = vmatpush.bf16.msra.mxu0 %v4599
  %4642 = vmatpush.bf16.msra.mxu0 %v4597
  %4643 = vmatpush.bf16.msra.mxu0 %v4595
  %4644 = vmatpush.bf16.msra.mxu0 %v4593
  %4645 = vmatmul.bf16.gmra.mxu0 %v4521
  %v4646 = vpop.f32.mrf.mxu0
  %v4647 = vadd.f32 %v4541, %v4646
  %v4648 = vpop.f32.mrf.mxu0
  %4649 = vdwg.mxu0
  %v4650 = vmax.f32 %v4422, %v4435
  %4651 = vmax.xlane.f32.xlu0 %v4650
  %v4652 = vpop.xlane.xlu0 %4651
  %v4653 = vsub.f32 %v4422, %v4652
  %v4654 = vsub.f32 %v4435, %v4652
  %v4655 = vmax.f32 %v4634, %v4647
  %4656 = vmax.xlane.f32.xlu0 %v4655
  %v4657 = vpop.xlane.xlu0 %4656
  %v4658 = vsub.f32 %v4634, %v4657
  %v4659 = vsub.f32 %v4647, %v4657
  %v4660 = vmin.f32 %v4658, %v4659
  %4661 = vmin.xlane.f32.xlu0 %v4660
  %v4662 = vpop.xlane.xlu0 %4661
  %vm4663 = vcmp.gt.f32.partialorder %v4221, 0.0
  %vm4664 = vcmp.gt.f32.partialorder %v4222, 0.0
  %v4665 = vsel %vm4663, 1, 0
  %v4666 = vsel %vm4664, 1, 0
  %vm4667 = vcmp.eq.s32.totalorder %v4665, 1
  %vm4668 = vcmp.eq.s32.totalorder %v4666, 1
  %v4669 = vsel %vm4667, %v4662, %v4658
  %v4670 = vsel %vm4668, %v4662, %v4659
  %v4671 = vmul.f32 %v4653, 1.442695
  %v4672 = vpow.pop %v4671
  %v4673 = vmul.f32 %v4654, 1.442695
  %v4674 = vpow.pop %v4673
  %v4675 = vadd.f32 %v4672, %v4674
  %4676 = vadd.xlane.f32.xlu0 %v4675
  %v4677 = vpop.xlane.xlu0 %4676
  %v4678 = vrcp.pop %v4677
  %v4679 = vmul.f32 %v4677, %v4678
  %v4680 = vsub.f32 1.0, %v4679
  %v4681 = vmul.f32 %v4678, %v4680
  %v4682 = vadd.f32 %v4678, %v4681
  %vm4683 = vweird.f32 %v4677
  %vm4684 = vweird.f32 %v4678
  %vm4685 = vmor %vm4683, %vm4684
  %v4686 = vsel %vm4685, %v4678, %v4682
  %v4687 = vand.u32 2147483647, %v4677
  %vm4688 = vcmp.eq.f32.partialorder %v4687, 8.507059e+37
  %v4689 = vand.u32 %v4677, 2147483648
  %v4690 = vor.u32 1.1754944e-38, %v4689
  %v4691 = vsel %vm4688, %v4690, %v4686
  %v4692 = vmul.f32 %v4672, %v4691
  %v4693 = vmul.f32 %v4674, %v4691
  %v4694 = vmul.f32 %v4669, 1.442695
  %v4695 = vpow.pop %v4694
  %v4696 = vmul.f32 %v4670, 1.442695
  %v4697 = vpow.pop %v4696
  %v4698 = vadd.f32 %v4695, %v4697
  %4699 = vadd.xlane.f32.xlu0 %v4698
  %v4700 = vpop.xlane.xlu0 %4699
  %v4701 = vlog2.pop %v4700
  %v4702 = vmul.f32 %v4701, 0.6931472
  %v4703 = vsub.f32 %v4669, %v4702
  %v4704 = vsub.f32 %v4670, %v4702
  %v4705 = vmax.f32 %v4692, %v4693
  %4706 = vmax.xlane.f32.xlu0 %v4705
  %v4707 = vpop.xlane.xlu0 %4706
  %vm4708 = vcmp.eq.f32.partialorder %v4692, %v4707
  %vm4709 = vcmp.eq.f32.partialorder %v4693, %v4707
  %v4710 = vsel %vm4708, %v1658, 256
  %v4711 = vsel %vm4709, %v1659, 256
  %vm4712 = vcmp.lt.s32.totalorder %v4710, %v4711
  %v4713 = vsel %vm4712, %v4710, %v4711
  %v4714 = vand.u32 %v4713, 65535
  %v4715 = vshra.s32 %v4713, 16
  %v4716 = vcvt.s32.f32 %v4714
  %v4717 = vcvt.s32.f32 %v4715
  %4718 = vmin.xlane.f32.xlu0 %v4717
  %v4719 = vpop.xlane.xlu0 %4718
  %vm4720 = vcmp.eq.f32.partialorder %v4717, %v4719
  %v4721 = vsel %vm4720, %v4716, inf
  %4722 = vmin.xlane.f32.xlu0 %v4721
  %v4723 = vpop.xlane.xlu0 %4722
  %v4724 = vcvt.f32.s32 %v4723
  %v4725 = vcvt.f32.s32 %v4719
  %v4726 = vshll.u32 %v4725, 16
  %v4727 = vadd.s32 %v4726, %v4724
  %vm4728 = vcmp.eq.s32.totalorder %v1658, %v4727
  %vm4729 = vcmp.eq.s32.totalorder %v1659, %v4727
  %v4730 = vsel %vm4728, 1, 0
  %v4731 = vsel %vm4729, 1, 0
  %v4732 = vcvt.s32.f32 %v4730
  %v4733 = vcvt.s32.f32 %v4731
  %v4734 = vpack.c.bf16 %v4732, %v4732
  %v4735 = vpack.c.bf16 %v4733, %v4733
  %v4736 = vld [vmem:[%s43] sm:$0xf]
  %v4737 = vld [vmem:[%s43 + $0x4] sm:$0xf]
  %v4738 = vld [vmem:[%s43 + $0x8] sm:$0xf]
  %v4739 = vld [vmem:[%s43 + $0xc] sm:$0xf]
  %v4740 = vld [vmem:[%s43 + $0x10] sm:$0xf]
  %v4741 = vld [vmem:[%s43 + $0x14] sm:$0xf]
  %v4742 = vld [vmem:[%s43 + $0x18] sm:$0xf]
  %v4743 = vld [vmem:[%s43 + $0x1c] sm:$0xf]
  %v4744 = vld [vmem:[%s43 + $0x20] sm:$0xf]
  %v4745 = vld [vmem:[%s43 + $0x24] sm:$0xf]
  %v4746 = vld [vmem:[%s43 + $0x28] sm:$0xf]
  %v4747 = vld [vmem:[%s43 + $0x2c] sm:$0xf]
  %v4748 = vld [vmem:[%s43 + $0x30] sm:$0xf]
  %v4749 = vld [vmem:[%s43 + $0x34] sm:$0xf]
  %v4750 = vld [vmem:[%s43 + $0x38] sm:$0xf]
  %v4751 = vld [vmem:[%s43 + $0x3c] sm:$0xf]
  %v4752 = vld [vmem:[%s43 + $0x40] sm:$0xf]
  %v4753 = vld [vmem:[%s43 + $0x44] sm:$0xf]
  %v4754 = vld [vmem:[%s43 + $0x48] sm:$0xf]
  %v4755 = vld [vmem:[%s43 + $0x4c] sm:$0xf]
  %v4756 = vld [vmem:[%s43 + $0x50] sm:$0xf]
  %v4757 = vld [vmem:[%s43 + $0x54] sm:$0xf]
  %v4758 = vld [vmem:[%s43 + $0x58] sm:$0xf]
  %v4759 = vld [vmem:[%s43 + $0x5c] sm:$0xf]
  %v4760 = vld [vmem:[%s43 + $0x60] sm:$0xf]
  %v4761 = vld [vmem:[%s43 + $0x64] sm:$0xf]
  %v4762 = vld [vmem:[%s43 + $0x68] sm:$0xf]
  %v4763 = vld [vmem:[%s43 + $0x6c] sm:$0xf]
  %v4764 = vld [vmem:[%s43 + $0x70] sm:$0xf]
  %v4765 = vld [vmem:[%s43 + $0x74] sm:$0xf]
  %v4766 = vld [vmem:[%s43 + $0x78] sm:$0xf]
  %v4767 = vld [vmem:[%s43 + $0x7c] sm:$0xf]
  %v4800 = vunpack.c.l.b16 %v4736
  %v4801 = vunpack.c.l.b16 %v4737
  %v4802 = vunpack.c.l.b16 %v4738
  %v4803 = vunpack.c.l.b16 %v4739
  %v4804 = vunpack.c.l.b16 %v4740
  %v4805 = vunpack.c.l.b16 %v4741
  %v4806 = vunpack.c.l.b16 %v4742
  %v4807 = vunpack.c.l.b16 %v4743
  %v4808 = vunpack.c.l.b16 %v4744
  %v4809 = vunpack.c.l.b16 %v4745
  %v4810 = vunpack.c.l.b16 %v4746
  %v4811 = vunpack.c.l.b16 %v4747
  %v4812 = vunpack.c.l.b16 %v4748
  %v4813 = vunpack.c.l.b16 %v4749
  %v4814 = vunpack.c.l.b16 %v4750
  %v4815 = vunpack.c.l.b16 %v4751
  %v4816 = vunpack.c.l.b16 %v4752
  %v4817 = vunpack.c.l.b16 %v4753
  %v4818 = vunpack.c.l.b16 %v4754
  %v4819 = vunpack.c.l.b16 %v4755
  %v4820 = vunpack.c.l.b16 %v4756
  %v4821 = vunpack.c.l.b16 %v4757
  %v4822 = vunpack.c.l.b16 %v4758
  %v4823 = vunpack.c.l.b16 %v4759
  %v4824 = vunpack.c.l.b16 %v4760
  %v4825 = vunpack.c.l.b16 %v4761
  %v4826 = vunpack.c.l.b16 %v4762
  %v4827 = vunpack.c.l.b16 %v4763
  %v4828 = vunpack.c.l.b16 %v4764
  %v4829 = vunpack.c.l.b16 %v4765
  %v4830 = vunpack.c.l.b16 %v4766
  %v4831 = vunpack.c.l.b16 %v4767
  %v4832 = vpack.c.b16 %v4801, %v4800
  %v4833 = vpack.c.b16 %v4803, %v4802
  %v4834 = vpack.c.b16 %v4805, %v4804
  %v4835 = vpack.c.b16 %v4807, %v4806
  %v4836 = vpack.c.b16 %v4809, %v4808
  %v4837 = vpack.c.b16 %v4811, %v4810
  %v4838 = vpack.c.b16 %v4813, %v4812
  %v4839 = vpack.c.b16 %v4815, %v4814
  %v4840 = vpack.c.b16 %v4817, %v4816
  %v4841 = vpack.c.b16 %v4819, %v4818
  %v4842 = vpack.c.b16 %v4821, %v4820
  %v4843 = vpack.c.b16 %v4823, %v4822
  %v4844 = vpack.c.b16 %v4825, %v4824
  %v4845 = vpack.c.b16 %v4827, %v4826
  %v4846 = vpack.c.b16 %v4829, %v4828
  %v4847 = vpack.c.b16 %v4831, %v4830
  %4864 = vmatpush.bf16.msra.mxu0 %v4839
  %4865 = vmatpush.bf16.msra.mxu0 %v4838
  %4866 = vmatpush.bf16.msra.mxu0 %v4837
  %4867 = vmatpush.bf16.msra.mxu0 %v4836
  %4868 = vmatpush.bf16.msra.mxu0 %v4835
  %4869 = vmatpush.bf16.msra.mxu0 %v4834
  %4870 = vmatpush.bf16.msra.mxu0 %v4833
  %4871 = vmatpush.bf16.msra.mxu0 %v4832
  %4872 = vmatmul.bf16.gmra.mxu0 %v4734
  %v4873 = vpop.f32.mrf.mxu0
  %v4874 = vadd.f32 0.0, %v4873
  %v4875 = vpop.f32.mrf.mxu0
  %4876 = vdwg.mxu0
  %4877 = vmatpush.bf16.msra.mxu0 %v4847
  %4878 = vmatpush.bf16.msra.mxu0 %v4846
  %4879 = vmatpush.bf16.msra.mxu0 %v4845
  %4880 = vmatpush.bf16.msra.mxu0 %v4844
  %4881 = vmatpush.bf16.msra.mxu0 %v4843
  %4882 = vmatpush.bf16.msra.mxu0 %v4842
  %4883 = vmatpush.bf16.msra.mxu0 %v4841
  %4884 = vmatpush.bf16.msra.mxu0 %v4840
  %4885 = vmatmul.bf16.gmra.mxu0 %v4735
  %v4886 = vpop.f32.mrf.mxu0
  %v4887 = vadd.f32 %v4874, %v4886
  %v4888 = vpop.f32.mrf.mxu0
  %4889 = vdwg.mxu0
  %s4890 = scalar_lea.vmem %s69, 64
  %4891 = vst [vmem:[%s4890] sm:$0xff] %v4692
  %4892 = vst [vmem:[%s4890 + $0x8] sm:$0xff] %v4693
  %s4893 = scalar_lea.vmem %s71, 64
  %4894 = vst [vmem:[%s4893] sm:$0xff] %v4703
  %4895 = vst [vmem:[%s4893 + $0x8] sm:$0xff] %v4704
  %vm4896 = vcmp.eq.s32.totalorder %v4727, 220
  %v4897 = vsel %vm4896, 1, 0
  %vm4898 = vcmp.eq.s32.totalorder %v4897, 1
  %v4899 = vsel %vm4898, %v2118, %v4887
  %v4900 = vadd.f32 %v4205, %v4887
  %v4901 = vadd.f32 %v4206, %v4887
  %v4902 = vmul.f32 %v4732, %v1664
  %v4903 = vmul.f32 %v4733, %v1664
  %v4904 = vrot.slane %v4902, 4
  %v4905 = vmax.f32 %v4902, %v4904
  %v4906 = vrot.slane %v4905, 2
  %v4907 = vmax.f32 %v4905, %v4906
  %v4908 = vrot.slane %v4907, 1
  %v4909 = vmax.f32 %v4907, %v4908
  %v4910 = vrot.slane %v4903, 4
  %v4911 = vmax.f32 %v4903, %v4910
  %v4912 = vrot.slane %v4911, 2
  %v4913 = vmax.f32 %v4911, %v4912
  %v4914 = vrot.slane %v4913, 1
  %v4915 = vmax.f32 %v4913, %v4914
  %v4916 = vmax.f32 %v4221, %v4909
  %v4917 = vmax.f32 %v4222, %v4915
  %v4918 = vadd.f32 %v4223, %v4899
  %v4919 = vmul.f32 %v4900, 0.11111111
  %v4920 = vmul.f32 %v4901, 0.2
  %v4921 = vpack.c.bf16 %v4919, %v4919
  %v4922 = vld [vmem:[%s27] sm:$0xf]
  %v4923 = vld [vmem:[%s27 + $0x4] sm:$0xf]
  %v4924 = vld [vmem:[%s27 + $0x8] sm:$0xf]
  %v4925 = vld [vmem:[%s27 + $0xc] sm:$0xf]
  %v4926 = vld [vmem:[%s27 + $0x10] sm:$0xf]
  %v4927 = vld [vmem:[%s27 + $0x14] sm:$0xf]
  %v4928 = vld [vmem:[%s27 + $0x18] sm:$0xf]
  %v4929 = vld [vmem:[%s27 + $0x1c] sm:$0xf]
  %v4930 = vld [vmem:[%s27 + $0x20] sm:$0xf]
  %v4931 = vld [vmem:[%s27 + $0x24] sm:$0xf]
  %v4932 = vld [vmem:[%s27 + $0x28] sm:$0xf]
  %v4933 = vld [vmem:[%s27 + $0x2c] sm:$0xf]
  %v4934 = vld [vmem:[%s27 + $0x30] sm:$0xf]
  %v4935 = vld [vmem:[%s27 + $0x34] sm:$0xf]
  %v4936 = vld [vmem:[%s27 + $0x38] sm:$0xf]
  %v4937 = vld [vmem:[%s27 + $0x3c] sm:$0xf]
  %v4938 = vld [vmem:[%s29] sm:$0x1]
  %v4940 = vperm.slane %v4938, 0
  %v4958 = vunpack.c.l.b16 %v4922
  %v4959 = vunpack.c.l.b16 %v4923
  %v4960 = vunpack.c.l.b16 %v4924
  %v4961 = vunpack.c.l.b16 %v4925
  %v4962 = vunpack.c.l.b16 %v4926
  %v4963 = vunpack.c.l.b16 %v4927
  %v4964 = vunpack.c.l.b16 %v4928
  %v4965 = vunpack.c.l.b16 %v4929
  %v4966 = vunpack.c.l.b16 %v4930
  %v4967 = vunpack.c.l.b16 %v4931
  %v4968 = vunpack.c.l.b16 %v4932
  %v4969 = vunpack.c.l.b16 %v4933
  %v4970 = vunpack.c.l.b16 %v4934
  %v4971 = vunpack.c.l.b16 %v4935
  %v4972 = vunpack.c.l.b16 %v4936
  %v4973 = vunpack.c.l.b16 %v4937
  %v4974 = vpack.c.b16 %v4959, %v4958
  %v4975 = vpack.c.b16 %v4961, %v4960
  %v4976 = vpack.c.b16 %v4963, %v4962
  %v4977 = vpack.c.b16 %v4965, %v4964
  %v4978 = vpack.c.b16 %v4967, %v4966
  %v4979 = vpack.c.b16 %v4969, %v4968
  %v4980 = vpack.c.b16 %v4971, %v4970
  %v4981 = vpack.c.b16 %v4973, %v4972
  %4990 = vmatpush.bf16.msra.mxu0 %v4981
  %4991 = vmatpush.bf16.msra.mxu0 %v4980
  %4992 = vmatpush.bf16.msra.mxu0 %v4979
  %4993 = vmatpush.bf16.msra.mxu0 %v4978
  %4994 = vmatpush.bf16.msra.mxu0 %v4977
  %4995 = vmatpush.bf16.msra.mxu0 %v4976
  %4996 = vmatpush.bf16.msra.mxu0 %v4975
  %4997 = vmatpush.bf16.msra.mxu0 %v4974
  %4998 = vmatmul.bf16.gmra.mxu0 %v4921
  %v4999 = vpop.f32.mrf.mxu0
  %v5000 = vadd.f32 %v4940, %v4999
  %v5001 = vpop.f32.mrf.mxu0
  %5002 = vdwg.mxu0
  %v5003 = vtanh.pop %v5000
  %v5004 = vpack.c.bf16 %v5003, %v5003
  %v5005 = vld [vmem:[%s31] sm:$0xff]
  %v5006 = vld [vmem:[%s31 + $0x8] sm:$0xff]
  %v5007 = vld [vmem:[%s31 + $0x10] sm:$0xff]
  %v5008 = vld [vmem:[%s31 + $0x18] sm:$0xff]
  %v5009 = vld [vmem:[%s31 + $0x20] sm:$0xff]
  %v5010 = vld [vmem:[%s31 + $0x28] sm:$0xff]
  %v5011 = vld [vmem:[%s31 + $0x30] sm:$0xff]
  %v5012 = vld [vmem:[%s31 + $0x38] sm:$0xff]
  %v5013 = vld [vmem:[%s31 + $0x40] sm:$0xff]
  %v5014 = vld [vmem:[%s31 + $0x48] sm:$0xff]
  %v5015 = vld [vmem:[%s31 + $0x50] sm:$0xff]
  %v5016 = vld [vmem:[%s31 + $0x58] sm:$0xff]
  %v5017 = vld [vmem:[%s31 + $0x60] sm:$0xff]
  %v5018 = vld [vmem:[%s31 + $0x68] sm:$0xff]
  %v5019 = vld [vmem:[%s31 + $0x70] sm:$0xff]
  %v5020 = vld [vmem:[%s31 + $0x78] sm:$0xff]
  %v5021 = vld [vmem:[%s33] sm:$0x3]
  %v5023 = vperm.slane %v5021, 0
  %v5024 = vperm.slane %v5021, 1
  %v5043 = vunpack.c.l.b16 %v5005
  %v5044 = vunpack.c.h.b16 %v5005
  %v5045 = vunpack.c.l.b16 %v5006
  %v5046 = vunpack.c.h.b16 %v5006
  %v5047 = vunpack.c.l.b16 %v5007
  %v5048 = vunpack.c.h.b16 %v5007
  %v5049 = vunpack.c.l.b16 %v5008
  %v5050 = vunpack.c.h.b16 %v5008
  %v5051 = vunpack.c.l.b16 %v5009
  %v5052 = vunpack.c.h.b16 %v5009
  %v5053 = vunpack.c.l.b16 %v5010
  %v5054 = vunpack.c.h.b16 %v5010
  %v5055 = vunpack.c.l.b16 %v5011
  %v5056 = vunpack.c.h.b16 %v5011
  %v5057 = vunpack.c.l.b16 %v5012
  %v5058 = vunpack.c.h.b16 %v5012
  %v5059 = vunpack.c.l.b16 %v5013
  %v5060 = vunpack.c.h.b16 %v5013
  %v5061 = vunpack.c.l.b16 %v5014
  %v5062 = vunpack.c.h.b16 %v5014
  %v5063 = vunpack.c.l.b16 %v5015
  %v5064 = vunpack.c.h.b16 %v5015
  %v5065 = vunpack.c.l.b16 %v5016
  %v5066 = vunpack.c.h.b16 %v5016
  %v5067 = vunpack.c.l.b16 %v5017
  %v5068 = vunpack.c.h.b16 %v5017
  %v5069 = vunpack.c.l.b16 %v5018
  %v5070 = vunpack.c.h.b16 %v5018
  %v5071 = vunpack.c.l.b16 %v5019
  %v5072 = vunpack.c.h.b16 %v5019
  %v5073 = vunpack.c.l.b16 %v5020
  %v5074 = vunpack.c.h.b16 %v5020
  %v5075 = vpack.c.b16 %v5045, %v5043
  %v5076 = vpack.c.b16 %v5046, %v5044
  %v5077 = vpack.c.b16 %v5049, %v5047
  %v5078 = vpack.c.b16 %v5050, %v5048
  %v5079 = vpack.c.b16 %v5053, %v5051
  %v5080 = vpack.c.b16 %v5054, %v5052
  %v5081 = vpack.c.b16 %v5057, %v5055
  %v5082 = vpack.c.b16 %v5058, %v5056
  %v5083 = vpack.c.b16 %v5061, %v5059
  %v5084 = vpack.c.b16 %v5062, %v5060
  %v5085 = vpack.c.b16 %v5065, %v5063
  %v5086 = vpack.c.b16 %v5066, %v5064
  %v5087 = vpack.c.b16 %v5069, %v5067
  %v5088 = vpack.c.b16 %v5070, %v5068
  %v5089 = vpack.c.b16 %v5073, %v5071
  %v5090 = vpack.c.b16 %v5074, %v5072
  %5107 = vmatpush.bf16.msra.mxu0 %v5089
  %5108 = vmatpush.bf16.msra.mxu0 %v5087
  %5109 = vmatpush.bf16.msra.mxu0 %v5085
  %5110 = vmatpush.bf16.msra.mxu0 %v5083
  %5111 = vmatpush.bf16.msra.mxu0 %v5081
  %5112 = vmatpush.bf16.msra.mxu0 %v5079
  %5113 = vmatpush.bf16.msra.mxu0 %v5077
  %5114 = vmatpush.bf16.msra.mxu0 %v5075
  %5115 = vmatmul.bf16.gmra.mxu0 %v5004
  %v5116 = vpop.f32.mrf.mxu0
  %v5117 = vadd.f32 %v5023, %v5116
  %v5118 = vpop.f32.mrf.mxu0
  %5119 = vdwg.mxu0
  %5120 = vmatpush.bf16.msra.mxu0 %v5090
  %5121 = vmatpush.bf16.msra.mxu0 %v5088
  %5122 = vmatpush.bf16.msra.mxu0 %v5086
  %5123 = vmatpush.bf16.msra.mxu0 %v5084
  %5124 = vmatpush.bf16.msra.mxu0 %v5082
  %5125 = vmatpush.bf16.msra.mxu0 %v5080
  %5126 = vmatpush.bf16.msra.mxu0 %v5078
  %5127 = vmatpush.bf16.msra.mxu0 %v5076
  %5128 = vmatmul.bf16.gmra.mxu0 %v5004
  %v5129 = vpop.f32.mrf.mxu0
  %v5130 = vadd.f32 %v5024, %v5129
  %v5131 = vpop.f32.mrf.mxu0
  %5132 = vdwg.mxu0
  %v5133 = vpack.c.bf16 %v4920, %v4920
  %v5134 = vld [vmem:[%s35] sm:$0xf]
  %v5135 = vld [vmem:[%s35 + $0x4] sm:$0xf]
  %v5136 = vld [vmem:[%s35 + $0x8] sm:$0xf]
  %v5137 = vld [vmem:[%s35 + $0xc] sm:$0xf]
  %v5138 = vld [vmem:[%s35 + $0x10] sm:$0xf]
  %v5139 = vld [vmem:[%s35 + $0x14] sm:$0xf]
  %v5140 = vld [vmem:[%s35 + $0x18] sm:$0xf]
  %v5141 = vld [vmem:[%s35 + $0x1c] sm:$0xf]
  %v5142 = vld [vmem:[%s35 + $0x20] sm:$0xf]
  %v5143 = vld [vmem:[%s35 + $0x24] sm:$0xf]
  %v5144 = vld [vmem:[%s35 + $0x28] sm:$0xf]
  %v5145 = vld [vmem:[%s35 + $0x2c] sm:$0xf]
  %v5146 = vld [vmem:[%s35 + $0x30] sm:$0xf]
  %v5147 = vld [vmem:[%s35 + $0x34] sm:$0xf]
  %v5148 = vld [vmem:[%s35 + $0x38] sm:$0xf]
  %v5149 = vld [vmem:[%s35 + $0x3c] sm:$0xf]
  %v5150 = vld [vmem:[%s37] sm:$0x1]
  %v5152 = vperm.slane %v5150, 0
  %v5170 = vunpack.c.l.b16 %v5134
  %v5171 = vunpack.c.l.b16 %v5135
  %v5172 = vunpack.c.l.b16 %v5136
  %v5173 = vunpack.c.l.b16 %v5137
  %v5174 = vunpack.c.l.b16 %v5138
  %v5175 = vunpack.c.l.b16 %v5139
  %v5176 = vunpack.c.l.b16 %v5140
  %v5177 = vunpack.c.l.b16 %v5141
  %v5178 = vunpack.c.l.b16 %v5142
  %v5179 = vunpack.c.l.b16 %v5143
  %v5180 = vunpack.c.l.b16 %v5144
  %v5181 = vunpack.c.l.b16 %v5145
  %v5182 = vunpack.c.l.b16 %v5146
  %v5183 = vunpack.c.l.b16 %v5147
  %v5184 = vunpack.c.l.b16 %v5148
  %v5185 = vunpack.c.l.b16 %v5149
  %v5186 = vpack.c.b16 %v5171, %v5170
  %v5187 = vpack.c.b16 %v5173, %v5172
  %v5188 = vpack.c.b16 %v5175, %v5174
  %v5189 = vpack.c.b16 %v5177, %v5176
  %v5190 = vpack.c.b16 %v5179, %v5178
  %v5191 = vpack.c.b16 %v5181, %v5180
  %v5192 = vpack.c.b16 %v5183, %v5182
  %v5193 = vpack.c.b16 %v5185, %v5184
  %5202 = vmatpush.bf16.msra.mxu0 %v5193
  %5203 = vmatpush.bf16.msra.mxu0 %v5192
  %5204 = vmatpush.bf16.msra.mxu0 %v5191
  %5205 = vmatpush.bf16.msra.mxu0 %v5190
  %5206 = vmatpush.bf16.msra.mxu0 %v5189
  %5207 = vmatpush.bf16.msra.mxu0 %v5188
  %5208 = vmatpush.bf16.msra.mxu0 %v5187
  %5209 = vmatpush.bf16.msra.mxu0 %v5186
  %5210 = vmatmul.bf16.gmra.mxu0 %v5133
  %v5211 = vpop.f32.mrf.mxu0
  %v5212 = vadd.f32 %v5152, %v5211
  %v5213 = vpop.f32.mrf.mxu0
  %5214 = vdwg.mxu0
  %v5215 = vtanh.pop %v5212
  %v5216 = vpack.c.bf16 %v5215, %v5215
  %v5217 = vld [vmem:[%s39] sm:$0xff]
  %v5218 = vld [vmem:[%s39 + $0x8] sm:$0xff]
  %v5219 = vld [vmem:[%s39 + $0x10] sm:$0xff]
  %v5220 = vld [vmem:[%s39 + $0x18] sm:$0xff]
  %v5221 = vld [vmem:[%s39 + $0x20] sm:$0xff]
  %v5222 = vld [vmem:[%s39 + $0x28] sm:$0xff]
  %v5223 = vld [vmem:[%s39 + $0x30] sm:$0xff]
  %v5224 = vld [vmem:[%s39 + $0x38] sm:$0xff]
  %v5225 = vld [vmem:[%s39 + $0x40] sm:$0xff]
  %v5226 = vld [vmem:[%s39 + $0x48] sm:$0xff]
  %v5227 = vld [vmem:[%s39 + $0x50] sm:$0xff]
  %v5228 = vld [vmem:[%s39 + $0x58] sm:$0xff]
  %v5229 = vld [vmem:[%s39 + $0x60] sm:$0xff]
  %v5230 = vld [vmem:[%s39 + $0x68] sm:$0xff]
  %v5231 = vld [vmem:[%s39 + $0x70] sm:$0xff]
  %v5232 = vld [vmem:[%s39 + $0x78] sm:$0xff]
  %v5233 = vld [vmem:[%s41] sm:$0x3]
  %v5235 = vperm.slane %v5233, 0
  %v5236 = vperm.slane %v5233, 1
  %v5255 = vunpack.c.l.b16 %v5217
  %v5256 = vunpack.c.h.b16 %v5217
  %v5257 = vunpack.c.l.b16 %v5218
  %v5258 = vunpack.c.h.b16 %v5218
  %v5259 = vunpack.c.l.b16 %v5219
  %v5260 = vunpack.c.h.b16 %v5219
  %v5261 = vunpack.c.l.b16 %v5220
  %v5262 = vunpack.c.h.b16 %v5220
  %v5263 = vunpack.c.l.b16 %v5221
  %v5264 = vunpack.c.h.b16 %v5221
  %v5265 = vunpack.c.l.b16 %v5222
  %v5266 = vunpack.c.h.b16 %v5222
  %v5267 = vunpack.c.l.b16 %v5223
  %v5268 = vunpack.c.h.b16 %v5223
  %v5269 = vunpack.c.l.b16 %v5224
  %v5270 = vunpack.c.h.b16 %v5224
  %v5271 = vunpack.c.l.b16 %v5225
  %v5272 = vunpack.c.h.b16 %v5225
  %v5273 = vunpack.c.l.b16 %v5226
  %v5274 = vunpack.c.h.b16 %v5226
  %v5275 = vunpack.c.l.b16 %v5227
  %v5276 = vunpack.c.h.b16 %v5227
  %v5277 = vunpack.c.l.b16 %v5228
  %v5278 = vunpack.c.h.b16 %v5228
  %v5279 = vunpack.c.l.b16 %v5229
  %v5280 = vunpack.c.h.b16 %v5229
  %v5281 = vunpack.c.l.b16 %v5230
  %v5282 = vunpack.c.h.b16 %v5230
  %v5283 = vunpack.c.l.b16 %v5231
  %v5284 = vunpack.c.h.b16 %v5231
  %v5285 = vunpack.c.l.b16 %v5232
  %v5286 = vunpack.c.h.b16 %v5232
  %v5287 = vpack.c.b16 %v5257, %v5255
  %v5288 = vpack.c.b16 %v5258, %v5256
  %v5289 = vpack.c.b16 %v5261, %v5259
  %v5290 = vpack.c.b16 %v5262, %v5260
  %v5291 = vpack.c.b16 %v5265, %v5263
  %v5292 = vpack.c.b16 %v5266, %v5264
  %v5293 = vpack.c.b16 %v5269, %v5267
  %v5294 = vpack.c.b16 %v5270, %v5268
  %v5295 = vpack.c.b16 %v5273, %v5271
  %v5296 = vpack.c.b16 %v5274, %v5272
  %v5297 = vpack.c.b16 %v5277, %v5275
  %v5298 = vpack.c.b16 %v5278, %v5276
  %v5299 = vpack.c.b16 %v5281, %v5279
  %v5300 = vpack.c.b16 %v5282, %v5280
  %v5301 = vpack.c.b16 %v5285, %v5283
  %v5302 = vpack.c.b16 %v5286, %v5284
  %5319 = vmatpush.bf16.msra.mxu0 %v5301
  %5320 = vmatpush.bf16.msra.mxu0 %v5299
  %5321 = vmatpush.bf16.msra.mxu0 %v5297
  %5322 = vmatpush.bf16.msra.mxu0 %v5295
  %5323 = vmatpush.bf16.msra.mxu0 %v5293
  %5324 = vmatpush.bf16.msra.mxu0 %v5291
  %5325 = vmatpush.bf16.msra.mxu0 %v5289
  %5326 = vmatpush.bf16.msra.mxu0 %v5287
  %5327 = vmatmul.bf16.gmra.mxu0 %v5216
  %v5328 = vpop.f32.mrf.mxu0
  %v5329 = vadd.f32 %v5235, %v5328
  %v5330 = vpop.f32.mrf.mxu0
  %5331 = vdwg.mxu0
  %5332 = vmatpush.bf16.msra.mxu0 %v5302
  %5333 = vmatpush.bf16.msra.mxu0 %v5300
  %5334 = vmatpush.bf16.msra.mxu0 %v5298
  %5335 = vmatpush.bf16.msra.mxu0 %v5296
  %5336 = vmatpush.bf16.msra.mxu0 %v5294
  %5337 = vmatpush.bf16.msra.mxu0 %v5292
  %5338 = vmatpush.bf16.msra.mxu0 %v5290
  %5339 = vmatpush.bf16.msra.mxu0 %v5288
  %5340 = vmatmul.bf16.gmra.mxu0 %v5216
  %v5341 = vpop.f32.mrf.mxu0
  %v5342 = vadd.f32 %v5236, %v5341
  %v5343 = vpop.f32.mrf.mxu0
  %5344 = vdwg.mxu0
  %v5345 = vmax.f32 %v5117, %v5130
  %5346 = vmax.xlane.f32.xlu0 %v5345
  %v5347 = vpop.xlane.xlu0 %5346
  %v5348 = vsub.f32 %v5117, %v5347
  %v5349 = vsub.f32 %v5130, %v5347
  %v5350 = vmax.f32 %v5329, %v5342
  %5351 = vmax.xlane.f32.xlu0 %v5350
  %v5352 = vpop.xlane.xlu0 %5351
  %v5353 = vsub.f32 %v5329, %v5352
  %v5354 = vsub.f32 %v5342, %v5352
  %v5355 = vmin.f32 %v5353, %v5354
  %5356 = vmin.xlane.f32.xlu0 %v5355
  %v5357 = vpop.xlane.xlu0 %5356
  %vm5358 = vcmp.gt.f32.partialorder %v4916, 0.0
  %vm5359 = vcmp.gt.f32.partialorder %v4917, 0.0
  %v5360 = vsel %vm5358, 1, 0
  %v5361 = vsel %vm5359, 1, 0
  %vm5362 = vcmp.eq.s32.totalorder %v5360, 1
  %vm5363 = vcmp.eq.s32.totalorder %v5361, 1
  %v5364 = vsel %vm5362, %v5357, %v5353
  %v5365 = vsel %vm5363, %v5357, %v5354
  %v5366 = vmul.f32 %v5348, 1.442695
  %v5367 = vpow.pop %v5366
  %v5368 = vmul.f32 %v5349, 1.442695
  %v5369 = vpow.pop %v5368
  %v5370 = vadd.f32 %v5367, %v5369
  %5371 = vadd.xlane.f32.xlu0 %v5370
  %v5372 = vpop.xlane.xlu0 %5371
  %v5373 = vrcp.pop %v5372
  %v5374 = vmul.f32 %v5372, %v5373
  %v5375 = vsub.f32 1.0, %v5374
  %v5376 = vmul.f32 %v5373, %v5375
  %v5377 = vadd.f32 %v5373, %v5376
  %vm5378 = vweird.f32 %v5372
  %vm5379 = vweird.f32 %v5373
  %vm5380 = vmor %vm5378, %vm5379
  %v5381 = vsel %vm5380, %v5373, %v5377
  %v5382 = vand.u32 2147483647, %v5372
  %vm5383 = vcmp.eq.f32.partialorder %v5382, 8.507059e+37
  %v5384 = vand.u32 %v5372, 2147483648
  %v5385 = vor.u32 1.1754944e-38, %v5384
  %v5386 = vsel %vm5383, %v5385, %v5381
  %v5387 = vmul.f32 %v5367, %v5386
  %v5388 = vmul.f32 %v5369, %v5386
  %v5389 = vmul.f32 %v5364, 1.442695
  %v5390 = vpow.pop %v5389
  %v5391 = vmul.f32 %v5365, 1.442695
  %v5392 = vpow.pop %v5391
  %v5393 = vadd.f32 %v5390, %v5392
  %5394 = vadd.xlane.f32.xlu0 %v5393
  %v5395 = vpop.xlane.xlu0 %5394
  %v5396 = vlog2.pop %v5395
  %v5397 = vmul.f32 %v5396, 0.6931472
  %v5398 = vsub.f32 %v5364, %v5397
  %v5399 = vsub.f32 %v5365, %v5397
  %v5400 = vmax.f32 %v5387, %v5388
  %5401 = vmax.xlane.f32.xlu0 %v5400
  %v5402 = vpop.xlane.xlu0 %5401
  %vm5403 = vcmp.eq.f32.partialorder %v5387, %v5402
  %vm5404 = vcmp.eq.f32.partialorder %v5388, %v5402
  %v5405 = vsel %vm5403, %v1658, 256
  %v5406 = vsel %vm5404, %v1659, 256
  %vm5407 = vcmp.lt.s32.totalorder %v5405, %v5406
  %v5408 = vsel %vm5407, %v5405, %v5406
  %v5409 = vand.u32 %v5408, 65535
  %v5410 = vshra.s32 %v5408, 16
  %v5411 = vcvt.s32.f32 %v5409
  %v5412 = vcvt.s32.f32 %v5410
  %5413 = vmin.xlane.f32.xlu0 %v5412
  %v5414 = vpop.xlane.xlu0 %5413
  %vm5415 = vcmp.eq.f32.partialorder %v5412, %v5414
  %v5416 = vsel %vm5415, %v5411, inf
  %5417 = vmin.xlane.f32.xlu0 %v5416
  %v5418 = vpop.xlane.xlu0 %5417
  %v5419 = vcvt.f32.s32 %v5418
  %v5420 = vcvt.f32.s32 %v5414
  %v5421 = vshll.u32 %v5420, 16
  %v5422 = vadd.s32 %v5421, %v5419
  %vm5423 = vcmp.eq.s32.totalorder %v1658, %v5422
  %vm5424 = vcmp.eq.s32.totalorder %v1659, %v5422
  %v5425 = vsel %vm5423, 1, 0
  %v5426 = vsel %vm5424, 1, 0
  %v5427 = vcvt.s32.f32 %v5425
  %v5428 = vcvt.s32.f32 %v5426
  %v5429 = vpack.c.bf16 %v5427, %v5427
  %v5430 = vpack.c.bf16 %v5428, %v5428
  %v5431 = vld [vmem:[%s43] sm:$0xf]
  %v5432 = vld [vmem:[%s43 + $0x4] sm:$0xf]
  %v5433 = vld [vmem:[%s43 + $0x8] sm:$0xf]
  %v5434 = vld [vmem:[%s43 + $0xc] sm:$0xf]
  %v5435 = vld [vmem:[%s43 + $0x10] sm:$0xf]
  %v5436 = vld [vmem:[%s43 + $0x14] sm:$0xf]
  %v5437 = vld [vmem:[%s43 + $0x18] sm:$0xf]
  %v5438 = vld [vmem:[%s43 + $0x1c] sm:$0xf]
  %v5439 = vld [vmem:[%s43 + $0x20] sm:$0xf]
  %v5440 = vld [vmem:[%s43 + $0x24] sm:$0xf]
  %v5441 = vld [vmem:[%s43 + $0x28] sm:$0xf]
  %v5442 = vld [vmem:[%s43 + $0x2c] sm:$0xf]
  %v5443 = vld [vmem:[%s43 + $0x30] sm:$0xf]
  %v5444 = vld [vmem:[%s43 + $0x34] sm:$0xf]
  %v5445 = vld [vmem:[%s43 + $0x38] sm:$0xf]
  %v5446 = vld [vmem:[%s43 + $0x3c] sm:$0xf]
  %v5447 = vld [vmem:[%s43 + $0x40] sm:$0xf]
  %v5448 = vld [vmem:[%s43 + $0x44] sm:$0xf]
  %v5449 = vld [vmem:[%s43 + $0x48] sm:$0xf]
  %v5450 = vld [vmem:[%s43 + $0x4c] sm:$0xf]
  %v5451 = vld [vmem:[%s43 + $0x50] sm:$0xf]
  %v5452 = vld [vmem:[%s43 + $0x54] sm:$0xf]
  %v5453 = vld [vmem:[%s43 + $0x58] sm:$0xf]
  %v5454 = vld [vmem:[%s43 + $0x5c] sm:$0xf]
  %v5455 = vld [vmem:[%s43 + $0x60] sm:$0xf]
  %v5456 = vld [vmem:[%s43 + $0x64] sm:$0xf]
  %v5457 = vld [vmem:[%s43 + $0x68] sm:$0xf]
  %v5458 = vld [vmem:[%s43 + $0x6c] sm:$0xf]
  %v5459 = vld [vmem:[%s43 + $0x70] sm:$0xf]
  %v5460 = vld [vmem:[%s43 + $0x74] sm:$0xf]
  %v5461 = vld [vmem:[%s43 + $0x78] sm:$0xf]
  %v5462 = vld [vmem:[%s43 + $0x7c] sm:$0xf]
  %v5495 = vunpack.c.l.b16 %v5431
  %v5496 = vunpack.c.l.b16 %v5432
  %v5497 = vunpack.c.l.b16 %v5433
  %v5498 = vunpack.c.l.b16 %v5434
  %v5499 = vunpack.c.l.b16 %v5435
  %v5500 = vunpack.c.l.b16 %v5436
  %v5501 = vunpack.c.l.b16 %v5437
  %v5502 = vunpack.c.l.b16 %v5438
  %v5503 = vunpack.c.l.b16 %v5439
  %v5504 = vunpack.c.l.b16 %v5440
  %v5505 = vunpack.c.l.b16 %v5441
  %v5506 = vunpack.c.l.b16 %v5442
  %v5507 = vunpack.c.l.b16 %v5443
  %v5508 = vunpack.c.l.b16 %v5444
  %v5509 = vunpack.c.l.b16 %v5445
  %v5510 = vunpack.c.l.b16 %v5446
  %v5511 = vunpack.c.l.b16 %v5447
  %v5512 = vunpack.c.l.b16 %v5448
  %v5513 = vunpack.c.l.b16 %v5449
  %v5514 = vunpack.c.l.b16 %v5450
  %v5515 = vunpack.c.l.b16 %v5451
  %v5516 = vunpack.c.l.b16 %v5452
  %v5517 = vunpack.c.l.b16 %v5453
  %v5518 = vunpack.c.l.b16 %v5454
  %v5519 = vunpack.c.l.b16 %v5455
  %v5520 = vunpack.c.l.b16 %v5456
  %v5521 = vunpack.c.l.b16 %v5457
  %v5522 = vunpack.c.l.b16 %v5458
  %v5523 = vunpack.c.l.b16 %v5459
  %v5524 = vunpack.c.l.b16 %v5460
  %v5525 = vunpack.c.l.b16 %v5461
  %v5526 = vunpack.c.l.b16 %v5462
  %v5527 = vpack.c.b16 %v5496, %v5495
  %v5528 = vpack.c.b16 %v5498, %v5497
  %v5529 = vpack.c.b16 %v5500, %v5499
  %v5530 = vpack.c.b16 %v5502, %v5501
  %v5531 = vpack.c.b16 %v5504, %v5503
  %v5532 = vpack.c.b16 %v5506, %v5505
  %v5533 = vpack.c.b16 %v5508, %v5507
  %v5534 = vpack.c.b16 %v5510, %v5509
  %v5535 = vpack.c.b16 %v5512, %v5511
  %v5536 = vpack.c.b16 %v5514, %v5513
  %v5537 = vpack.c.b16 %v5516, %v5515
  %v5538 = vpack.c.b16 %v5518, %v5517
  %v5539 = vpack.c.b16 %v5520, %v5519
  %v5540 = vpack.c.b16 %v5522, %v5521
  %v5541 = vpack.c.b16 %v5524, %v5523
  %v5542 = vpack.c.b16 %v5526, %v5525
  %5559 = vmatpush.bf16.msra.mxu0 %v5534
  %5560 = vmatpush.bf16.msra.mxu0 %v5533
  %5561 = vmatpush.bf16.msra.mxu0 %v5532
  %5562 = vmatpush.bf16.msra.mxu0 %v5531
  %5563 = vmatpush.bf16.msra.mxu0 %v5530
  %5564 = vmatpush.bf16.msra.mxu0 %v5529
  %5565 = vmatpush.bf16.msra.mxu0 %v5528
  %5566 = vmatpush.bf16.msra.mxu0 %v5527
  %5567 = vmatmul.bf16.gmra.mxu0 %v5429
  %v5568 = vpop.f32.mrf.mxu0
  %v5569 = vadd.f32 0.0, %v5568
  %v5570 = vpop.f32.mrf.mxu0
  %5571 = vdwg.mxu0
  %5572 = vmatpush.bf16.msra.mxu0 %v5542
  %5573 = vmatpush.bf16.msra.mxu0 %v5541
  %5574 = vmatpush.bf16.msra.mxu0 %v5540
  %5575 = vmatpush.bf16.msra.mxu0 %v5539
  %5576 = vmatpush.bf16.msra.mxu0 %v5538
  %5577 = vmatpush.bf16.msra.mxu0 %v5537
  %5578 = vmatpush.bf16.msra.mxu0 %v5536
  %5579 = vmatpush.bf16.msra.mxu0 %v5535
  %5580 = vmatmul.bf16.gmra.mxu0 %v5430
  %v5581 = vpop.f32.mrf.mxu0
  %v5582 = vadd.f32 %v5569, %v5581
  %v5583 = vpop.f32.mrf.mxu0
  %5584 = vdwg.mxu0
  %s5585 = scalar_lea.vmem %s69, 80
  %5586 = vst [vmem:[%s5585] sm:$0xff] %v5387
  %5587 = vst [vmem:[%s5585 + $0x8] sm:$0xff] %v5388
  %s5588 = scalar_lea.vmem %s71, 80
  %5589 = vst [vmem:[%s5588] sm:$0xff] %v5398
  %5590 = vst [vmem:[%s5588 + $0x8] sm:$0xff] %v5399
  %vm5591 = vcmp.eq.s32.totalorder %v5422, 220
  %v5592 = vsel %vm5591, 1, 0
  %vm5593 = vcmp.eq.s32.totalorder %v5592, 1
  %v5594 = vsel %vm5593, %v2118, %v5582
  %v5595 = vadd.f32 %v4918, %v5594
  %v5597 = vperm.slane %v1655, 0
  %v5599 = vadd.f32 %v5595, %v5597
  %v5600 = vadd.f32 %v5599, %v2118
  %v5601 = vmul.f32 %v5600, 0.125
  %v5602 = vpack.c.bf16 %v5601, %v5601
  %v5603 = vld [vmem:[%s49] sm:$0xf]
  %v5604 = vld [vmem:[%s49 + $0x4] sm:$0xf]
  %v5605 = vld [vmem:[%s49 + $0x8] sm:$0xf]
  %v5606 = vld [vmem:[%s49 + $0xc] sm:$0xf]
  %v5607 = vld [vmem:[%s49 + $0x10] sm:$0xf]
  %v5608 = vld [vmem:[%s49 + $0x14] sm:$0xf]
  %v5609 = vld [vmem:[%s49 + $0x18] sm:$0xf]
  %v5610 = vld [vmem:[%s49 + $0x1c] sm:$0xf]
  %v5611 = vld [vmem:[%s49 + $0x20] sm:$0xf]
  %v5612 = vld [vmem:[%s49 + $0x24] sm:$0xf]
  %v5613 = vld [vmem:[%s49 + $0x28] sm:$0xf]
  %v5614 = vld [vmem:[%s49 + $0x2c] sm:$0xf]
  %v5615 = vld [vmem:[%s49 + $0x30] sm:$0xf]
  %v5616 = vld [vmem:[%s49 + $0x34] sm:$0xf]
  %v5617 = vld [vmem:[%s49 + $0x38] sm:$0xf]
  %v5618 = vld [vmem:[%s49 + $0x3c] sm:$0xf]
  %v5619 = vld [vmem:[%s51] sm:$0x1]
  %v5621 = vperm.slane %v5619, 0
  %v5639 = vunpack.c.l.b16 %v5603
  %v5640 = vunpack.c.l.b16 %v5604
  %v5641 = vunpack.c.l.b16 %v5605
  %v5642 = vunpack.c.l.b16 %v5606
  %v5643 = vunpack.c.l.b16 %v5607
  %v5644 = vunpack.c.l.b16 %v5608
  %v5645 = vunpack.c.l.b16 %v5609
  %v5646 = vunpack.c.l.b16 %v5610
  %v5647 = vunpack.c.l.b16 %v5611
  %v5648 = vunpack.c.l.b16 %v5612
  %v5649 = vunpack.c.l.b16 %v5613
  %v5650 = vunpack.c.l.b16 %v5614
  %v5651 = vunpack.c.l.b16 %v5615
  %v5652 = vunpack.c.l.b16 %v5616
  %v5653 = vunpack.c.l.b16 %v5617
  %v5654 = vunpack.c.l.b16 %v5618
  %v5655 = vpack.c.b16 %v5640, %v5639
  %v5656 = vpack.c.b16 %v5642, %v5641
  %v5657 = vpack.c.b16 %v5644, %v5643
  %v5658 = vpack.c.b16 %v5646, %v5645
  %v5659 = vpack.c.b16 %v5648, %v5647
  %v5660 = vpack.c.b16 %v5650, %v5649
  %v5661 = vpack.c.b16 %v5652, %v5651
  %v5662 = vpack.c.b16 %v5654, %v5653
  %5671 = vmatpush.bf16.msra.mxu0 %v5662
  %5672 = vmatpush.bf16.msra.mxu0 %v5661
  %5673 = vmatpush.bf16.msra.mxu0 %v5660
  %5674 = vmatpush.bf16.msra.mxu0 %v5659
  %5675 = vmatpush.bf16.msra.mxu0 %v5658
  %5676 = vmatpush.bf16.msra.mxu0 %v5657
  %5677 = vmatpush.bf16.msra.mxu0 %v5656
  %5678 = vmatpush.bf16.msra.mxu0 %v5655
  %5679 = vmatmul.bf16.gmra.mxu0 %v5602
  %v5680 = vpop.f32.mrf.mxu0
  %v5681 = vadd.f32 %v5621, %v5680
  %v5682 = vpop.f32.mrf.mxu0
  %5683 = vdwg.mxu0
  %v5684 = vpack.c.bf16 %v5681, %v5681
  %v5685 = vld [vmem:[%s53] sm:$0xf]
  %v5686 = vld [vmem:[%s53 + $0x4] sm:$0xf]
  %v5687 = vld [vmem:[%s53 + $0x8] sm:$0xf]
  %v5688 = vld [vmem:[%s53 + $0xc] sm:$0xf]
  %v5689 = vld [vmem:[%s53 + $0x10] sm:$0xf]
  %v5690 = vld [vmem:[%s53 + $0x14] sm:$0xf]
  %v5691 = vld [vmem:[%s53 + $0x18] sm:$0xf]
  %v5692 = vld [vmem:[%s53 + $0x1c] sm:$0xf]
  %v5693 = vld [vmem:[%s53 + $0x20] sm:$0xf]
  %v5694 = vld [vmem:[%s53 + $0x24] sm:$0xf]
  %v5695 = vld [vmem:[%s53 + $0x28] sm:$0xf]
  %v5696 = vld [vmem:[%s53 + $0x2c] sm:$0xf]
  %v5697 = vld [vmem:[%s53 + $0x30] sm:$0xf]
  %v5698 = vld [vmem:[%s53 + $0x34] sm:$0xf]
  %v5699 = vld [vmem:[%s53 + $0x38] sm:$0xf]
  %v5700 = vld [vmem:[%s53 + $0x3c] sm:$0xf]
  %v5701 = vld [vmem:[%s55] sm:$0x1]
  %v5703 = vperm.slane %v5701, 0
  %v5721 = vunpack.c.l.b16 %v5685
  %v5722 = vunpack.c.l.b16 %v5686
  %v5723 = vunpack.c.l.b16 %v5687
  %v5724 = vunpack.c.l.b16 %v5688
  %v5725 = vunpack.c.l.b16 %v5689
  %v5726 = vunpack.c.l.b16 %v5690
  %v5727 = vunpack.c.l.b16 %v5691
  %v5728 = vunpack.c.l.b16 %v5692
  %v5729 = vunpack.c.l.b16 %v5693
  %v5730 = vunpack.c.l.b16 %v5694
  %v5731 = vunpack.c.l.b16 %v5695
  %v5732 = vunpack.c.l.b16 %v5696
  %v5733 = vunpack.c.l.b16 %v5697
  %v5734 = vunpack.c.l.b16 %v5698
  %v5735 = vunpack.c.l.b16 %v5699
  %v5736 = vunpack.c.l.b16 %v5700
  %v5737 = vpack.c.b16 %v5722, %v5721
  %v5738 = vpack.c.b16 %v5724, %v5723
  %v5739 = vpack.c.b16 %v5726, %v5725
  %v5740 = vpack.c.b16 %v5728, %v5727
  %v5741 = vpack.c.b16 %v5730, %v5729
  %v5742 = vpack.c.b16 %v5732, %v5731
  %v5743 = vpack.c.b16 %v5734, %v5733
  %v5744 = vpack.c.b16 %v5736, %v5735
  %5753 = vmatpush.bf16.msra.mxu0 %v5744
  %5754 = vmatpush.bf16.msra.mxu0 %v5743
  %5755 = vmatpush.bf16.msra.mxu0 %v5742
  %5756 = vmatpush.bf16.msra.mxu0 %v5741
  %5757 = vmatpush.bf16.msra.mxu0 %v5740
  %5758 = vmatpush.bf16.msra.mxu0 %v5739
  %5759 = vmatpush.bf16.msra.mxu0 %v5738
  %5760 = vmatpush.bf16.msra.mxu0 %v5737
  %5761 = vmatmul.bf16.gmra.mxu0 %v5684
  %v5762 = vpop.f32.mrf.mxu0
  %v5763 = vadd.f32 %v5703, %v5762
  %v5764 = vpop.f32.mrf.mxu0
  %5765 = vdwg.mxu0
  %5766 = vst [vmem:[%s65] sm:$0xff] %v5763
  %v5767 = vpack.c.bf16 %v5763, %v5763
  %v5768 = vld [vmem:[%s57] sm:$0xff]
  %v5769 = vld [vmem:[%s57 + $0x8] sm:$0xff]
  %v5770 = vld [vmem:[%s57 + $0x10] sm:$0xff]
  %v5771 = vld [vmem:[%s57 + $0x18] sm:$0xff]
  %v5772 = vld [vmem:[%s57 + $0x20] sm:$0xff]
  %v5773 = vld [vmem:[%s57 + $0x28] sm:$0xff]
  %v5774 = vld [vmem:[%s57 + $0x30] sm:$0xff]
  %v5775 = vld [vmem:[%s57 + $0x38] sm:$0xff]
  %v5776 = vld [vmem:[%s57 + $0x40] sm:$0xff]
  %v5777 = vld [vmem:[%s57 + $0x48] sm:$0xff]
  %v5778 = vld [vmem:[%s57 + $0x50] sm:$0xff]
  %v5779 = vld [vmem:[%s57 + $0x58] sm:$0xff]
  %v5780 = vld [vmem:[%s57 + $0x60] sm:$0xff]
  %v5781 = vld [vmem:[%s57 + $0x68] sm:$0xff]
  %v5782 = vld [vmem:[%s57 + $0x70] sm:$0xff]
  %v5783 = vld [vmem:[%s57 + $0x78] sm:$0xff]
  %v5800 = vunpack.c.l.b16 %v5768
  %v5801 = vunpack.c.h.b16 %v5768
  %v5802 = vunpack.c.l.b16 %v5769
  %v5803 = vunpack.c.h.b16 %v5769
  %v5804 = vunpack.c.l.b16 %v5770
  %v5805 = vunpack.c.h.b16 %v5770
  %v5806 = vunpack.c.l.b16 %v5771
  %v5807 = vunpack.c.h.b16 %v5771
  %v5808 = vunpack.c.l.b16 %v5772
  %v5809 = vunpack.c.h.b16 %v5772
  %v5810 = vunpack.c.l.b16 %v5773
  %v5811 = vunpack.c.h.b16 %v5773
  %v5812 = vunpack.c.l.b16 %v5774
  %v5813 = vunpack.c.h.b16 %v5774
  %v5814 = vunpack.c.l.b16 %v5775
  %v5815 = vunpack.c.h.b16 %v5775
  %v5816 = vunpack.c.l.b16 %v5776
  %v5817 = vunpack.c.h.b16 %v5776
  %v5818 = vunpack.c.l.b16 %v5777
  %v5819 = vunpack.c.h.b16 %v5777
  %v5820 = vunpack.c.l.b16 %v5778
  %v5821 = vunpack.c.h.b16 %v5778
  %v5822 = vunpack.c.l.b16 %v5779
  %v5823 = vunpack.c.h.b16 %v5779
  %v5824 = vunpack.c.l.b16 %v5780
  %v5825 = vunpack.c.h.b16 %v5780
  %v5826 = vunpack.c.l.b16 %v5781
  %v5827 = vunpack.c.h.b16 %v5781
  %v5828 = vunpack.c.l.b16 %v5782
  %v5829 = vunpack.c.h.b16 %v5782
  %v5830 = vunpack.c.l.b16 %v5783
  %v5831 = vunpack.c.h.b16 %v5783
  %v5832 = vpack.c.b16 %v5802, %v5800
  %v5833 = vpack.c.b16 %v5803, %v5801
  %v5834 = vpack.c.b16 %v5806, %v5804
  %v5835 = vpack.c.b16 %v5807, %v5805
  %v5836 = vpack.c.b16 %v5810, %v5808
  %v5837 = vpack.c.b16 %v5811, %v5809
  %v5838 = vpack.c.b16 %v5814, %v5812
  %v5839 = vpack.c.b16 %v5815, %v5813
  %v5840 = vpack.c.b16 %v5818, %v5816
  %v5841 = vpack.c.b16 %v5819, %v5817
  %v5842 = vpack.c.b16 %v5822, %v5820
  %v5843 = vpack.c.b16 %v5823, %v5821
  %v5844 = vpack.c.b16 %v5826, %v5824
  %v5845 = vpack.c.b16 %v5827, %v5825
  %v5846 = vpack.c.b16 %v5830, %v5828
  %v5847 = vpack.c.b16 %v5831, %v5829
  %5864 = vmatpush.bf16.msra.mxu0 %v5846
  %5865 = vmatpush.bf16.msra.mxu0 %v5844
  %5866 = vmatpush.bf16.msra.mxu0 %v5842
  %5867 = vmatpush.bf16.msra.mxu0 %v5840
  %5868 = vmatpush.bf16.msra.mxu0 %v5838
  %5869 = vmatpush.bf16.msra.mxu0 %v5836
  %5870 = vmatpush.bf16.msra.mxu0 %v5834
  %5871 = vmatpush.bf16.msra.mxu0 %v5832
  %5872 = vmatmul.bf16.gmra.mxu0 %v5767
  %v5873 = vpop.f32.mrf.mxu0
  %v5874 = vadd.f32 0.0, %v5873
  %v5875 = vpop.f32.mrf.mxu0
  %5876 = vdwg.mxu0
  %5877 = vmatpush.bf16.msra.mxu0 %v5847
  %5878 = vmatpush.bf16.msra.mxu0 %v5845
  %5879 = vmatpush.bf16.msra.mxu0 %v5843
  %5880 = vmatpush.bf16.msra.mxu0 %v5841
  %5881 = vmatpush.bf16.msra.mxu0 %v5839
  %5882 = vmatpush.bf16.msra.mxu0 %v5837
  %5883 = vmatpush.bf16.msra.mxu0 %v5835
  %5884 = vmatpush.bf16.msra.mxu0 %v5833
  %5885 = vmatmul.bf16.gmra.mxu0 %v5767
  %v5886 = vpop.f32.mrf.mxu0
  %v5887 = vadd.f32 0.0, %v5886
  %v5888 = vpop.f32.mrf.mxu0
  %5889 = vdwg.mxu0
  %v5890 = vmax.f32 %v5874, 0.0
  %v5891 = vmax.f32 %v5887, 0.0
  %v5892 = vpack.c.bf16 %v5890, %v5890
  %v5893 = vpack.c.bf16 %v5891, %v5891
  %v5894 = vld [vmem:[%s59] sm:$0xff]
  %v5895 = vld [vmem:[%s59 + $0x8] sm:$0xff]
  %v5896 = vld [vmem:[%s59 + $0x10] sm:$0xff]
  %v5897 = vld [vmem:[%s59 + $0x18] sm:$0xff]
  %v5898 = vld [vmem:[%s59 + $0x20] sm:$0xff]
  %v5899 = vld [vmem:[%s59 + $0x28] sm:$0xff]
  %v5900 = vld [vmem:[%s59 + $0x30] sm:$0xff]
  %v5901 = vld [vmem:[%s59 + $0x38] sm:$0xff]
  %v5902 = vld [vmem:[%s59 + $0x40] sm:$0xff]
  %v5903 = vld [vmem:[%s59 + $0x48] sm:$0xff]
  %v5904 = vld [vmem:[%s59 + $0x50] sm:$0xff]
  %v5905 = vld [vmem:[%s59 + $0x58] sm:$0xff]
  %v5906 = vld [vmem:[%s59 + $0x60] sm:$0xff]
  %v5907 = vld [vmem:[%s59 + $0x68] sm:$0xff]
  %v5908 = vld [vmem:[%s59 + $0x70] sm:$0xff]
  %v5909 = vld [vmem:[%s59 + $0x78] sm:$0xff]
  %v5910 = vld [vmem:[%s59 + $0x80] sm:$0xff]
  %v5911 = vld [vmem:[%s59 + $0x88] sm:$0xff]
  %v5912 = vld [vmem:[%s59 + $0x90] sm:$0xff]
  %v5913 = vld [vmem:[%s59 + $0x98] sm:$0xff]
  %v5914 = vld [vmem:[%s59 + $0xa0] sm:$0xff]
  %v5915 = vld [vmem:[%s59 + $0xa8] sm:$0xff]
  %v5916 = vld [vmem:[%s59 + $0xb0] sm:$0xff]
  %v5917 = vld [vmem:[%s59 + $0xb8] sm:$0xff]
  %v5918 = vld [vmem:[%s59 + $0xc0] sm:$0xff]
  %v5919 = vld [vmem:[%s59 + $0xc8] sm:$0xff]
  %v5920 = vld [vmem:[%s59 + $0xd0] sm:$0xff]
  %v5921 = vld [vmem:[%s59 + $0xd8] sm:$0xff]
  %v5922 = vld [vmem:[%s59 + $0xe0] sm:$0xff]
  %v5923 = vld [vmem:[%s59 + $0xe8] sm:$0xff]
  %v5924 = vld [vmem:[%s59 + $0xf0] sm:$0xff]
  %v5925 = vld [vmem:[%s59 + $0xf8] sm:$0xff]
  %v5958 = vunpack.c.l.b16 %v5894
  %v5959 = vunpack.c.h.b16 %v5894
  %v5960 = vunpack.c.l.b16 %v5895
  %v5961 = vunpack.c.h.b16 %v5895
  %v5962 = vunpack.c.l.b16 %v5896
  %v5963 = vunpack.c.h.b16 %v5896
  %v5964 = vunpack.c.l.b16 %v5897
  %v5965 = vunpack.c.h.b16 %v5897
  %v5966 = vunpack.c.l.b16 %v5898
  %v5967 = vunpack.c.h.b16 %v5898
  %v5968 = vunpack.c.l.b16 %v5899
  %v5969 = vunpack.c.h.b16 %v5899
  %v5970 = vunpack.c.l.b16 %v5900
  %v5971 = vunpack.c.h.b16 %v5900
  %v5972 = vunpack.c.l.b16 %v5901
  %v5973 = vunpack.c.h.b16 %v5901
  %v5974 = vunpack.c.l.b16 %v5902
  %v5975 = vunpack.c.h.b16 %v5902
  %v5976 = vunpack.c.l.b16 %v5903
  %v5977 = vunpack.c.h.b16 %v5903
  %v5978 = vunpack.c.l.b16 %v5904
  %v5979 = vunpack.c.h.b16 %v5904
  %v5980 = vunpack.c.l.b16 %v5905
  %v5981 = vunpack.c.h.b16 %v5905
  %v5982 = vunpack.c.l.b16 %v5906
  %v5983 = vunpack.c.h.b16 %v5906
  %v5984 = vunpack.c.l.b16 %v5907
  %v5985 = vunpack.c.h.b16 %v5907
  %v5986 = vunpack.c.l.b16 %v5908
  %v5987 = vunpack.c.h.b16 %v5908
  %v5988 = vunpack.c.l.b16 %v5909
  %v5989 = vunpack.c.h.b16 %v5909
  %v5990 = vunpack.c.l.b16 %v5910
  %v5991 = vunpack.c.h.b16 %v5910
  %v5992 = vunpack.c.l.b16 %v5911
  %v5993 = vunpack.c.h.b16 %v5911
  %v5994 = vunpack.c.l.b16 %v5912
  %v5995 = vunpack.c.h.b16 %v5912
  %v5996 = vunpack.c.l.b16 %v5913
  %v5997 = vunpack.c.h.b16 %v5913
  %v5998 = vunpack.c.l.b16 %v5914
  %v5999 = vunpack.c.h.b16 %v5914
  %v6000 = vunpack.c.l.b16 %v5915
  %v6001 = vunpack.c.h.b16 %v5915
  %v6002 = vunpack.c.l.b16 %v5916
  %v6003 = vunpack.c.h.b16 %v5916
  %v6004 = vunpack.c.l.b16 %v5917
  %v6005 = vunpack.c.h.b16 %v5917
  %v6006 = vunpack.c.l.b16 %v5918
  %v6007 = vunpack.c.h.b16 %v5918
  %v6008 = vunpack.c.l.b16 %v5919
  %v6009 = vunpack.c.h.b16 %v5919
  %v6010 = vunpack.c.l.b16 %v5920
  %v6011 = vunpack.c.h.b16 %v5920
  %v6012 = vunpack.c.l.b16 %v5921
  %v6013 = vunpack.c.h.b16 %v5921
  %v6014 = vunpack.c.l.b16 %v5922
  %v6015 = vunpack.c.h.b16 %v5922
  %v6016 = vunpack.c.l.b16 %v5923
  %v6017 = vunpack.c.h.b16 %v5923
  %v6018 = vunpack.c.l.b16 %v5924
  %v6019 = vunpack.c.h.b16 %v5924
  %v6020 = vunpack.c.l.b16 %v5925
  %v6021 = vunpack.c.h.b16 %v5925
  %v6022 = vpack.c.b16 %v5960, %v5958
  %v6023 = vpack.c.b16 %v5961, %v5959
  %v6024 = vpack.c.b16 %v5964, %v5962
  %v6025 = vpack.c.b16 %v5965, %v5963
  %v6026 = vpack.c.b16 %v5968, %v5966
  %v6027 = vpack.c.b16 %v5969, %v5967
  %v6028 = vpack.c.b16 %v5972, %v5970
  %v6029 = vpack.c.b16 %v5973, %v5971
  %v6030 = vpack.c.b16 %v5976, %v5974
  %v6031 = vpack.c.b16 %v5977, %v5975
  %v6032 = vpack.c.b16 %v5980, %v5978
  %v6033 = vpack.c.b16 %v5981, %v5979
  %v6034 = vpack.c.b16 %v5984, %v5982
  %v6035 = vpack.c.b16 %v5985, %v5983
  %v6036 = vpack.c.b16 %v5988, %v5986
  %v6037 = vpack.c.b16 %v5989, %v5987
  %v6038 = vpack.c.b16 %v5992, %v5990
  %v6039 = vpack.c.b16 %v5993, %v5991
  %v6040 = vpack.c.b16 %v5996, %v5994
  %v6041 = vpack.c.b16 %v5997, %v5995
  %v6042 = vpack.c.b16 %v6000, %v5998
  %v6043 = vpack.c.b16 %v6001, %v5999
  %v6044 = vpack.c.b16 %v6004, %v6002
  %v6045 = vpack.c.b16 %v6005, %v6003
  %v6046 = vpack.c.b16 %v6008, %v6006
  %v6047 = vpack.c.b16 %v6009, %v6007
  %v6048 = vpack.c.b16 %v6012, %v6010
  %v6049 = vpack.c.b16 %v6013, %v6011
  %v6050 = vpack.c.b16 %v6016, %v6014
  %v6051 = vpack.c.b16 %v6017, %v6015
  %v6052 = vpack.c.b16 %v6020, %v6018
  %v6053 = vpack.c.b16 %v6021, %v6019
  %6086 = vmatpush.bf16.msra.mxu0 %v6036
  %6087 = vmatpush.bf16.msra.mxu0 %v6034
  %6088 = vmatpush.bf16.msra.mxu0 %v6032
  %6089 = vmatpush.bf16.msra.mxu0 %v6030
  %6090 = vmatpush.bf16.msra.mxu0 %v6028
  %6091 = vmatpush.bf16.msra.mxu0 %v6026
  %6092 = vmatpush.bf16.msra.mxu0 %v6024
  %6093 = vmatpush.bf16.msra.mxu0 %v6022
  %6094 = vmatmul.bf16.gmra.mxu0 %v5892
  %v6095 = vpop.f32.mrf.mxu0
  %v6096 = vadd.f32 0.0, %v6095
  %v6097 = vpop.f32.mrf.mxu0
  %6098 = vdwg.mxu0
  %6099 = vmatpush.bf16.msra.mxu0 %v6052
  %6100 = vmatpush.bf16.msra.mxu0 %v6050
  %6101 = vmatpush.bf16.msra.mxu0 %v6048
  %6102 = vmatpush.bf16.msra.mxu0 %v6046
  %6103 = vmatpush.bf16.msra.mxu0 %v6044
  %6104 = vmatpush.bf16.msra.mxu0 %v6042
  %6105 = vmatpush.bf16.msra.mxu0 %v6040
  %6106 = vmatpush.bf16.msra.mxu0 %v6038
  %6107 = vmatmul.bf16.gmra.mxu0 %v5893
  %v6108 = vpop.f32.mrf.mxu0
  %v6109 = vadd.f32 %v6096, %v6108
  %v6110 = vpop.f32.mrf.mxu0
  %6111 = vdwg.mxu0
  %6112 = vmatpush.bf16.msra.mxu0 %v6037
  %6113 = vmatpush.bf16.msra.mxu0 %v6035
  %6114 = vmatpush.bf16.msra.mxu0 %v6033
  %6115 = vmatpush.bf16.msra.mxu0 %v6031
  %6116 = vmatpush.bf16.msra.mxu0 %v6029
  %6117 = vmatpush.bf16.msra.mxu0 %v6027
  %6118 = vmatpush.bf16.msra.mxu0 %v6025
  %6119 = vmatpush.bf16.msra.mxu0 %v6023
  %6120 = vmatmul.bf16.gmra.mxu0 %v5892
  %v6121 = vpop.f32.mrf.mxu0
  %v6122 = vadd.f32 0.0, %v6121
  %v6123 = vpop.f32.mrf.mxu0
  %6124 = vdwg.mxu0
  %6125 = vmatpush.bf16.msra.mxu0 %v6053
  %6126 = vmatpush.bf16.msra.mxu0 %v6051
  %6127 = vmatpush.bf16.msra.mxu0 %v6049
  %6128 = vmatpush.bf16.msra.mxu0 %v6047
  %6129 = vmatpush.bf16.msra.mxu0 %v6045
  %6130 = vmatpush.bf16.msra.mxu0 %v6043
  %6131 = vmatpush.bf16.msra.mxu0 %v6041
  %6132 = vmatpush.bf16.msra.mxu0 %v6039
  %6133 = vmatmul.bf16.gmra.mxu0 %v5893
  %v6134 = vpop.f32.mrf.mxu0
  %v6135 = vadd.f32 %v6122, %v6134
  %v6136 = vpop.f32.mrf.mxu0
  %6137 = vdwg.mxu0
  %6138 = vst [vmem:[%s67] sm:$0xff] %v6109
  %6139 = vst [vmem:[%s67 + $0x8] sm:$0xff] %v6135
  // Predicated region
  $region122: #{simsiam_vlm_forward.1} parent=0 // pred_check
    _
  $region123: #{simsiam_vlm_forward.1} parent=0 // pred_check_branch
    %6141 = sbr.rel (0) target = $region125
  $region124: #{simsiam_vlm_forward.1} parent=0 // pred_region
    _
  $region125: #{simsiam_vlm_forward.1} parent=0 // pred_fallthru
    _
  // Predicated region
  $region126: #{simsiam_vlm_forward.1} parent=0 // pred_check
    _
  $region127: #{simsiam_vlm_forward.1} parent=0 // pred_check_branch
    %6143 = sbr.rel (0) target = $region129
  $region128: #{simsiam_vlm_forward.1} parent=0 // pred_region
    _
  $region129: #{simsiam_vlm_forward.1} parent=0 // pred_fallthru
    _
  // Predicated region
  $region130: #{simsiam_vlm_forward.1} parent=0 // pred_check
    _
  $region131: #{simsiam_vlm_forward.1} parent=0 // pred_check_branch
    %6145 = sbr.rel (0) target = $region133
  $region132: #{simsiam_vlm_forward.1} parent=0 // pred_region
    _
  $region133: #{simsiam_vlm_forward.1} parent=0 // pred_fallthru
    _
  // Predicated region
  $region134: #{simsiam_vlm_forward.1} parent=0 // pred_check
    _
  $region135: #{simsiam_vlm_forward.1} parent=0 // pred_check_branch
    %6147 = sbr.rel (0) target = $region137
  $region136: #{simsiam_vlm_forward.1} parent=0 // pred_region
    _
  $region137: #{simsiam_vlm_forward.1} parent=0 // pred_fallthru
    _
  // Predicated region
  $region138: #{simsiam_vlm_forward.1} parent=0 // pred_check
    _
  $region139: #{simsiam_vlm_forward.1} parent=0 // pred_check_branch
    %6149 = sbr.rel (0) target = $region141
  $region140: #{simsiam_vlm_forward.1} parent=0 // pred_region
    _
  $region141: #{simsiam_vlm_forward.1} parent=0 // pred_fallthru
    _
  // Predicated region
  $region142: #{simsiam_vlm_forward.1} parent=0 // pred_check
    _
  $region143: #{simsiam_vlm_forward.1} parent=0 // pred_check_branch
    %6151 = sbr.rel (0) target = $region145
  $region144: #{simsiam_vlm_forward.1} parent=0 // pred_region
    _
  $region145: #{simsiam_vlm_forward.1} parent=0 // pred_fallthru
    _
  // Predicated region
  $region146: #{simsiam_vlm_forward.1} parent=0 // pred_check
    _
  $region147: #{simsiam_vlm_forward.1} parent=0 // pred_check_branch
    %6153 = sbr.rel (0) target = $region149
  $region148: #{simsiam_vlm_forward.1} parent=0 // pred_region
    _
  $region149: #{simsiam_vlm_forward.1} parent=0 // pred_fallthru
    _
  // Predicated region
  $region150: #{simsiam_vlm_forward.1} parent=0 // pred_check
    _
  $region151: #{simsiam_vlm_forward.1} parent=0 // pred_check_branch
    %6155 = sbr.rel (0) target = $region153
  $region152: #{simsiam_vlm_forward.1} parent=0 // pred_region
    _
  $region153: #{simsiam_vlm_forward.1} parent=0 // pred_fallthru
    _
  // Predicated region
  $region154: #{simsiam_vlm_forward.1} parent=0 // pred_check
    _
  $region155: #{simsiam_vlm_forward.1} parent=0 // pred_check_branch
    %6157 = sbr.rel (0) target = $region157
  $region156: #{simsiam_vlm_forward.1} parent=0 // pred_region
    _
  $region157: #{simsiam_vlm_forward.1} parent=0 // pred_fallthru
    _
  // Predicated region
  $region158: #{simsiam_vlm_forward.1} parent=0 // pred_check
    _
  $region159: #{simsiam_vlm_forward.1} parent=0 // pred_check_branch
    %6159 = sbr.rel (0) target = $region161
  $region160: #{simsiam_vlm_forward.1} parent=0 // pred_region
    _
  $region161: #{simsiam_vlm_forward.1} parent=0 // pred_fallthru
    _
  // Predicated region
  $region162: #{simsiam_vlm_forward.1} parent=0 // pred_check
    _
  $region163: #{simsiam_vlm_forward.1} parent=0 // pred_check_branch
    %6161 = sbr.rel (0) target = $region165
  $region164: #{simsiam_vlm_forward.1} parent=0 // pred_region
    _
  $region165: #{simsiam_vlm_forward.1} parent=0 // pred_fallthru
    _
  // Predicated region
  $region166: #{simsiam_vlm_forward.1} parent=0 // pred_check
    _
  $region167: #{simsiam_vlm_forward.1} parent=0 // pred_check_branch
    %6163 = sbr.rel (0) target = $region169
  $region168: #{simsiam_vlm_forward.1} parent=0 // pred_region
    _
  $region169: #{simsiam_vlm_forward.1} parent=0 // pred_fallthru
    _

</llo_original>
